<compile_context>
chip_gen: v7x
topology: tpu7x:2x2x1
jax: 0.10.0
libtpu: 0.0.40
codegen_flags: <defaults>
</compile_context>

<pallas_src>
import functools

import jax
import jax.numpy as jnp
from jax.experimental import pallas as pl
from jax.experimental.pallas import tpu as pltpu


# -----------------------------------------------------------------------------
# in-kernel helpers
# -----------------------------------------------------------------------------
def _mm(a, w):
    """bf16 MXU matmul with f32 accumulation (weights are pre-cast to bf16 at init)."""
    return jnp.dot(a.astype(jnp.bfloat16), w.astype(jnp.bfloat16),
                   preferred_element_type=jnp.float32)


def _ln(x, g, b):
    mu = jnp.mean(x, axis=-1, keepdims=True)
    xc = x - mu
    var = jnp.mean(xc * xc, axis=-1, keepdims=True)
    return xc * jax.lax.rsqrt(var + 1e-6) * g + b


def _gru(x, y, w3, u2, ug, d):
    # GTrXL-style GRU gating.
    # TODO(synk): Gating_layer source not provided; GRU gating with z-gate bias 2.0 assumed.
    yw = _mm(y, w3)                       # (rows, 3D): [r|z|g] contributions from y
    xu = _mm(x, u2)                       # (rows, 2D): [r|z] contributions from x
    r = jax.nn.sigmoid(yw[:, :d] + xu[:, :d])
    z = jax.nn.sigmoid(yw[:, d:2 * d] + xu[:, d:2 * d] - 2.0)
    h = jnp.tanh(yw[:, 2 * d:] + _mm(x * r, ug))
    return (1.0 - z) * x + z * h


def _attn(q, k, v, num_heads):
    # TODO(synk): MultiHeadAttention2/3 sources not provided; standard split-head scaled
    # dot-product attention assumed (scale from the q/k head dim); the output projection
    # is fused into the following residual block.
    dq = q.shape[-1]
    dv = v.shape[-1]
    dk = dq // num_heads
    dvh = dv // num_heads
    scale = 1.0 / (dk ** 0.5)
    heads = []
    for h in range(num_heads):            # static unroll; read-side slices only
        qh = (q[:, h * dk:(h + 1) * dk].astype(jnp.float32) * scale).astype(jnp.bfloat16)
        kh = k[:, h * dk:(h + 1) * dk].astype(jnp.bfloat16)
        vh = v[:, h * dvh:(h + 1) * dvh].astype(jnp.bfloat16)
        s = jax.lax.dot_general(qh, kh, (((1,), (1,)), ((), ())),
                                preferred_element_type=jnp.float32)
        mx = jnp.max(s, axis=-1, keepdims=True)
        e = jnp.exp(s - mx)
        p = e / jnp.sum(e, axis=-1, keepdims=True)       # exact divide (parity-safe)
        heads.append(jnp.dot(p.astype(jnp.bfloat16), vh,
                             preferred_element_type=jnp.float32))
    return jnp.concatenate(heads, axis=-1)


_BLK_KEYS = ("wo", "bo", "g1_w3", "g1_u2", "g1_ug", "lna_g", "lna_b",
             "f_w1", "f_b1", "f_w2", "f_b2",
             "g2_w3", "g2_u2", "g2_ug", "lnb_g", "lnb_b")


def _blk_args(bp):
    return [bp[k] for k in _BLK_KEYS]


def _residual_block(x, att_raw, refs, d):
    """MHA out-proj + gate1 -> LN -> FFN -> gate2 -> LN.  Returns (out, projected_att)."""
    (wo, bo, g1w, g1u, g1g, lnag, lnab,
     f1w, f1b, f2w, f2b, g2w, g2u, g2g, lnbg, lnbb) = refs
    att = _mm(att_raw, wo[...]) + bo[...]
    g1 = _gru(x, att, g1w[...], g1u[...], g1g[...], d)
    pos = _ln(g1, lnag[...], lnab[...])
    # TODO(synk): PositionwiseFeedForward2 source not provided; Linear->ReLU->Linear with
    # hidden width = D assumed.
    y2 = _mm(jnp.maximum(_mm(pos, f1w[...]) + f1b[...], 0.0), f2w[...]) + f2b[...]
    tr = _gru(g1, y2, g2w[...], g2u[...], g2g[...], d)
    return _ln(tr, lnbg[...], lnbb[...]), att


# -----------------------------------------------------------------------------
# spec helpers
# -----------------------------------------------------------------------------
def _pick_rows(m, cap=512):
    """Largest row tile <= cap that divides m (multiple of 8), else the full m."""
    if m <= cap:
        return m
    for t in range(cap - cap % 8, 7, -8):
        if m % t == 0:
            return t
    return m   # TODO(synk): pad + mask the tail instead of one full block for awkward m.


def _row_spec(tm, width):
    return pl.BlockSpec((tm, width), lambda i: (i, 0))


def _const_spec(shape):
    zeros = (0,) * len(shape)
    return pl.BlockSpec(shape, lambda i, _z=zeros: _z)


def _parallel(grid):
    return pltpu.CompilerParams(dimension_semantics=("parallel",) * len(grid))


# -----------------------------------------------------------------------------
# Kernel 1: Hypernet3 (per-token weight generation + matvec + tanh), fully fused
# -----------------------------------------------------------------------------
def _hypernet_kernel(q_ref, w1_ref, b1_ref, w2_ref, b2_ref, o_ref, *, d):
    # TODO(synk): Hypernet3 source not provided; Linear(D->H)->ReLU->Linear(H->D*D) assumed.
    q = q_ref[...].astype(jnp.float32)                        # (tm, D)
    h = jnp.maximum(_mm(q, w1_ref[...]) + b1_ref[...], 0.0)   # (tm, H)
    wf = _mm(h, w2_ref[...]) + b2_ref[...]                    # (tm, D*D), never hits HBM
    # out[m, e] = sum_j q[m, j] * wf[m, j*D + e]  (per-token matvec + tanh)
    acc = q[:, 0:1] * wf[:, 0:d]
    for j in range(1, d):
        acc = acc + q[:, j:j + 1] * wf[:, j * d:(j + 1) * d]
    o_ref[...] = jnp.tanh(acc).astype(o_ref.dtype)


def hypernet(q, w1, b1, w2, b2):
    m, d = q.shape
    hdim = w1.shape[1]
    # keep the live (tm, D*D) f32 block ~<= 8 MiB (v7x 64 MiB VMEM safe)
    cap = max(8, min(256, ((8 << 20) // (d * d * 4)) // 8 * 8))
    tm = _pick_rows(m, cap=cap)
    grid = (m // tm,)
    return pl.pallas_call(
        functools.partial(_hypernet_kernel, d=d),
        out_shape=jax.ShapeDtypeStruct((m, d), jnp.bfloat16),   # matmul/concat operand only
        grid=grid,
        in_specs=[_row_spec(tm, d),
                  _const_spec((d, hdim)), _const_spec((1, hdim)),
                  _const_spec((hdim, d * d)), _const_spec((1, d * d))],
        out_specs=_row_spec(tm, d),
        compiler_params=_parallel(grid),
    )(q, w1, b1, w2, b2)


# -----------------------------------------------------------------------------
# Kernel 2: fused attention stage (self / self-cross), gridded over the batch (T*K)
# -----------------------------------------------------------------------------
def _stage_kernel(x_ref, qi_ref, wqkv_ref, bqkv_ref, *refs,
                  d, num_heads, cat_qi, emit_att):
    blk_refs = refs[:16]
    out_refs = refs[16:]
    x = x_ref[...].astype(jnp.float32)                        # (N, D)
    qi = qi_ref[...].astype(jnp.float32)                      # (N, D)
    y = _mm(x, wqkv_ref[...]) + bqkv_ref[...]                 # (N, 3D): one wide matmul
    if cat_qi:        # self-cross stage: concat intention onto q and k
        q = jnp.concatenate([y[:, :d], qi], axis=-1)          # (N, 2D)
        k = jnp.concatenate([y[:, d:2 * d], qi], axis=-1)
    else:             # self stage: add intention to q and k
        q = y[:, :d] + qi
        k = y[:, d:2 * d] + qi
    v = y[:, 2 * d:]
    att_raw = _attn(q, k, v, num_heads)                       # (N, D), head-concat
    out, att = _residual_block(x, att_raw, blk_refs, d)
    out_refs[0][...] = out.astype(out_refs[0].dtype)
    if emit_att:                                              # only the last block needs it
        out_refs[1][...] = att.astype(out_refs[1].dtype)


def attention_stage(x_b, qi_b, wqkv, bqkv, blk_p, num_heads, *, cat_qi, emit_att):
    tk, n, d = x_b.shape
    grid = (tk,)
    data_spec = pl.BlockSpec((None, n, d), lambda i: (i, 0, 0))
    blk = _blk_args(blk_p)
    in_specs = ([data_spec, data_spec,
                 _const_spec(wqkv.shape), _const_spec(bqkv.shape)]
                + [_const_spec(a.shape) for a in blk])
    out_shape = [jax.ShapeDtypeStruct((tk, n, d), jnp.float32)]
    out_specs = [data_spec]
    if emit_att:
        out_shape.append(jax.ShapeDtypeStruct((tk, n, d), jnp.float32))
        out_specs.append(data_spec)
    res = pl.pallas_call(
        functools.partial(_stage_kernel, d=d, num_heads=num_heads,
                          cat_qi=cat_qi, emit_att=emit_att),
        out_shape=out_shape,
        grid=grid,
        in_specs=in_specs,
        out_specs=out_specs,
        compiler_params=_parallel(grid),
    )(x_b, qi_b, wqkv, bqkv, *blk)
    return (res[0], res[1]) if emit_att else (res[0], None)


# -----------------------------------------------------------------------------
# Kernel 3: cross-attention K/V projection (shared by every query row)
# -----------------------------------------------------------------------------
def _kv_kernel(x_ref, w_ref, b_ref, k_ref, v_ref, *, d):
    y = _mm(x_ref[...].astype(jnp.float32), w_ref[...]) + b_ref[...]   # (tm, 2D)
    k_ref[...] = y[:, :d].astype(k_ref.dtype)
    v_ref[...] = y[:, d:].astype(v_ref.dtype)


def kv_proj(x, w, b):
    m, d = x.shape
    tm = _pick_rows(m)
    grid = (m // tm,)
    return pl.pallas_call(
        functools.partial(_kv_kernel, d=d),
        out_shape=[jax.ShapeDtypeStruct((m, d), jnp.bfloat16)] * 2,  # MXU operands only
        grid=grid,
        in_specs=[_row_spec(tm, d),
                  _const_spec((d, 2 * d)), _const_spec((1, 2 * d))],
        out_specs=[_row_spec(tm, d)] * 2,
        compiler_params=_parallel(grid),
    )(x, w, b)


# -----------------------------------------------------------------------------
# Kernel 4: fused cross-attention stage, gridded over query-row tiles
# -----------------------------------------------------------------------------
def _cross_stage_kernel(x_ref, qi_ref, k_ref, v_ref, wq_ref, bq_ref, *refs,
                        d, num_heads):
    blk_refs = refs[:16]
    o_ref = refs[16]
    x = x_ref[...].astype(jnp.float32)                        # (tm, D)
    qi = qi_ref[...].astype(jnp.float32)
    q = _mm(x, wq_ref[...]) + bq_ref[...] + qi                # (tm, D)
    # every query row attends to the same global key set (batch-1 broadcast in PyTorch)
    att_raw = _attn(q, k_ref[...], v_ref[...], num_heads)     # (tm, D)
    out, _ = _residual_block(x, att_raw, blk_refs, d)
    o_ref[...] = out.astype(o_ref.dtype)


def cross_stage(x, qi, k, v, wq, bq, blk_p, num_heads):
    m, d = x.shape
    mk = k.shape[0]
    # bound the per-step (tm, mk) score block to ~4 MiB
    cap = max(8, min(512, ((4 << 20) // max(mk * 4, 1)) // 8 * 8))
    tm = _pick_rows(m, cap=cap)
    # TODO(synk): for very large key counts, add flash-style key tiling (online softmax)
    # instead of holding the full (mk, D) k/v and (tm, mk) scores per step.
    grid = (m // tm,)
    row = _row_spec(tm, d)
    blk = _blk_args(blk_p)
    in_specs = ([row, row, _const_spec((mk, d)), _const_spec((mk, d)),
                 _const_spec(wq.shape), _const_spec(bq.shape)]
                + [_const_spec(a.shape) for a in blk])
    return pl.pallas_call(
        functools.partial(_cross_stage_kernel, d=d, num_heads=num_heads),
        out_shape=jax.ShapeDtypeStruct((m, d), jnp.float32),
        grid=grid,
        in_specs=in_specs,
        out_specs=row,
        compiler_params=_parallel(grid),
    )(x, qi, k, v, wq, bq, *blk)


# -----------------------------------------------------------------------------
# Parameter init (deterministic, synthetic; matmul weights pre-cast to bf16)
# -----------------------------------------------------------------------------
def _init_linear(key, din, dout):
    k1, k2 = jax.random.split(key)
    lim = 1.0 / (din ** 0.5)
    w = jax.random.uniform(k1, (din, dout), jnp.float32, -lim, lim).astype(jnp.bfloat16)
    b = jax.random.uniform(k2, (dout,), jnp.float32, -lim, lim).reshape(1, dout)
    return w, b


def init_params(key, state_dim, hidden_dim):
    d = state_dim
    keys = iter(jax.random.split(key, 48))

    def lin(din, dout):
        return _init_linear(next(keys), din, dout)

    def fused(din, douts):
        ws, bs = zip(*(lin(din, do) for do in douts))
        return jnp.concatenate(ws, axis=1), jnp.concatenate(bs, axis=1)

    def gate():
        ks = jax.random.split(next(keys), 6)
        lim = 1.0 / (d ** 0.5)
        wr, wz, wg, ur, uz, ug = [
            jax.random.uniform(k, (d, d), jnp.float32, -lim, lim).astype(jnp.bfloat16)
            for k in ks]
        return (jnp.concatenate([wr, wz, wg], 1), jnp.concatenate([ur, uz], 1), ug)

    def ln():
        return jnp.ones((1, d), jnp.float32), jnp.zeros((1, d), jnp.float32)

    def block():
        wo, bo = lin(d, d)
        g1w, g1u, g1g = gate()
        lnag, lnab = ln()
        fw1, fb1 = lin(d, d)
        fw2, fb2 = lin(d, d)
        g2w, g2u, g2g = gate()
        lnbg, lnbb = ln()
        return {"wo": wo, "bo": bo,
                "g1_w3": g1w, "g1_u2": g1u, "g1_ug": g1g,
                "lna_g": lnag, "lna_b": lnab,
                "f_w1": fw1, "f_b1": fb1, "f_w2": fw2, "f_b2": fb2,
                "g2_w3": g2w, "g2_u2": g2u, "g2_ug": g2g,
                "lnb_g": lnbg, "lnb_b": lnbb}

    p = {}
    p["hyper_w1"], p["hyper_b1"] = lin(d, hidden_dim)
    p["hyper_w2"], p["hyper_b2"] = lin(hidden_dim, d * d)
    p["selfatt_w"], p["selfatt_b"] = fused(d, [d, d, d])          # [q|k|v] stacked
    p["blk1"] = block()                                           # self-attention block
    p["cross_q_w"], p["cross_q_b"] = lin(d, d)
    p["cross_kv_w"], p["cross_kv_b"] = fused(d, [d, d])           # [k|v] stacked
    p["blk2"] = block()                                           # cross-attention block
    p["selfcross_w"], p["selfcross_b"] = fused(d, [d, d, d])
    p["blk3"] = block()                                           # self-cross block
    # faithful to the PyTorch module: the final LayerNorm reuses layer_norm2_cross
    # (layer_norm2_selfcross exists in the module but is unused in forward())
    p["blk3"]["lnb_g"] = p["blk2"]["lnb_g"]
    p["blk3"]["lnb_b"] = p["blk2"]["lnb_b"]
    return p


# -----------------------------------------------------------------------------
# Forward pass (mirrors TransformerIntentionLayer.forward)
# -----------------------------------------------------------------------------
def transformer_intention_layer(params, adv_obs, k_intention, q_intention, num_heads):
    p = params
    T, K, N, D = adv_obs.shape
    M = T * K * N
    TK = T * K

    # Hypernet3: per-token (D, D) weight generated and applied inside one fused kernel.
    q_int = hypernet(q_intention.reshape(M, D),
                     p["hyper_w1"], p["hyper_b1"], p["hyper_w2"], p["hyper_b2"])  # (M,D) bf16
    q_int_b = q_int.reshape(TK, N, D)

    # --- self-attention stage (batch = T*K, seq = N), fully fused per batch element ---
    blk1_out, _ = attention_stage(adv_obs.reshape(TK, N, D), q_int_b,
                                  p["selfatt_w"], p["selfatt_b"], p["blk1"],
                                  num_heads, cat_qi=False, emit_att=False)

    # --- cross-attention stage ---
    # NOTE: the PyTorch transpose(1,2)->process->transpose-back round trip is a pure row
    # permutation of a row-wise-independent stage (all query rows attend to the same
    # broadcast key set; gate/LN/FFN are per-row), so it is elided: rows stay in
    # (T, K, N) order end-to-end.
    k_c, v_c = kv_proj(k_intention.reshape(M, D), p["cross_kv_w"], p["cross_kv_b"])
    blk2_out = cross_stage(blk1_out.reshape(M, D), q_int, k_c, v_c,
                           p["cross_q_w"], p["cross_q_b"], p["blk2"], num_heads)

    # --- self-cross stage (batch = T*K, seq = N; q/k concatenated with intention) ---
    out_b, att_b = attention_stage(blk2_out.reshape(TK, N, D), q_int_b,
                                   p["selfcross_w"], p["selfcross_b"], p["blk3"],
                                   num_heads, cat_qi=True, emit_att=True)

    return out_b.reshape(T, K, N, D), att_b.reshape(T, K, N, D)


# -----------------------------------------------------------------------------
if __name__ == "__main__":
    T, K, N = 2, 2, 4
    state_dim = 32
    hidden_dim = 32
    num_heads = 4

    key = jax.random.PRNGKey(0)
    kp, k1, k2, k3 = jax.random.split(key, 4)
    params = init_params(kp, state_dim, hidden_dim)

    adv_obs = jax.random.normal(k1, (T, K, N, state_dim), jnp.float32)
    k_intention = jax.random.normal(k2, (T, K, N, state_dim), jnp.float32)
    q_intention = jax.random.normal(k3, (T, K, N, state_dim), jnp.float32)

    fwd = jax.jit(transformer_intention_layer, static_argnames=("num_heads",))
    out_q, out_att = fwd(params, adv_obs, k_intention, q_intention, num_heads=num_heads)
    jax.block_until_ready((out_q, out_att))

    assert out_q.shape == (T, K, N, state_dim)
    assert out_att.shape == (T, K, N, state_dim)
    assert bool(jnp.all(jnp.isfinite(out_q))) and bool(jnp.all(jnp.isfinite(out_att)))
    print("KERNEL_OK")
</pallas_src>

<mosaic_0001>
module attributes {stable_mosaic.version = 11 : i64} {
  func.func @_kv_kernel(%arg0: i32, %arg1: memref<16x32xf32, #tpu.memory_space<vmem>>, %arg2: memref<32x64xbf16, #tpu.memory_space<vmem>>, %arg3: memref<1x64xf32, #tpu.memory_space<vmem>>, %arg4: memref<16x32xbf16, #tpu.memory_space<vmem>>, %arg5: memref<16x32xbf16, #tpu.memory_space<vmem>>) attributes {dimension_semantics = [#tpu.dimension_semantics<parallel>], iteration_bounds = array<i64: 1>, scalar_prefetch = 0 : i64, scratch_operands = 0 : i64, tpu.core_type = #tpu.core_type<tc>, window_params = [{transform_indices = @transform_0, window_bounds = array<i64: 16, 32>}, {pipeline_mode = #tpu.pipeline_mode<synchronous>, transform_indices = @transform_1, window_bounds = array<i64: 32, 64>}, {pipeline_mode = #tpu.pipeline_mode<synchronous>, transform_indices = @transform_2, window_bounds = array<i64: 1, 64>}, {transform_indices = @transform_3, window_bounds = array<i64: 16, 32>}, {transform_indices = @transform_4, window_bounds = array<i64: 16, 32>}]} {
    %c0 = arith.constant 0 : index
    %c0_0 = arith.constant 0 : index
    %0 = vector.load %arg1[%c0, %c0_0] : memref<16x32xf32, #tpu.memory_space<vmem>>, vector<16x32xf32>
    %c0_1 = arith.constant 0 : index
    %c0_2 = arith.constant 0 : index
    %1 = vector.load %arg2[%c0_1, %c0_2] : memref<32x64xbf16, #tpu.memory_space<vmem>>, vector<32x64xbf16>
    %2 = arith.truncf %0 : vector<16x32xf32> to vector<16x32xbf16>
    %cst = arith.constant dense<0.000000e+00> : vector<16x64xf32>
    %3 = tpu.matmul %2, %1, %cst {dimension_numbers = #tpu.dot_dimension_numbers<[1], [0], [0], [1], [0, 0, 1, 1], [], []>} : vector<16x32xbf16>, vector<32x64xbf16>, vector<16x64xf32> -> vector<16x64xf32>
    %c0_3 = arith.constant 0 : index
    %c0_4 = arith.constant 0 : index
    %4 = vector.load %arg3[%c0_3, %c0_4] : memref<1x64xf32, #tpu.memory_space<vmem>>, vector<1x64xf32>
    %5 = vector.broadcast %4 : vector<1x64xf32> to vector<16x64xf32>
    %6 = arith.addf %3, %5 : vector<16x64xf32>
    %7 = vector.extract_strided_slice %6 {offsets = [0, 0], sizes = [16, 32], strides = [1, 1]} : vector<16x64xf32> to vector<16x32xf32>
    %8 = arith.truncf %7 : vector<16x32xf32> to vector<16x32xbf16>
    %c0_5 = arith.constant 0 : index
    %c0_6 = arith.constant 0 : index
    %9 = vector.load %arg4[%c0_5, %c0_6] : memref<16x32xbf16, #tpu.memory_space<vmem>>, vector<16x32xbf16>
    tpu.vector_store %arg4[%c0_5, %c0_6], %8 {strides = array<i32>} : memref<16x32xbf16, #tpu.memory_space<vmem>>, vector<16x32xbf16>,
    %10 = vector.extract_strided_slice %6 {offsets = [0, 32], sizes = [16, 32], strides = [1, 1]} : vector<16x64xf32> to vector<16x32xf32>
    %11 = arith.truncf %10 : vector<16x32xf32> to vector<16x32xbf16>
    %c0_7 = arith.constant 0 : index
    %c0_8 = arith.constant 0 : index
    %12 = vector.load %arg5[%c0_7, %c0_8] : memref<16x32xbf16, #tpu.memory_space<vmem>>, vector<16x32xbf16>
    tpu.vector_store %arg5[%c0_7, %c0_8], %11 {strides = array<i32>} : memref<16x32xbf16, #tpu.memory_space<vmem>>, vector<16x32xbf16>,
    return
  }
  func.func @transform_0(%arg0: i32) -> (i32, i32) {
    %c0_i32 = arith.constant 0 : i32
    %c0_i32_0 = arith.constant 0 : i32
    return %arg0, %c0_i32 : i32, i32
  }
  func.func @transform_1(%arg0: i32) -> (i32, i32) {
    %c0_i32 = arith.constant 0 : i32
    %c0_i32_0 = arith.constant 0 : i32
    %c0_i32_1 = arith.constant 0 : i32
    return %c0_i32, %c0_i32_0 : i32, i32
  }
  func.func @transform_2(%arg0: i32) -> (i32, i32) {
    %c0_i32 = arith.constant 0 : i32
    %c0_i32_0 = arith.constant 0 : i32
    %c0_i32_1 = arith.constant 0 : i32
    return %c0_i32, %c0_i32_0 : i32, i32
  }
  func.func @transform_3(%arg0: i32) -> (i32, i32) {
    %c0_i32 = arith.constant 0 : i32
    %c0_i32_0 = arith.constant 0 : i32
    return %arg0, %c0_i32 : i32, i32
  }
  func.func @transform_4(%arg0: i32) -> (i32, i32) {
    %c0_i32 = arith.constant 0 : i32
    %c0_i32_0 = arith.constant 0 : i32
    return %arg0, %c0_i32 : i32, i32
  }
}

module attributes {stable_mosaic.version = 11 : i64} {
  func.func @_stage_kernel(%arg0: i32, %arg1: memref<1x4x32xf32, #tpu.memory_space<vmem>>, %arg2: memref<1x4x32xbf16, #tpu.memory_space<vmem>>, %arg3: memref<32x96xbf16, #tpu.memory_space<vmem>>, %arg4: memref<1x96xf32, #tpu.memory_space<vmem>>, %arg5: memref<32x32xbf16, #tpu.memory_space<vmem>>, %arg6: memref<1x32xf32, #tpu.memory_space<vmem>>, %arg7: memref<32x96xbf16, #tpu.memory_space<vmem>>, %arg8: memref<32x64xbf16, #tpu.memory_space<vmem>>, %arg9: memref<32x32xbf16, #tpu.memory_space<vmem>>, %arg10: memref<1x32xf32, #tpu.memory_space<vmem>>, %arg11: memref<1x32xf32, #tpu.memory_space<vmem>>, %arg12: memref<32x32xbf16, #tpu.memory_space<vmem>>, %arg13: memref<1x32xf32, #tpu.memory_space<vmem>>, %arg14: memref<32x32xbf16, #tpu.memory_space<vmem>>, %arg15: memref<1x32xf32, #tpu.memory_space<vmem>>, %arg16: memref<32x96xbf16, #tpu.memory_space<vmem>>, %arg17: memref<32x64xbf16, #tpu.memory_space<vmem>>, %arg18: memref<32x32xbf16, #tpu.memory_space<vmem>>, %arg19: memref<1x32xf32, #tpu.memory_space<vmem>>, %arg20: memref<1x32xf32, #tpu.memory_space<vmem>>, %arg21: memref<1x4x32xf32, #tpu.memory_space<vmem>>) attributes {dimension_semantics = [#tpu.dimension_semantics<parallel>], iteration_bounds = array<i64: 4>, scalar_prefetch = 0 : i64, scratch_operands = 0 : i64, tpu.core_type = #tpu.core_type<tc>, window_params = [{transform_indices = @transform_0, window_bounds = array<i64: 1, 4, 32>}, {transform_indices = @transform_1, window_bounds = array<i64: 1, 4, 32>}, {pipeline_mode = #tpu.pipeline_mode<synchronous>, transform_indices = @transform_2, window_bounds = array<i64: 32, 96>}, {pipeline_mode = #tpu.pipeline_mode<synchronous>, transform_indices = @transform_3, window_bounds = array<i64: 1, 96>}, {pipeline_mode = #tpu.pipeline_mode<synchronous>, transform_indices = @transform_4, window_bounds = array<i64: 32, 32>}, {pipeline_mode = #tpu.pipeline_mode<synchronous>, transform_indices = @transform_5, window_bounds = array<i64: 1, 32>}, {pipeline_mode = #tpu.pipeline_mode<synchronous>, transform_indices = @transform_6, window_bounds = array<i64: 32, 96>}, {pipeline_mode = #tpu.pipeline_mode<synchronous>, transform_indices = @transform_7, window_bounds = array<i64: 32, 64>}, {pipeline_mode = #tpu.pipeline_mode<synchronous>, transform_indices = @transform_8, window_bounds = array<i64: 32, 32>}, {pipeline_mode = #tpu.pipeline_mode<synchronous>, transform_indices = @transform_9, window_bounds = array<i64: 1, 32>}, {pipeline_mode = #tpu.pipeline_mode<synchronous>, transform_indices = @transform_10, window_bounds = array<i64: 1, 32>}, {pipeline_mode = #tpu.pipeline_mode<synchronous>, transform_indices = @transform_11, window_bounds = array<i64: 32, 32>}, {pipeline_mode = #tpu.pipeline_mode<synchronous>, transform_indices = @transform_12, window_bounds = array<i64: 1, 32>}, {pipeline_mode = #tpu.pipeline_mode<synchronous>, transform_indices = @transform_13, window_bounds = array<i64: 32, 32>}, {pipeline_mode = #tpu.pipeline_mode<synchronous>, transform_indices = @transform_14, window_bounds = array<i64: 1, 32>}, {pipeline_mode = #tpu.pipeline_mode<synchronous>, transform_indices = @transform_15, window_bounds = array<i64: 32, 96>}, {pipeline_mode = #tpu.pipeline_mode<synchronous>, transform_indices = @transform_16, window_bounds = array<i64: 32, 64>}, {pipeline_mode = #tpu.pipeline_mode<synchronous>, transform_indices = @transform_17, window_bounds = array<i64: 32, 32>}, {pipeline_mode = #tpu.pipeline_mode<synchronous>, transform_indices = @transform_18, window_bounds = array<i64: 1, 32>}, {pipeline_mode = #tpu.pipeline_mode<synchronous>, transform_indices = @transform_19, window_bounds = array<i64: 1, 32>}, {transform_indices = @transform_20, window_bounds = array<i64: 1, 4, 32>}]} {
    %c0 = arith.constant 0 : index
    %c0_0 = arith.constant 0 : index
    %c0_1 = arith.constant 0 : index
    %0 = vector.load %arg1[%c0, %c0_0, %c0_1] : memref<1x4x32xf32, #tpu.memory_space<vmem>>, vector<1x4x32xf32>
    %1 = vector.shape_cast %0 : vector<1x4x32xf32> to vector<4x32xf32>
    %c0_2 = arith.constant 0 : index
    %c0_3 = arith.constant 0 : index
    %c0_4 = arith.constant 0 : index
    %2 = vector.load %arg2[%c0_2, %c0_3, %c0_4] : memref<1x4x32xbf16, #tpu.memory_space<vmem>>, vector<1x4x32xbf16>
    %3 = vector.shape_cast %2 : vector<1x4x32xbf16> to vector<4x32xbf16>
    %4 = arith.extf %3 : vector<4x32xbf16> to vector<4x32xf32>
    %c0_5 = arith.constant 0 : index
    %c0_6 = arith.constant 0 : index
    %5 = vector.load %arg3[%c0_5, %c0_6] : memref<32x96xbf16, #tpu.memory_space<vmem>>, vector<32x96xbf16>
    %6 = arith.truncf %1 : vector<4x32xf32> to vector<4x32xbf16>
    %cst = arith.constant dense<0.000000e+00> : vector<4x96xf32>
    %7 = tpu.matmul %6, %5, %cst {dimension_numbers = #tpu.dot_dimension_numbers<[1], [0], [0], [1], [0, 0, 1, 1], [], []>} : vector<4x32xbf16>, vector<32x96xbf16>, vector<4x96xf32> -> vector<4x96xf32>
    %c0_7 = arith.constant 0 : index
    %c0_8 = arith.constant 0 : index
    %8 = vector.load %arg4[%c0_7, %c0_8] : memref<1x96xf32, #tpu.memory_space<vmem>>, vector<1x96xf32>
    %9 = vector.broadcast %8 : vector<1x96xf32> to vector<4x96xf32>
    %10 = arith.addf %7, %9 : vector<4x96xf32>
    %11 = vector.extract_strided_slice %10 {offsets = [0, 0], sizes = [4, 32], strides = [1, 1]} : vector<4x96xf32> to vector<4x32xf32>
    %12 = arith.addf %11, %4 : vector<4x32xf32>
    %13 = vector.extract_strided_slice %10 {offsets = [0, 32], sizes = [4, 32], strides = [1, 1]} : vector<4x96xf32> to vector<4x32xf32>
    %14 = arith.addf %13, %4 : vector<4x32xf32>
    %15 = vector.extract_strided_slice %10 {offsets = [0, 64], sizes = [4, 32], strides = [1, 1]} : vector<4x96xf32> to vector<4x32xf32>
    %16 = vector.extract_strided_slice %12 {offsets = [0, 0], sizes = [4, 8], strides = [1, 1]} : vector<4x32xf32> to vector<4x8xf32>
    %cst_9 = arith.constant 0.353553385 : f32
    %17 = vector.broadcast %cst_9 : f32 to vector<4x8xf32>
    %18 = arith.mulf %16, %17 : vector<4x8xf32>
    %19 = arith.truncf %18 : vector<4x8xf32> to vector<4x8xbf16>
    %20 = vector.extract_strided_slice %14 {offsets = [0, 0], sizes = [4, 8], strides = [1, 1]} : vector<4x32xf32> to vector<4x8xf32>
    %21 = arith.truncf %20 : vector<4x8xf32> to vector<4x8xbf16>
    %22 = vector.extract_strided_slice %15 {offsets = [0, 0], sizes = [4, 8], strides = [1, 1]} : vector<4x32xf32> to vector<4x8xf32>
    %23 = arith.truncf %22 : vector<4x8xf32> to vector<4x8xbf16>
    %cst_10 = arith.constant dense<0.000000e+00> : vector<4x4xf32>
    %24 = tpu.matmul %19, %21, %cst_10 {dimension_numbers = #tpu.dot_dimension_numbers<[1], [1], [0], [0], [0, 0, 1, 0], [], []>} : vector<4x8xbf16>, vector<4x8xbf16>, vector<4x4xf32> -> vector<4x4xf32>
    %cst_11 = arith.constant dense<0xFF800000> : vector<4xf32>
    %25 = vector.multi_reduction <maximumf>, %24, %cst_11 [1] : vector<4x4xf32> to vector<4xf32>
    %26 = vector.shape_cast %25 : vector<4xf32> to vector<4x1xf32>
    %27 = vector.broadcast %26 : vector<4x1xf32> to vector<4x4xf32>
    %28 = arith.subf %24, %27 : vector<4x4xf32>
    %29 = math.exp %28 : vector<4x4xf32>
    %cst_12 = arith.constant dense<0.000000e+00> : vector<4xf32>
    %30 = vector.multi_reduction <add>, %29, %cst_12 [1] : vector<4x4xf32> to vector<4xf32>
    %31 = vector.shape_cast %30 : vector<4xf32> to vector<4x1xf32>
    %32 = vector.broadcast %31 : vector<4x1xf32> to vector<4x4xf32>
    %33 = arith.divf %29, %32 : vector<4x4xf32>
    %34 = arith.truncf %33 : vector<4x4xf32> to vector<4x4xbf16>
    %cst_13 = arith.constant dense<0.000000e+00> : vector<4x8xf32>
    %35 = tpu.matmul %34, %23, %cst_13 {dimension_numbers = #tpu.dot_dimension_numbers<[1], [0], [0], [1], [0, 0, 1, 1], [], []>} : vector<4x4xbf16>, vector<4x8xbf16>, vector<4x8xf32> -> vector<4x8xf32>
    %36 = vector.extract_strided_slice %12 {offsets = [0, 8], sizes = [4, 8], strides = [1, 1]} : vector<4x32xf32> to vector<4x8xf32>
    %cst_14 = arith.constant 0.353553385 : f32
    %37 = vector.broadcast %cst_14 : f32 to vector<4x8xf32>
    %38 = arith.mulf %36, %37 : vector<4x8xf32>
    %39 = arith.truncf %38 : vector<4x8xf32> to vector<4x8xbf16>
    %40 = vector.extract_strided_slice %14 {offsets = [0, 8], sizes = [4, 8], strides = [1, 1]} : vector<4x32xf32> to vector<4x8xf32>
    %41 = arith.truncf %40 : vector<4x8xf32> to vector<4x8xbf16>
    %42 = vector.extract_strided_slice %15 {offsets = [0, 8], sizes = [4, 8], strides = [1, 1]} : vector<4x32xf32> to vector<4x8xf32>
    %43 = arith.truncf %42 : vector<4x8xf32> to vector<4x8xbf16>
    %cst_15 = arith.constant dense<0.000000e+00> : vector<4x4xf32>
    %44 = tpu.matmul %39, %41, %cst_15 {dimension_numbers = #tpu.dot_dimension_numbers<[1], [1], [0], [0], [0, 0, 1, 0], [], []>} : vector<4x8xbf16>, vector<4x8xbf16>, vector<4x4xf32> -> vector<4x4xf32>
    %cst_16 = arith.constant dense<0xFF800000> : vector<4xf32>
    %45 = vector.multi_reduction <maximumf>, %44, %cst_16 [1] : vector<4x4xf32> to vector<4xf32>
    %46 = vector.shape_cast %45 : vector<4xf32> to vector<4x1xf32>
    %47 = vector.broadcast %46 : vector<4x1xf32> to vector<4x4xf32>
    %48 = arith.subf %44, %47 : vector<4x4xf32>
    %49 = math.exp %48 : vector<4x4xf32>
    %cst_17 = arith.constant dense<0.000000e+00> : vector<4xf32>
    %50 = vector.multi_reduction <add>, %49, %cst_17 [1] : vector<4x4xf32> to vector<4xf32>
    %51 = vector.shape_cast %50 : vector<4xf32> to vector<4x1xf32>
    %52 = vector.broadcast %51 : vector<4x1xf32> to vector<4x4xf32>
    %53 = arith.divf %49, %52 : vector<4x4xf32>
    %54 = arith.truncf %53 : vector<4x4xf32> to vector<4x4xbf16>
    %cst_18 = arith.constant dense<0.000000e+00> : vector<4x8xf32>
    %55 = tpu.matmul %54, %43, %cst_18 {dimension_numbers = #tpu.dot_dimension_numbers<[1], [0], [0], [1], [0, 0, 1, 1], [], []>} : vector<4x4xbf16>, vector<4x8xbf16>, vector<4x8xf32> -> vector<4x8xf32>
    %56 = vector.extract_strided_slice %12 {offsets = [0, 16], sizes = [4, 8], strides = [1, 1]} : vector<4x32xf32> to vector<4x8xf32>
    %cst_19 = arith.constant 0.353553385 : f32
    %57 = vector.broadcast %cst_19 : f32 to vector<4x8xf32>
    %58 = arith.mulf %56, %57 : vector<4x8xf32>
    %59 = arith.truncf %58 : vector<4x8xf32> to vector<4x8xbf16>
    %60 = vector.extract_strided_slice %14 {offsets = [0, 16], sizes = [4, 8], strides = [1, 1]} : vector<4x32xf32> to vector<4x8xf32>
    %61 = arith.truncf %60 : vector<4x8xf32> to vector<4x8xbf16>
    %62 = vector.extract_strided_slice %15 {offsets = [0, 16], sizes = [4, 8], strides = [1, 1]} : vector<4x32xf32> to vector<4x8xf32>
    %63 = arith.truncf %62 : vector<4x8xf32> to vector<4x8xbf16>
    %cst_20 = arith.constant dense<0.000000e+00> : vector<4x4xf32>
    %64 = tpu.matmul %59, %61, %cst_20 {dimension_numbers = #tpu.dot_dimension_numbers<[1], [1], [0], [0], [0, 0, 1, 0], [], []>} : vector<4x8xbf16>, vector<4x8xbf16>, vector<4x4xf32> -> vector<4x4xf32>
    %cst_21 = arith.constant dense<0xFF800000> : vector<4xf32>
    %65 = vector.multi_reduction <maximumf>, %64, %cst_21 [1] : vector<4x4xf32> to vector<4xf32>
    %66 = vector.shape_cast %65 : vector<4xf32> to vector<4x1xf32>
    %67 = vector.broadcast %66 : vector<4x1xf32> to vector<4x4xf32>
    %68 = arith.subf %64, %67 : vector<4x4xf32>
    %69 = math.exp %68 : vector<4x4xf32>
    %cst_22 = arith.constant dense<0.000000e+00> : vector<4xf32>
    %70 = vector.multi_reduction <add>, %69, %cst_22 [1] : vector<4x4xf32> to vector<4xf32>
    %71 = vector.shape_cast %70 : vector<4xf32> to vector<4x1xf32>
    %72 = vector.broadcast %71 : vector<4x1xf32> to vector<4x4xf32>
    %73 = arith.divf %69, %72 : vector<4x4xf32>
    %74 = arith.truncf %73 : vector<4x4xf32> to vector<4x4xbf16>
    %cst_23 = arith.constant dense<0.000000e+00> : vector<4x8xf32>
    %75 = tpu.matmul %74, %63, %cst_23 {dimension_numbers = #tpu.dot_dimension_numbers<[1], [0], [0], [1], [0, 0, 1, 1], [], []>} : vector<4x4xbf16>, vector<4x8xbf16>, vector<4x8xf32> -> vector<4x8xf32>
    %76 = vector.extract_strided_slice %12 {offsets = [0, 24], sizes = [4, 8], strides = [1, 1]} : vector<4x32xf32> to vector<4x8xf32>
    %cst_24 = arith.constant 0.353553385 : f32
    %77 = vector.broadcast %cst_24 : f32 to vector<4x8xf32>
    %78 = arith.mulf %76, %77 : vector<4x8xf32>
    %79 = arith.truncf %78 : vector<4x8xf32> to vector<4x8xbf16>
    %80 = vector.extract_strided_slice %14 {offsets = [0, 24], sizes = [4, 8], strides = [1, 1]} : vector<4x32xf32> to vector<4x8xf32>
    %81 = arith.truncf %80 : vector<4x8xf32> to vector<4x8xbf16>
    %82 = vector.extract_strided_slice %15 {offsets = [0, 24], sizes = [4, 8], strides = [1, 1]} : vector<4x32xf32> to vector<4x8xf32>
    %83 = arith.truncf %82 : vector<4x8xf32> to vector<4x8xbf16>
    %cst_25 = arith.constant dense<0.000000e+00> : vector<4x4xf32>
    %84 = tpu.matmul %79, %81, %cst_25 {dimension_numbers = #tpu.dot_dimension_numbers<[1], [1], [0], [0], [0, 0, 1, 0], [], []>} : vector<4x8xbf16>, vector<4x8xbf16>, vector<4x4xf32> -> vector<4x4xf32>
    %cst_26 = arith.constant dense<0xFF800000> : vector<4xf32>
    %85 = vector.multi_reduction <maximumf>, %84, %cst_26 [1] : vector<4x4xf32> to vector<4xf32>
    %86 = vector.shape_cast %85 : vector<4xf32> to vector<4x1xf32>
    %87 = vector.broadcast %86 : vector<4x1xf32> to vector<4x4xf32>
    %88 = arith.subf %84, %87 : vector<4x4xf32>
    %89 = math.exp %88 : vector<4x4xf32>
    %cst_27 = arith.constant dense<0.000000e+00> : vector<4xf32>
    %90 = vector.multi_reduction <add>, %89, %cst_27 [1] : vector<4x4xf32> to vector<4xf32>
    %91 = vector.shape_cast %90 : vector<4xf32> to vector<4x1xf32>
    %92 = vector.broadcast %91 : vector<4x1xf32> to vector<4x4xf32>
    %93 = arith.divf %89, %92 : vector<4x4xf32>
    %94 = arith.truncf %93 : vector<4x4xf32> to vector<4x4xbf16>
    %cst_28 = arith.constant dense<0.000000e+00> : vector<4x8xf32>
    %95 = tpu.matmul %94, %83, %cst_28 {dimension_numbers = #tpu.dot_dimension_numbers<[1], [0], [0], [1], [0, 0, 1, 1], [], []>} : vector<4x4xbf16>, vector<4x8xbf16>, vector<4x8xf32> -> vector<4x8xf32>
    %96 = tpu.concatenate %35, %55, %75, %95 in 1 : vector<4x8xf32>, vector<4x8xf32>, vector<4x8xf32>, vector<4x8xf32> -> vector<4x32xf32>
    %c0_29 = arith.constant 0 : index
    %c0_30 = arith.constant 0 : index
    %97 = vector.load %arg5[%c0_29, %c0_30] : memref<32x32xbf16, #tpu.memory_space<vmem>>, vector<32x32xbf16>
    %98 = arith.truncf %96 : vector<4x32xf32> to vector<4x32xbf16>
    %cst_31 = arith.constant dense<0.000000e+00> : vector<4x32xf32>
    %99 = tpu.matmul %98, %97, %cst_31 {dimension_numbers = #tpu.dot_dimension_numbers<[1], [0], [0], [1], [0, 0, 1, 1], [], []>} : vector<4x32xbf16>, vector<32x32xbf16>, vector<4x32xf32> -> vector<4x32xf32>
    %c0_32 = arith.constant 0 : index
    %c0_33 = arith.constant 0 : index
    %100 = vector.load %arg6[%c0_32, %c0_33] : memref<1x32xf32, #tpu.memory_space<vmem>>, vector<1x32xf32>
    %101 = vector.broadcast %100 : vector<1x32xf32> to vector<4x32xf32>
    %102 = arith.addf %99, %101 : vector<4x32xf32>
    %c0_34 = arith.constant 0 : index
    %c0_35 = arith.constant 0 : index
    %103 = vector.load %arg7[%c0_34, %c0_35] : memref<32x96xbf16, #tpu.memory_space<vmem>>, vector<32x96xbf16>
    %c0_36 = arith.constant 0 : index
    %c0_37 = arith.constant 0 : index
    %104 = vector.load %arg8[%c0_36, %c0_37] : memref<32x64xbf16, #tpu.memory_space<vmem>>, vector<32x64xbf16>
    %c0_38 = arith.constant 0 : index
    %c0_39 = arith.constant 0 : index
    %105 = vector.load %arg9[%c0_38, %c0_39] : memref<32x32xbf16, #tpu.memory_space<vmem>>, vector<32x32xbf16>
    %106 = arith.truncf %102 : vector<4x32xf32> to vector<4x32xbf16>
    %cst_40 = arith.constant dense<0.000000e+00> : vector<4x96xf32>
    %107 = tpu.matmul %106, %103, %cst_40 {dimension_numbers = #tpu.dot_dimension_numbers<[1], [0], [0], [1], [0, 0, 1, 1], [], []>} : vector<4x32xbf16>, vector<32x96xbf16>, vector<4x96xf32> -> vector<4x96xf32>
    %108 = arith.truncf %1 : vector<4x32xf32> to vector<4x32xbf16>
    %cst_41 = arith.constant dense<0.000000e+00> : vector<4x64xf32>
    %109 = tpu.matmul %108, %104, %cst_41 {dimension_numbers = #tpu.dot_dimension_numbers<[1], [0], [0], [1], [0, 0, 1, 1], [], []>} : vector<4x32xbf16>, vector<32x64xbf16>, vector<4x64xf32> -> vector<4x64xf32>
    %110 = vector.extract_strided_slice %107 {offsets = [0, 0], sizes = [4, 32], strides = [1, 1]} : vector<4x96xf32> to vector<4x32xf32>
    %111 = vector.extract_strided_slice %109 {offsets = [0, 0], sizes = [4, 32], strides = [1, 1]} : vector<4x64xf32> to vector<4x32xf32>
    %112 = arith.addf %110, %111 : vector<4x32xf32>
    %113 = arith.negf %112 : vector<4x32xf32>
    %114 = math.exp %113 : vector<4x32xf32>
    %cst_42 = arith.constant 1.000000e+00 : f32
    %115 = vector.broadcast %cst_42 : f32 to vector<4x32xf32>
    %116 = arith.addf %115, %114 : vector<4x32xf32>
    %117 = arith.divf %115, %116 : vector<4x32xf32>
    %118 = vector.extract_strided_slice %107 {offsets = [0, 32], sizes = [4, 32], strides = [1, 1]} : vector<4x96xf32> to vector<4x32xf32>
    %119 = vector.extract_strided_slice %109 {offsets = [0, 32], sizes = [4, 32], strides = [1, 1]} : vector<4x64xf32> to vector<4x32xf32>
    %120 = arith.addf %118, %119 : vector<4x32xf32>
    %cst_43 = arith.constant 2.000000e+00 : f32
    %121 = vector.broadcast %cst_43 : f32 to vector<4x32xf32>
    %122 = arith.subf %120, %121 : vector<4x32xf32>
    %123 = arith.negf %122 : vector<4x32xf32>
    %124 = math.exp %123 : vector<4x32xf32>
    %cst_44 = arith.constant 1.000000e+00 : f32
    %125 = vector.broadcast %cst_44 : f32 to vector<4x32xf32>
    %126 = arith.addf %125, %124 : vector<4x32xf32>
    %127 = arith.divf %125, %126 : vector<4x32xf32>
    %128 = vector.extract_strided_slice %107 {offsets = [0, 64], sizes = [4, 32], strides = [1, 1]} : vector<4x96xf32> to vector<4x32xf32>
    %129 = arith.mulf %1, %117 : vector<4x32xf32>
    %130 = arith.truncf %129 : vector<4x32xf32> to vector<4x32xbf16>
    %cst_45 = arith.constant dense<0.000000e+00> : vector<4x32xf32>
    %131 = tpu.matmul %130, %105, %cst_45 {dimension_numbers = #tpu.dot_dimension_numbers<[1], [0], [0], [1], [0, 0, 1, 1], [], []>} : vector<4x32xbf16>, vector<32x32xbf16>, vector<4x32xf32> -> vector<4x32xf32>
    %132 = arith.addf %128, %131 : vector<4x32xf32>
    %133 = math.tanh %132 : vector<4x32xf32>
    %cst_46 = arith.constant 1.000000e+00 : f32
    %134 = vector.broadcast %cst_46 : f32 to vector<4x32xf32>
    %135 = arith.subf %134, %127 : vector<4x32xf32>
    %136 = arith.mulf %135, %1 : vector<4x32xf32>
    %137 = arith.mulf %127, %133 : vector<4x32xf32>
    %138 = arith.addf %136, %137 : vector<4x32xf32>
    %c0_47 = arith.constant 0 : index
    %c0_48 = arith.constant 0 : index
    %139 = vector.load %arg10[%c0_47, %c0_48] : memref<1x32xf32, #tpu.memory_space<vmem>>, vector<1x32xf32>
    %c0_49 = arith.constant 0 : index
    %c0_50 = arith.constant 0 : index
    %140 = vector.load %arg11[%c0_49, %c0_50] : memref<1x32xf32, #tpu.memory_space<vmem>>, vector<1x32xf32>
    %cst_51 = arith.constant dense<0.000000e+00> : vector<4xf32>
    %141 = vector.multi_reduction <add>, %138, %cst_51 [1] : vector<4x32xf32> to vector<4xf32>
    %142 = vector.shape_cast %141 : vector<4xf32> to vector<4x1xf32>
    %cst_52 = arith.constant 3.200000e+01 : f32
    %143 = vector.broadcast %cst_52 : f32 to vector<4x1xf32>
    %144 = arith.divf %142, %143 : vector<4x1xf32>
    %145 = vector.broadcast %144 : vector<4x1xf32> to vector<4x32xf32>
    %146 = arith.subf %138, %145 : vector<4x32xf32>
    %147 = arith.mulf %146, %146 : vector<4x32xf32>
    %cst_53 = arith.constant dense<0.000000e+00> : vector<4xf32>
    %148 = vector.multi_reduction <add>, %147, %cst_53 [1] : vector<4x32xf32> to vector<4xf32>
    %149 = vector.shape_cast %148 : vector<4xf32> to vector<4x1xf32>
    %cst_54 = arith.constant 3.200000e+01 : f32
    %150 = vector.broadcast %cst_54 : f32 to vector<4x1xf32>
    %151 = arith.divf %149, %150 : vector<4x1xf32>
    %cst_55 = arith.constant 9.99999997E-7 : f32
    %152 = vector.broadcast %cst_55 : f32 to vector<4x1xf32>
    %153 = arith.addf %151, %152 : vector<4x1xf32>
    %154 = math.rsqrt %153 : vector<4x1xf32>
    %155 = vector.broadcast %154 : vector<4x1xf32> to vector<4x32xf32>
    %156 = arith.mulf %146, %155 : vector<4x32xf32>
    %157 = vector.broadcast %139 : vector<1x32xf32> to vector<4x32xf32>
    %158 = arith.mulf %156, %157 : vector<4x32xf32>
    %159 = vector.broadcast %140 : vector<1x32xf32> to vector<4x32xf32>
    %160 = arith.addf %158, %159 : vector<4x32xf32>
    %c0_56 = arith.constant 0 : index
    %c0_57 = arith.constant 0 : index
    %161 = vector.load %arg12[%c0_56, %c0_57] : memref<32x32xbf16, #tpu.memory_space<vmem>>, vector<32x32xbf16>
    %162 = arith.truncf %160 : vector<4x32xf32> to vector<4x32xbf16>
    %cst_58 = arith.constant dense<0.000000e+00> : vector<4x32xf32>
    %163 = tpu.matmul %162, %161, %cst_58 {dimension_numbers = #tpu.dot_dimension_numbers<[1], [0], [0], [1], [0, 0, 1, 1], [], []>} : vector<4x32xbf16>, vector<32x32xbf16>, vector<4x32xf32> -> vector<4x32xf32>
    %c0_59 = arith.constant 0 : index
    %c0_60 = arith.constant 0 : index
    %164 = vector.load %arg13[%c0_59, %c0_60] : memref<1x32xf32, #tpu.memory_space<vmem>>, vector<1x32xf32>
    %165 = vector.broadcast %164 : vector<1x32xf32> to vector<4x32xf32>
    %166 = arith.addf %163, %165 : vector<4x32xf32>
    %cst_61 = arith.constant 0.000000e+00 : f32
    %167 = vector.broadcast %cst_61 : f32 to vector<4x32xf32>
    %168 = arith.maximumf %166, %167 : vector<4x32xf32>
    %c0_62 = arith.constant 0 : index
    %c0_63 = arith.constant 0 : index
    %169 = vector.load %arg14[%c0_62, %c0_63] : memref<32x32xbf16, #tpu.memory_space<vmem>>, vector<32x32xbf16>
    %170 = arith.truncf %168 : vector<4x32xf32> to vector<4x32xbf16>
    %cst_64 = arith.constant dense<0.000000e+00> : vector<4x32xf32>
    %171 = tpu.matmul %170, %169, %cst_64 {dimension_numbers = #tpu.dot_dimension_numbers<[1], [0], [0], [1], [0, 0, 1, 1], [], []>} : vector<4x32xbf16>, vector<32x32xbf16>, vector<4x32xf32> -> vector<4x32xf32>
    %c0_65 = arith.constant 0 : index
    %c0_66 = arith.constant 0 : index
    %172 = vector.load %arg15[%c0_65, %c0_66] : memref<1x32xf32, #tpu.memory_space<vmem>>, vector<1x32xf32>
    %173 = vector.broadcast %172 : vector<1x32xf32> to vector<4x32xf32>
    %174 = arith.addf %171, %173 : vector<4x32xf32>
    %c0_67 = arith.constant 0 : index
    %c0_68 = arith.constant 0 : index
    %175 = vector.load %arg16[%c0_67, %c0_68] : memref<32x96xbf16, #tpu.memory_space<vmem>>, vector<32x96xbf16>
    %c0_69 = arith.constant 0 : index
    %c0_70 = arith.constant 0 : index
    %176 = vector.load %arg17[%c0_69, %c0_70] : memref<32x64xbf16, #tpu.memory_space<vmem>>, vector<32x64xbf16>
    %c0_71 = arith.constant 0 : index
    %c0_72 = arith.constant 0 : index
    %177 = vector.load %arg18[%c0_71, %c0_72] : memref<32x32xbf16, #tpu.memory_space<vmem>>, vector<32x32xbf16>
    %178 = arith.truncf %174 : vector<4x32xf32> to vector<4x32xbf16>
    %cst_73 = arith.constant dense<0.000000e+00> : vector<4x96xf32>
    %179 = tpu.matmul %178, %175, %cst_73 {dimension_numbers = #tpu.dot_dimension_numbers<[1], [0], [0], [1], [0, 0, 1, 1], [], []>} : vector<4x32xbf16>, vector<32x96xbf16>, vector<4x96xf32> -> vector<4x96xf32>
    %180 = arith.truncf %138 : vector<4x32xf32> to vector<4x32xbf16>
    %cst_74 = arith.constant dense<0.000000e+00> : vector<4x64xf32>
    %181 = tpu.matmul %180, %176, %cst_74 {dimension_numbers = #tpu.dot_dimension_numbers<[1], [0], [0], [1], [0, 0, 1, 1], [], []>} : vector<4x32xbf16>, vector<32x64xbf16>, vector<4x64xf32> -> vector<4x64xf32>
    %182 = vector.extract_strided_slice %179 {offsets = [0, 0], sizes = [4, 32], strides = [1, 1]} : vector<4x96xf32> to vector<4x32xf32>
    %183 = vector.extract_strided_slice %181 {offsets = [0, 0], sizes = [4, 32], strides = [1, 1]} : vector<4x64xf32> to vector<4x32xf32>
    %184 = arith.addf %182, %183 : vector<4x32xf32>
    %185 = arith.negf %184 : vector<4x32xf32>
    %186 = math.exp %185 : vector<4x32xf32>
    %cst_75 = arith.constant 1.000000e+00 : f32
    %187 = vector.broadcast %cst_75 : f32 to vector<4x32xf32>
    %188 = arith.addf %187, %186 : vector<4x32xf32>
    %189 = arith.divf %187, %188 : vector<4x32xf32>
    %190 = vector.extract_strided_slice %179 {offsets = [0, 32], sizes = [4, 32], strides = [1, 1]} : vector<4x96xf32> to vector<4x32xf32>
    %191 = vector.extract_strided_slice %181 {offsets = [0, 32], sizes = [4, 32], strides = [1, 1]} : vector<4x64xf32> to vector<4x32xf32>
    %192 = arith.addf %190, %191 : vector<4x32xf32>
    %cst_76 = arith.constant 2.000000e+00 : f32
    %193 = vector.broadcast %cst_76 : f32 to vector<4x32xf32>
    %194 = arith.subf %192, %193 : vector<4x32xf32>
    %195 = arith.negf %194 : vector<4x32xf32>
    %196 = math.exp %195 : vector<4x32xf32>
    %cst_77 = arith.constant 1.000000e+00 : f32
    %197 = vector.broadcast %cst_77 : f32 to vector<4x32xf32>
    %198 = arith.addf %197, %196 : vector<4x32xf32>
    %199 = arith.divf %197, %198 : vector<4x32xf32>
    %200 = vector.extract_strided_slice %179 {offsets = [0, 64], sizes = [4, 32], strides = [1, 1]} : vector<4x96xf32> to vector<4x32xf32>
    %201 = arith.mulf %138, %189 : vector<4x32xf32>
    %202 = arith.truncf %201 : vector<4x32xf32> to vector<4x32xbf16>
    %cst_78 = arith.constant dense<0.000000e+00> : vector<4x32xf32>
    %203 = tpu.matmul %202, %177, %cst_78 {dimension_numbers = #tpu.dot_dimension_numbers<[1], [0], [0], [1], [0, 0, 1, 1], [], []>} : vector<4x32xbf16>, vector<32x32xbf16>, vector<4x32xf32> -> vector<4x32xf32>
    %204 = arith.addf %200, %203 : vector<4x32xf32>
    %205 = math.tanh %204 : vector<4x32xf32>
    %cst_79 = arith.constant 1.000000e+00 : f32
    %206 = vector.broadcast %cst_79 : f32 to vector<4x32xf32>
    %207 = arith.subf %206, %199 : vector<4x32xf32>
    %208 = arith.mulf %207, %138 : vector<4x32xf32>
    %209 = arith.mulf %199, %205 : vector<4x32xf32>
    %210 = arith.addf %208, %209 : vector<4x32xf32>
    %c0_80 = arith.constant 0 : index
    %c0_81 = arith.constant 0 : index
    %211 = vector.load %arg19[%c0_80, %c0_81] : memref<1x32xf32, #tpu.memory_space<vmem>>, vector<1x32xf32>
    %c0_82 = arith.constant 0 : index
    %c0_83 = arith.constant 0 : index
    %212 = vector.load %arg20[%c0_82, %c0_83] : memref<1x32xf32, #tpu.memory_space<vmem>>, vector<1x32xf32>
    %cst_84 = arith.constant dense<0.000000e+00> : vector<4xf32>
    %213 = vector.multi_reduction <add>, %210, %cst_84 [1] : vector<4x32xf32> to vector<4xf32>
    %214 = vector.shape_cast %213 : vector<4xf32> to vector<4x1xf32>
    %cst_85 = arith.constant 3.200000e+01 : f32
    %215 = vector.broadcast %cst_85 : f32 to vector<4x1xf32>
    %216 = arith.divf %214, %215 : vector<4x1xf32>
    %217 = vector.broadcast %216 : vector<4x1xf32> to vector<4x32xf32>
    %218 = arith.subf %210, %217 : vector<4x32xf32>
    %219 = arith.mulf %218, %218 : vector<4x32xf32>
    %cst_86 = arith.constant dense<0.000000e+00> : vector<4xf32>
    %220 = vector.multi_reduction <add>, %219, %cst_86 [1] : vector<4x32xf32> to vector<4xf32>
    %221 = vector.shape_cast %220 : vector<4xf32> to vector<4x1xf32>
    %cst_87 = arith.constant 3.200000e+01 : f32
    %222 = vector.broadcast %cst_87 : f32 to vector<4x1xf32>
    %223 = arith.divf %221, %222 : vector<4x1xf32>
    %cst_88 = arith.constant 9.99999997E-7 : f32
    %224 = vector.broadcast %cst_88 : f32 to vector<4x1xf32>
    %225 = arith.addf %223, %224 : vector<4x1xf32>
    %226 = math.rsqrt %225 : vector<4x1xf32>
    %227 = vector.broadcast %226 : vector<4x1xf32> to vector<4x32xf32>
    %228 = arith.mulf %218, %227 : vector<4x32xf32>
    %229 = vector.broadcast %211 : vector<1x32xf32> to vector<4x32xf32>
    %230 = arith.mulf %228, %229 : vector<4x32xf32>
    %231 = vector.broadcast %212 : vector<1x32xf32> to vector<4x32xf32>
    %232 = arith.addf %230, %231 : vector<4x32xf32>
    %c0_89 = arith.constant 0 : index
    %c0_90 = arith.constant 0 : index
    %c0_91 = arith.constant 0 : index
    %233 = vector.load %arg21[%c0_89, %c0_90, %c0_91] : memref<1x4x32xf32, #tpu.memory_space<vmem>>, vector<1x4x32xf32>
    %234 = vector.shape_cast %233 : vector<1x4x32xf32> to vector<4x32xf32>
    %235 = vector.shape_cast %232 : vector<4x32xf32> to vector<1x4x32xf32>
    tpu.vector_store %arg21[%c0_89, %c0_90, %c0_91], %235 {strides = array<i32>} : memref<1x4x32xf32, #tpu.memory_space<vmem>>, vector<1x4x32xf32>,
    return
  }
  func.func @transform_0(%arg0: i32) -> (i32, i32, i32) {
    %c0_i32 = arith.constant 0 : i32
    %c0_i32_0 = arith.constant 0 : i32
    %c0_i32_1 = arith.constant 0 : i32
    return %arg0, %c0_i32, %c0_i32_0 : i32, i32, i32
  }
  func.func @transform_1(%arg0: i32) -> (i32, i32, i32) {
    %c0_i32 = arith.constant 0 : i32
    %c0_i32_0 = arith.constant 0 : i32
    %c0_i32_1 = arith.constant 0 : i32
    return %arg0, %c0_i32, %c0_i32_0 : i32, i32, i32
  }
  func.func @transform_2(%arg0: i32) -> (i32, i32) {
    %c0_i32 = arith.constant 0 : i32
    %c0_i32_0 = arith.constant 0 : i32
    %c0_i32_1 = arith.constant 0 : i32
    return %c0_i32, %c0_i32_0 : i32, i32
  }
  func.func @transform_3(%arg0: i32) -> (i32, i32) {
    %c0_i32 = arith.constant 0 : i32
    %c0_i32_0 = arith.constant 0 : i32
    %c0_i32_1 = arith.constant 0 : i32
    return %c0_i32, %c0_i32_0 : i32, i32
  }
  func.func @transform_4(%arg0: i32) -> (i32, i32) {
    %c0_i32 = arith.constant 0 : i32
    %c0_i32_0 = arith.constant 0 : i32
    %c0_i32_1 = arith.constant 0 : i32
    return %c0_i32, %c0_i32_0 : i32, i32
  }
  func.func @transform_5(%arg0: i32) -> (i32, i32) {
    %c0_i32 = arith.constant 0 : i32
    %c0_i32_0 = arith.constant 0 : i32
    %c0_i32_1 = arith.constant 0 : i32
    return %c0_i32, %c0_i32_0 : i32, i32
  }
  func.func @transform_6(%arg0: i32) -> (i32, i32) {
    %c0_i32 = arith.constant 0 : i32
    %c0_i32_0 = arith.constant 0 : i32
    %c0_i32_1 = arith.constant 0 : i32
    return %c0_i32, %c0_i32_0 : i32, i32
  }
  func.func @transform_7(%arg0: i32) -> (i32, i32) {
    %c0_i32 = arith.constant 0 : i32
    %c0_i32_0 = arith.constant 0 : i32
    %c0_i32_1 = arith.constant 0 : i32
    return %c0_i32, %c0_i32_0 : i32, i32
  }
  func.func @transform_8(%arg0: i32) -> (i32, i32) {
    %c0_i32 = arith.constant 0 : i32
    %c0_i32_0 = arith.constant 0 : i32
    %c0_i32_1 = arith.constant 0 : i32
    return %c0_i32, %c0_i32_0 : i32, i32
  }
  func.func @transform_9(%arg0: i32) -> (i32, i32) {
    %c0_i32 = arith.constant 0 : i32
    %c0_i32_0 = arith.constant 0 : i32
    %c0_i32_1 = arith.constant 0 : i32
    return %c0_i32, %c0_i32_0 : i32, i32
  }
  func.func @transform_10(%arg0: i32) -> (i32, i32) {
    %c0_i32 = arith.constant 0 : i32
    %c0_i32_0 = arith.constant 0 : i32
    %c0_i32_1 = arith.constant 0 : i32
    return %c0_i32, %c0_i32_0 : i32, i32
  }
  func.func @transform_11(%arg0: i32) -> (i32, i32) {
    %c0_i32 = arith.constant 0 : i32
    %c0_i32_0 = arith.constant 0 : i32
    %c0_i32_1 = arith.constant 0 : i32
    return %c0_i32, %c0_i32_0 : i32, i32
  }
  func.func @transform_12(%arg0: i32) -> (i32, i32) {
    %c0_i32 = arith.constant 0 : i32
    %c0_i32_0 = arith.constant 0 : i32
    %c0_i32_1 = arith.constant 0 : i32
    return %c0_i32, %c0_i32_0 : i32, i32
  }
  func.func @transform_13(%arg0: i32) -> (i32, i32) {
    %c0_i32 = arith.constant 0 : i32
    %c0_i32_0 = arith.constant 0 : i32
    %c0_i32_1 = arith.constant 0 : i32
    return %c0_i32, %c0_i32_0 : i32, i32
  }
  func.func @transform_14(%arg0: i32) -> (i32, i32) {
    %c0_i32 = arith.constant 0 : i32
    %c0_i32_0 = arith.constant 0 : i32
    %c0_i32_1 = arith.constant 0 : i32
    return %c0_i32, %c0_i32_0 : i32, i32
  }
  func.func @transform_15(%arg0: i32) -> (i32, i32) {
    %c0_i32 = arith.constant 0 : i32
    %c0_i32_0 = arith.constant 0 : i32
    %c0_i32_1 = arith.constant 0 : i32
    return %c0_i32, %c0_i32_0 : i32, i32
  }
  func.func @transform_16(%arg0: i32) -> (i32, i32) {
    %c0_i32 = arith.constant 0 : i32
    %c0_i32_0 = arith.constant 0 : i32
    %c0_i32_1 = arith.constant 0 : i32
    return %c0_i32, %c0_i32_0 : i32, i32
  }
  func.func @transform_17(%arg0: i32) -> (i32, i32) {
    %c0_i32 = arith.constant 0 : i32
    %c0_i32_0 = arith.constant 0 : i32
    %c0_i32_1 = arith.constant 0 : i32
    return %c0_i32, %c0_i32_0 : i32, i32
  }
  func.func @transform_18(%arg0: i32) -> (i32, i32) {
    %c0_i32 = arith.constant 0 : i32
    %c0_i32_0 = arith.constant 0 : i32
    %c0_i32_1 = arith.constant 0 : i32
    return %c0_i32, %c0_i32_0 : i32, i32
  }
  func.func @transform_19(%arg0: i32) -> (i32, i32) {
    %c0_i32 = arith.constant 0 : i32
    %c0_i32_0 = arith.constant 0 : i32
    %c0_i32_1 = arith.constant 0 : i32
    return %c0_i32, %c0_i32_0 : i32, i32
  }
  func.func @transform_20(%arg0: i32) -> (i32, i32, i32) {
    %c0_i32 = arith.constant 0 : i32
    %c0_i32_0 = arith.constant 0 : i32
    %c0_i32_1 = arith.constant 0 : i32
    return %arg0, %c0_i32, %c0_i32_0 : i32, i32, i32
  }
}

module attributes {stable_mosaic.version = 11 : i64} {
  func.func @_cross_stage_kernel(%arg0: i32, %arg1: memref<16x32xf32, #tpu.memory_space<vmem>>, %arg2: memref<16x32xbf16, #tpu.memory_space<vmem>>, %arg3: memref<16x32xbf16, #tpu.memory_space<vmem>>, %arg4: memref<16x32xbf16, #tpu.memory_space<vmem>>, %arg5: memref<32x32xbf16, #tpu.memory_space<vmem>>, %arg6: memref<1x32xf32, #tpu.memory_space<vmem>>, %arg7: memref<32x32xbf16, #tpu.memory_space<vmem>>, %arg8: memref<1x32xf32, #tpu.memory_space<vmem>>, %arg9: memref<32x96xbf16, #tpu.memory_space<vmem>>, %arg10: memref<32x64xbf16, #tpu.memory_space<vmem>>, %arg11: memref<32x32xbf16, #tpu.memory_space<vmem>>, %arg12: memref<1x32xf32, #tpu.memory_space<vmem>>, %arg13: memref<1x32xf32, #tpu.memory_space<vmem>>, %arg14: memref<32x32xbf16, #tpu.memory_space<vmem>>, %arg15: memref<1x32xf32, #tpu.memory_space<vmem>>, %arg16: memref<32x32xbf16, #tpu.memory_space<vmem>>, %arg17: memref<1x32xf32, #tpu.memory_space<vmem>>, %arg18: memref<32x96xbf16, #tpu.memory_space<vmem>>, %arg19: memref<32x64xbf16, #tpu.memory_space<vmem>>, %arg20: memref<32x32xbf16, #tpu.memory_space<vmem>>, %arg21: memref<1x32xf32, #tpu.memory_space<vmem>>, %arg22: memref<1x32xf32, #tpu.memory_space<vmem>>, %arg23: memref<16x32xf32, #tpu.memory_space<vmem>>) attributes {dimension_semantics = [#tpu.dimension_semantics<parallel>], iteration_bounds = array<i64: 1>, scalar_prefetch = 0 : i64, scratch_operands = 0 : i64, tpu.core_type = #tpu.core_type<tc>, window_params = [{transform_indices = @transform_0, window_bounds = array<i64: 16, 32>}, {transform_indices = @transform_1, window_bounds = array<i64: 16, 32>}, {pipeline_mode = #tpu.pipeline_mode<synchronous>, transform_indices = @transform_2, window_bounds = array<i64: 16, 32>}, {pipeline_mode = #tpu.pipeline_mode<synchronous>, transform_indices = @transform_3, window_bounds = array<i64: 16, 32>}, {pipeline_mode = #tpu.pipeline_mode<synchronous>, transform_indices = @transform_4, window_bounds = array<i64: 32, 32>}, {pipeline_mode = #tpu.pipeline_mode<synchronous>, transform_indices = @transform_5, window_bounds = array<i64: 1, 32>}, {pipeline_mode = #tpu.pipeline_mode<synchronous>, transform_indices = @transform_6, window_bounds = array<i64: 32, 32>}, {pipeline_mode = #tpu.pipeline_mode<synchronous>, transform_indices = @transform_7, window_bounds = array<i64: 1, 32>}, {pipeline_mode = #tpu.pipeline_mode<synchronous>, transform_indices = @transform_8, window_bounds = array<i64: 32, 96>}, {pipeline_mode = #tpu.pipeline_mode<synchronous>, transform_indices = @transform_9, window_bounds = array<i64: 32, 64>}, {pipeline_mode = #tpu.pipeline_mode<synchronous>, transform_indices = @transform_10, window_bounds = array<i64: 32, 32>}, {pipeline_mode = #tpu.pipeline_mode<synchronous>, transform_indices = @transform_11, window_bounds = array<i64: 1, 32>}, {pipeline_mode = #tpu.pipeline_mode<synchronous>, transform_indices = @transform_12, window_bounds = array<i64: 1, 32>}, {pipeline_mode = #tpu.pipeline_mode<synchronous>, transform_indices = @transform_13, window_bounds = array<i64: 32, 32>}, {pipeline_mode = #tpu.pipeline_mode<synchronous>, transform_indices = @transform_14, window_bounds = array<i64: 1, 32>}, {pipeline_mode = #tpu.pipeline_mode<synchronous>, transform_indices = @transform_15, window_bounds = array<i64: 32, 32>}, {pipeline_mode = #tpu.pipeline_mode<synchronous>, transform_indices = @transform_16, window_bounds = array<i64: 1, 32>}, {pipeline_mode = #tpu.pipeline_mode<synchronous>, transform_indices = @transform_17, window_bounds = array<i64: 32, 96>}, {pipeline_mode = #tpu.pipeline_mode<synchronous>, transform_indices = @transform_18, window_bounds = array<i64: 32, 64>}, {pipeline_mode = #tpu.pipeline_mode<synchronous>, transform_indices = @transform_19, window_bounds = array<i64: 32, 32>}, {pipeline_mode = #tpu.pipeline_mode<synchronous>, transform_indices = @transform_20, window_bounds = array<i64: 1, 32>}, {pipeline_mode = #tpu.pipeline_mode<synchronous>, transform_indices = @transform_21, window_bounds = array<i64: 1, 32>}, {transform_indices = @transform_22, window_bounds = array<i64: 16, 32>}]} {
    %c0 = arith.constant 0 : index
    %c0_0 = arith.constant 0 : index
    %0 = vector.load %arg1[%c0, %c0_0] : memref<16x32xf32, #tpu.memory_space<vmem>>, vector<16x32xf32>
    %c0_1 = arith.constant 0 : index
    %c0_2 = arith.constant 0 : index
    %1 = vector.load %arg2[%c0_1, %c0_2] : memref<16x32xbf16, #tpu.memory_space<vmem>>, vector<16x32xbf16>
    %2 = arith.extf %1 : vector<16x32xbf16> to vector<16x32xf32>
    %c0_3 = arith.constant 0 : index
    %c0_4 = arith.constant 0 : index
    %3 = vector.load %arg5[%c0_3, %c0_4] : memref<32x32xbf16, #tpu.memory_space<vmem>>, vector<32x32xbf16>
    %4 = arith.truncf %0 : vector<16x32xf32> to vector<16x32xbf16>
    %cst = arith.constant dense<0.000000e+00> : vector<16x32xf32>
    %5 = tpu.matmul %4, %3, %cst {dimension_numbers = #tpu.dot_dimension_numbers<[1], [0], [0], [1], [0, 0, 1, 1], [], []>} : vector<16x32xbf16>, vector<32x32xbf16>, vector<16x32xf32> -> vector<16x32xf32>
    %c0_5 = arith.constant 0 : index
    %c0_6 = arith.constant 0 : index
    %6 = vector.load %arg6[%c0_5, %c0_6] : memref<1x32xf32, #tpu.memory_space<vmem>>, vector<1x32xf32>
    %7 = vector.broadcast %6 : vector<1x32xf32> to vector<16x32xf32>
    %8 = arith.addf %5, %7 : vector<16x32xf32>
    %9 = arith.addf %8, %2 : vector<16x32xf32>
    %c0_7 = arith.constant 0 : index
    %c0_8 = arith.constant 0 : index
    %10 = vector.load %arg3[%c0_7, %c0_8] : memref<16x32xbf16, #tpu.memory_space<vmem>>, vector<16x32xbf16>
    %c0_9 = arith.constant 0 : index
    %c0_10 = arith.constant 0 : index
    %11 = vector.load %arg4[%c0_9, %c0_10] : memref<16x32xbf16, #tpu.memory_space<vmem>>, vector<16x32xbf16>
    %12 = vector.extract_strided_slice %9 {offsets = [0, 0], sizes = [16, 8], strides = [1, 1]} : vector<16x32xf32> to vector<16x8xf32>
    %cst_11 = arith.constant 0.353553385 : f32
    %13 = vector.broadcast %cst_11 : f32 to vector<16x8xf32>
    %14 = arith.mulf %12, %13 : vector<16x8xf32>
    %15 = arith.truncf %14 : vector<16x8xf32> to vector<16x8xbf16>
    %16 = vector.extract_strided_slice %10 {offsets = [0, 0], sizes = [16, 8], strides = [1, 1]} : vector<16x32xbf16> to vector<16x8xbf16>
    %17 = vector.extract_strided_slice %11 {offsets = [0, 0], sizes = [16, 8], strides = [1, 1]} : vector<16x32xbf16> to vector<16x8xbf16>
    %cst_12 = arith.constant dense<0.000000e+00> : vector<16x16xf32>
    %18 = tpu.matmul %15, %16, %cst_12 {dimension_numbers = #tpu.dot_dimension_numbers<[1], [1], [0], [0], [0, 0, 1, 0], [], []>} : vector<16x8xbf16>, vector<16x8xbf16>, vector<16x16xf32> -> vector<16x16xf32>
    %cst_13 = arith.constant dense<0xFF800000> : vector<16xf32>
    %19 = vector.multi_reduction <maximumf>, %18, %cst_13 [1] : vector<16x16xf32> to vector<16xf32>
    %20 = vector.shape_cast %19 : vector<16xf32> to vector<16x1xf32>
    %21 = vector.broadcast %20 : vector<16x1xf32> to vector<16x16xf32>
    %22 = arith.subf %18, %21 : vector<16x16xf32>
    %23 = math.exp %22 : vector<16x16xf32>
    %cst_14 = arith.constant dense<0.000000e+00> : vector<16xf32>
    %24 = vector.multi_reduction <add>, %23, %cst_14 [1] : vector<16x16xf32> to vector<16xf32>
    %25 = vector.shape_cast %24 : vector<16xf32> to vector<16x1xf32>
    %26 = vector.broadcast %25 : vector<16x1xf32> to vector<16x16xf32>
    %27 = arith.divf %23, %26 : vector<16x16xf32>
    %28 = arith.truncf %27 : vector<16x16xf32> to vector<16x16xbf16>
    %cst_15 = arith.constant dense<0.000000e+00> : vector<16x8xf32>
    %29 = tpu.matmul %28, %17, %cst_15 {dimension_numbers = #tpu.dot_dimension_numbers<[1], [0], [0], [1], [0, 0, 1, 1], [], []>} : vector<16x16xbf16>, vector<16x8xbf16>, vector<16x8xf32> -> vector<16x8xf32>
    %30 = vector.extract_strided_slice %9 {offsets = [0, 8], sizes = [16, 8], strides = [1, 1]} : vector<16x32xf32> to vector<16x8xf32>
    %cst_16 = arith.constant 0.353553385 : f32
    %31 = vector.broadcast %cst_16 : f32 to vector<16x8xf32>
    %32 = arith.mulf %30, %31 : vector<16x8xf32>
    %33 = arith.truncf %32 : vector<16x8xf32> to vector<16x8xbf16>
    %34 = vector.extract_strided_slice %10 {offsets = [0, 8], sizes = [16, 8], strides = [1, 1]} : vector<16x32xbf16> to vector<16x8xbf16>
    %35 = vector.extract_strided_slice %11 {offsets = [0, 8], sizes = [16, 8], strides = [1, 1]} : vector<16x32xbf16> to vector<16x8xbf16>
    %cst_17 = arith.constant dense<0.000000e+00> : vector<16x16xf32>
    %36 = tpu.matmul %33, %34, %cst_17 {dimension_numbers = #tpu.dot_dimension_numbers<[1], [1], [0], [0], [0, 0, 1, 0], [], []>} : vector<16x8xbf16>, vector<16x8xbf16>, vector<16x16xf32> -> vector<16x16xf32>
    %cst_18 = arith.constant dense<0xFF800000> : vector<16xf32>
    %37 = vector.multi_reduction <maximumf>, %36, %cst_18 [1] : vector<16x16xf32> to vector<16xf32>
    %38 = vector.shape_cast %37 : vector<16xf32> to vector<16x1xf32>
    %39 = vector.broadcast %38 : vector<16x1xf32> to vector<16x16xf32>
    %40 = arith.subf %36, %39 : vector<16x16xf32>
    %41 = math.exp %40 : vector<16x16xf32>
    %cst_19 = arith.constant dense<0.000000e+00> : vector<16xf32>
    %42 = vector.multi_reduction <add>, %41, %cst_19 [1] : vector<16x16xf32> to vector<16xf32>
    %43 = vector.shape_cast %42 : vector<16xf32> to vector<16x1xf32>
    %44 = vector.broadcast %43 : vector<16x1xf32> to vector<16x16xf32>
    %45 = arith.divf %41, %44 : vector<16x16xf32>
    %46 = arith.truncf %45 : vector<16x16xf32> to vector<16x16xbf16>
    %cst_20 = arith.constant dense<0.000000e+00> : vector<16x8xf32>
    %47 = tpu.matmul %46, %35, %cst_20 {dimension_numbers = #tpu.dot_dimension_numbers<[1], [0], [0], [1], [0, 0, 1, 1], [], []>} : vector<16x16xbf16>, vector<16x8xbf16>, vector<16x8xf32> -> vector<16x8xf32>
    %48 = vector.extract_strided_slice %9 {offsets = [0, 16], sizes = [16, 8], strides = [1, 1]} : vector<16x32xf32> to vector<16x8xf32>
    %cst_21 = arith.constant 0.353553385 : f32
    %49 = vector.broadcast %cst_21 : f32 to vector<16x8xf32>
    %50 = arith.mulf %48, %49 : vector<16x8xf32>
    %51 = arith.truncf %50 : vector<16x8xf32> to vector<16x8xbf16>
    %52 = vector.extract_strided_slice %10 {offsets = [0, 16], sizes = [16, 8], strides = [1, 1]} : vector<16x32xbf16> to vector<16x8xbf16>
    %53 = vector.extract_strided_slice %11 {offsets = [0, 16], sizes = [16, 8], strides = [1, 1]} : vector<16x32xbf16> to vector<16x8xbf16>
    %cst_22 = arith.constant dense<0.000000e+00> : vector<16x16xf32>
    %54 = tpu.matmul %51, %52, %cst_22 {dimension_numbers = #tpu.dot_dimension_numbers<[1], [1], [0], [0], [0, 0, 1, 0], [], []>} : vector<16x8xbf16>, vector<16x8xbf16>, vector<16x16xf32> -> vector<16x16xf32>
    %cst_23 = arith.constant dense<0xFF800000> : vector<16xf32>
    %55 = vector.multi_reduction <maximumf>, %54, %cst_23 [1] : vector<16x16xf32> to vector<16xf32>
    %56 = vector.shape_cast %55 : vector<16xf32> to vector<16x1xf32>
    %57 = vector.broadcast %56 : vector<16x1xf32> to vector<16x16xf32>
    %58 = arith.subf %54, %57 : vector<16x16xf32>
    %59 = math.exp %58 : vector<16x16xf32>
    %cst_24 = arith.constant dense<0.000000e+00> : vector<16xf32>
    %60 = vector.multi_reduction <add>, %59, %cst_24 [1] : vector<16x16xf32> to vector<16xf32>
    %61 = vector.shape_cast %60 : vector<16xf32> to vector<16x1xf32>
    %62 = vector.broadcast %61 : vector<16x1xf32> to vector<16x16xf32>
    %63 = arith.divf %59, %62 : vector<16x16xf32>
    %64 = arith.truncf %63 : vector<16x16xf32> to vector<16x16xbf16>
    %cst_25 = arith.constant dense<0.000000e+00> : vector<16x8xf32>
    %65 = tpu.matmul %64, %53, %cst_25 {dimension_numbers = #tpu.dot_dimension_numbers<[1], [0], [0], [1], [0, 0, 1, 1], [], []>} : vector<16x16xbf16>, vector<16x8xbf16>, vector<16x8xf32> -> vector<16x8xf32>
    %66 = vector.extract_strided_slice %9 {offsets = [0, 24], sizes = [16, 8], strides = [1, 1]} : vector<16x32xf32> to vector<16x8xf32>
    %cst_26 = arith.constant 0.353553385 : f32
    %67 = vector.broadcast %cst_26 : f32 to vector<16x8xf32>
    %68 = arith.mulf %66, %67 : vector<16x8xf32>
    %69 = arith.truncf %68 : vector<16x8xf32> to vector<16x8xbf16>
    %70 = vector.extract_strided_slice %10 {offsets = [0, 24], sizes = [16, 8], strides = [1, 1]} : vector<16x32xbf16> to vector<16x8xbf16>
    %71 = vector.extract_strided_slice %11 {offsets = [0, 24], sizes = [16, 8], strides = [1, 1]} : vector<16x32xbf16> to vector<16x8xbf16>
    %cst_27 = arith.constant dense<0.000000e+00> : vector<16x16xf32>
    %72 = tpu.matmul %69, %70, %cst_27 {dimension_numbers = #tpu.dot_dimension_numbers<[1], [1], [0], [0], [0, 0, 1, 0], [], []>} : vector<16x8xbf16>, vector<16x8xbf16>, vector<16x16xf32> -> vector<16x16xf32>
    %cst_28 = arith.constant dense<0xFF800000> : vector<16xf32>
    %73 = vector.multi_reduction <maximumf>, %72, %cst_28 [1] : vector<16x16xf32> to vector<16xf32>
    %74 = vector.shape_cast %73 : vector<16xf32> to vector<16x1xf32>
    %75 = vector.broadcast %74 : vector<16x1xf32> to vector<16x16xf32>
    %76 = arith.subf %72, %75 : vector<16x16xf32>
    %77 = math.exp %76 : vector<16x16xf32>
    %cst_29 = arith.constant dense<0.000000e+00> : vector<16xf32>
    %78 = vector.multi_reduction <add>, %77, %cst_29 [1] : vector<16x16xf32> to vector<16xf32>
    %79 = vector.shape_cast %78 : vector<16xf32> to vector<16x1xf32>
    %80 = vector.broadcast %79 : vector<16x1xf32> to vector<16x16xf32>
    %81 = arith.divf %77, %80 : vector<16x16xf32>
    %82 = arith.truncf %81 : vector<16x16xf32> to vector<16x16xbf16>
    %cst_30 = arith.constant dense<0.000000e+00> : vector<16x8xf32>
    %83 = tpu.matmul %82, %71, %cst_30 {dimension_numbers = #tpu.dot_dimension_numbers<[1], [0], [0], [1], [0, 0, 1, 1], [], []>} : vector<16x16xbf16>, vector<16x8xbf16>, vector<16x8xf32> -> vector<16x8xf32>
    %84 = tpu.concatenate %29, %47, %65, %83 in 1 : vector<16x8xf32>, vector<16x8xf32>, vector<16x8xf32>, vector<16x8xf32> -> vector<16x32xf32>
    %c0_31 = arith.constant 0 : index
    %c0_32 = arith.constant 0 : index
    %85 = vector.load %arg7[%c0_31, %c0_32] : memref<32x32xbf16, #tpu.memory_space<vmem>>, vector<32x32xbf16>
    %86 = arith.truncf %84 : vector<16x32xf32> to vector<16x32xbf16>
    %cst_33 = arith.constant dense<0.000000e+00> : vector<16x32xf32>
    %87 = tpu.matmul %86, %85, %cst_33 {dimension_numbers = #tpu.dot_dimension_numbers<[1], [0], [0], [1], [0, 0, 1, 1], [], []>} : vector<16x32xbf16>, vector<32x32xbf16>, vector<16x32xf32> -> vector<16x32xf32>
    %c0_34 = arith.constant 0 : index
    %c0_35 = arith.constant 0 : index
    %88 = vector.load %arg8[%c0_34, %c0_35] : memref<1x32xf32, #tpu.memory_space<vmem>>, vector<1x32xf32>
    %89 = vector.broadcast %88 : vector<1x32xf32> to vector<16x32xf32>
    %90 = arith.addf %87, %89 : vector<16x32xf32>
    %c0_36 = arith.constant 0 : index
    %c0_37 = arith.constant 0 : index
    %91 = vector.load %arg9[%c0_36, %c0_37] : memref<32x96xbf16, #tpu.memory_space<vmem>>, vector<32x96xbf16>
    %c0_38 = arith.constant 0 : index
    %c0_39 = arith.constant 0 : index
    %92 = vector.load %arg10[%c0_38, %c0_39] : memref<32x64xbf16, #tpu.memory_space<vmem>>, vector<32x64xbf16>
    %c0_40 = arith.constant 0 : index
    %c0_41 = arith.constant 0 : index
    %93 = vector.load %arg11[%c0_40, %c0_41] : memref<32x32xbf16, #tpu.memory_space<vmem>>, vector<32x32xbf16>
    %94 = arith.truncf %90 : vector<16x32xf32> to vector<16x32xbf16>
    %cst_42 = arith.constant dense<0.000000e+00> : vector<16x96xf32>
    %95 = tpu.matmul %94, %91, %cst_42 {dimension_numbers = #tpu.dot_dimension_numbers<[1], [0], [0], [1], [0, 0, 1, 1], [], []>} : vector<16x32xbf16>, vector<32x96xbf16>, vector<16x96xf32> -> vector<16x96xf32>
    %96 = arith.truncf %0 : vector<16x32xf32> to vector<16x32xbf16>
    %cst_43 = arith.constant dense<0.000000e+00> : vector<16x64xf32>
    %97 = tpu.matmul %96, %92, %cst_43 {dimension_numbers = #tpu.dot_dimension_numbers<[1], [0], [0], [1], [0, 0, 1, 1], [], []>} : vector<16x32xbf16>, vector<32x64xbf16>, vector<16x64xf32> -> vector<16x64xf32>
    %98 = vector.extract_strided_slice %95 {offsets = [0, 0], sizes = [16, 32], strides = [1, 1]} : vector<16x96xf32> to vector<16x32xf32>
    %99 = vector.extract_strided_slice %97 {offsets = [0, 0], sizes = [16, 32], strides = [1, 1]} : vector<16x64xf32> to vector<16x32xf32>
    %100 = arith.addf %98, %99 : vector<16x32xf32>
    %101 = arith.negf %100 : vector<16x32xf32>
    %102 = math.exp %101 : vector<16x32xf32>
    %cst_44 = arith.constant 1.000000e+00 : f32
    %103 = vector.broadcast %cst_44 : f32 to vector<16x32xf32>
    %104 = arith.addf %103, %102 : vector<16x32xf32>
    %105 = arith.divf %103, %104 : vector<16x32xf32>
    %106 = vector.extract_strided_slice %95 {offsets = [0, 32], sizes = [16, 32], strides = [1, 1]} : vector<16x96xf32> to vector<16x32xf32>
    %107 = vector.extract_strided_slice %97 {offsets = [0, 32], sizes = [16, 32], strides = [1, 1]} : vector<16x64xf32> to vector<16x32xf32>
    %108 = arith.addf %106, %107 : vector<16x32xf32>
    %cst_45 = arith.constant 2.000000e+00 : f32
    %109 = vector.broadcast %cst_45 : f32 to vector<16x32xf32>
    %110 = arith.subf %108, %109 : vector<16x32xf32>
    %111 = arith.negf %110 : vector<16x32xf32>
    %112 = math.exp %111 : vector<16x32xf32>
    %cst_46 = arith.constant 1.000000e+00 : f32
    %113 = vector.broadcast %cst_46 : f32 to vector<16x32xf32>
    %114 = arith.addf %113, %112 : vector<16x32xf32>
    %115 = arith.divf %113, %114 : vector<16x32xf32>
    %116 = vector.extract_strided_slice %95 {offsets = [0, 64], sizes = [16, 32], strides = [1, 1]} : vector<16x96xf32> to vector<16x32xf32>
    %117 = arith.mulf %0, %105 : vector<16x32xf32>
    %118 = arith.truncf %117 : vector<16x32xf32> to vector<16x32xbf16>
    %cst_47 = arith.constant dense<0.000000e+00> : vector<16x32xf32>
    %119 = tpu.matmul %118, %93, %cst_47 {dimension_numbers = #tpu.dot_dimension_numbers<[1], [0], [0], [1], [0, 0, 1, 1], [], []>} : vector<16x32xbf16>, vector<32x32xbf16>, vector<16x32xf32> -> vector<16x32xf32>
    %120 = arith.addf %116, %119 : vector<16x32xf32>
    %121 = math.tanh %120 : vector<16x32xf32>
    %cst_48 = arith.constant 1.000000e+00 : f32
    %122 = vector.broadcast %cst_48 : f32 to vector<16x32xf32>
    %123 = arith.subf %122, %115 : vector<16x32xf32>
    %124 = arith.mulf %123, %0 : vector<16x32xf32>
    %125 = arith.mulf %115, %121 : vector<16x32xf32>
    %126 = arith.addf %124, %125 : vector<16x32xf32>
    %c0_49 = arith.constant 0 : index
    %c0_50 = arith.constant 0 : index
    %127 = vector.load %arg12[%c0_49, %c0_50] : memref<1x32xf32, #tpu.memory_space<vmem>>, vector<1x32xf32>
    %c0_51 = arith.constant 0 : index
    %c0_52 = arith.constant 0 : index
    %128 = vector.load %arg13[%c0_51, %c0_52] : memref<1x32xf32, #tpu.memory_space<vmem>>, vector<1x32xf32>
    %cst_53 = arith.constant dense<0.000000e+00> : vector<16xf32>
    %129 = vector.multi_reduction <add>, %126, %cst_53 [1] : vector<16x32xf32> to vector<16xf32>
    %130 = vector.shape_cast %129 : vector<16xf32> to vector<16x1xf32>
    %cst_54 = arith.constant 3.200000e+01 : f32
    %131 = vector.broadcast %cst_54 : f32 to vector<16x1xf32>
    %132 = arith.divf %130, %131 : vector<16x1xf32>
    %133 = vector.broadcast %132 : vector<16x1xf32> to vector<16x32xf32>
    %134 = arith.subf %126, %133 : vector<16x32xf32>
    %135 = arith.mulf %134, %134 : vector<16x32xf32>
    %cst_55 = arith.constant dense<0.000000e+00> : vector<16xf32>
    %136 = vector.multi_reduction <add>, %135, %cst_55 [1] : vector<16x32xf32> to vector<16xf32>
    %137 = vector.shape_cast %136 : vector<16xf32> to vector<16x1xf32>
    %cst_56 = arith.constant 3.200000e+01 : f32
    %138 = vector.broadcast %cst_56 : f32 to vector<16x1xf32>
    %139 = arith.divf %137, %138 : vector<16x1xf32>
    %cst_57 = arith.constant 9.99999997E-7 : f32
    %140 = vector.broadcast %cst_57 : f32 to vector<16x1xf32>
    %141 = arith.addf %139, %140 : vector<16x1xf32>
    %142 = math.rsqrt %141 : vector<16x1xf32>
    %143 = vector.broadcast %142 : vector<16x1xf32> to vector<16x32xf32>
    %144 = arith.mulf %134, %143 : vector<16x32xf32>
    %145 = vector.broadcast %127 : vector<1x32xf32> to vector<16x32xf32>
    %146 = arith.mulf %144, %145 : vector<16x32xf32>
    %147 = vector.broadcast %128 : vector<1x32xf32> to vector<16x32xf32>
    %148 = arith.addf %146, %147 : vector<16x32xf32>
    %c0_58 = arith.constant 0 : index
    %c0_59 = arith.constant 0 : index
    %149 = vector.load %arg14[%c0_58, %c0_59] : memref<32x32xbf16, #tpu.memory_space<vmem>>, vector<32x32xbf16>
    %150 = arith.truncf %148 : vector<16x32xf32> to vector<16x32xbf16>
    %cst_60 = arith.constant dense<0.000000e+00> : vector<16x32xf32>
    %151 = tpu.matmul %150, %149, %cst_60 {dimension_numbers = #tpu.dot_dimension_numbers<[1], [0], [0], [1], [0, 0, 1, 1], [], []>} : vector<16x32xbf16>, vector<32x32xbf16>, vector<16x32xf32> -> vector<16x32xf32>
    %c0_61 = arith.constant 0 : index
    %c0_62 = arith.constant 0 : index
    %152 = vector.load %arg15[%c0_61, %c0_62] : memref<1x32xf32, #tpu.memory_space<vmem>>, vector<1x32xf32>
    %153 = vector.broadcast %152 : vector<1x32xf32> to vector<16x32xf32>
    %154 = arith.addf %151, %153 : vector<16x32xf32>
    %cst_63 = arith.constant 0.000000e+00 : f32
    %155 = vector.broadcast %cst_63 : f32 to vector<16x32xf32>
    %156 = arith.maximumf %154, %155 : vector<16x32xf32>
    %c0_64 = arith.constant 0 : index
    %c0_65 = arith.constant 0 : index
    %157 = vector.load %arg16[%c0_64, %c0_65] : memref<32x32xbf16, #tpu.memory_space<vmem>>, vector<32x32xbf16>
    %158 = arith.truncf %156 : vector<16x32xf32> to vector<16x32xbf16>
    %cst_66 = arith.constant dense<0.000000e+00> : vector<16x32xf32>
    %159 = tpu.matmul %158, %157, %cst_66 {dimension_numbers = #tpu.dot_dimension_numbers<[1], [0], [0], [1], [0, 0, 1, 1], [], []>} : vector<16x32xbf16>, vector<32x32xbf16>, vector<16x32xf32> -> vector<16x32xf32>
    %c0_67 = arith.constant 0 : index
    %c0_68 = arith.constant 0 : index
    %160 = vector.load %arg17[%c0_67, %c0_68] : memref<1x32xf32, #tpu.memory_space<vmem>>, vector<1x32xf32>
    %161 = vector.broadcast %160 : vector<1x32xf32> to vector<16x32xf32>
    %162 = arith.addf %159, %161 : vector<16x32xf32>
    %c0_69 = arith.constant 0 : index
    %c0_70 = arith.constant 0 : index
    %163 = vector.load %arg18[%c0_69, %c0_70] : memref<32x96xbf16, #tpu.memory_space<vmem>>, vector<32x96xbf16>
    %c0_71 = arith.constant 0 : index
    %c0_72 = arith.constant 0 : index
    %164 = vector.load %arg19[%c0_71, %c0_72] : memref<32x64xbf16, #tpu.memory_space<vmem>>, vector<32x64xbf16>
    %c0_73 = arith.constant 0 : index
    %c0_74 = arith.constant 0 : index
    %165 = vector.load %arg20[%c0_73, %c0_74] : memref<32x32xbf16, #tpu.memory_space<vmem>>, vector<32x32xbf16>
    %166 = arith.truncf %162 : vector<16x32xf32> to vector<16x32xbf16>
    %cst_75 = arith.constant dense<0.000000e+00> : vector<16x96xf32>
    %167 = tpu.matmul %166, %163, %cst_75 {dimension_numbers = #tpu.dot_dimension_numbers<[1], [0], [0], [1], [0, 0, 1, 1], [], []>} : vector<16x32xbf16>, vector<32x96xbf16>, vector<16x96xf32> -> vector<16x96xf32>
    %168 = arith.truncf %126 : vector<16x32xf32> to vector<16x32xbf16>
    %cst_76 = arith.constant dense<0.000000e+00> : vector<16x64xf32>
    %169 = tpu.matmul %168, %164, %cst_76 {dimension_numbers = #tpu.dot_dimension_numbers<[1], [0], [0], [1], [0, 0, 1, 1], [], []>} : vector<16x32xbf16>, vector<32x64xbf16>, vector<16x64xf32> -> vector<16x64xf32>
    %170 = vector.extract_strided_slice %167 {offsets = [0, 0], sizes = [16, 32], strides = [1, 1]} : vector<16x96xf32> to vector<16x32xf32>
    %171 = vector.extract_strided_slice %169 {offsets = [0, 0], sizes = [16, 32], strides = [1, 1]} : vector<16x64xf32> to vector<16x32xf32>
    %172 = arith.addf %170, %171 : vector<16x32xf32>
    %173 = arith.negf %172 : vector<16x32xf32>
    %174 = math.exp %173 : vector<16x32xf32>
    %cst_77 = arith.constant 1.000000e+00 : f32
    %175 = vector.broadcast %cst_77 : f32 to vector<16x32xf32>
    %176 = arith.addf %175, %174 : vector<16x32xf32>
    %177 = arith.divf %175, %176 : vector<16x32xf32>
    %178 = vector.extract_strided_slice %167 {offsets = [0, 32], sizes = [16, 32], strides = [1, 1]} : vector<16x96xf32> to vector<16x32xf32>
    %179 = vector.extract_strided_slice %169 {offsets = [0, 32], sizes = [16, 32], strides = [1, 1]} : vector<16x64xf32> to vector<16x32xf32>
    %180 = arith.addf %178, %179 : vector<16x32xf32>
    %cst_78 = arith.constant 2.000000e+00 : f32
    %181 = vector.broadcast %cst_78 : f32 to vector<16x32xf32>
    %182 = arith.subf %180, %181 : vector<16x32xf32>
    %183 = arith.negf %182 : vector<16x32xf32>
    %184 = math.exp %183 : vector<16x32xf32>
    %cst_79 = arith.constant 1.000000e+00 : f32
    %185 = vector.broadcast %cst_79 : f32 to vector<16x32xf32>
    %186 = arith.addf %185, %184 : vector<16x32xf32>
    %187 = arith.divf %185, %186 : vector<16x32xf32>
    %188 = vector.extract_strided_slice %167 {offsets = [0, 64], sizes = [16, 32], strides = [1, 1]} : vector<16x96xf32> to vector<16x32xf32>
    %189 = arith.mulf %126, %177 : vector<16x32xf32>
    %190 = arith.truncf %189 : vector<16x32xf32> to vector<16x32xbf16>
    %cst_80 = arith.constant dense<0.000000e+00> : vector<16x32xf32>
    %191 = tpu.matmul %190, %165, %cst_80 {dimension_numbers = #tpu.dot_dimension_numbers<[1], [0], [0], [1], [0, 0, 1, 1], [], []>} : vector<16x32xbf16>, vector<32x32xbf16>, vector<16x32xf32> -> vector<16x32xf32>
    %192 = arith.addf %188, %191 : vector<16x32xf32>
    %193 = math.tanh %192 : vector<16x32xf32>
    %cst_81 = arith.constant 1.000000e+00 : f32
    %194 = vector.broadcast %cst_81 : f32 to vector<16x32xf32>
    %195 = arith.subf %194, %187 : vector<16x32xf32>
    %196 = arith.mulf %195, %126 : vector<16x32xf32>
    %197 = arith.mulf %187, %193 : vector<16x32xf32>
    %198 = arith.addf %196, %197 : vector<16x32xf32>
    %c0_82 = arith.constant 0 : index
    %c0_83 = arith.constant 0 : index
    %199 = vector.load %arg21[%c0_82, %c0_83] : memref<1x32xf32, #tpu.memory_space<vmem>>, vector<1x32xf32>
    %c0_84 = arith.constant 0 : index
    %c0_85 = arith.constant 0 : index
    %200 = vector.load %arg22[%c0_84, %c0_85] : memref<1x32xf32, #tpu.memory_space<vmem>>, vector<1x32xf32>
    %cst_86 = arith.constant dense<0.000000e+00> : vector<16xf32>
    %201 = vector.multi_reduction <add>, %198, %cst_86 [1] : vector<16x32xf32> to vector<16xf32>
    %202 = vector.shape_cast %201 : vector<16xf32> to vector<16x1xf32>
    %cst_87 = arith.constant 3.200000e+01 : f32
    %203 = vector.broadcast %cst_87 : f32 to vector<16x1xf32>
    %204 = arith.divf %202, %203 : vector<16x1xf32>
    %205 = vector.broadcast %204 : vector<16x1xf32> to vector<16x32xf32>
    %206 = arith.subf %198, %205 : vector<16x32xf32>
    %207 = arith.mulf %206, %206 : vector<16x32xf32>
    %cst_88 = arith.constant dense<0.000000e+00> : vector<16xf32>
    %208 = vector.multi_reduction <add>, %207, %cst_88 [1] : vector<16x32xf32> to vector<16xf32>
    %209 = vector.shape_cast %208 : vector<16xf32> to vector<16x1xf32>
    %cst_89 = arith.constant 3.200000e+01 : f32
    %210 = vector.broadcast %cst_89 : f32 to vector<16x1xf32>
    %211 = arith.divf %209, %210 : vector<16x1xf32>
    %cst_90 = arith.constant 9.99999997E-7 : f32
    %212 = vector.broadcast %cst_90 : f32 to vector<16x1xf32>
    %213 = arith.addf %211, %212 : vector<16x1xf32>
    %214 = math.rsqrt %213 : vector<16x1xf32>
    %215 = vector.broadcast %214 : vector<16x1xf32> to vector<16x32xf32>
    %216 = arith.mulf %206, %215 : vector<16x32xf32>
    %217 = vector.broadcast %199 : vector<1x32xf32> to vector<16x32xf32>
    %218 = arith.mulf %216, %217 : vector<16x32xf32>
    %219 = vector.broadcast %200 : vector<1x32xf32> to vector<16x32xf32>
    %220 = arith.addf %218, %219 : vector<16x32xf32>
    %c0_91 = arith.constant 0 : index
    %c0_92 = arith.constant 0 : index
    %221 = vector.load %arg23[%c0_91, %c0_92] : memref<16x32xf32, #tpu.memory_space<vmem>>, vector<16x32xf32>
    tpu.vector_store %arg23[%c0_91, %c0_92], %220 {strides = array<i32>} : memref<16x32xf32, #tpu.memory_space<vmem>>, vector<16x32xf32>,
    return
  }
  func.func @transform_0(%arg0: i32) -> (i32, i32) {
    %c0_i32 = arith.constant 0 : i32
    %c0_i32_0 = arith.constant 0 : i32
    return %arg0, %c0_i32 : i32, i32
  }
  func.func @transform_1(%arg0: i32) -> (i32, i32) {
    %c0_i32 = arith.constant 0 : i32
    %c0_i32_0 = arith.constant 0 : i32
    return %arg0, %c0_i32 : i32, i32
  }
  func.func @transform_2(%arg0: i32) -> (i32, i32) {
    %c0_i32 = arith.constant 0 : i32
    %c0_i32_0 = arith.constant 0 : i32
    %c0_i32_1 = arith.constant 0 : i32
    return %c0_i32, %c0_i32_0 : i32, i32
  }
  func.func @transform_3(%arg0: i32) -> (i32, i32) {
    %c0_i32 = arith.constant 0 : i32
    %c0_i32_0 = arith.constant 0 : i32
    %c0_i32_1 = arith.constant 0 : i32
    return %c0_i32, %c0_i32_0 : i32, i32
  }
  func.func @transform_4(%arg0: i32) -> (i32, i32) {
    %c0_i32 = arith.constant 0 : i32
    %c0_i32_0 = arith.constant 0 : i32
    %c0_i32_1 = arith.constant 0 : i32
    return %c0_i32, %c0_i32_0 : i32, i32
  }
  func.func @transform_5(%arg0: i32) -> (i32, i32) {
    %c0_i32 = arith.constant 0 : i32
    %c0_i32_0 = arith.constant 0 : i32
    %c0_i32_1 = arith.constant 0 : i32
    return %c0_i32, %c0_i32_0 : i32, i32
  }
  func.func @transform_6(%arg0: i32) -> (i32, i32) {
    %c0_i32 = arith.constant 0 : i32
    %c0_i32_0 = arith.constant 0 : i32
    %c0_i32_1 = arith.constant 0 : i32
    return %c0_i32, %c0_i32_0 : i32, i32
  }
  func.func @transform_7(%arg0: i32) -> (i32, i32) {
    %c0_i32 = arith.constant 0 : i32
    %c0_i32_0 = arith.constant 0 : i32
    %c0_i32_1 = arith.constant 0 : i32
    return %c0_i32, %c0_i32_0 : i32, i32
  }
  func.func @transform_8(%arg0: i32) -> (i32, i32) {
    %c0_i32 = arith.constant 0 : i32
    %c0_i32_0 = arith.constant 0 : i32
    %c0_i32_1 = arith.constant 0 : i32
    return %c0_i32, %c0_i32_0 : i32, i32
  }
  func.func @transform_9(%arg0: i32) -> (i32, i32) {
    %c0_i32 = arith.constant 0 : i32
    %c0_i32_0 = arith.constant 0 : i32
    %c0_i32_1 = arith.constant 0 : i32
    return %c0_i32, %c0_i32_0 : i32, i32
  }
  func.func @transform_10(%arg0: i32) -> (i32, i32) {
    %c0_i32 = arith.constant 0 : i32
    %c0_i32_0 = arith.constant 0 : i32
    %c0_i32_1 = arith.constant 0 : i32
    return %c0_i32, %c0_i32_0 : i32, i32
  }
  func.func @transform_11(%arg0: i32) -> (i32, i32) {
    %c0_i32 = arith.constant 0 : i32
    %c0_i32_0 = arith.constant 0 : i32
    %c0_i32_1 = arith.constant 0 : i32
    return %c0_i32, %c0_i32_0 : i32, i32
  }
  func.func @transform_12(%arg0: i32) -> (i32, i32) {
    %c0_i32 = arith.constant 0 : i32
    %c0_i32_0 = arith.constant 0 : i32
    %c0_i32_1 = arith.constant 0 : i32
    return %c0_i32, %c0_i32_0 : i32, i32
  }
  func.func @transform_13(%arg0: i32) -> (i32, i32) {
    %c0_i32 = arith.constant 0 : i32
    %c0_i32_0 = arith.constant 0 : i32
    %c0_i32_1 = arith.constant 0 : i32
    return %c0_i32, %c0_i32_0 : i32, i32
  }
  func.func @transform_14(%arg0: i32) -> (i32, i32) {
    %c0_i32 = arith.constant 0 : i32
    %c0_i32_0 = arith.constant 0 : i32
    %c0_i32_1 = arith.constant 0 : i32
    return %c0_i32, %c0_i32_0 : i32, i32
  }
  func.func @transform_15(%arg0: i32) -> (i32, i32) {
    %c0_i32 = arith.constant 0 : i32
    %c0_i32_0 = arith.constant 0 : i32
    %c0_i32_1 = arith.constant 0 : i32
    return %c0_i32, %c0_i32_0 : i32, i32
  }
  func.func @transform_16(%arg0: i32) -> (i32, i32) {
    %c0_i32 = arith.constant 0 : i32
    %c0_i32_0 = arith.constant 0 : i32
    %c0_i32_1 = arith.constant 0 : i32
    return %c0_i32, %c0_i32_0 : i32, i32
  }
  func.func @transform_17(%arg0: i32) -> (i32, i32) {
    %c0_i32 = arith.constant 0 : i32
    %c0_i32_0 = arith.constant 0 : i32
    %c0_i32_1 = arith.constant 0 : i32
    return %c0_i32, %c0_i32_0 : i32, i32
  }
  func.func @transform_18(%arg0: i32) -> (i32, i32) {
    %c0_i32 = arith.constant 0 : i32
    %c0_i32_0 = arith.constant 0 : i32
    %c0_i32_1 = arith.constant 0 : i32
    return %c0_i32, %c0_i32_0 : i32, i32
  }
  func.func @transform_19(%arg0: i32) -> (i32, i32) {
    %c0_i32 = arith.constant 0 : i32
    %c0_i32_0 = arith.constant 0 : i32
    %c0_i32_1 = arith.constant 0 : i32
    return %c0_i32, %c0_i32_0 : i32, i32
  }
  func.func @transform_20(%arg0: i32) -> (i32, i32) {
    %c0_i32 = arith.constant 0 : i32
    %c0_i32_0 = arith.constant 0 : i32
    %c0_i32_1 = arith.constant 0 : i32
    return %c0_i32, %c0_i32_0 : i32, i32
  }
  func.func @transform_21(%arg0: i32) -> (i32, i32) {
    %c0_i32 = arith.constant 0 : i32
    %c0_i32_0 = arith.constant 0 : i32
    %c0_i32_1 = arith.constant 0 : i32
    return %c0_i32, %c0_i32_0 : i32, i32
  }
  func.func @transform_22(%arg0: i32) -> (i32, i32) {
    %c0_i32 = arith.constant 0 : i32
    %c0_i32_0 = arith.constant 0 : i32
    return %arg0, %c0_i32 : i32, i32
  }
}

module attributes {stable_mosaic.version = 11 : i64} {
  func.func @_hypernet_kernel(%arg0: i32, %arg1: memref<16x32xf32, #tpu.memory_space<vmem>>, %arg2: memref<32x32xbf16, #tpu.memory_space<vmem>>, %arg3: memref<1x32xf32, #tpu.memory_space<vmem>>, %arg4: memref<32x1024xbf16, #tpu.memory_space<vmem>>, %arg5: memref<1x1024xf32, #tpu.memory_space<vmem>>, %arg6: memref<16x32xbf16, #tpu.memory_space<vmem>>) attributes {dimension_semantics = [#tpu.dimension_semantics<parallel>], iteration_bounds = array<i64: 1>, scalar_prefetch = 0 : i64, scratch_operands = 0 : i64, tpu.core_type = #tpu.core_type<tc>, window_params = [{transform_indices = @transform_0, window_bounds = array<i64: 16, 32>}, {pipeline_mode = #tpu.pipeline_mode<synchronous>, transform_indices = @transform_1, window_bounds = array<i64: 32, 32>}, {pipeline_mode = #tpu.pipeline_mode<synchronous>, transform_indices = @transform_2, window_bounds = array<i64: 1, 32>}, {pipeline_mode = #tpu.pipeline_mode<synchronous>, transform_indices = @transform_3, window_bounds = array<i64: 32, 1024>}, {pipeline_mode = #tpu.pipeline_mode<synchronous>, transform_indices = @transform_4, window_bounds = array<i64: 1, 1024>}, {transform_indices = @transform_5, window_bounds = array<i64: 16, 32>}]} {
    %c0 = arith.constant 0 : index
    %c0_0 = arith.constant 0 : index
    %0 = vector.load %arg1[%c0, %c0_0] : memref<16x32xf32, #tpu.memory_space<vmem>>, vector<16x32xf32>
    %c0_1 = arith.constant 0 : index
    %c0_2 = arith.constant 0 : index
    %1 = vector.load %arg2[%c0_1, %c0_2] : memref<32x32xbf16, #tpu.memory_space<vmem>>, vector<32x32xbf16>
    %2 = arith.truncf %0 : vector<16x32xf32> to vector<16x32xbf16>
    %cst = arith.constant dense<0.000000e+00> : vector<16x32xf32>
    %3 = tpu.matmul %2, %1, %cst {dimension_numbers = #tpu.dot_dimension_numbers<[1], [0], [0], [1], [0, 0, 1, 1], [], []>} : vector<16x32xbf16>, vector<32x32xbf16>, vector<16x32xf32> -> vector<16x32xf32>
    %c0_3 = arith.constant 0 : index
    %c0_4 = arith.constant 0 : index
    %4 = vector.load %arg3[%c0_3, %c0_4] : memref<1x32xf32, #tpu.memory_space<vmem>>, vector<1x32xf32>
    %5 = vector.broadcast %4 : vector<1x32xf32> to vector<16x32xf32>
    %6 = arith.addf %3, %5 : vector<16x32xf32>
    %cst_5 = arith.constant 0.000000e+00 : f32
    %7 = vector.broadcast %cst_5 : f32 to vector<16x32xf32>
    %8 = arith.maximumf %6, %7 : vector<16x32xf32>
    %c0_6 = arith.constant 0 : index
    %c0_7 = arith.constant 0 : index
    %9 = vector.load %arg4[%c0_6, %c0_7] : memref<32x1024xbf16, #tpu.memory_space<vmem>>, vector<32x1024xbf16>
    %10 = arith.truncf %8 : vector<16x32xf32> to vector<16x32xbf16>
    %cst_8 = arith.constant dense<0.000000e+00> : vector<16x1024xf32>
    %11 = tpu.matmul %10, %9, %cst_8 {dimension_numbers = #tpu.dot_dimension_numbers<[1], [0], [0], [1], [0, 0, 1, 1], [], []>} : vector<16x32xbf16>, vector<32x1024xbf16>, vector<16x1024xf32> -> vector<16x1024xf32>
    %c0_9 = arith.constant 0 : index
    %c0_10 = arith.constant 0 : index
    %12 = vector.load %arg5[%c0_9, %c0_10] : memref<1x1024xf32, #tpu.memory_space<vmem>>, vector<1x1024xf32>
    %13 = vector.broadcast %12 : vector<1x1024xf32> to vector<16x1024xf32>
    %14 = arith.addf %11, %13 : vector<16x1024xf32>
    %15 = vector.extract_strided_slice %0 {offsets = [0, 0], sizes = [16, 1], strides = [1, 1]} : vector<16x32xf32> to vector<16x1xf32>
    %16 = vector.extract_strided_slice %14 {offsets = [0, 0], sizes = [16, 32], strides = [1, 1]} : vector<16x1024xf32> to vector<16x32xf32>
    %17 = vector.broadcast %15 : vector<16x1xf32> to vector<16x32xf32>
    %18 = arith.mulf %17, %16 : vector<16x32xf32>
    %19 = vector.extract_strided_slice %0 {offsets = [0, 1], sizes = [16, 1], strides = [1, 1]} : vector<16x32xf32> to vector<16x1xf32>
    %20 = vector.extract_strided_slice %14 {offsets = [0, 32], sizes = [16, 32], strides = [1, 1]} : vector<16x1024xf32> to vector<16x32xf32>
    %21 = vector.broadcast %19 : vector<16x1xf32> to vector<16x32xf32>
    %22 = arith.mulf %21, %20 : vector<16x32xf32>
    %23 = arith.addf %18, %22 : vector<16x32xf32>
    %24 = vector.extract_strided_slice %0 {offsets = [0, 2], sizes = [16, 1], strides = [1, 1]} : vector<16x32xf32> to vector<16x1xf32>
    %25 = vector.extract_strided_slice %14 {offsets = [0, 64], sizes = [16, 32], strides = [1, 1]} : vector<16x1024xf32> to vector<16x32xf32>
    %26 = vector.broadcast %24 : vector<16x1xf32> to vector<16x32xf32>
    %27 = arith.mulf %26, %25 : vector<16x32xf32>
    %28 = arith.addf %23, %27 : vector<16x32xf32>
    %29 = vector.extract_strided_slice %0 {offsets = [0, 3], sizes = [16, 1], strides = [1, 1]} : vector<16x32xf32> to vector<16x1xf32>
    %30 = vector.extract_strided_slice %14 {offsets = [0, 96], sizes = [16, 32], strides = [1, 1]} : vector<16x1024xf32> to vector<16x32xf32>
    %31 = vector.broadcast %29 : vector<16x1xf32> to vector<16x32xf32>
    %32 = arith.mulf %31, %30 : vector<16x32xf32>
    %33 = arith.addf %28, %32 : vector<16x32xf32>
    %34 = vector.extract_strided_slice %0 {offsets = [0, 4], sizes = [16, 1], strides = [1, 1]} : vector<16x32xf32> to vector<16x1xf32>
    %35 = vector.extract_strided_slice %14 {offsets = [0, 128], sizes = [16, 32], strides = [1, 1]} : vector<16x1024xf32> to vector<16x32xf32>
    %36 = vector.broadcast %34 : vector<16x1xf32> to vector<16x32xf32>
    %37 = arith.mulf %36, %35 : vector<16x32xf32>
    %38 = arith.addf %33, %37 : vector<16x32xf32>
    %39 = vector.extract_strided_slice %0 {offsets = [0, 5], sizes = [16, 1], strides = [1, 1]} : vector<16x32xf32> to vector<16x1xf32>
    %40 = vector.extract_strided_slice %14 {offsets = [0, 160], sizes = [16, 32], strides = [1, 1]} : vector<16x1024xf32> to vector<16x32xf32>
    %41 = vector.broadcast %39 : vector<16x1xf32> to vector<16x32xf32>
    %42 = arith.mulf %41, %40 : vector<16x32xf32>
    %43 = arith.addf %38, %42 : vector<16x32xf32>
    %44 = vector.extract_strided_slice %0 {offsets = [0, 6], sizes = [16, 1], strides = [1, 1]} : vector<16x32xf32> to vector<16x1xf32>
    %45 = vector.extract_strided_slice %14 {offsets = [0, 192], sizes = [16, 32], strides = [1, 1]} : vector<16x1024xf32> to vector<16x32xf32>
    %46 = vector.broadcast %44 : vector<16x1xf32> to vector<16x32xf32>
    %47 = arith.mulf %46, %45 : vector<16x32xf32>
    %48 = arith.addf %43, %47 : vector<16x32xf32>
    %49 = vector.extract_strided_slice %0 {offsets = [0, 7], sizes = [16, 1], strides = [1, 1]} : vector<16x32xf32> to vector<16x1xf32>
    %50 = vector.extract_strided_slice %14 {offsets = [0, 224], sizes = [16, 32], strides = [1, 1]} : vector<16x1024xf32> to vector<16x32xf32>
    %51 = vector.broadcast %49 : vector<16x1xf32> to vector<16x32xf32>
    %52 = arith.mulf %51, %50 : vector<16x32xf32>
    %53 = arith.addf %48, %52 : vector<16x32xf32>
    %54 = vector.extract_strided_slice %0 {offsets = [0, 8], sizes = [16, 1], strides = [1, 1]} : vector<16x32xf32> to vector<16x1xf32>
    %55 = vector.extract_strided_slice %14 {offsets = [0, 256], sizes = [16, 32], strides = [1, 1]} : vector<16x1024xf32> to vector<16x32xf32>
    %56 = vector.broadcast %54 : vector<16x1xf32> to vector<16x32xf32>
    %57 = arith.mulf %56, %55 : vector<16x32xf32>
    %58 = arith.addf %53, %57 : vector<16x32xf32>
    %59 = vector.extract_strided_slice %0 {offsets = [0, 9], sizes = [16, 1], strides = [1, 1]} : vector<16x32xf32> to vector<16x1xf32>
    %60 = vector.extract_strided_slice %14 {offsets = [0, 288], sizes = [16, 32], strides = [1, 1]} : vector<16x1024xf32> to vector<16x32xf32>
    %61 = vector.broadcast %59 : vector<16x1xf32> to vector<16x32xf32>
    %62 = arith.mulf %61, %60 : vector<16x32xf32>
    %63 = arith.addf %58, %62 : vector<16x32xf32>
    %64 = vector.extract_strided_slice %0 {offsets = [0, 10], sizes = [16, 1], strides = [1, 1]} : vector<16x32xf32> to vector<16x1xf32>
    %65 = vector.extract_strided_slice %14 {offsets = [0, 320], sizes = [16, 32], strides = [1, 1]} : vector<16x1024xf32> to vector<16x32xf32>
    %66 = vector.broadcast %64 : vector<16x1xf32> to vector<16x32xf32>
    %67 = arith.mulf %66, %65 : vector<16x32xf32>
    %68 = arith.addf %63, %67 : vector<16x32xf32>
    %69 = vector.extract_strided_slice %0 {offsets = [0, 11], sizes = [16, 1], strides = [1, 1]} : vector<16x32xf32> to vector<16x1xf32>
    %70 = vector.extract_strided_slice %14 {offsets = [0, 352], sizes = [16, 32], strides = [1, 1]} : vector<16x1024xf32> to vector<16x32xf32>
    %71 = vector.broadcast %69 : vector<16x1xf32> to vector<16x32xf32>
    %72 = arith.mulf %71, %70 : vector<16x32xf32>
    %73 = arith.addf %68, %72 : vector<16x32xf32>
    %74 = vector.extract_strided_slice %0 {offsets = [0, 12], sizes = [16, 1], strides = [1, 1]} : vector<16x32xf32> to vector<16x1xf32>
    %75 = vector.extract_strided_slice %14 {offsets = [0, 384], sizes = [16, 32], strides = [1, 1]} : vector<16x1024xf32> to vector<16x32xf32>
    %76 = vector.broadcast %74 : vector<16x1xf32> to vector<16x32xf32>
    %77 = arith.mulf %76, %75 : vector<16x32xf32>
    %78 = arith.addf %73, %77 : vector<16x32xf32>
    %79 = vector.extract_strided_slice %0 {offsets = [0, 13], sizes = [16, 1], strides = [1, 1]} : vector<16x32xf32> to vector<16x1xf32>
    %80 = vector.extract_strided_slice %14 {offsets = [0, 416], sizes = [16, 32], strides = [1, 1]} : vector<16x1024xf32> to vector<16x32xf32>
    %81 = vector.broadcast %79 : vector<16x1xf32> to vector<16x32xf32>
    %82 = arith.mulf %81, %80 : vector<16x32xf32>
    %83 = arith.addf %78, %82 : vector<16x32xf32>
    %84 = vector.extract_strided_slice %0 {offsets = [0, 14], sizes = [16, 1], strides = [1, 1]} : vector<16x32xf32> to vector<16x1xf32>
    %85 = vector.extract_strided_slice %14 {offsets = [0, 448], sizes = [16, 32], strides = [1, 1]} : vector<16x1024xf32> to vector<16x32xf32>
    %86 = vector.broadcast %84 : vector<16x1xf32> to vector<16x32xf32>
    %87 = arith.mulf %86, %85 : vector<16x32xf32>
    %88 = arith.addf %83, %87 : vector<16x32xf32>
    %89 = vector.extract_strided_slice %0 {offsets = [0, 15], sizes = [16, 1], strides = [1, 1]} : vector<16x32xf32> to vector<16x1xf32>
    %90 = vector.extract_strided_slice %14 {offsets = [0, 480], sizes = [16, 32], strides = [1, 1]} : vector<16x1024xf32> to vector<16x32xf32>
    %91 = vector.broadcast %89 : vector<16x1xf32> to vector<16x32xf32>
    %92 = arith.mulf %91, %90 : vector<16x32xf32>
    %93 = arith.addf %88, %92 : vector<16x32xf32>
    %94 = vector.extract_strided_slice %0 {offsets = [0, 16], sizes = [16, 1], strides = [1, 1]} : vector<16x32xf32> to vector<16x1xf32>
    %95 = vector.extract_strided_slice %14 {offsets = [0, 512], sizes = [16, 32], strides = [1, 1]} : vector<16x1024xf32> to vector<16x32xf32>
    %96 = vector.broadcast %94 : vector<16x1xf32> to vector<16x32xf32>
    %97 = arith.mulf %96, %95 : vector<16x32xf32>
    %98 = arith.addf %93, %97 : vector<16x32xf32>
    %99 = vector.extract_strided_slice %0 {offsets = [0, 17], sizes = [16, 1], strides = [1, 1]} : vector<16x32xf32> to vector<16x1xf32>
    %100 = vector.extract_strided_slice %14 {offsets = [0, 544], sizes = [16, 32], strides = [1, 1]} : vector<16x1024xf32> to vector<16x32xf32>
    %101 = vector.broadcast %99 : vector<16x1xf32> to vector<16x32xf32>
    %102 = arith.mulf %101, %100 : vector<16x32xf32>
    %103 = arith.addf %98, %102 : vector<16x32xf32>
    %104 = vector.extract_strided_slice %0 {offsets = [0, 18], sizes = [16, 1], strides = [1, 1]} : vector<16x32xf32> to vector<16x1xf32>
    %105 = vector.extract_strided_slice %14 {offsets = [0, 576], sizes = [16, 32], strides = [1, 1]} : vector<16x1024xf32> to vector<16x32xf32>
    %106 = vector.broadcast %104 : vector<16x1xf32> to vector<16x32xf32>
    %107 = arith.mulf %106, %105 : vector<16x32xf32>
    %108 = arith.addf %103, %107 : vector<16x32xf32>
    %109 = vector.extract_strided_slice %0 {offsets = [0, 19], sizes = [16, 1], strides = [1, 1]} : vector<16x32xf32> to vector<16x1xf32>
    %110 = vector.extract_strided_slice %14 {offsets = [0, 608], sizes = [16, 32], strides = [1, 1]} : vector<16x1024xf32> to vector<16x32xf32>
    %111 = vector.broadcast %109 : vector<16x1xf32> to vector<16x32xf32>
    %112 = arith.mulf %111, %110 : vector<16x32xf32>
    %113 = arith.addf %108, %112 : vector<16x32xf32>
    %114 = vector.extract_strided_slice %0 {offsets = [0, 20], sizes = [16, 1], strides = [1, 1]} : vector<16x32xf32> to vector<16x1xf32>
    %115 = vector.extract_strided_slice %14 {offsets = [0, 640], sizes = [16, 32], strides = [1, 1]} : vector<16x1024xf32> to vector<16x32xf32>
    %116 = vector.broadcast %114 : vector<16x1xf32> to vector<16x32xf32>
    %117 = arith.mulf %116, %115 : vector<16x32xf32>
    %118 = arith.addf %113, %117 : vector<16x32xf32>
    %119 = vector.extract_strided_slice %0 {offsets = [0, 21], sizes = [16, 1], strides = [1, 1]} : vector<16x32xf32> to vector<16x1xf32>
    %120 = vector.extract_strided_slice %14 {offsets = [0, 672], sizes = [16, 32], strides = [1, 1]} : vector<16x1024xf32> to vector<16x32xf32>
    %121 = vector.broadcast %119 : vector<16x1xf32> to vector<16x32xf32>
    %122 = arith.mulf %121, %120 : vector<16x32xf32>
    %123 = arith.addf %118, %122 : vector<16x32xf32>
    %124 = vector.extract_strided_slice %0 {offsets = [0, 22], sizes = [16, 1], strides = [1, 1]} : vector<16x32xf32> to vector<16x1xf32>
    %125 = vector.extract_strided_slice %14 {offsets = [0, 704], sizes = [16, 32], strides = [1, 1]} : vector<16x1024xf32> to vector<16x32xf32>
    %126 = vector.broadcast %124 : vector<16x1xf32> to vector<16x32xf32>
    %127 = arith.mulf %126, %125 : vector<16x32xf32>
    %128 = arith.addf %123, %127 : vector<16x32xf32>
    %129 = vector.extract_strided_slice %0 {offsets = [0, 23], sizes = [16, 1], strides = [1, 1]} : vector<16x32xf32> to vector<16x1xf32>
    %130 = vector.extract_strided_slice %14 {offsets = [0, 736], sizes = [16, 32], strides = [1, 1]} : vector<16x1024xf32> to vector<16x32xf32>
    %131 = vector.broadcast %129 : vector<16x1xf32> to vector<16x32xf32>
    %132 = arith.mulf %131, %130 : vector<16x32xf32>
    %133 = arith.addf %128, %132 : vector<16x32xf32>
    %134 = vector.extract_strided_slice %0 {offsets = [0, 24], sizes = [16, 1], strides = [1, 1]} : vector<16x32xf32> to vector<16x1xf32>
    %135 = vector.extract_strided_slice %14 {offsets = [0, 768], sizes = [16, 32], strides = [1, 1]} : vector<16x1024xf32> to vector<16x32xf32>
    %136 = vector.broadcast %134 : vector<16x1xf32> to vector<16x32xf32>
    %137 = arith.mulf %136, %135 : vector<16x32xf32>
    %138 = arith.addf %133, %137 : vector<16x32xf32>
    %139 = vector.extract_strided_slice %0 {offsets = [0, 25], sizes = [16, 1], strides = [1, 1]} : vector<16x32xf32> to vector<16x1xf32>
    %140 = vector.extract_strided_slice %14 {offsets = [0, 800], sizes = [16, 32], strides = [1, 1]} : vector<16x1024xf32> to vector<16x32xf32>
    %141 = vector.broadcast %139 : vector<16x1xf32> to vector<16x32xf32>
    %142 = arith.mulf %141, %140 : vector<16x32xf32>
    %143 = arith.addf %138, %142 : vector<16x32xf32>
    %144 = vector.extract_strided_slice %0 {offsets = [0, 26], sizes = [16, 1], strides = [1, 1]} : vector<16x32xf32> to vector<16x1xf32>
    %145 = vector.extract_strided_slice %14 {offsets = [0, 832], sizes = [16, 32], strides = [1, 1]} : vector<16x1024xf32> to vector<16x32xf32>
    %146 = vector.broadcast %144 : vector<16x1xf32> to vector<16x32xf32>
    %147 = arith.mulf %146, %145 : vector<16x32xf32>
    %148 = arith.addf %143, %147 : vector<16x32xf32>
    %149 = vector.extract_strided_slice %0 {offsets = [0, 27], sizes = [16, 1], strides = [1, 1]} : vector<16x32xf32> to vector<16x1xf32>
    %150 = vector.extract_strided_slice %14 {offsets = [0, 864], sizes = [16, 32], strides = [1, 1]} : vector<16x1024xf32> to vector<16x32xf32>
    %151 = vector.broadcast %149 : vector<16x1xf32> to vector<16x32xf32>
    %152 = arith.mulf %151, %150 : vector<16x32xf32>
    %153 = arith.addf %148, %152 : vector<16x32xf32>
    %154 = vector.extract_strided_slice %0 {offsets = [0, 28], sizes = [16, 1], strides = [1, 1]} : vector<16x32xf32> to vector<16x1xf32>
    %155 = vector.extract_strided_slice %14 {offsets = [0, 896], sizes = [16, 32], strides = [1, 1]} : vector<16x1024xf32> to vector<16x32xf32>
    %156 = vector.broadcast %154 : vector<16x1xf32> to vector<16x32xf32>
    %157 = arith.mulf %156, %155 : vector<16x32xf32>
    %158 = arith.addf %153, %157 : vector<16x32xf32>
    %159 = vector.extract_strided_slice %0 {offsets = [0, 29], sizes = [16, 1], strides = [1, 1]} : vector<16x32xf32> to vector<16x1xf32>
    %160 = vector.extract_strided_slice %14 {offsets = [0, 928], sizes = [16, 32], strides = [1, 1]} : vector<16x1024xf32> to vector<16x32xf32>
    %161 = vector.broadcast %159 : vector<16x1xf32> to vector<16x32xf32>
    %162 = arith.mulf %161, %160 : vector<16x32xf32>
    %163 = arith.addf %158, %162 : vector<16x32xf32>
    %164 = vector.extract_strided_slice %0 {offsets = [0, 30], sizes = [16, 1], strides = [1, 1]} : vector<16x32xf32> to vector<16x1xf32>
    %165 = vector.extract_strided_slice %14 {offsets = [0, 960], sizes = [16, 32], strides = [1, 1]} : vector<16x1024xf32> to vector<16x32xf32>
    %166 = vector.broadcast %164 : vector<16x1xf32> to vector<16x32xf32>
    %167 = arith.mulf %166, %165 : vector<16x32xf32>
    %168 = arith.addf %163, %167 : vector<16x32xf32>
    %169 = vector.extract_strided_slice %0 {offsets = [0, 31], sizes = [16, 1], strides = [1, 1]} : vector<16x32xf32> to vector<16x1xf32>
    %170 = vector.extract_strided_slice %14 {offsets = [0, 992], sizes = [16, 32], strides = [1, 1]} : vector<16x1024xf32> to vector<16x32xf32>
    %171 = vector.broadcast %169 : vector<16x1xf32> to vector<16x32xf32>
    %172 = arith.mulf %171, %170 : vector<16x32xf32>
    %173 = arith.addf %168, %172 : vector<16x32xf32>
    %174 = math.tanh %173 : vector<16x32xf32>
    %175 = arith.truncf %174 : vector<16x32xf32> to vector<16x32xbf16>
    %c0_11 = arith.constant 0 : index
    %c0_12 = arith.constant 0 : index
    %176 = vector.load %arg6[%c0_11, %c0_12] : memref<16x32xbf16, #tpu.memory_space<vmem>>, vector<16x32xbf16>
    tpu.vector_store %arg6[%c0_11, %c0_12], %175 {strides = array<i32>} : memref<16x32xbf16, #tpu.memory_space<vmem>>, vector<16x32xbf16>,
    return
  }
  func.func @transform_0(%arg0: i32) -> (i32, i32) {
    %c0_i32 = arith.constant 0 : i32
    %c0_i32_0 = arith.constant 0 : i32
    return %arg0, %c0_i32 : i32, i32
  }
  func.func @transform_1(%arg0: i32) -> (i32, i32) {
    %c0_i32 = arith.constant 0 : i32
    %c0_i32_0 = arith.constant 0 : i32
    %c0_i32_1 = arith.constant 0 : i32
    return %c0_i32, %c0_i32_0 : i32, i32
  }
  func.func @transform_2(%arg0: i32) -> (i32, i32) {
    %c0_i32 = arith.constant 0 : i32
    %c0_i32_0 = arith.constant 0 : i32
    %c0_i32_1 = arith.constant 0 : i32
    return %c0_i32, %c0_i32_0 : i32, i32
  }
  func.func @transform_3(%arg0: i32) -> (i32, i32) {
    %c0_i32 = arith.constant 0 : i32
    %c0_i32_0 = arith.constant 0 : i32
    %c0_i32_1 = arith.constant 0 : i32
    return %c0_i32, %c0_i32_0 : i32, i32
  }
  func.func @transform_4(%arg0: i32) -> (i32, i32) {
    %c0_i32 = arith.constant 0 : i32
    %c0_i32_0 = arith.constant 0 : i32
    %c0_i32_1 = arith.constant 0 : i32
    return %c0_i32, %c0_i32_0 : i32, i32
  }
  func.func @transform_5(%arg0: i32) -> (i32, i32) {
    %c0_i32 = arith.constant 0 : i32
    %c0_i32_0 = arith.constant 0 : i32
    return %arg0, %c0_i32 : i32, i32
  }
}

module attributes {stable_mosaic.version = 11 : i64} {
  func.func @_stage_kernel(%arg0: i32, %arg1: memref<1x4x32xf32, #tpu.memory_space<vmem>>, %arg2: memref<1x4x32xbf16, #tpu.memory_space<vmem>>, %arg3: memref<32x96xbf16, #tpu.memory_space<vmem>>, %arg4: memref<1x96xf32, #tpu.memory_space<vmem>>, %arg5: memref<32x32xbf16, #tpu.memory_space<vmem>>, %arg6: memref<1x32xf32, #tpu.memory_space<vmem>>, %arg7: memref<32x96xbf16, #tpu.memory_space<vmem>>, %arg8: memref<32x64xbf16, #tpu.memory_space<vmem>>, %arg9: memref<32x32xbf16, #tpu.memory_space<vmem>>, %arg10: memref<1x32xf32, #tpu.memory_space<vmem>>, %arg11: memref<1x32xf32, #tpu.memory_space<vmem>>, %arg12: memref<32x32xbf16, #tpu.memory_space<vmem>>, %arg13: memref<1x32xf32, #tpu.memory_space<vmem>>, %arg14: memref<32x32xbf16, #tpu.memory_space<vmem>>, %arg15: memref<1x32xf32, #tpu.memory_space<vmem>>, %arg16: memref<32x96xbf16, #tpu.memory_space<vmem>>, %arg17: memref<32x64xbf16, #tpu.memory_space<vmem>>, %arg18: memref<32x32xbf16, #tpu.memory_space<vmem>>, %arg19: memref<1x32xf32, #tpu.memory_space<vmem>>, %arg20: memref<1x32xf32, #tpu.memory_space<vmem>>, %arg21: memref<1x4x32xf32, #tpu.memory_space<vmem>>, %arg22: memref<1x4x32xf32, #tpu.memory_space<vmem>>) attributes {dimension_semantics = [#tpu.dimension_semantics<parallel>], iteration_bounds = array<i64: 4>, scalar_prefetch = 0 : i64, scratch_operands = 0 : i64, tpu.core_type = #tpu.core_type<tc>, window_params = [{transform_indices = @transform_0, window_bounds = array<i64: 1, 4, 32>}, {transform_indices = @transform_1, window_bounds = array<i64: 1, 4, 32>}, {pipeline_mode = #tpu.pipeline_mode<synchronous>, transform_indices = @transform_2, window_bounds = array<i64: 32, 96>}, {pipeline_mode = #tpu.pipeline_mode<synchronous>, transform_indices = @transform_3, window_bounds = array<i64: 1, 96>}, {pipeline_mode = #tpu.pipeline_mode<synchronous>, transform_indices = @transform_4, window_bounds = array<i64: 32, 32>}, {pipeline_mode = #tpu.pipeline_mode<synchronous>, transform_indices = @transform_5, window_bounds = array<i64: 1, 32>}, {pipeline_mode = #tpu.pipeline_mode<synchronous>, transform_indices = @transform_6, window_bounds = array<i64: 32, 96>}, {pipeline_mode = #tpu.pipeline_mode<synchronous>, transform_indices = @transform_7, window_bounds = array<i64: 32, 64>}, {pipeline_mode = #tpu.pipeline_mode<synchronous>, transform_indices = @transform_8, window_bounds = array<i64: 32, 32>}, {pipeline_mode = #tpu.pipeline_mode<synchronous>, transform_indices = @transform_9, window_bounds = array<i64: 1, 32>}, {pipeline_mode = #tpu.pipeline_mode<synchronous>, transform_indices = @transform_10, window_bounds = array<i64: 1, 32>}, {pipeline_mode = #tpu.pipeline_mode<synchronous>, transform_indices = @transform_11, window_bounds = array<i64: 32, 32>}, {pipeline_mode = #tpu.pipeline_mode<synchronous>, transform_indices = @transform_12, window_bounds = array<i64: 1, 32>}, {pipeline_mode = #tpu.pipeline_mode<synchronous>, transform_indices = @transform_13, window_bounds = array<i64: 32, 32>}, {pipeline_mode = #tpu.pipeline_mode<synchronous>, transform_indices = @transform_14, window_bounds = array<i64: 1, 32>}, {pipeline_mode = #tpu.pipeline_mode<synchronous>, transform_indices = @transform_15, window_bounds = array<i64: 32, 96>}, {pipeline_mode = #tpu.pipeline_mode<synchronous>, transform_indices = @transform_16, window_bounds = array<i64: 32, 64>}, {pipeline_mode = #tpu.pipeline_mode<synchronous>, transform_indices = @transform_17, window_bounds = array<i64: 32, 32>}, {pipeline_mode = #tpu.pipeline_mode<synchronous>, transform_indices = @transform_18, window_bounds = array<i64: 1, 32>}, {pipeline_mode = #tpu.pipeline_mode<synchronous>, transform_indices = @transform_19, window_bounds = array<i64: 1, 32>}, {transform_indices = @transform_20, window_bounds = array<i64: 1, 4, 32>}, {transform_indices = @transform_21, window_bounds = array<i64: 1, 4, 32>}]} {
    %c0 = arith.constant 0 : index
    %c0_0 = arith.constant 0 : index
    %c0_1 = arith.constant 0 : index
    %0 = vector.load %arg1[%c0, %c0_0, %c0_1] : memref<1x4x32xf32, #tpu.memory_space<vmem>>, vector<1x4x32xf32>
    %1 = vector.shape_cast %0 : vector<1x4x32xf32> to vector<4x32xf32>
    %c0_2 = arith.constant 0 : index
    %c0_3 = arith.constant 0 : index
    %c0_4 = arith.constant 0 : index
    %2 = vector.load %arg2[%c0_2, %c0_3, %c0_4] : memref<1x4x32xbf16, #tpu.memory_space<vmem>>, vector<1x4x32xbf16>
    %3 = vector.shape_cast %2 : vector<1x4x32xbf16> to vector<4x32xbf16>
    %4 = arith.extf %3 : vector<4x32xbf16> to vector<4x32xf32>
    %c0_5 = arith.constant 0 : index
    %c0_6 = arith.constant 0 : index
    %5 = vector.load %arg3[%c0_5, %c0_6] : memref<32x96xbf16, #tpu.memory_space<vmem>>, vector<32x96xbf16>
    %6 = arith.truncf %1 : vector<4x32xf32> to vector<4x32xbf16>
    %cst = arith.constant dense<0.000000e+00> : vector<4x96xf32>
    %7 = tpu.matmul %6, %5, %cst {dimension_numbers = #tpu.dot_dimension_numbers<[1], [0], [0], [1], [0, 0, 1, 1], [], []>} : vector<4x32xbf16>, vector<32x96xbf16>, vector<4x96xf32> -> vector<4x96xf32>
    %c0_7 = arith.constant 0 : index
    %c0_8 = arith.constant 0 : index
    %8 = vector.load %arg4[%c0_7, %c0_8] : memref<1x96xf32, #tpu.memory_space<vmem>>, vector<1x96xf32>
    %9 = vector.broadcast %8 : vector<1x96xf32> to vector<4x96xf32>
    %10 = arith.addf %7, %9 : vector<4x96xf32>
    %11 = vector.extract_strided_slice %10 {offsets = [0, 0], sizes = [4, 32], strides = [1, 1]} : vector<4x96xf32> to vector<4x32xf32>
    %12 = tpu.concatenate %11, %4 in 1 : vector<4x32xf32>, vector<4x32xf32> -> vector<4x64xf32>
    %13 = vector.extract_strided_slice %10 {offsets = [0, 32], sizes = [4, 32], strides = [1, 1]} : vector<4x96xf32> to vector<4x32xf32>
    %14 = tpu.concatenate %13, %4 in 1 : vector<4x32xf32>, vector<4x32xf32> -> vector<4x64xf32>
    %15 = vector.extract_strided_slice %10 {offsets = [0, 64], sizes = [4, 32], strides = [1, 1]} : vector<4x96xf32> to vector<4x32xf32>
    %16 = vector.extract_strided_slice %12 {offsets = [0, 0], sizes = [4, 16], strides = [1, 1]} : vector<4x64xf32> to vector<4x16xf32>
    %cst_9 = arith.constant 2.500000e-01 : f32
    %17 = vector.broadcast %cst_9 : f32 to vector<4x16xf32>
    %18 = arith.mulf %16, %17 : vector<4x16xf32>
    %19 = arith.truncf %18 : vector<4x16xf32> to vector<4x16xbf16>
    %20 = vector.extract_strided_slice %14 {offsets = [0, 0], sizes = [4, 16], strides = [1, 1]} : vector<4x64xf32> to vector<4x16xf32>
    %21 = arith.truncf %20 : vector<4x16xf32> to vector<4x16xbf16>
    %22 = vector.extract_strided_slice %15 {offsets = [0, 0], sizes = [4, 8], strides = [1, 1]} : vector<4x32xf32> to vector<4x8xf32>
    %23 = arith.truncf %22 : vector<4x8xf32> to vector<4x8xbf16>
    %cst_10 = arith.constant dense<0.000000e+00> : vector<4x4xf32>
    %24 = tpu.matmul %19, %21, %cst_10 {dimension_numbers = #tpu.dot_dimension_numbers<[1], [1], [0], [0], [0, 0, 1, 0], [], []>} : vector<4x16xbf16>, vector<4x16xbf16>, vector<4x4xf32> -> vector<4x4xf32>
    %cst_11 = arith.constant dense<0xFF800000> : vector<4xf32>
    %25 = vector.multi_reduction <maximumf>, %24, %cst_11 [1] : vector<4x4xf32> to vector<4xf32>
    %26 = vector.shape_cast %25 : vector<4xf32> to vector<4x1xf32>
    %27 = vector.broadcast %26 : vector<4x1xf32> to vector<4x4xf32>
    %28 = arith.subf %24, %27 : vector<4x4xf32>
    %29 = math.exp %28 : vector<4x4xf32>
    %cst_12 = arith.constant dense<0.000000e+00> : vector<4xf32>
    %30 = vector.multi_reduction <add>, %29, %cst_12 [1] : vector<4x4xf32> to vector<4xf32>
    %31 = vector.shape_cast %30 : vector<4xf32> to vector<4x1xf32>
    %32 = vector.broadcast %31 : vector<4x1xf32> to vector<4x4xf32>
    %33 = arith.divf %29, %32 : vector<4x4xf32>
    %34 = arith.truncf %33 : vector<4x4xf32> to vector<4x4xbf16>
    %cst_13 = arith.constant dense<0.000000e+00> : vector<4x8xf32>
    %35 = tpu.matmul %34, %23, %cst_13 {dimension_numbers = #tpu.dot_dimension_numbers<[1], [0], [0], [1], [0, 0, 1, 1], [], []>} : vector<4x4xbf16>, vector<4x8xbf16>, vector<4x8xf32> -> vector<4x8xf32>
    %36 = vector.extract_strided_slice %12 {offsets = [0, 16], sizes = [4, 16], strides = [1, 1]} : vector<4x64xf32> to vector<4x16xf32>
    %cst_14 = arith.constant 2.500000e-01 : f32
    %37 = vector.broadcast %cst_14 : f32 to vector<4x16xf32>
    %38 = arith.mulf %36, %37 : vector<4x16xf32>
    %39 = arith.truncf %38 : vector<4x16xf32> to vector<4x16xbf16>
    %40 = vector.extract_strided_slice %14 {offsets = [0, 16], sizes = [4, 16], strides = [1, 1]} : vector<4x64xf32> to vector<4x16xf32>
    %41 = arith.truncf %40 : vector<4x16xf32> to vector<4x16xbf16>
    %42 = vector.extract_strided_slice %15 {offsets = [0, 8], sizes = [4, 8], strides = [1, 1]} : vector<4x32xf32> to vector<4x8xf32>
    %43 = arith.truncf %42 : vector<4x8xf32> to vector<4x8xbf16>
    %cst_15 = arith.constant dense<0.000000e+00> : vector<4x4xf32>
    %44 = tpu.matmul %39, %41, %cst_15 {dimension_numbers = #tpu.dot_dimension_numbers<[1], [1], [0], [0], [0, 0, 1, 0], [], []>} : vector<4x16xbf16>, vector<4x16xbf16>, vector<4x4xf32> -> vector<4x4xf32>
    %cst_16 = arith.constant dense<0xFF800000> : vector<4xf32>
    %45 = vector.multi_reduction <maximumf>, %44, %cst_16 [1] : vector<4x4xf32> to vector<4xf32>
    %46 = vector.shape_cast %45 : vector<4xf32> to vector<4x1xf32>
    %47 = vector.broadcast %46 : vector<4x1xf32> to vector<4x4xf32>
    %48 = arith.subf %44, %47 : vector<4x4xf32>
    %49 = math.exp %48 : vector<4x4xf32>
    %cst_17 = arith.constant dense<0.000000e+00> : vector<4xf32>
    %50 = vector.multi_reduction <add>, %49, %cst_17 [1] : vector<4x4xf32> to vector<4xf32>
    %51 = vector.shape_cast %50 : vector<4xf32> to vector<4x1xf32>
    %52 = vector.broadcast %51 : vector<4x1xf32> to vector<4x4xf32>
    %53 = arith.divf %49, %52 : vector<4x4xf32>
    %54 = arith.truncf %53 : vector<4x4xf32> to vector<4x4xbf16>
    %cst_18 = arith.constant dense<0.000000e+00> : vector<4x8xf32>
    %55 = tpu.matmul %54, %43, %cst_18 {dimension_numbers = #tpu.dot_dimension_numbers<[1], [0], [0], [1], [0, 0, 1, 1], [], []>} : vector<4x4xbf16>, vector<4x8xbf16>, vector<4x8xf32> -> vector<4x8xf32>
    %56 = vector.extract_strided_slice %12 {offsets = [0, 32], sizes = [4, 16], strides = [1, 1]} : vector<4x64xf32> to vector<4x16xf32>
    %cst_19 = arith.constant 2.500000e-01 : f32
    %57 = vector.broadcast %cst_19 : f32 to vector<4x16xf32>
    %58 = arith.mulf %56, %57 : vector<4x16xf32>
    %59 = arith.truncf %58 : vector<4x16xf32> to vector<4x16xbf16>
    %60 = vector.extract_strided_slice %14 {offsets = [0, 32], sizes = [4, 16], strides = [1, 1]} : vector<4x64xf32> to vector<4x16xf32>
    %61 = arith.truncf %60 : vector<4x16xf32> to vector<4x16xbf16>
    %62 = vector.extract_strided_slice %15 {offsets = [0, 16], sizes = [4, 8], strides = [1, 1]} : vector<4x32xf32> to vector<4x8xf32>
    %63 = arith.truncf %62 : vector<4x8xf32> to vector<4x8xbf16>
    %cst_20 = arith.constant dense<0.000000e+00> : vector<4x4xf32>
    %64 = tpu.matmul %59, %61, %cst_20 {dimension_numbers = #tpu.dot_dimension_numbers<[1], [1], [0], [0], [0, 0, 1, 0], [], []>} : vector<4x16xbf16>, vector<4x16xbf16>, vector<4x4xf32> -> vector<4x4xf32>
    %cst_21 = arith.constant dense<0xFF800000> : vector<4xf32>
    %65 = vector.multi_reduction <maximumf>, %64, %cst_21 [1] : vector<4x4xf32> to vector<4xf32>
    %66 = vector.shape_cast %65 : vector<4xf32> to vector<4x1xf32>
    %67 = vector.broadcast %66 : vector<4x1xf32> to vector<4x4xf32>
    %68 = arith.subf %64, %67 : vector<4x4xf32>
    %69 = math.exp %68 : vector<4x4xf32>
    %cst_22 = arith.constant dense<0.000000e+00> : vector<4xf32>
    %70 = vector.multi_reduction <add>, %69, %cst_22 [1] : vector<4x4xf32> to vector<4xf32>
    %71 = vector.shape_cast %70 : vector<4xf32> to vector<4x1xf32>
    %72 = vector.broadcast %71 : vector<4x1xf32> to vector<4x4xf32>
    %73 = arith.divf %69, %72 : vector<4x4xf32>
    %74 = arith.truncf %73 : vector<4x4xf32> to vector<4x4xbf16>
    %cst_23 = arith.constant dense<0.000000e+00> : vector<4x8xf32>
    %75 = tpu.matmul %74, %63, %cst_23 {dimension_numbers = #tpu.dot_dimension_numbers<[1], [0], [0], [1], [0, 0, 1, 1], [], []>} : vector<4x4xbf16>, vector<4x8xbf16>, vector<4x8xf32> -> vector<4x8xf32>
    %76 = vector.extract_strided_slice %12 {offsets = [0, 48], sizes = [4, 16], strides = [1, 1]} : vector<4x64xf32> to vector<4x16xf32>
    %cst_24 = arith.constant 2.500000e-01 : f32
    %77 = vector.broadcast %cst_24 : f32 to vector<4x16xf32>
    %78 = arith.mulf %76, %77 : vector<4x16xf32>
    %79 = arith.truncf %78 : vector<4x16xf32> to vector<4x16xbf16>
    %80 = vector.extract_strided_slice %14 {offsets = [0, 48], sizes = [4, 16], strides = [1, 1]} : vector<4x64xf32> to vector<4x16xf32>
    %81 = arith.truncf %80 : vector<4x16xf32> to vector<4x16xbf16>
    %82 = vector.extract_strided_slice %15 {offsets = [0, 24], sizes = [4, 8], strides = [1, 1]} : vector<4x32xf32> to vector<4x8xf32>
    %83 = arith.truncf %82 : vector<4x8xf32> to vector<4x8xbf16>
    %cst_25 = arith.constant dense<0.000000e+00> : vector<4x4xf32>
    %84 = tpu.matmul %79, %81, %cst_25 {dimension_numbers = #tpu.dot_dimension_numbers<[1], [1], [0], [0], [0, 0, 1, 0], [], []>} : vector<4x16xbf16>, vector<4x16xbf16>, vector<4x4xf32> -> vector<4x4xf32>
    %cst_26 = arith.constant dense<0xFF800000> : vector<4xf32>
    %85 = vector.multi_reduction <maximumf>, %84, %cst_26 [1] : vector<4x4xf32> to vector<4xf32>
    %86 = vector.shape_cast %85 : vector<4xf32> to vector<4x1xf32>
    %87 = vector.broadcast %86 : vector<4x1xf32> to vector<4x4xf32>
    %88 = arith.subf %84, %87 : vector<4x4xf32>
    %89 = math.exp %88 : vector<4x4xf32>
    %cst_27 = arith.constant dense<0.000000e+00> : vector<4xf32>
    %90 = vector.multi_reduction <add>, %89, %cst_27 [1] : vector<4x4xf32> to vector<4xf32>
    %91 = vector.shape_cast %90 : vector<4xf32> to vector<4x1xf32>
    %92 = vector.broadcast %91 : vector<4x1xf32> to vector<4x4xf32>
    %93 = arith.divf %89, %92 : vector<4x4xf32>
    %94 = arith.truncf %93 : vector<4x4xf32> to vector<4x4xbf16>
    %cst_28 = arith.constant dense<0.000000e+00> : vector<4x8xf32>
    %95 = tpu.matmul %94, %83, %cst_28 {dimension_numbers = #tpu.dot_dimension_numbers<[1], [0], [0], [1], [0, 0, 1, 1], [], []>} : vector<4x4xbf16>, vector<4x8xbf16>, vector<4x8xf32> -> vector<4x8xf32>
    %96 = tpu.concatenate %35, %55, %75, %95 in 1 : vector<4x8xf32>, vector<4x8xf32>, vector<4x8xf32>, vector<4x8xf32> -> vector<4x32xf32>
    %c0_29 = arith.constant 0 : index
    %c0_30 = arith.constant 0 : index
    %97 = vector.load %arg5[%c0_29, %c0_30] : memref<32x32xbf16, #tpu.memory_space<vmem>>, vector<32x32xbf16>
    %98 = arith.truncf %96 : vector<4x32xf32> to vector<4x32xbf16>
    %cst_31 = arith.constant dense<0.000000e+00> : vector<4x32xf32>
    %99 = tpu.matmul %98, %97, %cst_31 {dimension_numbers = #tpu.dot_dimension_numbers<[1], [0], [0], [1], [0, 0, 1, 1], [], []>} : vector<4x32xbf16>, vector<32x32xbf16>, vector<4x32xf32> -> vector<4x32xf32>
    %c0_32 = arith.constant 0 : index
    %c0_33 = arith.constant 0 : index
    %100 = vector.load %arg6[%c0_32, %c0_33] : memref<1x32xf32, #tpu.memory_space<vmem>>, vector<1x32xf32>
    %101 = vector.broadcast %100 : vector<1x32xf32> to vector<4x32xf32>
    %102 = arith.addf %99, %101 : vector<4x32xf32>
    %c0_34 = arith.constant 0 : index
    %c0_35 = arith.constant 0 : index
    %103 = vector.load %arg7[%c0_34, %c0_35] : memref<32x96xbf16, #tpu.memory_space<vmem>>, vector<32x96xbf16>
    %c0_36 = arith.constant 0 : index
    %c0_37 = arith.constant 0 : index
    %104 = vector.load %arg8[%c0_36, %c0_37] : memref<32x64xbf16, #tpu.memory_space<vmem>>, vector<32x64xbf16>
    %c0_38 = arith.constant 0 : index
    %c0_39 = arith.constant 0 : index
    %105 = vector.load %arg9[%c0_38, %c0_39] : memref<32x32xbf16, #tpu.memory_space<vmem>>, vector<32x32xbf16>
    %106 = arith.truncf %102 : vector<4x32xf32> to vector<4x32xbf16>
    %cst_40 = arith.constant dense<0.000000e+00> : vector<4x96xf32>
    %107 = tpu.matmul %106, %103, %cst_40 {dimension_numbers = #tpu.dot_dimension_numbers<[1], [0], [0], [1], [0, 0, 1, 1], [], []>} : vector<4x32xbf16>, vector<32x96xbf16>, vector<4x96xf32> -> vector<4x96xf32>
    %108 = arith.truncf %1 : vector<4x32xf32> to vector<4x32xbf16>
    %cst_41 = arith.constant dense<0.000000e+00> : vector<4x64xf32>
    %109 = tpu.matmul %108, %104, %cst_41 {dimension_numbers = #tpu.dot_dimension_numbers<[1], [0], [0], [1], [0, 0, 1, 1], [], []>} : vector<4x32xbf16>, vector<32x64xbf16>, vector<4x64xf32> -> vector<4x64xf32>
    %110 = vector.extract_strided_slice %107 {offsets = [0, 0], sizes = [4, 32], strides = [1, 1]} : vector<4x96xf32> to vector<4x32xf32>
    %111 = vector.extract_strided_slice %109 {offsets = [0, 0], sizes = [4, 32], strides = [1, 1]} : vector<4x64xf32> to vector<4x32xf32>
    %112 = arith.addf %110, %111 : vector<4x32xf32>
    %113 = arith.negf %112 : vector<4x32xf32>
    %114 = math.exp %113 : vector<4x32xf32>
    %cst_42 = arith.constant 1.000000e+00 : f32
    %115 = vector.broadcast %cst_42 : f32 to vector<4x32xf32>
    %116 = arith.addf %115, %114 : vector<4x32xf32>
    %117 = arith.divf %115, %116 : vector<4x32xf32>
    %118 = vector.extract_strided_slice %107 {offsets = [0, 32], sizes = [4, 32], strides = [1, 1]} : vector<4x96xf32> to vector<4x32xf32>
    %119 = vector.extract_strided_slice %109 {offsets = [0, 32], sizes = [4, 32], strides = [1, 1]} : vector<4x64xf32> to vector<4x32xf32>
    %120 = arith.addf %118, %119 : vector<4x32xf32>
    %cst_43 = arith.constant 2.000000e+00 : f32
    %121 = vector.broadcast %cst_43 : f32 to vector<4x32xf32>
    %122 = arith.subf %120, %121 : vector<4x32xf32>
    %123 = arith.negf %122 : vector<4x32xf32>
    %124 = math.exp %123 : vector<4x32xf32>
    %cst_44 = arith.constant 1.000000e+00 : f32
    %125 = vector.broadcast %cst_44 : f32 to vector<4x32xf32>
    %126 = arith.addf %125, %124 : vector<4x32xf32>
    %127 = arith.divf %125, %126 : vector<4x32xf32>
    %128 = vector.extract_strided_slice %107 {offsets = [0, 64], sizes = [4, 32], strides = [1, 1]} : vector<4x96xf32> to vector<4x32xf32>
    %129 = arith.mulf %1, %117 : vector<4x32xf32>
    %130 = arith.truncf %129 : vector<4x32xf32> to vector<4x32xbf16>
    %cst_45 = arith.constant dense<0.000000e+00> : vector<4x32xf32>
    %131 = tpu.matmul %130, %105, %cst_45 {dimension_numbers = #tpu.dot_dimension_numbers<[1], [0], [0], [1], [0, 0, 1, 1], [], []>} : vector<4x32xbf16>, vector<32x32xbf16>, vector<4x32xf32> -> vector<4x32xf32>
    %132 = arith.addf %128, %131 : vector<4x32xf32>
    %133 = math.tanh %132 : vector<4x32xf32>
    %cst_46 = arith.constant 1.000000e+00 : f32
    %134 = vector.broadcast %cst_46 : f32 to vector<4x32xf32>
    %135 = arith.subf %134, %127 : vector<4x32xf32>
    %136 = arith.mulf %135, %1 : vector<4x32xf32>
    %137 = arith.mulf %127, %133 : vector<4x32xf32>
    %138 = arith.addf %136, %137 : vector<4x32xf32>
    %c0_47 = arith.constant 0 : index
    %c0_48 = arith.constant 0 : index
    %139 = vector.load %arg10[%c0_47, %c0_48] : memref<1x32xf32, #tpu.memory_space<vmem>>, vector<1x32xf32>
    %c0_49 = arith.constant 0 : index
    %c0_50 = arith.constant 0 : index
    %140 = vector.load %arg11[%c0_49, %c0_50] : memref<1x32xf32, #tpu.memory_space<vmem>>, vector<1x32xf32>
    %cst_51 = arith.constant dense<0.000000e+00> : vector<4xf32>
    %141 = vector.multi_reduction <add>, %138, %cst_51 [1] : vector<4x32xf32> to vector<4xf32>
    %142 = vector.shape_cast %141 : vector<4xf32> to vector<4x1xf32>
    %cst_52 = arith.constant 3.200000e+01 : f32
    %143 = vector.broadcast %cst_52 : f32 to vector<4x1xf32>
    %144 = arith.divf %142, %143 : vector<4x1xf32>
    %145 = vector.broadcast %144 : vector<4x1xf32> to vector<4x32xf32>
    %146 = arith.subf %138, %145 : vector<4x32xf32>
    %147 = arith.mulf %146, %146 : vector<4x32xf32>
    %cst_53 = arith.constant dense<0.000000e+00> : vector<4xf32>
    %148 = vector.multi_reduction <add>, %147, %cst_53 [1] : vector<4x32xf32> to vector<4xf32>
    %149 = vector.shape_cast %148 : vector<4xf32> to vector<4x1xf32>
    %cst_54 = arith.constant 3.200000e+01 : f32
    %150 = vector.broadcast %cst_54 : f32 to vector<4x1xf32>
    %151 = arith.divf %149, %150 : vector<4x1xf32>
    %cst_55 = arith.constant 9.99999997E-7 : f32
    %152 = vector.broadcast %cst_55 : f32 to vector<4x1xf32>
    %153 = arith.addf %151, %152 : vector<4x1xf32>
    %154 = math.rsqrt %153 : vector<4x1xf32>
    %155 = vector.broadcast %154 : vector<4x1xf32> to vector<4x32xf32>
    %156 = arith.mulf %146, %155 : vector<4x32xf32>
    %157 = vector.broadcast %139 : vector<1x32xf32> to vector<4x32xf32>
    %158 = arith.mulf %156, %157 : vector<4x32xf32>
    %159 = vector.broadcast %140 : vector<1x32xf32> to vector<4x32xf32>
    %160 = arith.addf %158, %159 : vector<4x32xf32>
    %c0_56 = arith.constant 0 : index
    %c0_57 = arith.constant 0 : index
    %161 = vector.load %arg12[%c0_56, %c0_57] : memref<32x32xbf16, #tpu.memory_space<vmem>>, vector<32x32xbf16>
    %162 = arith.truncf %160 : vector<4x32xf32> to vector<4x32xbf16>
    %cst_58 = arith.constant dense<0.000000e+00> : vector<4x32xf32>
    %163 = tpu.matmul %162, %161, %cst_58 {dimension_numbers = #tpu.dot_dimension_numbers<[1], [0], [0], [1], [0, 0, 1, 1], [], []>} : vector<4x32xbf16>, vector<32x32xbf16>, vector<4x32xf32> -> vector<4x32xf32>
    %c0_59 = arith.constant 0 : index
    %c0_60 = arith.constant 0 : index
    %164 = vector.load %arg13[%c0_59, %c0_60] : memref<1x32xf32, #tpu.memory_space<vmem>>, vector<1x32xf32>
    %165 = vector.broadcast %164 : vector<1x32xf32> to vector<4x32xf32>
    %166 = arith.addf %163, %165 : vector<4x32xf32>
    %cst_61 = arith.constant 0.000000e+00 : f32
    %167 = vector.broadcast %cst_61 : f32 to vector<4x32xf32>
    %168 = arith.maximumf %166, %167 : vector<4x32xf32>
    %c0_62 = arith.constant 0 : index
    %c0_63 = arith.constant 0 : index
    %169 = vector.load %arg14[%c0_62, %c0_63] : memref<32x32xbf16, #tpu.memory_space<vmem>>, vector<32x32xbf16>
    %170 = arith.truncf %168 : vector<4x32xf32> to vector<4x32xbf16>
    %cst_64 = arith.constant dense<0.000000e+00> : vector<4x32xf32>
    %171 = tpu.matmul %170, %169, %cst_64 {dimension_numbers = #tpu.dot_dimension_numbers<[1], [0], [0], [1], [0, 0, 1, 1], [], []>} : vector<4x32xbf16>, vector<32x32xbf16>, vector<4x32xf32> -> vector<4x32xf32>
    %c0_65 = arith.constant 0 : index
    %c0_66 = arith.constant 0 : index
    %172 = vector.load %arg15[%c0_65, %c0_66] : memref<1x32xf32, #tpu.memory_space<vmem>>, vector<1x32xf32>
    %173 = vector.broadcast %172 : vector<1x32xf32> to vector<4x32xf32>
    %174 = arith.addf %171, %173 : vector<4x32xf32>
    %c0_67 = arith.constant 0 : index
    %c0_68 = arith.constant 0 : index
    %175 = vector.load %arg16[%c0_67, %c0_68] : memref<32x96xbf16, #tpu.memory_space<vmem>>, vector<32x96xbf16>
    %c0_69 = arith.constant 0 : index
    %c0_70 = arith.constant 0 : index
    %176 = vector.load %arg17[%c0_69, %c0_70] : memref<32x64xbf16, #tpu.memory_space<vmem>>, vector<32x64xbf16>
    %c0_71 = arith.constant 0 : index
    %c0_72 = arith.constant 0 : index
    %177 = vector.load %arg18[%c0_71, %c0_72] : memref<32x32xbf16, #tpu.memory_space<vmem>>, vector<32x32xbf16>
    %178 = arith.truncf %174 : vector<4x32xf32> to vector<4x32xbf16>
    %cst_73 = arith.constant dense<0.000000e+00> : vector<4x96xf32>
    %179 = tpu.matmul %178, %175, %cst_73 {dimension_numbers = #tpu.dot_dimension_numbers<[1], [0], [0], [1], [0, 0, 1, 1], [], []>} : vector<4x32xbf16>, vector<32x96xbf16>, vector<4x96xf32> -> vector<4x96xf32>
    %180 = arith.truncf %138 : vector<4x32xf32> to vector<4x32xbf16>
    %cst_74 = arith.constant dense<0.000000e+00> : vector<4x64xf32>
    %181 = tpu.matmul %180, %176, %cst_74 {dimension_numbers = #tpu.dot_dimension_numbers<[1], [0], [0], [1], [0, 0, 1, 1], [], []>} : vector<4x32xbf16>, vector<32x64xbf16>, vector<4x64xf32> -> vector<4x64xf32>
    %182 = vector.extract_strided_slice %179 {offsets = [0, 0], sizes = [4, 32], strides = [1, 1]} : vector<4x96xf32> to vector<4x32xf32>
    %183 = vector.extract_strided_slice %181 {offsets = [0, 0], sizes = [4, 32], strides = [1, 1]} : vector<4x64xf32> to vector<4x32xf32>
    %184 = arith.addf %182, %183 : vector<4x32xf32>
    %185 = arith.negf %184 : vector<4x32xf32>
    %186 = math.exp %185 : vector<4x32xf32>
    %cst_75 = arith.constant 1.000000e+00 : f32
    %187 = vector.broadcast %cst_75 : f32 to vector<4x32xf32>
    %188 = arith.addf %187, %186 : vector<4x32xf32>
    %189 = arith.divf %187, %188 : vector<4x32xf32>
    %190 = vector.extract_strided_slice %179 {offsets = [0, 32], sizes = [4, 32], strides = [1, 1]} : vector<4x96xf32> to vector<4x32xf32>
    %191 = vector.extract_strided_slice %181 {offsets = [0, 32], sizes = [4, 32], strides = [1, 1]} : vector<4x64xf32> to vector<4x32xf32>
    %192 = arith.addf %190, %191 : vector<4x32xf32>
    %cst_76 = arith.constant 2.000000e+00 : f32
    %193 = vector.broadcast %cst_76 : f32 to vector<4x32xf32>
    %194 = arith.subf %192, %193 : vector<4x32xf32>
    %195 = arith.negf %194 : vector<4x32xf32>
    %196 = math.exp %195 : vector<4x32xf32>
    %cst_77 = arith.constant 1.000000e+00 : f32
    %197 = vector.broadcast %cst_77 : f32 to vector<4x32xf32>
    %198 = arith.addf %197, %196 : vector<4x32xf32>
    %199 = arith.divf %197, %198 : vector<4x32xf32>
    %200 = vector.extract_strided_slice %179 {offsets = [0, 64], sizes = [4, 32], strides = [1, 1]} : vector<4x96xf32> to vector<4x32xf32>
    %201 = arith.mulf %138, %189 : vector<4x32xf32>
    %202 = arith.truncf %201 : vector<4x32xf32> to vector<4x32xbf16>
    %cst_78 = arith.constant dense<0.000000e+00> : vector<4x32xf32>
    %203 = tpu.matmul %202, %177, %cst_78 {dimension_numbers = #tpu.dot_dimension_numbers<[1], [0], [0], [1], [0, 0, 1, 1], [], []>} : vector<4x32xbf16>, vector<32x32xbf16>, vector<4x32xf32> -> vector<4x32xf32>
    %204 = arith.addf %200, %203 : vector<4x32xf32>
    %205 = math.tanh %204 : vector<4x32xf32>
    %cst_79 = arith.constant 1.000000e+00 : f32
    %206 = vector.broadcast %cst_79 : f32 to vector<4x32xf32>
    %207 = arith.subf %206, %199 : vector<4x32xf32>
    %208 = arith.mulf %207, %138 : vector<4x32xf32>
    %209 = arith.mulf %199, %205 : vector<4x32xf32>
    %210 = arith.addf %208, %209 : vector<4x32xf32>
    %c0_80 = arith.constant 0 : index
    %c0_81 = arith.constant 0 : index
    %211 = vector.load %arg19[%c0_80, %c0_81] : memref<1x32xf32, #tpu.memory_space<vmem>>, vector<1x32xf32>
    %c0_82 = arith.constant 0 : index
    %c0_83 = arith.constant 0 : index
    %212 = vector.load %arg20[%c0_82, %c0_83] : memref<1x32xf32, #tpu.memory_space<vmem>>, vector<1x32xf32>
    %cst_84 = arith.constant dense<0.000000e+00> : vector<4xf32>
    %213 = vector.multi_reduction <add>, %210, %cst_84 [1] : vector<4x32xf32> to vector<4xf32>
    %214 = vector.shape_cast %213 : vector<4xf32> to vector<4x1xf32>
    %cst_85 = arith.constant 3.200000e+01 : f32
    %215 = vector.broadcast %cst_85 : f32 to vector<4x1xf32>
    %216 = arith.divf %214, %215 : vector<4x1xf32>
    %217 = vector.broadcast %216 : vector<4x1xf32> to vector<4x32xf32>
    %218 = arith.subf %210, %217 : vector<4x32xf32>
    %219 = arith.mulf %218, %218 : vector<4x32xf32>
    %cst_86 = arith.constant dense<0.000000e+00> : vector<4xf32>
    %220 = vector.multi_reduction <add>, %219, %cst_86 [1] : vector<4x32xf32> to vector<4xf32>
    %221 = vector.shape_cast %220 : vector<4xf32> to vector<4x1xf32>
    %cst_87 = arith.constant 3.200000e+01 : f32
    %222 = vector.broadcast %cst_87 : f32 to vector<4x1xf32>
    %223 = arith.divf %221, %222 : vector<4x1xf32>
    %cst_88 = arith.constant 9.99999997E-7 : f32
    %224 = vector.broadcast %cst_88 : f32 to vector<4x1xf32>
    %225 = arith.addf %223, %224 : vector<4x1xf32>
    %226 = math.rsqrt %225 : vector<4x1xf32>
    %227 = vector.broadcast %226 : vector<4x1xf32> to vector<4x32xf32>
    %228 = arith.mulf %218, %227 : vector<4x32xf32>
    %229 = vector.broadcast %211 : vector<1x32xf32> to vector<4x32xf32>
    %230 = arith.mulf %228, %229 : vector<4x32xf32>
    %231 = vector.broadcast %212 : vector<1x32xf32> to vector<4x32xf32>
    %232 = arith.addf %230, %231 : vector<4x32xf32>
    %c0_89 = arith.constant 0 : index
    %c0_90 = arith.constant 0 : index
    %c0_91 = arith.constant 0 : index
    %233 = vector.load %arg21[%c0_89, %c0_90, %c0_91] : memref<1x4x32xf32, #tpu.memory_space<vmem>>, vector<1x4x32xf32>
    %234 = vector.shape_cast %233 : vector<1x4x32xf32> to vector<4x32xf32>
    %235 = vector.shape_cast %232 : vector<4x32xf32> to vector<1x4x32xf32>
    tpu.vector_store %arg21[%c0_89, %c0_90, %c0_91], %235 {strides = array<i32>} : memref<1x4x32xf32, #tpu.memory_space<vmem>>, vector<1x4x32xf32>,
    %c0_92 = arith.constant 0 : index
    %c0_93 = arith.constant 0 : index
    %c0_94 = arith.constant 0 : index
    %236 = vector.load %arg22[%c0_92, %c0_93, %c0_94] : memref<1x4x32xf32, #tpu.memory_space<vmem>>, vector<1x4x32xf32>
    %237 = vector.shape_cast %236 : vector<1x4x32xf32> to vector<4x32xf32>
    %238 = vector.shape_cast %102 : vector<4x32xf32> to vector<1x4x32xf32>
    tpu.vector_store %arg22[%c0_92, %c0_93, %c0_94], %238 {strides = array<i32>} : memref<1x4x32xf32, #tpu.memory_space<vmem>>, vector<1x4x32xf32>,
    return
  }
  func.func @transform_0(%arg0: i32) -> (i32, i32, i32) {
    %c0_i32 = arith.constant 0 : i32
    %c0_i32_0 = arith.constant 0 : i32
    %c0_i32_1 = arith.constant 0 : i32
    return %arg0, %c0_i32, %c0_i32_0 : i32, i32, i32
  }
  func.func @transform_1(%arg0: i32) -> (i32, i32, i32) {
    %c0_i32 = arith.constant 0 : i32
    %c0_i32_0 = arith.constant 0 : i32
    %c0_i32_1 = arith.constant 0 : i32
    return %arg0, %c0_i32, %c0_i32_0 : i32, i32, i32
  }
  func.func @transform_2(%arg0: i32) -> (i32, i32) {
    %c0_i32 = arith.constant 0 : i32
    %c0_i32_0 = arith.constant 0 : i32
    %c0_i32_1 = arith.constant 0 : i32
    return %c0_i32, %c0_i32_0 : i32, i32
  }
  func.func @transform_3(%arg0: i32) -> (i32, i32) {
    %c0_i32 = arith.constant 0 : i32
    %c0_i32_0 = arith.constant 0 : i32
    %c0_i32_1 = arith.constant 0 : i32
    return %c0_i32, %c0_i32_0 : i32, i32
  }
  func.func @transform_4(%arg0: i32) -> (i32, i32) {
    %c0_i32 = arith.constant 0 : i32
    %c0_i32_0 = arith.constant 0 : i32
    %c0_i32_1 = arith.constant 0 : i32
    return %c0_i32, %c0_i32_0 : i32, i32
  }
  func.func @transform_5(%arg0: i32) -> (i32, i32) {
    %c0_i32 = arith.constant 0 : i32
    %c0_i32_0 = arith.constant 0 : i32
    %c0_i32_1 = arith.constant 0 : i32
    return %c0_i32, %c0_i32_0 : i32, i32
  }
  func.func @transform_6(%arg0: i32) -> (i32, i32) {
    %c0_i32 = arith.constant 0 : i32
    %c0_i32_0 = arith.constant 0 : i32
    %c0_i32_1 = arith.constant 0 : i32
    return %c0_i32, %c0_i32_0 : i32, i32
  }
  func.func @transform_7(%arg0: i32) -> (i32, i32) {
    %c0_i32 = arith.constant 0 : i32
    %c0_i32_0 = arith.constant 0 : i32
    %c0_i32_1 = arith.constant 0 : i32
    return %c0_i32, %c0_i32_0 : i32, i32
  }
  func.func @transform_8(%arg0: i32) -> (i32, i32) {
    %c0_i32 = arith.constant 0 : i32
    %c0_i32_0 = arith.constant 0 : i32
    %c0_i32_1 = arith.constant 0 : i32
    return %c0_i32, %c0_i32_0 : i32, i32
  }
  func.func @transform_9(%arg0: i32) -> (i32, i32) {
    %c0_i32 = arith.constant 0 : i32
    %c0_i32_0 = arith.constant 0 : i32
    %c0_i32_1 = arith.constant 0 : i32
    return %c0_i32, %c0_i32_0 : i32, i32
  }
  func.func @transform_10(%arg0: i32) -> (i32, i32) {
    %c0_i32 = arith.constant 0 : i32
    %c0_i32_0 = arith.constant 0 : i32
    %c0_i32_1 = arith.constant 0 : i32
    return %c0_i32, %c0_i32_0 : i32, i32
  }
  func.func @transform_11(%arg0: i32) -> (i32, i32) {
    %c0_i32 = arith.constant 0 : i32
    %c0_i32_0 = arith.constant 0 : i32
    %c0_i32_1 = arith.constant 0 : i32
    return %c0_i32, %c0_i32_0 : i32, i32
  }
  func.func @transform_12(%arg0: i32) -> (i32, i32) {
    %c0_i32 = arith.constant 0 : i32
    %c0_i32_0 = arith.constant 0 : i32
    %c0_i32_1 = arith.constant 0 : i32
    return %c0_i32, %c0_i32_0 : i32, i32
  }
  func.func @transform_13(%arg0: i32) -> (i32, i32) {
    %c0_i32 = arith.constant 0 : i32
    %c0_i32_0 = arith.constant 0 : i32
    %c0_i32_1 = arith.constant 0 : i32
    return %c0_i32, %c0_i32_0 : i32, i32
  }
  func.func @transform_14(%arg0: i32) -> (i32, i32) {
    %c0_i32 = arith.constant 0 : i32
    %c0_i32_0 = arith.constant 0 : i32
    %c0_i32_1 = arith.constant 0 : i32
    return %c0_i32, %c0_i32_0 : i32, i32
  }
  func.func @transform_15(%arg0: i32) -> (i32, i32) {
    %c0_i32 = arith.constant 0 : i32
    %c0_i32_0 = arith.constant 0 : i32
    %c0_i32_1 = arith.constant 0 : i32
    return %c0_i32, %c0_i32_0 : i32, i32
  }
  func.func @transform_16(%arg0: i32) -> (i32, i32) {
    %c0_i32 = arith.constant 0 : i32
    %c0_i32_0 = arith.constant 0 : i32
    %c0_i32_1 = arith.constant 0 : i32
    return %c0_i32, %c0_i32_0 : i32, i32
  }
  func.func @transform_17(%arg0: i32) -> (i32, i32) {
    %c0_i32 = arith.constant 0 : i32
    %c0_i32_0 = arith.constant 0 : i32
    %c0_i32_1 = arith.constant 0 : i32
    return %c0_i32, %c0_i32_0 : i32, i32
  }
  func.func @transform_18(%arg0: i32) -> (i32, i32) {
    %c0_i32 = arith.constant 0 : i32
    %c0_i32_0 = arith.constant 0 : i32
    %c0_i32_1 = arith.constant 0 : i32
    return %c0_i32, %c0_i32_0 : i32, i32
  }
  func.func @transform_19(%arg0: i32) -> (i32, i32) {
    %c0_i32 = arith.constant 0 : i32
    %c0_i32_0 = arith.constant 0 : i32
    %c0_i32_1 = arith.constant 0 : i32
    return %c0_i32, %c0_i32_0 : i32, i32
  }
  func.func @transform_20(%arg0: i32) -> (i32, i32, i32) {
    %c0_i32 = arith.constant 0 : i32
    %c0_i32_0 = arith.constant 0 : i32
    %c0_i32_1 = arith.constant 0 : i32
    return %arg0, %c0_i32, %c0_i32_0 : i32, i32, i32
  }
  func.func @transform_21(%arg0: i32) -> (i32, i32, i32) {
    %c0_i32 = arith.constant 0 : i32
    %c0_i32_0 = arith.constant 0 : i32
    %c0_i32_1 = arith.constant 0 : i32
    return %arg0, %c0_i32, %c0_i32_0 : i32, i32, i32
  }
}

</mosaic_0001>

<llo_original>
// kernel: transformer_intention_layer.7
$region0: #{transformer_intention_layer.7}
  #allocation0 [shape = 'u32[]', space=smem, size = 0x4, offset = 0x4, fixed_abs, tag = 'smem constant byte address 0x4 - core index']
  #allocation1 [shape = 'u32[144,128]{1,0:T(1,128)}', space=vmem, size = 0x12000, scoped, tag = 'internal scratch']
  %s0 = inlined_call_operand.vmem [shape: f32[16,32], index: 0, kind: input, shape index: {}]
  %s1 = inlined_call_operand.vmem [shape: bf16[32,64], index: 1, kind: input, shape index: {}]
  %s2 = inlined_call_operand.vmem [shape: f32[1,64], index: 2, kind: input, shape index: {}]
  %s3 = inlined_call_operand.vmem [shape: bf16[16,32], index: 3, kind: output, shape index: {0}]
  %s4 = inlined_call_operand.vmem [shape: bf16[16,32], index: 4, kind: output, shape index: {1}]
  %5 = xla_tuple %s3, %s4
  %s6 = sld [smem:[#allocation0]]
  $region30: #{transformer_intention_layer.7} parent=0
    _
  %s8 = ssub.s32 1, %s6
  %s9 = scalar_select 0, %s8, %s6
  // Predicated region
  $region2: #{transformer_intention_layer.7} parent=0 // pred_check
    _
  $region3: #{transformer_intention_layer.7} parent=0 // pred_check_branch
    %11 = sbr.rel (0) target = $region5
  $region4: #{transformer_intention_layer.7} parent=0 // pred_region
    _
  $region5: #{transformer_intention_layer.7} parent=0 // pred_fallthru
    _
  // Predicated region
  $region6: #{transformer_intention_layer.7} parent=0 // pred_check
    _
  $region7: #{transformer_intention_layer.7} parent=0 // pred_check_branch
    %13 = sbr.rel (0) target = $region9
  $region8: #{transformer_intention_layer.7} parent=0 // pred_region
    _
  $region9: #{transformer_intention_layer.7} parent=0 // pred_fallthru
    _
  // Predicated region
  $region10: #{transformer_intention_layer.7} parent=0 // pred_check
    _
  $region11: #{transformer_intention_layer.7} parent=0 // pred_check_branch
    %15 = sbr.rel (0) target = $region13
  $region12: #{transformer_intention_layer.7} parent=0 // pred_region
    _
  $region13: #{transformer_intention_layer.7} parent=0 // pred_fallthru
    _
  %v17 = vld [vmem:[%s0] sm:$0xff]
  %v18 = vld [vmem:[%s0 + $0x8] sm:$0xff]
  %v19 = vld [vmem:[%s1] sm:$0xf]
  %v20 = vld [vmem:[%s1 + $0x4] sm:$0xf]
  %v21 = vld [vmem:[%s1 + $0x8] sm:$0xf]
  %v22 = vld [vmem:[%s1 + $0xc] sm:$0xf]
  %v23 = vpack.c.bf16 %v18, %v17
  %v24 = vld [vmem:[%s2] sm:$0x1]
  %v26 = vlaneseq
  %v27 = vshrl.u32 %v26, 7
  %v28 = vsub.s32 0, %v27
  %v29 = vrot.slane %v24, %v28
  %v35 = vunpack.c.l.b16 %v19
  %v36 = vunpack.c.l.b16 %v20
  %v37 = vunpack.c.l.b16 %v21
  %v38 = vunpack.c.l.b16 %v22
  %v39 = vpack.c.b16 %v36, %v35
  %v40 = vpack.c.b16 %v38, %v37
  %vm43 = vcmask 261120
  %v45 = vsel %vm43, %v23, 0
  %47 = vmatprep.subr.bf16.mxu0 0
  %48 = vmatpush1.bf16.msra.mxu0 %v39
  %49 = vmatprep.subr.bf16.mxu0 0
  %50 = vmatpush1.bf16.msra.mxu0 %v40
  %51 = vmatprep.subr.bf16.mxu0 0
  %52 = vmatpush1.bf16.msra.mxu0 0
  %53 = vmatprep.subr.bf16.mxu0 0
  %54 = vmatpush1.bf16.msra.mxu0 0
  %55 = vmatprep.subr.bf16.mxu0 0
  %56 = vmatpush1.bf16.msra.mxu0 0
  %57 = vmatprep.subr.bf16.mxu0 0
  %58 = vmatpush1.bf16.msra.mxu0 0
  %59 = vmatprep.subr.bf16.mxu0 0
  %60 = vmatpush1.bf16.msra.mxu0 0
  %61 = vmatprep.subr.bf16.mxu0 0
  %62 = vmatpush1.bf16.msra.mxu0 0
  %63 = vmatprep.subr.bf16.mxu0 0
  %64 = vmatpush1.bf16.msra.mxu0 0
  %65 = vmatprep.subr.bf16.mxu0 0
  %66 = vmatpush1.bf16.msra.mxu0 0
  %67 = vmatprep.subr.bf16.mxu0 0
  %68 = vmatpush1.bf16.msra.mxu0 0
  %69 = vmatprep.subr.bf16.mxu0 0
  %70 = vmatpush1.bf16.msra.mxu0 0
  %71 = vmatprep.subr.bf16.mxu0 0
  %72 = vmatpush1.bf16.msra.mxu0 0
  %73 = vmatprep.subr.bf16.mxu0 0
  %74 = vmatpush1.bf16.msra.mxu0 0
  %75 = vmatprep.subr.bf16.mxu0 0
  %76 = vmatpush1.bf16.msra.mxu0 0
  %77 = vmatprep.subr.bf16.mxu0 0
  %78 = vmatpush1.bf16.msra.mxu0 0
  %79 = vmatprep.mubr.bf16.mxu0 0
  %80 = vmatmul.mubr.bf16.gmra.mrb[0].mxu0 %v45
  %v81 = vpop.f32.mrb[0].mxu0
  %v82 = vadd.f32 %v29, %v81
  %v83 = vpop.f32.mrb[0].mxu0
  %v84 = vpop.f32.mrb[0].mxu0
  %v85 = vadd.f32 %v29, %v84
  %v86 = vpop.f32.mrb[0].mxu0
  %87 = vdwg.mxu0
  %v88 = vpack.c.bf16 %v85, %v82
  %v90 = vunpack.c.l.b16 %v88
  %v91 = vunpack.c.h.b16 %v88
  %v92 = vpack.c.b16 %v90, %v90
  %v93 = vpack.c.b16 %v91, %v91
  %vm96 = vcmask 257024
  %97 = vst.msk [vmem:[%s3] sm:$0xf] %vm96, %v92
  %98 = vst.msk [vmem:[%s3 + $0x4] sm:$0xf] %vm96, %v93
  %99 = vrot.lane.b32.xlu0 %v92, 96
  %v100 = vpop.permute.xlu0 %99
  %101 = vrot.lane.b32.xlu0 %v93, 96
  %v102 = vpop.permute.xlu0 %101
  %105 = vst.msk [vmem:[%s4] sm:$0xf] %vm96, %v100
  %106 = vst.msk [vmem:[%s4 + $0x4] sm:$0xf] %vm96, %v102
  // Predicated region
  $region14: #{transformer_intention_layer.7} parent=0 // pred_check
    _
  $region15: #{transformer_intention_layer.7} parent=0 // pred_check_branch
    %108 = sbr.rel (0) target = $region17
  $region16: #{transformer_intention_layer.7} parent=0 // pred_region
    _
  $region17: #{transformer_intention_layer.7} parent=0 // pred_fallthru
    _
  // Predicated region
  $region18: #{transformer_intention_layer.7} parent=0 // pred_check
    _
  $region19: #{transformer_intention_layer.7} parent=0 // pred_check_branch
    %110 = sbr.rel (0) target = $region21
  $region20: #{transformer_intention_layer.7} parent=0 // pred_region
    _
  $region21: #{transformer_intention_layer.7} parent=0 // pred_fallthru
    _
  // Predicated region
  $region22: #{transformer_intention_layer.7} parent=0 // pred_check
    _
  $region23: #{transformer_intention_layer.7} parent=0 // pred_check_branch
    %112 = sbr.rel (0) target = $region25
  $region24: #{transformer_intention_layer.7} parent=0 // pred_region
    _
  $region25: #{transformer_intention_layer.7} parent=0 // pred_fallthru
    _
  // Predicated region
  $region26: #{transformer_intention_layer.7} parent=0 // pred_check
    _
  $region27: #{transformer_intention_layer.7} parent=0 // pred_check_branch
    %114 = sbr.rel (0) target = $region29
  $region28: #{transformer_intention_layer.7} parent=0 // pred_region
    _
  $region29: #{transformer_intention_layer.7} parent=0 // pred_fallthru
    _

// kernel: transformer_intention_layer.5
$region0: #{transformer_intention_layer.5}
  #allocation0 [shape = 'u32[]', space=smem, size = 0x4, offset = 0x4, fixed_abs, tag = 'smem constant byte address 0x4 - core index']
  #allocation1 [shape = 'u32[144,128]{1,0:T(1,128)}', space=vmem, size = 0x12000, scoped, tag = 'internal scratch']
  %s0 = inlined_call_operand.vmem [shape: f32[16,32], index: 0, kind: input, shape index: {}]
  %s1 = inlined_call_operand.vmem [shape: bf16[32,32], index: 1, kind: input, shape index: {}]
  %s2 = inlined_call_operand.vmem [shape: f32[1,32], index: 2, kind: input, shape index: {}]
  %s3 = inlined_call_operand.vmem [shape: bf16[32,1024], index: 3, kind: input, shape index: {}]
  %s4 = inlined_call_operand.vmem [shape: f32[1,1024], index: 4, kind: input, shape index: {}]
  %s5 = inlined_call_operand.vmem [shape: bf16[16,32], index: 5, kind: output, shape index: {}]
  %s6 = sld [smem:[#allocation0]]
  $region30: #{transformer_intention_layer.5} parent=0
    _
  %s8 = ssub.s32 1, %s6
  %s9 = scalar_select 0, %s8, %s6
  // Predicated region
  $region2: #{transformer_intention_layer.5} parent=0 // pred_check
    _
  $region3: #{transformer_intention_layer.5} parent=0 // pred_check_branch
    %11 = sbr.rel (0) target = $region5
  $region4: #{transformer_intention_layer.5} parent=0 // pred_region
    _
  $region5: #{transformer_intention_layer.5} parent=0 // pred_fallthru
    _
  // Predicated region
  $region6: #{transformer_intention_layer.5} parent=0 // pred_check
    _
  $region7: #{transformer_intention_layer.5} parent=0 // pred_check_branch
    %13 = sbr.rel (0) target = $region9
  $region8: #{transformer_intention_layer.5} parent=0 // pred_region
    _
  $region9: #{transformer_intention_layer.5} parent=0 // pred_fallthru
    _
  // Predicated region
  $region10: #{transformer_intention_layer.5} parent=0 // pred_check
    _
  $region11: #{transformer_intention_layer.5} parent=0 // pred_check_branch
    %15 = sbr.rel (0) target = $region13
  $region12: #{transformer_intention_layer.5} parent=0 // pred_region
    _
  $region13: #{transformer_intention_layer.5} parent=0 // pred_fallthru
    _
  // Predicated region
  $region14: #{transformer_intention_layer.5} parent=0 // pred_check
    _
  $region15: #{transformer_intention_layer.5} parent=0 // pred_check_branch
    %17 = sbr.rel (0) target = $region17
  $region16: #{transformer_intention_layer.5} parent=0 // pred_region
    _
  $region17: #{transformer_intention_layer.5} parent=0 // pred_fallthru
    _
  // Predicated region
  $region18: #{transformer_intention_layer.5} parent=0 // pred_check
    _
  $region19: #{transformer_intention_layer.5} parent=0 // pred_check_branch
    %19 = sbr.rel (0) target = $region21
  $region20: #{transformer_intention_layer.5} parent=0 // pred_region
    _
  $region21: #{transformer_intention_layer.5} parent=0 // pred_fallthru
    _
  %v21 = vld [vmem:[%s0] sm:$0xff]
  %v22 = vld [vmem:[%s0 + $0x8] sm:$0xff]
  %v23 = vld [vmem:[%s1] sm:$0xf]
  %v24 = vld [vmem:[%s1 + $0x4] sm:$0xf]
  %v25 = vld [vmem:[%s1 + $0x8] sm:$0xf]
  %v26 = vld [vmem:[%s1 + $0xc] sm:$0xf]
  %v27 = vpack.c.bf16 %v22, %v21
  %v28 = vld [vmem:[%s2] sm:$0x1]
  %v30 = vlaneseq
  %v31 = vshrl.u32 %v30, 7
  %v32 = vsub.s32 0, %v31
  %v33 = vrot.slane %v28, %v32
  %v39 = vunpack.c.l.b16 %v23
  %v40 = vunpack.c.l.b16 %v24
  %v41 = vunpack.c.l.b16 %v25
  %v42 = vunpack.c.l.b16 %v26
  %v43 = vpack.c.b16 %v40, %v39
  %v44 = vpack.c.b16 %v42, %v41
  %vm47 = vcmask 261120
  %v49 = vsel %vm47, %v27, 0
  %51 = vmatprep.subr.bf16.mxu0 0
  %52 = vmatpush1.bf16.msra.mxu0 %v43
  %53 = vmatprep.subr.bf16.mxu0 0
  %54 = vmatpush1.bf16.msra.mxu0 %v44
  %55 = vmatprep.subr.bf16.mxu0 0
  %56 = vmatpush1.bf16.msra.mxu0 0
  %57 = vmatprep.subr.bf16.mxu0 0
  %58 = vmatpush1.bf16.msra.mxu0 0
  %59 = vmatprep.subr.bf16.mxu0 0
  %60 = vmatpush1.bf16.msra.mxu0 0
  %61 = vmatprep.subr.bf16.mxu0 0
  %62 = vmatpush1.bf16.msra.mxu0 0
  %63 = vmatprep.subr.bf16.mxu0 0
  %64 = vmatpush1.bf16.msra.mxu0 0
  %65 = vmatprep.subr.bf16.mxu0 0
  %66 = vmatpush1.bf16.msra.mxu0 0
  %67 = vmatprep.subr.bf16.mxu0 0
  %68 = vmatpush1.bf16.msra.mxu0 0
  %69 = vmatprep.subr.bf16.mxu0 0
  %70 = vmatpush1.bf16.msra.mxu0 0
  %71 = vmatprep.subr.bf16.mxu0 0
  %72 = vmatpush1.bf16.msra.mxu0 0
  %73 = vmatprep.subr.bf16.mxu0 0
  %74 = vmatpush1.bf16.msra.mxu0 0
  %75 = vmatprep.subr.bf16.mxu0 0
  %76 = vmatpush1.bf16.msra.mxu0 0
  %77 = vmatprep.subr.bf16.mxu0 0
  %78 = vmatpush1.bf16.msra.mxu0 0
  %79 = vmatprep.subr.bf16.mxu0 0
  %80 = vmatpush1.bf16.msra.mxu0 0
  %81 = vmatprep.subr.bf16.mxu0 0
  %82 = vmatpush1.bf16.msra.mxu0 0
  %83 = vmatprep.mubr.bf16.mxu0 0
  %84 = vmatmul.mubr.bf16.gmra.mrb[0].mxu0 %v49
  %v85 = vpop.f32.mrb[0].mxu0
  %v86 = vadd.f32 %v33, %v85
  %v87 = vpop.f32.mrb[0].mxu0
  %v88 = vpop.f32.mrb[0].mxu0
  %v89 = vadd.f32 %v33, %v88
  %v90 = vpop.f32.mrb[0].mxu0
  %91 = vdwg.mxu0
  %v92 = vmax.f32 %v86, 0.0
  %v93 = vmax.f32 %v89, 0.0
  %v94 = vld [vmem:[%s3] sm:$0xff]
  %v95 = vld [vmem:[%s3 + $0x8] sm:$0xff]
  %v96 = vld [vmem:[%s3 + $0x10] sm:$0xff]
  %v97 = vld [vmem:[%s3 + $0x18] sm:$0xff]
  %v98 = vld [vmem:[%s3 + $0x20] sm:$0xff]
  %v99 = vld [vmem:[%s3 + $0x28] sm:$0xff]
  %v100 = vld [vmem:[%s3 + $0x30] sm:$0xff]
  %v101 = vld [vmem:[%s3 + $0x38] sm:$0xff]
  %v102 = vld [vmem:[%s3 + $0x40] sm:$0xff]
  %v103 = vld [vmem:[%s3 + $0x48] sm:$0xff]
  %v104 = vld [vmem:[%s3 + $0x50] sm:$0xff]
  %v105 = vld [vmem:[%s3 + $0x58] sm:$0xff]
  %v106 = vld [vmem:[%s3 + $0x60] sm:$0xff]
  %v107 = vld [vmem:[%s3 + $0x68] sm:$0xff]
  %v108 = vld [vmem:[%s3 + $0x70] sm:$0xff]
  %v109 = vld [vmem:[%s3 + $0x78] sm:$0xff]
  %v110 = vpack.c.bf16 %v93, %v92
  %v111 = vld [vmem:[%s4] sm:$0xff]
  %v113 = vlaneseq
  %v114 = vshrl.u32 %v113, 7
  %v115 = vsub.s32 0, %v114
  %v116 = vrot.slane %v111, %v115
  %v117 = vlaneseq
  %v118 = vshrl.u32 %v117, 7
  %v119 = vsub.s32 1, %v118
  %v120 = vrot.slane %v111, %v119
  %v121 = vlaneseq
  %v122 = vshrl.u32 %v121, 7
  %v123 = vsub.s32 2, %v122
  %v124 = vrot.slane %v111, %v123
  %v125 = vlaneseq
  %v126 = vshrl.u32 %v125, 7
  %v127 = vsub.s32 3, %v126
  %v128 = vrot.slane %v111, %v127
  %v129 = vlaneseq
  %v130 = vshrl.u32 %v129, 7
  %v131 = vsub.s32 4, %v130
  %v132 = vrot.slane %v111, %v131
  %v133 = vlaneseq
  %v134 = vshrl.u32 %v133, 7
  %v135 = vsub.s32 5, %v134
  %v136 = vrot.slane %v111, %v135
  %v137 = vlaneseq
  %v138 = vshrl.u32 %v137, 7
  %v139 = vsub.s32 6, %v138
  %v140 = vrot.slane %v111, %v139
  %v141 = vlaneseq
  %v142 = vshrl.u32 %v141, 7
  %v143 = vsub.s32 7, %v142
  %v144 = vrot.slane %v111, %v143
  %v169 = vunpack.c.l.b16 %v94
  %v170 = vunpack.c.h.b16 %v94
  %v171 = vunpack.c.l.b16 %v95
  %v172 = vunpack.c.h.b16 %v95
  %v173 = vunpack.c.l.b16 %v96
  %v174 = vunpack.c.h.b16 %v96
  %v175 = vunpack.c.l.b16 %v97
  %v176 = vunpack.c.h.b16 %v97
  %v177 = vunpack.c.l.b16 %v98
  %v178 = vunpack.c.h.b16 %v98
  %v179 = vunpack.c.l.b16 %v99
  %v180 = vunpack.c.h.b16 %v99
  %v181 = vunpack.c.l.b16 %v100
  %v182 = vunpack.c.h.b16 %v100
  %v183 = vunpack.c.l.b16 %v101
  %v184 = vunpack.c.h.b16 %v101
  %v185 = vunpack.c.l.b16 %v102
  %v186 = vunpack.c.h.b16 %v102
  %v187 = vunpack.c.l.b16 %v103
  %v188 = vunpack.c.h.b16 %v103
  %v189 = vunpack.c.l.b16 %v104
  %v190 = vunpack.c.h.b16 %v104
  %v191 = vunpack.c.l.b16 %v105
  %v192 = vunpack.c.h.b16 %v105
  %v193 = vunpack.c.l.b16 %v106
  %v194 = vunpack.c.h.b16 %v106
  %v195 = vunpack.c.l.b16 %v107
  %v196 = vunpack.c.h.b16 %v107
  %v197 = vunpack.c.l.b16 %v108
  %v198 = vunpack.c.h.b16 %v108
  %v199 = vunpack.c.l.b16 %v109
  %v200 = vunpack.c.h.b16 %v109
  %v201 = vpack.c.b16 %v177, %v169
  %v202 = vpack.c.b16 %v178, %v170
  %v203 = vpack.c.b16 %v179, %v171
  %v204 = vpack.c.b16 %v180, %v172
  %v205 = vpack.c.b16 %v181, %v173
  %v206 = vpack.c.b16 %v182, %v174
  %v207 = vpack.c.b16 %v183, %v175
  %v208 = vpack.c.b16 %v184, %v176
  %v209 = vpack.c.b16 %v193, %v185
  %v210 = vpack.c.b16 %v194, %v186
  %v211 = vpack.c.b16 %v195, %v187
  %v212 = vpack.c.b16 %v196, %v188
  %v213 = vpack.c.b16 %v197, %v189
  %v214 = vpack.c.b16 %v198, %v190
  %v215 = vpack.c.b16 %v199, %v191
  %v216 = vpack.c.b16 %v200, %v192
  %v234 = vsel %vm47, %v110, 0
  %236 = vmatprep.subr.bf16.mxu0 %v202
  %237 = vmatpush1.bf16.msra.mxu0 %v201
  %238 = vmatprep.subr.bf16.mxu0 %v210
  %239 = vmatpush1.bf16.msra.mxu0 %v209
  %240 = vmatprep.subr.bf16.mxu0 0
  %241 = vmatpush1.bf16.msra.mxu0 0
  %242 = vmatprep.subr.bf16.mxu0 0
  %243 = vmatpush1.bf16.msra.mxu0 0
  %244 = vmatprep.subr.bf16.mxu0 0
  %245 = vmatpush1.bf16.msra.mxu0 0
  %246 = vmatprep.subr.bf16.mxu0 0
  %247 = vmatpush1.bf16.msra.mxu0 0
  %248 = vmatprep.subr.bf16.mxu0 0
  %249 = vmatpush1.bf16.msra.mxu0 0
  %250 = vmatprep.subr.bf16.mxu0 0
  %251 = vmatpush1.bf16.msra.mxu0 0
  %252 = vmatprep.subr.bf16.mxu0 0
  %253 = vmatpush1.bf16.msra.mxu0 0
  %254 = vmatprep.subr.bf16.mxu0 0
  %255 = vmatpush1.bf16.msra.mxu0 0
  %256 = vmatprep.subr.bf16.mxu0 0
  %257 = vmatpush1.bf16.msra.mxu0 0
  %258 = vmatprep.subr.bf16.mxu0 0
  %259 = vmatpush1.bf16.msra.mxu0 0
  %260 = vmatprep.subr.bf16.mxu0 0
  %261 = vmatpush1.bf16.msra.mxu0 0
  %262 = vmatprep.subr.bf16.mxu0 0
  %263 = vmatpush1.bf16.msra.mxu0 0
  %264 = vmatprep.subr.bf16.mxu0 0
  %265 = vmatpush1.bf16.msra.mxu0 0
  %266 = vmatprep.subr.bf16.mxu0 0
  %267 = vmatpush1.bf16.msra.mxu0 0
  %268 = vmatprep.mubr.bf16.mxu0 0
  %269 = vmatmul.mubr.bf16.gmra.mrb[0].mxu0 %v234
  %v270 = vpop.f32.mrb[0].mxu0
  %v271 = vadd.f32 %v116, %v270
  %v272 = vpop.f32.mrb[0].mxu0
  %v273 = vadd.f32 %v120, %v272
  %v274 = vpop.f32.mrb[0].mxu0
  %v275 = vadd.f32 %v116, %v274
  %v276 = vpop.f32.mrb[0].mxu0
  %v277 = vadd.f32 %v120, %v276
  %278 = vdwg.mxu0
  %279 = vmatprep.subr.bf16.mxu0 %v204
  %280 = vmatpush1.bf16.msra.mxu0 %v203
  %281 = vmatprep.subr.bf16.mxu0 %v212
  %282 = vmatpush1.bf16.msra.mxu0 %v211
  %283 = vmatprep.subr.bf16.mxu0 0
  %284 = vmatpush1.bf16.msra.mxu0 0
  %285 = vmatprep.subr.bf16.mxu0 0
  %286 = vmatpush1.bf16.msra.mxu0 0
  %287 = vmatprep.subr.bf16.mxu0 0
  %288 = vmatpush1.bf16.msra.mxu0 0
  %289 = vmatprep.subr.bf16.mxu0 0
  %290 = vmatpush1.bf16.msra.mxu0 0
  %291 = vmatprep.subr.bf16.mxu0 0
  %292 = vmatpush1.bf16.msra.mxu0 0
  %293 = vmatprep.subr.bf16.mxu0 0
  %294 = vmatpush1.bf16.msra.mxu0 0
  %295 = vmatprep.subr.bf16.mxu0 0
  %296 = vmatpush1.bf16.msra.mxu0 0
  %297 = vmatprep.subr.bf16.mxu0 0
  %298 = vmatpush1.bf16.msra.mxu0 0
  %299 = vmatprep.subr.bf16.mxu0 0
  %300 = vmatpush1.bf16.msra.mxu0 0
  %301 = vmatprep.subr.bf16.mxu0 0
  %302 = vmatpush1.bf16.msra.mxu0 0
  %303 = vmatprep.subr.bf16.mxu0 0
  %304 = vmatpush1.bf16.msra.mxu0 0
  %305 = vmatprep.subr.bf16.mxu0 0
  %306 = vmatpush1.bf16.msra.mxu0 0
  %307 = vmatprep.subr.bf16.mxu0 0
  %308 = vmatpush1.bf16.msra.mxu0 0
  %309 = vmatprep.subr.bf16.mxu0 0
  %310 = vmatpush1.bf16.msra.mxu0 0
  %311 = vmatprep.mubr.bf16.mxu0 0
  %312 = vmatmul.mubr.bf16.gmra.mrb[0].mxu0 %v234
  %v313 = vpop.f32.mrb[0].mxu0
  %v314 = vadd.f32 %v124, %v313
  %v315 = vpop.f32.mrb[0].mxu0
  %v316 = vadd.f32 %v128, %v315
  %v317 = vpop.f32.mrb[0].mxu0
  %v318 = vadd.f32 %v124, %v317
  %v319 = vpop.f32.mrb[0].mxu0
  %v320 = vadd.f32 %v128, %v319
  %321 = vdwg.mxu0
  %322 = vmatprep.subr.bf16.mxu0 %v206
  %323 = vmatpush1.bf16.msra.mxu0 %v205
  %324 = vmatprep.subr.bf16.mxu0 %v214
  %325 = vmatpush1.bf16.msra.mxu0 %v213
  %326 = vmatprep.subr.bf16.mxu0 0
  %327 = vmatpush1.bf16.msra.mxu0 0
  %328 = vmatprep.subr.bf16.mxu0 0
  %329 = vmatpush1.bf16.msra.mxu0 0
  %330 = vmatprep.subr.bf16.mxu0 0
  %331 = vmatpush1.bf16.msra.mxu0 0
  %332 = vmatprep.subr.bf16.mxu0 0
  %333 = vmatpush1.bf16.msra.mxu0 0
  %334 = vmatprep.subr.bf16.mxu0 0
  %335 = vmatpush1.bf16.msra.mxu0 0
  %336 = vmatprep.subr.bf16.mxu0 0
  %337 = vmatpush1.bf16.msra.mxu0 0
  %338 = vmatprep.subr.bf16.mxu0 0
  %339 = vmatpush1.bf16.msra.mxu0 0
  %340 = vmatprep.subr.bf16.mxu0 0
  %341 = vmatpush1.bf16.msra.mxu0 0
  %342 = vmatprep.subr.bf16.mxu0 0
  %343 = vmatpush1.bf16.msra.mxu0 0
  %344 = vmatprep.subr.bf16.mxu0 0
  %345 = vmatpush1.bf16.msra.mxu0 0
  %346 = vmatprep.subr.bf16.mxu0 0
  %347 = vmatpush1.bf16.msra.mxu0 0
  %348 = vmatprep.subr.bf16.mxu0 0
  %349 = vmatpush1.bf16.msra.mxu0 0
  %350 = vmatprep.subr.bf16.mxu0 0
  %351 = vmatpush1.bf16.msra.mxu0 0
  %352 = vmatprep.subr.bf16.mxu0 0
  %353 = vmatpush1.bf16.msra.mxu0 0
  %354 = vmatprep.mubr.bf16.mxu0 0
  %355 = vmatmul.mubr.bf16.gmra.mrb[0].mxu0 %v234
  %v356 = vpop.f32.mrb[0].mxu0
  %v357 = vadd.f32 %v132, %v356
  %v358 = vpop.f32.mrb[0].mxu0
  %v359 = vadd.f32 %v136, %v358
  %v360 = vpop.f32.mrb[0].mxu0
  %v361 = vadd.f32 %v132, %v360
  %v362 = vpop.f32.mrb[0].mxu0
  %v363 = vadd.f32 %v136, %v362
  %364 = vdwg.mxu0
  %365 = vmatprep.subr.bf16.mxu0 %v208
  %366 = vmatpush1.bf16.msra.mxu0 %v207
  %367 = vmatprep.subr.bf16.mxu0 %v216
  %368 = vmatpush1.bf16.msra.mxu0 %v215
  %369 = vmatprep.subr.bf16.mxu0 0
  %370 = vmatpush1.bf16.msra.mxu0 0
  %371 = vmatprep.subr.bf16.mxu0 0
  %372 = vmatpush1.bf16.msra.mxu0 0
  %373 = vmatprep.subr.bf16.mxu0 0
  %374 = vmatpush1.bf16.msra.mxu0 0
  %375 = vmatprep.subr.bf16.mxu0 0
  %376 = vmatpush1.bf16.msra.mxu0 0
  %377 = vmatprep.subr.bf16.mxu0 0
  %378 = vmatpush1.bf16.msra.mxu0 0
  %379 = vmatprep.subr.bf16.mxu0 0
  %380 = vmatpush1.bf16.msra.mxu0 0
  %381 = vmatprep.subr.bf16.mxu0 0
  %382 = vmatpush1.bf16.msra.mxu0 0
  %383 = vmatprep.subr.bf16.mxu0 0
  %384 = vmatpush1.bf16.msra.mxu0 0
  %385 = vmatprep.subr.bf16.mxu0 0
  %386 = vmatpush1.bf16.msra.mxu0 0
  %387 = vmatprep.subr.bf16.mxu0 0
  %388 = vmatpush1.bf16.msra.mxu0 0
  %389 = vmatprep.subr.bf16.mxu0 0
  %390 = vmatpush1.bf16.msra.mxu0 0
  %391 = vmatprep.subr.bf16.mxu0 0
  %392 = vmatpush1.bf16.msra.mxu0 0
  %393 = vmatprep.subr.bf16.mxu0 0
  %394 = vmatpush1.bf16.msra.mxu0 0
  %395 = vmatprep.subr.bf16.mxu0 0
  %396 = vmatpush1.bf16.msra.mxu0 0
  %397 = vmatprep.mubr.bf16.mxu0 0
  %398 = vmatmul.mubr.bf16.gmra.mrb[0].mxu0 %v234
  %v399 = vpop.f32.mrb[0].mxu0
  %v400 = vadd.f32 %v140, %v399
  %v401 = vpop.f32.mrb[0].mxu0
  %v402 = vadd.f32 %v144, %v401
  %v403 = vpop.f32.mrb[0].mxu0
  %v404 = vadd.f32 %v140, %v403
  %v405 = vpop.f32.mrb[0].mxu0
  %v406 = vadd.f32 %v144, %v405
  %407 = vdwg.mxu0
  %409 = vset.pattern.permute.xlu0 0
  %410 = vperm.xlu0 %409, %v21
  %v411 = vpop.permute.xlu0 %410
  %414 = vset.pattern.permute.xlu0 0
  %415 = vperm.xlu0 %414, %v22
  %v416 = vpop.permute.xlu0 %415
  %v418 = vmul.f32 %v411, %v271
  %v419 = vmul.f32 %v416, %v275
  %420 = vset.pattern.permute.xlu0 1
  %421 = vperm.xlu0 %420, %v21
  %v422 = vpop.permute.xlu0 %421
  %424 = vset.pattern.permute.xlu0 1
  %425 = vperm.xlu0 %424, %v22
  %v426 = vpop.permute.xlu0 %425
  %v428 = vmul.f32 %v422, %v271
  %v429 = vmul.f32 %v426, %v275
  %432 = vrot.lane.b32.xlu0 %v428, 96
  %v433 = vpop.permute.xlu0 %432
  %434 = vrot.lane.b32.xlu0 %v429, 96
  %v435 = vpop.permute.xlu0 %434
  %v438 = vadd.f32 %v418, %v433
  %v439 = vadd.f32 %v419, %v435
  %440 = vset.pattern.permute.xlu0 2
  %441 = vperm.xlu0 %440, %v21
  %v442 = vpop.permute.xlu0 %441
  %444 = vset.pattern.permute.xlu0 2
  %445 = vperm.xlu0 %444, %v22
  %v446 = vpop.permute.xlu0 %445
  %v448 = vmul.f32 %v442, %v271
  %v449 = vmul.f32 %v446, %v275
  %452 = vrot.lane.b32.xlu0 %v448, 64
  %v453 = vpop.permute.xlu0 %452
  %454 = vrot.lane.b32.xlu0 %v449, 64
  %v455 = vpop.permute.xlu0 %454
  %v458 = vadd.f32 %v438, %v453
  %v459 = vadd.f32 %v439, %v455
  %460 = vset.pattern.permute.xlu0 3
  %461 = vperm.xlu0 %460, %v21
  %v462 = vpop.permute.xlu0 %461
  %464 = vset.pattern.permute.xlu0 3
  %465 = vperm.xlu0 %464, %v22
  %v466 = vpop.permute.xlu0 %465
  %v468 = vmul.f32 %v462, %v271
  %v469 = vmul.f32 %v466, %v275
  %472 = vrot.lane.b32.xlu0 %v468, 32
  %v473 = vpop.permute.xlu0 %472
  %474 = vrot.lane.b32.xlu0 %v469, 32
  %v475 = vpop.permute.xlu0 %474
  %v478 = vadd.f32 %v458, %v473
  %v479 = vadd.f32 %v459, %v475
  %480 = vset.pattern.permute.xlu0 4
  %481 = vperm.xlu0 %480, %v21
  %v482 = vpop.permute.xlu0 %481
  %484 = vset.pattern.permute.xlu0 4
  %485 = vperm.xlu0 %484, %v22
  %v486 = vpop.permute.xlu0 %485
  %v488 = vmul.f32 %v482, %v273
  %v489 = vmul.f32 %v486, %v277
  %v490 = vadd.f32 %v478, %v488
  %v491 = vadd.f32 %v479, %v489
  %492 = vset.pattern.permute.xlu0 5
  %493 = vperm.xlu0 %492, %v21
  %v494 = vpop.permute.xlu0 %493
  %496 = vset.pattern.permute.xlu0 5
  %497 = vperm.xlu0 %496, %v22
  %v498 = vpop.permute.xlu0 %497
  %v500 = vmul.f32 %v494, %v273
  %v501 = vmul.f32 %v498, %v277
  %504 = vrot.lane.b32.xlu0 %v500, 96
  %v505 = vpop.permute.xlu0 %504
  %506 = vrot.lane.b32.xlu0 %v501, 96
  %v507 = vpop.permute.xlu0 %506
  %v510 = vadd.f32 %v490, %v505
  %v511 = vadd.f32 %v491, %v507
  %512 = vset.pattern.permute.xlu0 6
  %513 = vperm.xlu0 %512, %v21
  %v514 = vpop.permute.xlu0 %513
  %516 = vset.pattern.permute.xlu0 6
  %517 = vperm.xlu0 %516, %v22
  %v518 = vpop.permute.xlu0 %517
  %v520 = vmul.f32 %v514, %v273
  %v521 = vmul.f32 %v518, %v277
  %524 = vrot.lane.b32.xlu0 %v520, 64
  %v525 = vpop.permute.xlu0 %524
  %526 = vrot.lane.b32.xlu0 %v521, 64
  %v527 = vpop.permute.xlu0 %526
  %v530 = vadd.f32 %v510, %v525
  %v531 = vadd.f32 %v511, %v527
  %532 = vset.pattern.permute.xlu0 7
  %533 = vperm.xlu0 %532, %v21
  %v534 = vpop.permute.xlu0 %533
  %536 = vset.pattern.permute.xlu0 7
  %537 = vperm.xlu0 %536, %v22
  %v538 = vpop.permute.xlu0 %537
  %v540 = vmul.f32 %v534, %v273
  %v541 = vmul.f32 %v538, %v277
  %544 = vrot.lane.b32.xlu0 %v540, 32
  %v545 = vpop.permute.xlu0 %544
  %546 = vrot.lane.b32.xlu0 %v541, 32
  %v547 = vpop.permute.xlu0 %546
  %v550 = vadd.f32 %v530, %v545
  %v551 = vadd.f32 %v531, %v547
  %552 = vset.pattern.permute.xlu0 8
  %553 = vperm.xlu0 %552, %v21
  %v554 = vpop.permute.xlu0 %553
  %556 = vset.pattern.permute.xlu0 8
  %557 = vperm.xlu0 %556, %v22
  %v558 = vpop.permute.xlu0 %557
  %v560 = vmul.f32 %v554, %v314
  %v561 = vmul.f32 %v558, %v318
  %v562 = vadd.f32 %v550, %v560
  %v563 = vadd.f32 %v551, %v561
  %564 = vset.pattern.permute.xlu0 9
  %565 = vperm.xlu0 %564, %v21
  %v566 = vpop.permute.xlu0 %565
  %568 = vset.pattern.permute.xlu0 9
  %569 = vperm.xlu0 %568, %v22
  %v570 = vpop.permute.xlu0 %569
  %v572 = vmul.f32 %v566, %v314
  %v573 = vmul.f32 %v570, %v318
  %576 = vrot.lane.b32.xlu0 %v572, 96
  %v577 = vpop.permute.xlu0 %576
  %578 = vrot.lane.b32.xlu0 %v573, 96
  %v579 = vpop.permute.xlu0 %578
  %v582 = vadd.f32 %v562, %v577
  %v583 = vadd.f32 %v563, %v579
  %584 = vset.pattern.permute.xlu0 10
  %585 = vperm.xlu0 %584, %v21
  %v586 = vpop.permute.xlu0 %585
  %588 = vset.pattern.permute.xlu0 10
  %589 = vperm.xlu0 %588, %v22
  %v590 = vpop.permute.xlu0 %589
  %v592 = vmul.f32 %v586, %v314
  %v593 = vmul.f32 %v590, %v318
  %596 = vrot.lane.b32.xlu0 %v592, 64
  %v597 = vpop.permute.xlu0 %596
  %598 = vrot.lane.b32.xlu0 %v593, 64
  %v599 = vpop.permute.xlu0 %598
  %v602 = vadd.f32 %v582, %v597
  %v603 = vadd.f32 %v583, %v599
  %604 = vset.pattern.permute.xlu0 11
  %605 = vperm.xlu0 %604, %v21
  %v606 = vpop.permute.xlu0 %605
  %608 = vset.pattern.permute.xlu0 11
  %609 = vperm.xlu0 %608, %v22
  %v610 = vpop.permute.xlu0 %609
  %v612 = vmul.f32 %v606, %v314
  %v613 = vmul.f32 %v610, %v318
  %616 = vrot.lane.b32.xlu0 %v612, 32
  %v617 = vpop.permute.xlu0 %616
  %618 = vrot.lane.b32.xlu0 %v613, 32
  %v619 = vpop.permute.xlu0 %618
  %v622 = vadd.f32 %v602, %v617
  %v623 = vadd.f32 %v603, %v619
  %624 = vset.pattern.permute.xlu0 12
  %625 = vperm.xlu0 %624, %v21
  %v626 = vpop.permute.xlu0 %625
  %628 = vset.pattern.permute.xlu0 12
  %629 = vperm.xlu0 %628, %v22
  %v630 = vpop.permute.xlu0 %629
  %v632 = vmul.f32 %v626, %v316
  %v633 = vmul.f32 %v630, %v320
  %v634 = vadd.f32 %v622, %v632
  %v635 = vadd.f32 %v623, %v633
  %636 = vset.pattern.permute.xlu0 13
  %637 = vperm.xlu0 %636, %v21
  %v638 = vpop.permute.xlu0 %637
  %640 = vset.pattern.permute.xlu0 13
  %641 = vperm.xlu0 %640, %v22
  %v642 = vpop.permute.xlu0 %641
  %v644 = vmul.f32 %v638, %v316
  %v645 = vmul.f32 %v642, %v320
  %648 = vrot.lane.b32.xlu0 %v644, 96
  %v649 = vpop.permute.xlu0 %648
  %650 = vrot.lane.b32.xlu0 %v645, 96
  %v651 = vpop.permute.xlu0 %650
  %v654 = vadd.f32 %v634, %v649
  %v655 = vadd.f32 %v635, %v651
  %656 = vset.pattern.permute.xlu0 14
  %657 = vperm.xlu0 %656, %v21
  %v658 = vpop.permute.xlu0 %657
  %660 = vset.pattern.permute.xlu0 14
  %661 = vperm.xlu0 %660, %v22
  %v662 = vpop.permute.xlu0 %661
  %v664 = vmul.f32 %v658, %v316
  %v665 = vmul.f32 %v662, %v320
  %668 = vrot.lane.b32.xlu0 %v664, 64
  %v669 = vpop.permute.xlu0 %668
  %670 = vrot.lane.b32.xlu0 %v665, 64
  %v671 = vpop.permute.xlu0 %670
  %v674 = vadd.f32 %v654, %v669
  %v675 = vadd.f32 %v655, %v671
  %676 = vset.pattern.permute.xlu0 15
  %677 = vperm.xlu0 %676, %v21
  %v678 = vpop.permute.xlu0 %677
  %680 = vset.pattern.permute.xlu0 15
  %681 = vperm.xlu0 %680, %v22
  %v682 = vpop.permute.xlu0 %681
  %v684 = vmul.f32 %v678, %v316
  %v685 = vmul.f32 %v682, %v320
  %688 = vrot.lane.b32.xlu0 %v684, 32
  %v689 = vpop.permute.xlu0 %688
  %690 = vrot.lane.b32.xlu0 %v685, 32
  %v691 = vpop.permute.xlu0 %690
  %v694 = vadd.f32 %v674, %v689
  %v695 = vadd.f32 %v675, %v691
  %696 = vset.pattern.permute.xlu0 16
  %697 = vperm.xlu0 %696, %v21
  %v698 = vpop.permute.xlu0 %697
  %700 = vset.pattern.permute.xlu0 16
  %701 = vperm.xlu0 %700, %v22
  %v702 = vpop.permute.xlu0 %701
  %v704 = vmul.f32 %v698, %v357
  %v705 = vmul.f32 %v702, %v361
  %v706 = vadd.f32 %v694, %v704
  %v707 = vadd.f32 %v695, %v705
  %708 = vset.pattern.permute.xlu0 17
  %709 = vperm.xlu0 %708, %v21
  %v710 = vpop.permute.xlu0 %709
  %712 = vset.pattern.permute.xlu0 17
  %713 = vperm.xlu0 %712, %v22
  %v714 = vpop.permute.xlu0 %713
  %v716 = vmul.f32 %v710, %v357
  %v717 = vmul.f32 %v714, %v361
  %720 = vrot.lane.b32.xlu0 %v716, 96
  %v721 = vpop.permute.xlu0 %720
  %722 = vrot.lane.b32.xlu0 %v717, 96
  %v723 = vpop.permute.xlu0 %722
  %v726 = vadd.f32 %v706, %v721
  %v727 = vadd.f32 %v707, %v723
  %728 = vset.pattern.permute.xlu0 18
  %729 = vperm.xlu0 %728, %v21
  %v730 = vpop.permute.xlu0 %729
  %732 = vset.pattern.permute.xlu0 18
  %733 = vperm.xlu0 %732, %v22
  %v734 = vpop.permute.xlu0 %733
  %v736 = vmul.f32 %v730, %v357
  %v737 = vmul.f32 %v734, %v361
  %740 = vrot.lane.b32.xlu0 %v736, 64
  %v741 = vpop.permute.xlu0 %740
  %742 = vrot.lane.b32.xlu0 %v737, 64
  %v743 = vpop.permute.xlu0 %742
  %v746 = vadd.f32 %v726, %v741
  %v747 = vadd.f32 %v727, %v743
  %748 = vset.pattern.permute.xlu0 19
  %749 = vperm.xlu0 %748, %v21
  %v750 = vpop.permute.xlu0 %749
  %752 = vset.pattern.permute.xlu0 19
  %753 = vperm.xlu0 %752, %v22
  %v754 = vpop.permute.xlu0 %753
  %v756 = vmul.f32 %v750, %v357
  %v757 = vmul.f32 %v754, %v361
  %760 = vrot.lane.b32.xlu0 %v756, 32
  %v761 = vpop.permute.xlu0 %760
  %762 = vrot.lane.b32.xlu0 %v757, 32
  %v763 = vpop.permute.xlu0 %762
  %v766 = vadd.f32 %v746, %v761
  %v767 = vadd.f32 %v747, %v763
  %768 = vset.pattern.permute.xlu0 20
  %769 = vperm.xlu0 %768, %v21
  %v770 = vpop.permute.xlu0 %769
  %772 = vset.pattern.permute.xlu0 20
  %773 = vperm.xlu0 %772, %v22
  %v774 = vpop.permute.xlu0 %773
  %v776 = vmul.f32 %v770, %v359
  %v777 = vmul.f32 %v774, %v363
  %v778 = vadd.f32 %v766, %v776
  %v779 = vadd.f32 %v767, %v777
  %780 = vset.pattern.permute.xlu0 21
  %781 = vperm.xlu0 %780, %v21
  %v782 = vpop.permute.xlu0 %781
  %784 = vset.pattern.permute.xlu0 21
  %785 = vperm.xlu0 %784, %v22
  %v786 = vpop.permute.xlu0 %785
  %v788 = vmul.f32 %v782, %v359
  %v789 = vmul.f32 %v786, %v363
  %792 = vrot.lane.b32.xlu0 %v788, 96
  %v793 = vpop.permute.xlu0 %792
  %794 = vrot.lane.b32.xlu0 %v789, 96
  %v795 = vpop.permute.xlu0 %794
  %v798 = vadd.f32 %v778, %v793
  %v799 = vadd.f32 %v779, %v795
  %800 = vset.pattern.permute.xlu0 22
  %801 = vperm.xlu0 %800, %v21
  %v802 = vpop.permute.xlu0 %801
  %804 = vset.pattern.permute.xlu0 22
  %805 = vperm.xlu0 %804, %v22
  %v806 = vpop.permute.xlu0 %805
  %v808 = vmul.f32 %v802, %v359
  %v809 = vmul.f32 %v806, %v363
  %812 = vrot.lane.b32.xlu0 %v808, 64
  %v813 = vpop.permute.xlu0 %812
  %814 = vrot.lane.b32.xlu0 %v809, 64
  %v815 = vpop.permute.xlu0 %814
  %v818 = vadd.f32 %v798, %v813
  %v819 = vadd.f32 %v799, %v815
  %820 = vset.pattern.permute.xlu0 23
  %821 = vperm.xlu0 %820, %v21
  %v822 = vpop.permute.xlu0 %821
  %824 = vset.pattern.permute.xlu0 23
  %825 = vperm.xlu0 %824, %v22
  %v826 = vpop.permute.xlu0 %825
  %v828 = vmul.f32 %v822, %v359
  %v829 = vmul.f32 %v826, %v363
  %832 = vrot.lane.b32.xlu0 %v828, 32
  %v833 = vpop.permute.xlu0 %832
  %834 = vrot.lane.b32.xlu0 %v829, 32
  %v835 = vpop.permute.xlu0 %834
  %v838 = vadd.f32 %v818, %v833
  %v839 = vadd.f32 %v819, %v835
  %840 = vset.pattern.permute.xlu0 24
  %841 = vperm.xlu0 %840, %v21
  %v842 = vpop.permute.xlu0 %841
  %844 = vset.pattern.permute.xlu0 24
  %845 = vperm.xlu0 %844, %v22
  %v846 = vpop.permute.xlu0 %845
  %v848 = vmul.f32 %v842, %v400
  %v849 = vmul.f32 %v846, %v404
  %v850 = vadd.f32 %v838, %v848
  %v851 = vadd.f32 %v839, %v849
  %852 = vset.pattern.permute.xlu0 25
  %853 = vperm.xlu0 %852, %v21
  %v854 = vpop.permute.xlu0 %853
  %856 = vset.pattern.permute.xlu0 25
  %857 = vperm.xlu0 %856, %v22
  %v858 = vpop.permute.xlu0 %857
  %v860 = vmul.f32 %v854, %v400
  %v861 = vmul.f32 %v858, %v404
  %864 = vrot.lane.b32.xlu0 %v860, 96
  %v865 = vpop.permute.xlu0 %864
  %866 = vrot.lane.b32.xlu0 %v861, 96
  %v867 = vpop.permute.xlu0 %866
  %v870 = vadd.f32 %v850, %v865
  %v871 = vadd.f32 %v851, %v867
  %872 = vset.pattern.permute.xlu0 26
  %873 = vperm.xlu0 %872, %v21
  %v874 = vpop.permute.xlu0 %873
  %876 = vset.pattern.permute.xlu0 26
  %877 = vperm.xlu0 %876, %v22
  %v878 = vpop.permute.xlu0 %877
  %v880 = vmul.f32 %v874, %v400
  %v881 = vmul.f32 %v878, %v404
  %884 = vrot.lane.b32.xlu0 %v880, 64
  %v885 = vpop.permute.xlu0 %884
  %886 = vrot.lane.b32.xlu0 %v881, 64
  %v887 = vpop.permute.xlu0 %886
  %v890 = vadd.f32 %v870, %v885
  %v891 = vadd.f32 %v871, %v887
  %892 = vset.pattern.permute.xlu0 27
  %893 = vperm.xlu0 %892, %v21
  %v894 = vpop.permute.xlu0 %893
  %896 = vset.pattern.permute.xlu0 27
  %897 = vperm.xlu0 %896, %v22
  %v898 = vpop.permute.xlu0 %897
  %v900 = vmul.f32 %v894, %v400
  %v901 = vmul.f32 %v898, %v404
  %904 = vrot.lane.b32.xlu0 %v900, 32
  %v905 = vpop.permute.xlu0 %904
  %906 = vrot.lane.b32.xlu0 %v901, 32
  %v907 = vpop.permute.xlu0 %906
  %v910 = vadd.f32 %v890, %v905
  %v911 = vadd.f32 %v891, %v907
  %912 = vset.pattern.permute.xlu0 28
  %913 = vperm.xlu0 %912, %v21
  %v914 = vpop.permute.xlu0 %913
  %916 = vset.pattern.permute.xlu0 28
  %917 = vperm.xlu0 %916, %v22
  %v918 = vpop.permute.xlu0 %917
  %v920 = vmul.f32 %v914, %v402
  %v921 = vmul.f32 %v918, %v406
  %v922 = vadd.f32 %v910, %v920
  %v923 = vadd.f32 %v911, %v921
  %924 = vset.pattern.permute.xlu0 29
  %925 = vperm.xlu0 %924, %v21
  %v926 = vpop.permute.xlu0 %925
  %928 = vset.pattern.permute.xlu0 29
  %929 = vperm.xlu0 %928, %v22
  %v930 = vpop.permute.xlu0 %929
  %v932 = vmul.f32 %v926, %v402
  %v933 = vmul.f32 %v930, %v406
  %936 = vrot.lane.b32.xlu0 %v932, 96
  %v937 = vpop.permute.xlu0 %936
  %938 = vrot.lane.b32.xlu0 %v933, 96
  %v939 = vpop.permute.xlu0 %938
  %v942 = vadd.f32 %v922, %v937
  %v943 = vadd.f32 %v923, %v939
  %944 = vset.pattern.permute.xlu0 30
  %945 = vperm.xlu0 %944, %v21
  %v946 = vpop.permute.xlu0 %945
  %948 = vset.pattern.permute.xlu0 30
  %949 = vperm.xlu0 %948, %v22
  %v950 = vpop.permute.xlu0 %949
  %v952 = vmul.f32 %v946, %v402
  %v953 = vmul.f32 %v950, %v406
  %956 = vrot.lane.b32.xlu0 %v952, 64
  %v957 = vpop.permute.xlu0 %956
  %958 = vrot.lane.b32.xlu0 %v953, 64
  %v959 = vpop.permute.xlu0 %958
  %v962 = vadd.f32 %v942, %v957
  %v963 = vadd.f32 %v943, %v959
  %964 = vset.pattern.permute.xlu0 31
  %965 = vperm.xlu0 %964, %v21
  %v966 = vpop.permute.xlu0 %965
  %968 = vset.pattern.permute.xlu0 31
  %969 = vperm.xlu0 %968, %v22
  %v970 = vpop.permute.xlu0 %969
  %v972 = vmul.f32 %v966, %v402
  %v973 = vmul.f32 %v970, %v406
  %976 = vrot.lane.b32.xlu0 %v972, 32
  %v977 = vpop.permute.xlu0 %976
  %978 = vrot.lane.b32.xlu0 %v973, 32
  %v979 = vpop.permute.xlu0 %978
  %v982 = vadd.f32 %v962, %v977
  %v983 = vadd.f32 %v963, %v979
  %v984 = vtanh.pop %v982
  %v985 = vtanh.pop %v983
  %v986 = vpack.c.bf16 %v985, %v984
  %v988 = vunpack.c.l.b16 %v986
  %v989 = vunpack.c.h.b16 %v986
  %v990 = vpack.c.b16 %v988, %v988
  %v991 = vpack.c.b16 %v989, %v989
  %vm994 = vcmask 257024
  %995 = vst.msk [vmem:[%s5] sm:$0xf] %vm994, %v990
  %996 = vst.msk [vmem:[%s5 + $0x4] sm:$0xf] %vm994, %v991
  // Predicated region
  $region22: #{transformer_intention_layer.5} parent=0 // pred_check
    _
  $region23: #{transformer_intention_layer.5} parent=0 // pred_check_branch
    %998 = sbr.rel (0) target = $region25
  $region24: #{transformer_intention_layer.5} parent=0 // pred_region
    _
  $region25: #{transformer_intention_layer.5} parent=0 // pred_fallthru
    _
  // Predicated region
  $region26: #{transformer_intention_layer.5} parent=0 // pred_check
    _
  $region27: #{transformer_intention_layer.5} parent=0 // pred_check_branch
    %1000 = sbr.rel (0) target = $region29
  $region28: #{transformer_intention_layer.5} parent=0 // pred_region
    _
  $region29: #{transformer_intention_layer.5} parent=0 // pred_fallthru
    _

// kernel: transformer_intention_layer.6
$region0: #{transformer_intention_layer.6}
  #allocation0 [shape = 'u32[]', space=smem, size = 0x4, offset = 0x4, fixed_abs, tag = 'smem constant byte address 0x4 - core index']
  #allocation1 [shape = 'u32[144,128]{1,0:T(1,128)}', space=vmem, size = 0x12000, scoped, tag = 'internal scratch']
  %s0 = inlined_call_operand.vmem [shape: f32[4,4,32], index: 0, kind: input, shape index: {}]
  %s1 = inlined_call_operand.vmem [shape: bf16[4,4,32], index: 1, kind: input, shape index: {}]
  %s2 = inlined_call_operand.vmem [shape: bf16[32,96], index: 2, kind: input, shape index: {}]
  %s3 = inlined_call_operand.vmem [shape: f32[1,96], index: 3, kind: input, shape index: {}]
  %s4 = inlined_call_operand.vmem [shape: bf16[32,32], index: 4, kind: input, shape index: {}]
  %s5 = inlined_call_operand.vmem [shape: f32[1,32], index: 5, kind: input, shape index: {}]
  %s6 = inlined_call_operand.vmem [shape: bf16[32,96], index: 6, kind: input, shape index: {}]
  %s7 = inlined_call_operand.vmem [shape: bf16[32,64], index: 7, kind: input, shape index: {}]
  %s8 = inlined_call_operand.vmem [shape: bf16[32,32], index: 8, kind: input, shape index: {}]
  %s9 = inlined_call_operand.vmem [shape: f32[1,32], index: 9, kind: input, shape index: {}]
  %s10 = inlined_call_operand.vmem [shape: f32[1,32], index: 10, kind: input, shape index: {}]
  %s11 = inlined_call_operand.vmem [shape: bf16[32,32], index: 11, kind: input, shape index: {}]
  %s12 = inlined_call_operand.vmem [shape: f32[1,32], index: 12, kind: input, shape index: {}]
  %s13 = inlined_call_operand.vmem [shape: bf16[32,32], index: 13, kind: input, shape index: {}]
  %s14 = inlined_call_operand.hbm [shape: f32[1,32], index: 14, kind: input, shape index: {}]
  %s15 = inlined_call_operand.vmem [shape: bf16[32,96], index: 15, kind: input, shape index: {}]
  %s16 = inlined_call_operand.vmem [shape: bf16[32,64], index: 16, kind: input, shape index: {}]
  %s17 = inlined_call_operand.vmem [shape: bf16[32,32], index: 17, kind: input, shape index: {}]
  %s18 = inlined_call_operand.vmem [shape: f32[1,32], index: 18, kind: input, shape index: {}]
  %s19 = inlined_call_operand.vmem [shape: f32[1,32], index: 19, kind: input, shape index: {}]
  %s20 = inlined_call_operand.vmem [shape: f32[4,4,32], index: 20, kind: output, shape index: {}]
  %s21 = sld [smem:[#allocation0]]
  $region117: #{transformer_intention_layer.6} parent=0
    _
  %s23 = ssub.s32 1, %s21
  %s24 = scalar_select 0, %s23, %s21
  $region1: #{transformer_intention_layer.6} parent=0
    #allocation2 [shape = 'u8[512]{0}', space=vmem, size = 0x400, scoped, tag = 'input window, operand 14, single buffered']
    #allocation3 [shape = 's32[2]{0}', space=sflag, size = 0x8, scoped, tag = 'scoped memory for transformer_intention_layer.6']
    %25 = vsyncpa [#allocation3], 0
    loop: start=0, step=1, limit=6
    $region2: #{transformer_intention_layer.6} parent=1 // loop_pre_header
      _
    $region3: #{transformer_intention_layer.6} parent=1 // loop_header
      %s27 = sphi 0, %s31
      %p28 = scmp.ge.s32.totalorder %s27, 6
      %s37 = sphi 0, %s39
      %s40 = sphi 0, %s37
      %s41 = sphi 0, %s40
      %s57 = sphi 0, %s41
      %s63 = sphi 0, %s65
      %s66 = sphi 0, %s63
      %s67 = sphi 0, %s66
      %s83 = sphi 0, %s67
      %s87 = sphi 0, %s87
      %s89 = sphi 0, %s87
      %s90 = sphi 0, %s89
      %s104 = sphi 0, %s90
      %s108 = sphi 0, %s108
      %s110 = sphi 0, %s108
      %s111 = sphi 0, %s110
      %s125 = sphi 0, %s111
      %s129 = sphi 0, %s129
      %s131 = sphi 0, %s129
      %s132 = sphi 0, %s131
      %s146 = sphi 0, %s132
      %s150 = sphi 0, %s150
      %s152 = sphi 0, %s150
      %s153 = sphi 0, %s152
      %s167 = sphi 0, %s153
      %s171 = sphi 0, %s171
      %s173 = sphi 0, %s171
      %s174 = sphi 0, %s173
      %s188 = sphi 0, %s174
      %s192 = sphi 0, %s192
      %s194 = sphi 0, %s192
      %s195 = sphi 0, %s194
      %s209 = sphi 0, %s195
      %s213 = sphi 0, %s213
      %s215 = sphi 0, %s213
      %s216 = sphi 0, %s215
      %s230 = sphi 0, %s216
      %s234 = sphi 0, %s234
      %s236 = sphi 0, %s234
      %s237 = sphi 0, %s236
      %s251 = sphi 0, %s237
      %s255 = sphi 0, %s255
      %s257 = sphi 0, %s255
      %s258 = sphi 0, %s257
      %s272 = sphi 0, %s258
      %s276 = sphi 0, %s276
      %s278 = sphi 0, %s276
      %s279 = sphi 0, %s278
      %s293 = sphi 0, %s279
      %s297 = sphi 0, %s297
      %s299 = sphi 0, %s297
      %s300 = sphi 0, %s299
      %s314 = sphi 0, %s300
      %s318 = sphi 0, %s318
      %s320 = sphi 0, %s318
      %s321 = sphi 0, %s320
      %s335 = sphi 0, %s321
      %s339 = sphi 0, %s339
      %s341 = sphi 0, %s339
      %s342 = sphi 0, %s341
      %s356 = sphi 0, %s342
      %s360 = sphi 0, %s360
      %s362 = sphi 0, %s360
      %s363 = sphi 0, %s362
      %s377 = sphi 0, %s363
      %s381 = sphi 0, %s381
      %s383 = sphi 0, %s381
      %s384 = sphi 0, %s383
      %s398 = sphi 0, %s384
      %s402 = sphi 0, %s402
      %s404 = sphi 0, %s402
      %s405 = sphi 0, %s404
      %s419 = sphi 0, %s405
      %s423 = sphi 0, %s423
      %s425 = sphi 0, %s423
      %s426 = sphi 0, %s425
      %s440 = sphi 0, %s426
      %s444 = sphi 0, %s444
      %s446 = sphi 0, %s444
      %s447 = sphi 0, %s446
      %s461 = sphi 0, %s447
      %s467 = sphi 0, %s469
      %s470 = sphi 0, %s467
      %s471 = sphi 0, %s470
      %s487 = sphi 0, %s471
    $region4: #{transformer_intention_layer.6} parent=1 // loop_header_branch
      %30 = sbr.rel (%p28) target = $region8
    $region5: #{transformer_intention_layer.6} parent=1 // loop_body
      %s32 = ssub.s32 %s27, 1
      %s33 = ssub.s32 %s27, 2
      %s34 = sadd.s32 %s27, 1
      %s35 = ssub.s32 %s27, %s34
      %p36 = scmp.eq.s32.totalorder %s35, 0
      %s38 = sadd.s32 %s37, 1
      %s39 = scalar_select %p36, %s37, %s38
      %p42 = pneg %p36
      %p43 = scmp.eq.s32.totalorder %s27, 3
      %p44 = por %p42, %p43
      %p45 = scmp.ne.s32.totalorder %s37, %s40
      %p46 = scmp.eq.s32.totalorder %s27, 0
      %p47 = por %p45, %p46
      %p48 = scmp.ne.s32.totalorder %s37, %s40
      %p49 = scmp.eq.s32.totalorder %s32, 3
      %p50 = por %p48, %p49
      %p51 = scmp.ne.s32.totalorder %s40, %s41
      %p52 = scmp.eq.s32.totalorder %s32, 0
      %p53 = por %p51, %p52
      %p54 = scmp.ne.s32.totalorder %s40, %s41
      %p55 = scmp.eq.s32.totalorder %s33, 3
      %p56 = por %p54, %p55
      %p58 = scmp.ne.s32.totalorder %s41, %s57
      %p59 = scmp.eq.s32.totalorder %s33, 0
      %p60 = por %p58, %p59
      %s61 = ssub.s32 %s27, %s34
      %p62 = scmp.eq.s32.totalorder %s61, 0
      %s64 = sadd.s32 %s63, 1
      %s65 = scalar_select %p62, %s63, %s64
      %p68 = pneg %p62
      %p69 = scmp.eq.s32.totalorder %s27, 3
      %p70 = por %p68, %p69
      %p71 = scmp.ne.s32.totalorder %s63, %s66
      %p72 = scmp.eq.s32.totalorder %s27, 0
      %p73 = por %p71, %p72
      %p74 = scmp.ne.s32.totalorder %s63, %s66
      %p75 = scmp.eq.s32.totalorder %s32, 3
      %p76 = por %p74, %p75
      %p77 = scmp.ne.s32.totalorder %s66, %s67
      %p78 = scmp.eq.s32.totalorder %s32, 0
      %p79 = por %p77, %p78
      %p80 = scmp.ne.s32.totalorder %s66, %s67
      %p81 = scmp.eq.s32.totalorder %s33, 3
      %p82 = por %p80, %p81
      %p84 = scmp.ne.s32.totalorder %s67, %s83
      %p85 = scmp.eq.s32.totalorder %s33, 0
      %p86 = por %p84, %p85
      %s88 = sadd.s32 %s87, 1
      %p91 = scmp.eq.s32.totalorder %s27, 3
      %p92 = scmp.ne.s32.totalorder %s87, %s89
      %p93 = scmp.eq.s32.totalorder %s27, 0
      %p94 = por %p92, %p93
      %p95 = scmp.ne.s32.totalorder %s87, %s89
      %p96 = scmp.eq.s32.totalorder %s32, 3
      %p97 = por %p95, %p96
      %p98 = scmp.ne.s32.totalorder %s89, %s90
      %p99 = scmp.eq.s32.totalorder %s32, 0
      %p100 = por %p98, %p99
      %p101 = scmp.ne.s32.totalorder %s89, %s90
      %p102 = scmp.eq.s32.totalorder %s33, 3
      %p103 = por %p101, %p102
      %p105 = scmp.ne.s32.totalorder %s90, %s104
      %p106 = scmp.eq.s32.totalorder %s33, 0
      %p107 = por %p105, %p106
      %s109 = sadd.s32 %s108, 1
      %p112 = scmp.eq.s32.totalorder %s27, 3
      %p113 = scmp.ne.s32.totalorder %s108, %s110
      %p114 = scmp.eq.s32.totalorder %s27, 0
      %p115 = por %p113, %p114
      %p116 = scmp.ne.s32.totalorder %s108, %s110
      %p117 = scmp.eq.s32.totalorder %s32, 3
      %p118 = por %p116, %p117
      %p119 = scmp.ne.s32.totalorder %s110, %s111
      %p120 = scmp.eq.s32.totalorder %s32, 0
      %p121 = por %p119, %p120
      %p122 = scmp.ne.s32.totalorder %s110, %s111
      %p123 = scmp.eq.s32.totalorder %s33, 3
      %p124 = por %p122, %p123
      %p126 = scmp.ne.s32.totalorder %s111, %s125
      %p127 = scmp.eq.s32.totalorder %s33, 0
      %p128 = por %p126, %p127
      %s130 = sadd.s32 %s129, 1
      %p133 = scmp.eq.s32.totalorder %s27, 3
      %p134 = scmp.ne.s32.totalorder %s129, %s131
      %p135 = scmp.eq.s32.totalorder %s27, 0
      %p136 = por %p134, %p135
      %p137 = scmp.ne.s32.totalorder %s129, %s131
      %p138 = scmp.eq.s32.totalorder %s32, 3
      %p139 = por %p137, %p138
      %p140 = scmp.ne.s32.totalorder %s131, %s132
      %p141 = scmp.eq.s32.totalorder %s32, 0
      %p142 = por %p140, %p141
      %p143 = scmp.ne.s32.totalorder %s131, %s132
      %p144 = scmp.eq.s32.totalorder %s33, 3
      %p145 = por %p143, %p144
      %p147 = scmp.ne.s32.totalorder %s132, %s146
      %p148 = scmp.eq.s32.totalorder %s33, 0
      %p149 = por %p147, %p148
      %s151 = sadd.s32 %s150, 1
      %p154 = scmp.eq.s32.totalorder %s27, 3
      %p155 = scmp.ne.s32.totalorder %s150, %s152
      %p156 = scmp.eq.s32.totalorder %s27, 0
      %p157 = por %p155, %p156
      %p158 = scmp.ne.s32.totalorder %s150, %s152
      %p159 = scmp.eq.s32.totalorder %s32, 3
      %p160 = por %p158, %p159
      %p161 = scmp.ne.s32.totalorder %s152, %s153
      %p162 = scmp.eq.s32.totalorder %s32, 0
      %p163 = por %p161, %p162
      %p164 = scmp.ne.s32.totalorder %s152, %s153
      %p165 = scmp.eq.s32.totalorder %s33, 3
      %p166 = por %p164, %p165
      %p168 = scmp.ne.s32.totalorder %s153, %s167
      %p169 = scmp.eq.s32.totalorder %s33, 0
      %p170 = por %p168, %p169
      %s172 = sadd.s32 %s171, 1
      %p175 = scmp.eq.s32.totalorder %s27, 3
      %p176 = scmp.ne.s32.totalorder %s171, %s173
      %p177 = scmp.eq.s32.totalorder %s27, 0
      %p178 = por %p176, %p177
      %p179 = scmp.ne.s32.totalorder %s171, %s173
      %p180 = scmp.eq.s32.totalorder %s32, 3
      %p181 = por %p179, %p180
      %p182 = scmp.ne.s32.totalorder %s173, %s174
      %p183 = scmp.eq.s32.totalorder %s32, 0
      %p184 = por %p182, %p183
      %p185 = scmp.ne.s32.totalorder %s173, %s174
      %p186 = scmp.eq.s32.totalorder %s33, 3
      %p187 = por %p185, %p186
      %p189 = scmp.ne.s32.totalorder %s174, %s188
      %p190 = scmp.eq.s32.totalorder %s33, 0
      %p191 = por %p189, %p190
      %s193 = sadd.s32 %s192, 1
      %p196 = scmp.eq.s32.totalorder %s27, 3
      %p197 = scmp.ne.s32.totalorder %s192, %s194
      %p198 = scmp.eq.s32.totalorder %s27, 0
      %p199 = por %p197, %p198
      %p200 = scmp.ne.s32.totalorder %s192, %s194
      %p201 = scmp.eq.s32.totalorder %s32, 3
      %p202 = por %p200, %p201
      %p203 = scmp.ne.s32.totalorder %s194, %s195
      %p204 = scmp.eq.s32.totalorder %s32, 0
      %p205 = por %p203, %p204
      %p206 = scmp.ne.s32.totalorder %s194, %s195
      %p207 = scmp.eq.s32.totalorder %s33, 3
      %p208 = por %p206, %p207
      %p210 = scmp.ne.s32.totalorder %s195, %s209
      %p211 = scmp.eq.s32.totalorder %s33, 0
      %p212 = por %p210, %p211
      %s214 = sadd.s32 %s213, 1
      %p217 = scmp.eq.s32.totalorder %s27, 3
      %p218 = scmp.ne.s32.totalorder %s213, %s215
      %p219 = scmp.eq.s32.totalorder %s27, 0
      %p220 = por %p218, %p219
      %p221 = scmp.ne.s32.totalorder %s213, %s215
      %p222 = scmp.eq.s32.totalorder %s32, 3
      %p223 = por %p221, %p222
      %p224 = scmp.ne.s32.totalorder %s215, %s216
      %p225 = scmp.eq.s32.totalorder %s32, 0
      %p226 = por %p224, %p225
      %p227 = scmp.ne.s32.totalorder %s215, %s216
      %p228 = scmp.eq.s32.totalorder %s33, 3
      %p229 = por %p227, %p228
      %p231 = scmp.ne.s32.totalorder %s216, %s230
      %p232 = scmp.eq.s32.totalorder %s33, 0
      %p233 = por %p231, %p232
      %s235 = sadd.s32 %s234, 1
      %p238 = scmp.eq.s32.totalorder %s27, 3
      %p239 = scmp.ne.s32.totalorder %s234, %s236
      %p240 = scmp.eq.s32.totalorder %s27, 0
      %p241 = por %p239, %p240
      %p242 = scmp.ne.s32.totalorder %s234, %s236
      %p243 = scmp.eq.s32.totalorder %s32, 3
      %p244 = por %p242, %p243
      %p245 = scmp.ne.s32.totalorder %s236, %s237
      %p246 = scmp.eq.s32.totalorder %s32, 0
      %p247 = por %p245, %p246
      %p248 = scmp.ne.s32.totalorder %s236, %s237
      %p249 = scmp.eq.s32.totalorder %s33, 3
      %p250 = por %p248, %p249
      %p252 = scmp.ne.s32.totalorder %s237, %s251
      %p253 = scmp.eq.s32.totalorder %s33, 0
      %p254 = por %p252, %p253
      %s256 = sadd.s32 %s255, 1
      %p259 = scmp.eq.s32.totalorder %s27, 3
      %p260 = scmp.ne.s32.totalorder %s255, %s257
      %p261 = scmp.eq.s32.totalorder %s27, 0
      %p262 = por %p260, %p261
      %p263 = scmp.ne.s32.totalorder %s255, %s257
      %p264 = scmp.eq.s32.totalorder %s32, 3
      %p265 = por %p263, %p264
      %p266 = scmp.ne.s32.totalorder %s257, %s258
      %p267 = scmp.eq.s32.totalorder %s32, 0
      %p268 = por %p266, %p267
      %p269 = scmp.ne.s32.totalorder %s257, %s258
      %p270 = scmp.eq.s32.totalorder %s33, 3
      %p271 = por %p269, %p270
      %p273 = scmp.ne.s32.totalorder %s258, %s272
      %p274 = scmp.eq.s32.totalorder %s33, 0
      %p275 = por %p273, %p274
      %s277 = sadd.s32 %s276, 1
      %p280 = scmp.eq.s32.totalorder %s27, 3
      %p281 = scmp.ne.s32.totalorder %s276, %s278
      %p282 = scmp.eq.s32.totalorder %s27, 0
      %p283 = por %p281, %p282
      %p284 = scmp.ne.s32.totalorder %s276, %s278
      %p285 = scmp.eq.s32.totalorder %s32, 3
      %p286 = por %p284, %p285
      %p287 = scmp.ne.s32.totalorder %s278, %s279
      %p288 = scmp.eq.s32.totalorder %s32, 0
      %p289 = por %p287, %p288
      %p290 = scmp.ne.s32.totalorder %s278, %s279
      %p291 = scmp.eq.s32.totalorder %s33, 3
      %p292 = por %p290, %p291
      %p294 = scmp.ne.s32.totalorder %s279, %s293
      %p295 = scmp.eq.s32.totalorder %s33, 0
      %p296 = por %p294, %p295
      %s298 = sadd.s32 %s297, 1
      %p301 = scmp.eq.s32.totalorder %s27, 3
      %p302 = scmp.ne.s32.totalorder %s297, %s299
      %p303 = scmp.eq.s32.totalorder %s27, 0
      %p304 = por %p302, %p303
      %p305 = scmp.ne.s32.totalorder %s297, %s299
      %p306 = scmp.eq.s32.totalorder %s32, 3
      %p307 = por %p305, %p306
      %p308 = scmp.ne.s32.totalorder %s299, %s300
      %p309 = scmp.eq.s32.totalorder %s32, 0
      %p310 = por %p308, %p309
      %p311 = scmp.ne.s32.totalorder %s299, %s300
      %p312 = scmp.eq.s32.totalorder %s33, 3
      %p313 = por %p311, %p312
      %p315 = scmp.ne.s32.totalorder %s300, %s314
      %p316 = scmp.eq.s32.totalorder %s33, 0
      %p317 = por %p315, %p316
      %s319 = sadd.s32 %s318, 1
      %p322 = scmp.eq.s32.totalorder %s27, 3
      %p323 = scmp.ne.s32.totalorder %s318, %s320
      %p324 = scmp.eq.s32.totalorder %s27, 0
      %p325 = por %p323, %p324
      %p326 = scmp.ne.s32.totalorder %s318, %s320
      %p327 = scmp.eq.s32.totalorder %s32, 3
      %p328 = por %p326, %p327
      %p329 = scmp.ne.s32.totalorder %s320, %s321
      %p330 = scmp.eq.s32.totalorder %s32, 0
      %p331 = por %p329, %p330
      %p332 = scmp.ne.s32.totalorder %s320, %s321
      %p333 = scmp.eq.s32.totalorder %s33, 3
      %p334 = por %p332, %p333
      %p336 = scmp.ne.s32.totalorder %s321, %s335
      %p337 = scmp.eq.s32.totalorder %s33, 0
      %p338 = por %p336, %p337
      %s340 = sadd.s32 %s339, 1
      %p343 = scmp.eq.s32.totalorder %s27, 3
      %p344 = scmp.ne.s32.totalorder %s339, %s341
      %p345 = scmp.eq.s32.totalorder %s27, 0
      %p346 = por %p344, %p345
      %p347 = scmp.ne.s32.totalorder %s339, %s341
      %p348 = scmp.eq.s32.totalorder %s32, 3
      %p349 = por %p347, %p348
      %p350 = scmp.ne.s32.totalorder %s341, %s342
      %p351 = scmp.eq.s32.totalorder %s32, 0
      %p352 = por %p350, %p351
      %p353 = scmp.ne.s32.totalorder %s341, %s342
      %p354 = scmp.eq.s32.totalorder %s33, 3
      %p355 = por %p353, %p354
      %p357 = scmp.ne.s32.totalorder %s342, %s356
      %p358 = scmp.eq.s32.totalorder %s33, 0
      %p359 = por %p357, %p358
      %s361 = sadd.s32 %s360, 1
      %p364 = scmp.eq.s32.totalorder %s27, 3
      %p365 = scmp.ne.s32.totalorder %s360, %s362
      %p366 = scmp.eq.s32.totalorder %s27, 0
      %p367 = por %p365, %p366
      %p368 = scmp.ne.s32.totalorder %s360, %s362
      %p369 = scmp.eq.s32.totalorder %s32, 3
      %p370 = por %p368, %p369
      %p371 = scmp.ne.s32.totalorder %s362, %s363
      %p372 = scmp.eq.s32.totalorder %s32, 0
      %p373 = por %p371, %p372
      %p374 = scmp.ne.s32.totalorder %s362, %s363
      %p375 = scmp.eq.s32.totalorder %s33, 3
      %p376 = por %p374, %p375
      %p378 = scmp.ne.s32.totalorder %s363, %s377
      %p379 = scmp.eq.s32.totalorder %s33, 0
      %p380 = por %p378, %p379
      %s382 = sadd.s32 %s381, 1
      %p385 = scmp.eq.s32.totalorder %s27, 3
      %p386 = scmp.ne.s32.totalorder %s381, %s383
      %p387 = scmp.eq.s32.totalorder %s27, 0
      %p388 = por %p386, %p387
      %p389 = scmp.ne.s32.totalorder %s381, %s383
      %p390 = scmp.eq.s32.totalorder %s32, 3
      %p391 = por %p389, %p390
      %p392 = scmp.ne.s32.totalorder %s383, %s384
      %p393 = scmp.eq.s32.totalorder %s32, 0
      %p394 = por %p392, %p393
      %p395 = scmp.ne.s32.totalorder %s383, %s384
      %p396 = scmp.eq.s32.totalorder %s33, 3
      %p397 = por %p395, %p396
      %p399 = scmp.ne.s32.totalorder %s384, %s398
      %p400 = scmp.eq.s32.totalorder %s33, 0
      %p401 = por %p399, %p400
      %s403 = sadd.s32 %s402, 1
      %p406 = scmp.eq.s32.totalorder %s27, 3
      %p407 = scmp.ne.s32.totalorder %s402, %s404
      %p408 = scmp.eq.s32.totalorder %s27, 0
      %p409 = por %p407, %p408
      %p410 = scmp.ne.s32.totalorder %s402, %s404
      %p411 = scmp.eq.s32.totalorder %s32, 3
      %p412 = por %p410, %p411
      %p413 = scmp.ne.s32.totalorder %s404, %s405
      %p414 = scmp.eq.s32.totalorder %s32, 0
      %p415 = por %p413, %p414
      %p416 = scmp.ne.s32.totalorder %s404, %s405
      %p417 = scmp.eq.s32.totalorder %s33, 3
      %p418 = por %p416, %p417
      %p420 = scmp.ne.s32.totalorder %s405, %s419
      %p421 = scmp.eq.s32.totalorder %s33, 0
      %p422 = por %p420, %p421
      %s424 = sadd.s32 %s423, 1
      %p427 = scmp.eq.s32.totalorder %s27, 3
      %p428 = scmp.ne.s32.totalorder %s423, %s425
      %p429 = scmp.eq.s32.totalorder %s27, 0
      %p430 = por %p428, %p429
      %p431 = scmp.ne.s32.totalorder %s423, %s425
      %p432 = scmp.eq.s32.totalorder %s32, 3
      %p433 = por %p431, %p432
      %p434 = scmp.ne.s32.totalorder %s425, %s426
      %p435 = scmp.eq.s32.totalorder %s32, 0
      %p436 = por %p434, %p435
      %p437 = scmp.ne.s32.totalorder %s425, %s426
      %p438 = scmp.eq.s32.totalorder %s33, 3
      %p439 = por %p437, %p438
      %p441 = scmp.ne.s32.totalorder %s426, %s440
      %p442 = scmp.eq.s32.totalorder %s33, 0
      %p443 = por %p441, %p442
      %s445 = sadd.s32 %s444, 1
      %p448 = scmp.eq.s32.totalorder %s27, 3
      %p449 = scmp.ne.s32.totalorder %s444, %s446
      %p450 = scmp.eq.s32.totalorder %s27, 0
      %p451 = por %p449, %p450
      %p452 = scmp.ne.s32.totalorder %s444, %s446
      %p453 = scmp.eq.s32.totalorder %s32, 3
      %p454 = por %p452, %p453
      %p455 = scmp.ne.s32.totalorder %s446, %s447
      %p456 = scmp.eq.s32.totalorder %s32, 0
      %p457 = por %p455, %p456
      %p458 = scmp.ne.s32.totalorder %s446, %s447
      %p459 = scmp.eq.s32.totalorder %s33, 3
      %p460 = por %p458, %p459
      %p462 = scmp.ne.s32.totalorder %s447, %s461
      %p463 = scmp.eq.s32.totalorder %s33, 0
      %p464 = por %p462, %p463
      %s465 = ssub.s32 %s27, %s34
      %p466 = scmp.eq.s32.totalorder %s465, 0
      %s468 = sadd.s32 %s467, 1
      %s469 = scalar_select %p466, %s467, %s468
      %p472 = pneg %p466
      %p473 = scmp.eq.s32.totalorder %s27, 3
      %p474 = por %p472, %p473
      %p475 = scmp.ne.s32.totalorder %s467, %s470
      %p476 = scmp.eq.s32.totalorder %s27, 0
      %p477 = por %p475, %p476
      %p478 = scmp.ne.s32.totalorder %s467, %s470
      %p479 = scmp.eq.s32.totalorder %s32, 3
      %p480 = por %p478, %p479
      %p481 = scmp.ne.s32.totalorder %s470, %s471
      %p482 = scmp.eq.s32.totalorder %s32, 0
      %p483 = por %p481, %p482
      %p484 = scmp.ne.s32.totalorder %s470, %s471
      %p485 = scmp.eq.s32.totalorder %s33, 3
      %p486 = por %p484, %p485
      %p488 = scmp.ne.s32.totalorder %s471, %s487
      %p489 = scmp.eq.s32.totalorder %s33, 0
      %p490 = por %p488, %p489
      %p491 = scmp.le.s32.totalorder 1, %s27
      %p492 = scmp.lt.s32.totalorder %s27, 5
      %p493 = pnand %p491, %p492
      %p494 = pneg %p493
      // Predicated region
      $region9: #{transformer_intention_layer.6} parent=5 // pred_check
        _
      $region10: #{transformer_intention_layer.6} parent=5 // pred_check_branch
        %496 = sbr.rel (%p493) target = $region12
      $region11: #{transformer_intention_layer.6} parent=5 // pred_region
        %s497 = ssub.s32 %s27, 1
        // Predicated region
        $region13: #{transformer_intention_layer.6} parent=11 // pred_check
          %p498 = pneg %p100
        $region14: #{transformer_intention_layer.6} parent=11 // pred_check_branch
          %500 = sbr.rel (%p498) target = $region16
        $region15: #{transformer_intention_layer.6} parent=11 // pred_region
          _
        $region16: #{transformer_intention_layer.6} parent=11 // pred_fallthru
          _
        // Predicated region
        $region17: #{transformer_intention_layer.6} parent=11 // pred_check
          %p501 = pneg %p121
        $region18: #{transformer_intention_layer.6} parent=11 // pred_check_branch
          %503 = sbr.rel (%p501) target = $region20
        $region19: #{transformer_intention_layer.6} parent=11 // pred_region
          _
        $region20: #{transformer_intention_layer.6} parent=11 // pred_fallthru
          _
        // Predicated region
        $region21: #{transformer_intention_layer.6} parent=11 // pred_check
          %p504 = pneg %p142
        $region22: #{transformer_intention_layer.6} parent=11 // pred_check_branch
          %506 = sbr.rel (%p504) target = $region24
        $region23: #{transformer_intention_layer.6} parent=11 // pred_region
          _
        $region24: #{transformer_intention_layer.6} parent=11 // pred_fallthru
          _
        // Predicated region
        $region25: #{transformer_intention_layer.6} parent=11 // pred_check
          %p507 = pneg %p163
        $region26: #{transformer_intention_layer.6} parent=11 // pred_check_branch
          %509 = sbr.rel (%p507) target = $region28
        $region27: #{transformer_intention_layer.6} parent=11 // pred_region
          _
        $region28: #{transformer_intention_layer.6} parent=11 // pred_fallthru
          _
        // Predicated region
        $region29: #{transformer_intention_layer.6} parent=11 // pred_check
          %p510 = pneg %p184
        $region30: #{transformer_intention_layer.6} parent=11 // pred_check_branch
          %512 = sbr.rel (%p510) target = $region32
        $region31: #{transformer_intention_layer.6} parent=11 // pred_region
          _
        $region32: #{transformer_intention_layer.6} parent=11 // pred_fallthru
          _
        // Predicated region
        $region33: #{transformer_intention_layer.6} parent=11 // pred_check
          %p513 = pneg %p205
        $region34: #{transformer_intention_layer.6} parent=11 // pred_check_branch
          %515 = sbr.rel (%p513) target = $region36
        $region35: #{transformer_intention_layer.6} parent=11 // pred_region
          _
        $region36: #{transformer_intention_layer.6} parent=11 // pred_fallthru
          _
        // Predicated region
        $region37: #{transformer_intention_layer.6} parent=11 // pred_check
          %p516 = pneg %p226
        $region38: #{transformer_intention_layer.6} parent=11 // pred_check_branch
          %518 = sbr.rel (%p516) target = $region40
        $region39: #{transformer_intention_layer.6} parent=11 // pred_region
          _
        $region40: #{transformer_intention_layer.6} parent=11 // pred_fallthru
          _
        // Predicated region
        $region41: #{transformer_intention_layer.6} parent=11 // pred_check
          %p519 = pneg %p247
        $region42: #{transformer_intention_layer.6} parent=11 // pred_check_branch
          %521 = sbr.rel (%p519) target = $region44
        $region43: #{transformer_intention_layer.6} parent=11 // pred_region
          _
        $region44: #{transformer_intention_layer.6} parent=11 // pred_fallthru
          _
        // Predicated region
        $region45: #{transformer_intention_layer.6} parent=11 // pred_check
          %p522 = pneg %p268
        $region46: #{transformer_intention_layer.6} parent=11 // pred_check_branch
          %524 = sbr.rel (%p522) target = $region48
        $region47: #{transformer_intention_layer.6} parent=11 // pred_region
          _
        $region48: #{transformer_intention_layer.6} parent=11 // pred_fallthru
          _
        // Predicated region
        $region49: #{transformer_intention_layer.6} parent=11 // pred_check
          %p525 = pneg %p289
        $region50: #{transformer_intention_layer.6} parent=11 // pred_check_branch
          %527 = sbr.rel (%p525) target = $region52
        $region51: #{transformer_intention_layer.6} parent=11 // pred_region
          _
        $region52: #{transformer_intention_layer.6} parent=11 // pred_fallthru
          _
        // Predicated region
        $region53: #{transformer_intention_layer.6} parent=11 // pred_check
          %p528 = pneg %p310
        $region54: #{transformer_intention_layer.6} parent=11 // pred_check_branch
          %530 = sbr.rel (%p528) target = $region56
        $region55: #{transformer_intention_layer.6} parent=11 // pred_region
          _
        $region56: #{transformer_intention_layer.6} parent=11 // pred_fallthru
          _
        // Predicated region
        $region57: #{transformer_intention_layer.6} parent=11 // pred_check
          %p531 = pneg %p331
        $region58: #{transformer_intention_layer.6} parent=11 // pred_check_branch
          %533 = sbr.rel (%p531) target = $region60
        $region59: #{transformer_intention_layer.6} parent=11 // pred_region
          _
        $region60: #{transformer_intention_layer.6} parent=11 // pred_fallthru
          _
        // Predicated region
        $region61: #{transformer_intention_layer.6} parent=11 // pred_check
          %p534 = pneg %p352
        $region62: #{transformer_intention_layer.6} parent=11 // pred_check_branch
          %536 = sbr.rel (%p534) target = $region64
        $region63: #{transformer_intention_layer.6} parent=11 // pred_region
          %s538 = ssub.s32 16, 16
          %539 = vsyncadd [#allocation3], %s538
          %s541 = sshll.u32 [#allocation2], 4
          %s542 = int_to_ptr.vmem [resolvable:$true] %s541
          %544 = dma.hbm_to_vmem [thread:$0]  %s14, 16, %s542, [#allocation3]
        $region64: #{transformer_intention_layer.6} parent=11 // pred_fallthru
          _
        // Predicated region
        $region65: #{transformer_intention_layer.6} parent=11 // pred_check
          %p545 = pneg %p373
        $region66: #{transformer_intention_layer.6} parent=11 // pred_check_branch
          %547 = sbr.rel (%p545) target = $region68
        $region67: #{transformer_intention_layer.6} parent=11 // pred_region
          _
        $region68: #{transformer_intention_layer.6} parent=11 // pred_fallthru
          _
        // Predicated region
        $region69: #{transformer_intention_layer.6} parent=11 // pred_check
          %p548 = pneg %p394
        $region70: #{transformer_intention_layer.6} parent=11 // pred_check_branch
          %550 = sbr.rel (%p548) target = $region72
        $region71: #{transformer_intention_layer.6} parent=11 // pred_region
          _
        $region72: #{transformer_intention_layer.6} parent=11 // pred_fallthru
          _
        // Predicated region
        $region73: #{transformer_intention_layer.6} parent=11 // pred_check
          %p551 = pneg %p415
        $region74: #{transformer_intention_layer.6} parent=11 // pred_check_branch
          %553 = sbr.rel (%p551) target = $region76
        $region75: #{transformer_intention_layer.6} parent=11 // pred_region
          _
        $region76: #{transformer_intention_layer.6} parent=11 // pred_fallthru
          _
        // Predicated region
        $region77: #{transformer_intention_layer.6} parent=11 // pred_check
          %p554 = pneg %p436
        $region78: #{transformer_intention_layer.6} parent=11 // pred_check_branch
          %556 = sbr.rel (%p554) target = $region80
        $region79: #{transformer_intention_layer.6} parent=11 // pred_region
          _
        $region80: #{transformer_intention_layer.6} parent=11 // pred_fallthru
          _
        // Predicated region
        $region81: #{transformer_intention_layer.6} parent=11 // pred_check
          %p557 = pneg %p457
        $region82: #{transformer_intention_layer.6} parent=11 // pred_check_branch
          %559 = sbr.rel (%p557) target = $region84
        $region83: #{transformer_intention_layer.6} parent=11 // pred_region
          _
        $region84: #{transformer_intention_layer.6} parent=11 // pred_fallthru
          _
      $region12: #{transformer_intention_layer.6} parent=5 // pred_fallthru
        _
      %p560 = scmp.lt.s32.totalorder %s27, 4
      // Predicated region
      $region85: #{transformer_intention_layer.6} parent=5 // pred_check
        %p561 = pneg %p560
      $region86: #{transformer_intention_layer.6} parent=5 // pred_check_branch
        %563 = sbr.rel (%p561) target = $region88
      $region87: #{transformer_intention_layer.6} parent=5 // pred_region
        // Predicated region
        $region89: #{transformer_intention_layer.6} parent=87 // pred_check
          %p564 = pneg %p47
        $region90: #{transformer_intention_layer.6} parent=87 // pred_check_branch
          %566 = sbr.rel (%p564) target = $region92
        $region91: #{transformer_intention_layer.6} parent=87 // pred_region
          %p567 = scmp.lt.s32.totalorder %s27, 3
          %s568 = scalar_select %p567, %s27, 3
          %s569 = smul.addr %s568, 4
          %s570 = scalar_lea.vmem %s0, %s569
        $region92: #{transformer_intention_layer.6} parent=87 // pred_fallthru
          _
        // Predicated region
        $region93: #{transformer_intention_layer.6} parent=87 // pred_check
          %p571 = pneg %p73
        $region94: #{transformer_intention_layer.6} parent=87 // pred_check_branch
          %573 = sbr.rel (%p571) target = $region96
        $region95: #{transformer_intention_layer.6} parent=87 // pred_region
          %p574 = scmp.lt.s32.totalorder %s27, 3
          %s575 = scalar_select %p574, %s27, 3
          %s576 = smul.addr %s575, 2
          %s577 = scalar_lea.vmem %s1, %s576
        $region96: #{transformer_intention_layer.6} parent=87 // pred_fallthru
          _
      $region88: #{transformer_intention_layer.6} parent=5 // pred_fallthru
        _
      %p578 = scmp.le.s32.totalorder 1, %s27
      %p579 = scmp.lt.s32.totalorder %s27, 5
      %p580 = pnand %p578, %p579
      %p581 = pneg %p580
      // Predicated region
      $region97: #{transformer_intention_layer.6} parent=5 // pred_check
        _
      $region98: #{transformer_intention_layer.6} parent=5 // pred_check_branch
        %583 = sbr.rel (%p580) target = $region100
      $region99: #{transformer_intention_layer.6} parent=5 // pred_region
        %s584 = ssub.s32 %s27, 1
        // Predicated region
        $region101: #{transformer_intention_layer.6} parent=99 // pred_check
          %p585 = pneg %p352
        $region102: #{transformer_intention_layer.6} parent=99 // pred_check_branch
          %587 = sbr.rel (%p585) target = $region104
        $region103: #{transformer_intention_layer.6} parent=99 // pred_region
          %588 = dma.done [#allocation3], 16
        $region104: #{transformer_intention_layer.6} parent=99 // pred_fallthru
          _
        %p589 = scmp.lt.s32.totalorder %s32, 3
        %s590 = scalar_select %p589, %s32, 3
        %s591 = smul.addr %s590, 4
        %s592 = scalar_lea.vmem %s0, %s591
        %p593 = pneg %p53
        %p594 = pneg %p50
        %p595 = scmp.lt.s32.totalorder %s32, 3
        %s596 = scalar_select %p595, %s32, 3
        %s597 = smul.addr %s596, 2
        %s598 = scalar_lea.vmem %s1, %s597
        %p599 = pneg %p79
        %p600 = pneg %p76
        %p601 = pneg %p100
        %p602 = pneg %p97
        %p603 = pneg %p121
        %p604 = pneg %p118
        %p605 = pneg %p142
        %p606 = pneg %p139
        %p607 = pneg %p163
        %p608 = pneg %p160
        %p609 = pneg %p184
        %p610 = pneg %p181
        %p611 = pneg %p205
        %p612 = pneg %p202
        %p613 = pneg %p226
        %p614 = pneg %p223
        %p615 = pneg %p247
        %p616 = pneg %p244
        %p617 = pneg %p268
        %p618 = pneg %p265
        %p619 = pneg %p289
        %p620 = pneg %p286
        %p621 = pneg %p310
        %p622 = pneg %p307
        %p623 = pneg %p331
        %p624 = pneg %p328
        %p625 = pneg %p352
        %p626 = pneg %p349
        %p627 = pneg %p373
        %p628 = pneg %p370
        %p629 = pneg %p394
        %p630 = pneg %p391
        %p631 = pneg %p415
        %p632 = pneg %p412
        %p633 = pneg %p436
        %p634 = pneg %p433
        %p635 = pneg %p457
        %p636 = pneg %p454
        %p637 = pneg %p483
        %p638 = pneg %p480
        %p639 = scmp.lt.s32.totalorder %s32, 3
        %s640 = scalar_select %p639, %s32, 3
        %s641 = smul.addr %s640, 4
        %s642 = scalar_lea.vmem %s20, %s641
        %p643 = scmp.lt.s32.totalorder %s32, 3
        %s644 = scalar_select %p643, %s32, 3
        %s645 = smul.addr %s644, 4
        %s646 = scalar_lea.vmem %s0, %s645
        %p647 = scmp.lt.s32.totalorder %s32, 3
        %s648 = scalar_select %p647, %s32, 3
        %s649 = smul.addr %s648, 2
        %s650 = scalar_lea.vmem %s1, %s649
        %p651 = scmp.lt.s32.totalorder %s32, 3
        %s652 = scalar_select %p651, %s32, 3
        %s653 = smul.addr %s652, 4
        %s654 = scalar_lea.vmem %s20, %s653
        %v656 = vld [vmem:[%s646] sm:$0xf]
        %v657 = vld [vmem:[%s650] sm:$0x3]
        %v658 = vunpack.c.l.bf16 %v657
        %v659 = vld [vmem:[%s2] sm:$0xf]
        %v660 = vld [vmem:[%s2 + $0x4] sm:$0xf]
        %v661 = vld [vmem:[%s2 + $0x8] sm:$0xf]
        %v662 = vld [vmem:[%s2 + $0xc] sm:$0xf]
        %v663 = vpack.c.bf16 %v656, %v656
        %v664 = vld [vmem:[%s3] sm:$0x1]
        %v666 = vlaneseq
        %v667 = vshrl.u32 %v666, 7
        %v668 = vsub.s32 0, %v667
        %v669 = vrot.slane %v664, %v668
        %v675 = vunpack.c.l.b16 %v659
        %v676 = vunpack.c.l.b16 %v660
        %v677 = vunpack.c.l.b16 %v661
        %v678 = vunpack.c.l.b16 %v662
        %v679 = vpack.c.b16 %v676, %v675
        %v680 = vpack.c.b16 %v678, %v677
        %vm683 = vcmask 261120
        %v685 = vsel %vm683, %v663, 0
        %687 = vmatprep.subr.bf16.mxu0 0
        %688 = vmatpush1.bf16.msra.mxu0 %v679
        %689 = vmatprep.subr.bf16.mxu0 0
        %690 = vmatpush1.bf16.msra.mxu0 %v680
        %691 = vmatprep.subr.bf16.mxu0 0
        %692 = vmatpush1.bf16.msra.mxu0 0
        %693 = vmatprep.subr.bf16.mxu0 0
        %694 = vmatpush1.bf16.msra.mxu0 0
        %695 = vmatprep.subr.bf16.mxu0 0
        %696 = vmatpush1.bf16.msra.mxu0 0
        %697 = vmatprep.subr.bf16.mxu0 0
        %698 = vmatpush1.bf16.msra.mxu0 0
        %699 = vmatprep.subr.bf16.mxu0 0
        %700 = vmatpush1.bf16.msra.mxu0 0
        %701 = vmatprep.subr.bf16.mxu0 0
        %702 = vmatpush1.bf16.msra.mxu0 0
        %703 = vmatprep.subr.bf16.mxu0 0
        %704 = vmatpush1.bf16.msra.mxu0 0
        %705 = vmatprep.subr.bf16.mxu0 0
        %706 = vmatpush1.bf16.msra.mxu0 0
        %707 = vmatprep.subr.bf16.mxu0 0
        %708 = vmatpush1.bf16.msra.mxu0 0
        %709 = vmatprep.subr.bf16.mxu0 0
        %710 = vmatpush1.bf16.msra.mxu0 0
        %711 = vmatprep.subr.bf16.mxu0 0
        %712 = vmatpush1.bf16.msra.mxu0 0
        %713 = vmatprep.subr.bf16.mxu0 0
        %714 = vmatpush1.bf16.msra.mxu0 0
        %715 = vmatprep.subr.bf16.mxu0 0
        %716 = vmatpush1.bf16.msra.mxu0 0
        %717 = vmatprep.subr.bf16.mxu0 0
        %718 = vmatpush1.bf16.msra.mxu0 0
        %719 = vmatprep.mubr.bf16.mxu0 0
        %720 = vmatmul.mubr.bf16.gmra.mrb[0].mxu0 %v685
        %v721 = vpop.f32.mrb[0].mxu0
        %v722 = vadd.f32 %v669, %v721
        %v723 = vpop.f32.mrb[0].mxu0
        %v724 = vpop.f32.mrb[0].mxu0
        %v725 = vpop.f32.mrb[0].mxu0
        %726 = vdwg.mxu0
        %v727 = vadd.f32 %v722, %v658
        %729 = vrot.lane.b32.xlu0 %v658, 32
        %v730 = vpop.permute.xlu0 %729
        %v732 = vadd.f32 %v722, %v730
        %v733 = vmul.f32 %v727, 0.35355338
        %v734 = vpack.c.bf16 %v733, %v733
        %v735 = vpack.c.bf16 %v732, %v732
        %v736 = vpack.c.bf16 %v722, %v722
        %738 = vrot.lane.b32.xlu0 %v735, 96
        %v739 = vpop.permute.xlu0 %738
        %vm740 = vcmask 64512
        %v742 = vsel %vm740, %v734, 0
        %v745 = vsel %vm740, %v739, 0
        %747 = vmatprep.subr.bf16.mxu0 0
        %748 = vmatpush1.bf16.xpose.msra.mxu0 %v745
        %749 = vmatprep.subr.bf16.mxu0 0
        %750 = vmatpush1.bf16.xpose.msra.mxu0 0
        %751 = vmatprep.subr.bf16.mxu0 0
        %752 = vmatpush1.bf16.xpose.msra.mxu0 0
        %753 = vmatprep.subr.bf16.mxu0 0
        %754 = vmatpush1.bf16.xpose.msra.mxu0 0
        %755 = vmatprep.subr.bf16.mxu0 0
        %756 = vmatpush1.bf16.xpose.msra.mxu0 0
        %757 = vmatprep.subr.bf16.mxu0 0
        %758 = vmatpush1.bf16.xpose.msra.mxu0 0
        %759 = vmatprep.subr.bf16.mxu0 0
        %760 = vmatpush1.bf16.xpose.msra.mxu0 0
        %761 = vmatprep.subr.bf16.mxu0 0
        %762 = vmatpush1.bf16.xpose.msra.mxu0 0
        %763 = vmatprep.subr.bf16.mxu0 0
        %764 = vmatpush1.bf16.xpose.msra.mxu0 0
        %765 = vmatprep.subr.bf16.mxu0 0
        %766 = vmatpush1.bf16.xpose.msra.mxu0 0
        %767 = vmatprep.subr.bf16.mxu0 0
        %768 = vmatpush1.bf16.xpose.msra.mxu0 0
        %769 = vmatprep.subr.bf16.mxu0 0
        %770 = vmatpush1.bf16.xpose.msra.mxu0 0
        %771 = vmatprep.subr.bf16.mxu0 0
        %772 = vmatpush1.bf16.xpose.msra.mxu0 0
        %773 = vmatprep.subr.bf16.mxu0 0
        %774 = vmatpush1.bf16.xpose.msra.mxu0 0
        %775 = vmatprep.subr.bf16.mxu0 0
        %776 = vmatpush1.bf16.xpose.msra.mxu0 0
        %777 = vmatprep.subr.bf16.mxu0 0
        %778 = vmatpush1.bf16.xpose.msra.mxu0 0
        %779 = vmatprep.mubr.bf16.mxu0 0
        %780 = vmatmul.mubr.bf16.gmra.mrb[0].mxu0 %v742
        %v781 = vpop.f32.mrb[0].mxu0
        %v782 = vadd.f32 0.0, %v781
        %v783 = vpop.f32.mrb[0].mxu0
        %v784 = vpop.f32.mrb[0].mxu0
        %v785 = vpop.f32.mrb[0].mxu0
        %786 = vdwg.mxu0
        %vm787 = vcmask 27648
        %v788 = vsel %vm787, %v782, -inf
        %789 = vmax.xlane.f32.xlu0 %v788
        %v790 = vpop.xlane.xlu0 %789
        %v791 = vsub.f32 %v782, %v790
        %v792 = vmul.f32 %v791, 1.442695
        %v793 = vpow.pop %v792
        %v794 = vsel %vm787, %v793, 0.0
        %795 = vadd.xlane.f32.xlu0 %v794
        %v796 = vpop.xlane.xlu0 %795
        %v797 = vrcp.pop %v796
        %v798 = vmul.f32 %v793, %v797
        %v799 = vpack.c.bf16 %v798, %v798
        %801 = vrot.lane.b32.xlu0 %v736, 64
        %v802 = vpop.permute.xlu0 %801
        %vm803 = vcmask 31744
        %v805 = vsel %vm803, %v799, 0
        %vm807 = vcmask 1041408
        %v809 = vsel %vm807, %v802, 0
        %811 = vmatprep.subr.bf16.mxu0 0
        %812 = vmatpush1.bf16.msra.mxu0 %v809
        %813 = vmatprep.subr.bf16.mxu0 0
        %814 = vmatpush1.bf16.msra.mxu0 0
        %815 = vmatprep.subr.bf16.mxu0 0
        %816 = vmatpush1.bf16.msra.mxu0 0
        %817 = vmatprep.subr.bf16.mxu0 0
        %818 = vmatpush1.bf16.msra.mxu0 0
        %819 = vmatprep.subr.bf16.mxu0 0
        %820 = vmatpush1.bf16.msra.mxu0 0
        %821 = vmatprep.subr.bf16.mxu0 0
        %822 = vmatpush1.bf16.msra.mxu0 0
        %823 = vmatprep.subr.bf16.mxu0 0
        %824 = vmatpush1.bf16.msra.mxu0 0
        %825 = vmatprep.subr.bf16.mxu0 0
        %826 = vmatpush1.bf16.msra.mxu0 0
        %827 = vmatprep.subr.bf16.mxu0 0
        %828 = vmatpush1.bf16.msra.mxu0 0
        %829 = vmatprep.subr.bf16.mxu0 0
        %830 = vmatpush1.bf16.msra.mxu0 0
        %831 = vmatprep.subr.bf16.mxu0 0
        %832 = vmatpush1.bf16.msra.mxu0 0
        %833 = vmatprep.subr.bf16.mxu0 0
        %834 = vmatpush1.bf16.msra.mxu0 0
        %835 = vmatprep.subr.bf16.mxu0 0
        %836 = vmatpush1.bf16.msra.mxu0 0
        %837 = vmatprep.subr.bf16.mxu0 0
        %838 = vmatpush1.bf16.msra.mxu0 0
        %839 = vmatprep.subr.bf16.mxu0 0
        %840 = vmatpush1.bf16.msra.mxu0 0
        %841 = vmatprep.subr.bf16.mxu0 0
        %842 = vmatpush1.bf16.msra.mxu0 0
        %843 = vmatprep.mubr.bf16.mxu0 0
        %844 = vmatmul.mubr.bf16.gmra.mrb[0].mxu0 %v805
        %v845 = vpop.f32.mrb[0].mxu0
        %v846 = vadd.f32 0.0, %v845
        %v847 = vpop.f32.mrb[0].mxu0
        %v848 = vpop.f32.mrb[0].mxu0
        %v849 = vpop.f32.mrb[0].mxu0
        %850 = vdwg.mxu0
        %852 = vrot.lane.b32.xlu0 %v734, 120
        %v853 = vpop.permute.xlu0 %852
        %854 = vrot.lane.b32.xlu0 %v735, 88
        %v855 = vpop.permute.xlu0 %854
        %v857 = vsel %vm740, %v853, 0
        %v860 = vsel %vm740, %v855, 0
        %862 = vmatprep.subr.bf16.mxu0 0
        %863 = vmatpush1.bf16.xpose.msra.mxu0 %v860
        %864 = vmatprep.subr.bf16.mxu0 0
        %865 = vmatpush1.bf16.xpose.msra.mxu0 0
        %866 = vmatprep.subr.bf16.mxu0 0
        %867 = vmatpush1.bf16.xpose.msra.mxu0 0
        %868 = vmatprep.subr.bf16.mxu0 0
        %869 = vmatpush1.bf16.xpose.msra.mxu0 0
        %870 = vmatprep.subr.bf16.mxu0 0
        %871 = vmatpush1.bf16.xpose.msra.mxu0 0
        %872 = vmatprep.subr.bf16.mxu0 0
        %873 = vmatpush1.bf16.xpose.msra.mxu0 0
        %874 = vmatprep.subr.bf16.mxu0 0
        %875 = vmatpush1.bf16.xpose.msra.mxu0 0
        %876 = vmatprep.subr.bf16.mxu0 0
        %877 = vmatpush1.bf16.xpose.msra.mxu0 0
        %878 = vmatprep.subr.bf16.mxu0 0
        %879 = vmatpush1.bf16.xpose.msra.mxu0 0
        %880 = vmatprep.subr.bf16.mxu0 0
        %881 = vmatpush1.bf16.xpose.msra.mxu0 0
        %882 = vmatprep.subr.bf16.mxu0 0
        %883 = vmatpush1.bf16.xpose.msra.mxu0 0
        %884 = vmatprep.subr.bf16.mxu0 0
        %885 = vmatpush1.bf16.xpose.msra.mxu0 0
        %886 = vmatprep.subr.bf16.mxu0 0
        %887 = vmatpush1.bf16.xpose.msra.mxu0 0
        %888 = vmatprep.subr.bf16.mxu0 0
        %889 = vmatpush1.bf16.xpose.msra.mxu0 0
        %890 = vmatprep.subr.bf16.mxu0 0
        %891 = vmatpush1.bf16.xpose.msra.mxu0 0
        %892 = vmatprep.subr.bf16.mxu0 0
        %893 = vmatpush1.bf16.xpose.msra.mxu0 0
        %894 = vmatprep.mubr.bf16.mxu0 0
        %895 = vmatmul.mubr.bf16.gmra.mrb[0].mxu0 %v857
        %v896 = vpop.f32.mrb[0].mxu0
        %v897 = vadd.f32 0.0, %v896
        %v898 = vpop.f32.mrb[0].mxu0
        %v899 = vpop.f32.mrb[0].mxu0
        %v900 = vpop.f32.mrb[0].mxu0
        %901 = vdwg.mxu0
        %v902 = vsel %vm787, %v897, -inf
        %903 = vmax.xlane.f32.xlu0 %v902
        %v904 = vpop.xlane.xlu0 %903
        %v905 = vsub.f32 %v897, %v904
        %v906 = vmul.f32 %v905, 1.442695
        %v907 = vpow.pop %v906
        %v908 = vsel %vm787, %v907, 0.0
        %909 = vadd.xlane.f32.xlu0 %v908
        %v910 = vpop.xlane.xlu0 %909
        %v911 = vrcp.pop %v910
        %v912 = vmul.f32 %v907, %v911
        %v913 = vpack.c.bf16 %v912, %v912
        %914 = vrot.lane.b32.xlu0 %v736, 56
        %v915 = vpop.permute.xlu0 %914
        %v917 = vsel %vm803, %v913, 0
        %v920 = vsel %vm807, %v915, 0
        %922 = vmatprep.subr.bf16.mxu0 0
        %923 = vmatpush1.bf16.msra.mxu0 %v920
        %924 = vmatprep.subr.bf16.mxu0 0
        %925 = vmatpush1.bf16.msra.mxu0 0
        %926 = vmatprep.subr.bf16.mxu0 0
        %927 = vmatpush1.bf16.msra.mxu0 0
        %928 = vmatprep.subr.bf16.mxu0 0
        %929 = vmatpush1.bf16.msra.mxu0 0
        %930 = vmatprep.subr.bf16.mxu0 0
        %931 = vmatpush1.bf16.msra.mxu0 0
        %932 = vmatprep.subr.bf16.mxu0 0
        %933 = vmatpush1.bf16.msra.mxu0 0
        %934 = vmatprep.subr.bf16.mxu0 0
        %935 = vmatpush1.bf16.msra.mxu0 0
        %936 = vmatprep.subr.bf16.mxu0 0
        %937 = vmatpush1.bf16.msra.mxu0 0
        %938 = vmatprep.subr.bf16.mxu0 0
        %939 = vmatpush1.bf16.msra.mxu0 0
        %940 = vmatprep.subr.bf16.mxu0 0
        %941 = vmatpush1.bf16.msra.mxu0 0
        %942 = vmatprep.subr.bf16.mxu0 0
        %943 = vmatpush1.bf16.msra.mxu0 0
        %944 = vmatprep.subr.bf16.mxu0 0
        %945 = vmatpush1.bf16.msra.mxu0 0
        %946 = vmatprep.subr.bf16.mxu0 0
        %947 = vmatpush1.bf16.msra.mxu0 0
        %948 = vmatprep.subr.bf16.mxu0 0
        %949 = vmatpush1.bf16.msra.mxu0 0
        %950 = vmatprep.subr.bf16.mxu0 0
        %951 = vmatpush1.bf16.msra.mxu0 0
        %952 = vmatprep.subr.bf16.mxu0 0
        %953 = vmatpush1.bf16.msra.mxu0 0
        %954 = vmatprep.mubr.bf16.mxu0 0
        %955 = vmatmul.mubr.bf16.gmra.mrb[0].mxu0 %v917
        %v956 = vpop.f32.mrb[0].mxu0
        %v957 = vadd.f32 0.0, %v956
        %v958 = vpop.f32.mrb[0].mxu0
        %v959 = vpop.f32.mrb[0].mxu0
        %v960 = vpop.f32.mrb[0].mxu0
        %961 = vdwg.mxu0
        %962 = vrot.lane.b32.xlu0 %v734, 112
        %v963 = vpop.permute.xlu0 %962
        %964 = vrot.lane.b32.xlu0 %v735, 80
        %v965 = vpop.permute.xlu0 %964
        %v967 = vsel %vm740, %v963, 0
        %v970 = vsel %vm740, %v965, 0
        %972 = vmatprep.subr.bf16.mxu0 0
        %973 = vmatpush1.bf16.xpose.msra.mxu0 %v970
        %974 = vmatprep.subr.bf16.mxu0 0
        %975 = vmatpush1.bf16.xpose.msra.mxu0 0
        %976 = vmatprep.subr.bf16.mxu0 0
        %977 = vmatpush1.bf16.xpose.msra.mxu0 0
        %978 = vmatprep.subr.bf16.mxu0 0
        %979 = vmatpush1.bf16.xpose.msra.mxu0 0
        %980 = vmatprep.subr.bf16.mxu0 0
        %981 = vmatpush1.bf16.xpose.msra.mxu0 0
        %982 = vmatprep.subr.bf16.mxu0 0
        %983 = vmatpush1.bf16.xpose.msra.mxu0 0
        %984 = vmatprep.subr.bf16.mxu0 0
        %985 = vmatpush1.bf16.xpose.msra.mxu0 0
        %986 = vmatprep.subr.bf16.mxu0 0
        %987 = vmatpush1.bf16.xpose.msra.mxu0 0
        %988 = vmatprep.subr.bf16.mxu0 0
        %989 = vmatpush1.bf16.xpose.msra.mxu0 0
        %990 = vmatprep.subr.bf16.mxu0 0
        %991 = vmatpush1.bf16.xpose.msra.mxu0 0
        %992 = vmatprep.subr.bf16.mxu0 0
        %993 = vmatpush1.bf16.xpose.msra.mxu0 0
        %994 = vmatprep.subr.bf16.mxu0 0
        %995 = vmatpush1.bf16.xpose.msra.mxu0 0
        %996 = vmatprep.subr.bf16.mxu0 0
        %997 = vmatpush1.bf16.xpose.msra.mxu0 0
        %998 = vmatprep.subr.bf16.mxu0 0
        %999 = vmatpush1.bf16.xpose.msra.mxu0 0
        %1000 = vmatprep.subr.bf16.mxu0 0
        %1001 = vmatpush1.bf16.xpose.msra.mxu0 0
        %1002 = vmatprep.subr.bf16.mxu0 0
        %1003 = vmatpush1.bf16.xpose.msra.mxu0 0
        %1004 = vmatprep.mubr.bf16.mxu0 0
        %1005 = vmatmul.mubr.bf16.gmra.mrb[0].mxu0 %v967
        %v1006 = vpop.f32.mrb[0].mxu0
        %v1007 = vadd.f32 0.0, %v1006
        %v1008 = vpop.f32.mrb[0].mxu0
        %v1009 = vpop.f32.mrb[0].mxu0
        %v1010 = vpop.f32.mrb[0].mxu0
        %1011 = vdwg.mxu0
        %v1012 = vsel %vm787, %v1007, -inf
        %1013 = vmax.xlane.f32.xlu0 %v1012
        %v1014 = vpop.xlane.xlu0 %1013
        %v1015 = vsub.f32 %v1007, %v1014
        %v1016 = vmul.f32 %v1015, 1.442695
        %v1017 = vpow.pop %v1016
        %v1018 = vsel %vm787, %v1017, 0.0
        %1019 = vadd.xlane.f32.xlu0 %v1018
        %v1020 = vpop.xlane.xlu0 %1019
        %v1021 = vrcp.pop %v1020
        %v1022 = vmul.f32 %v1017, %v1021
        %v1023 = vpack.c.bf16 %v1022, %v1022
        %1024 = vrot.lane.b32.xlu0 %v736, 48
        %v1025 = vpop.permute.xlu0 %1024
        %v1027 = vsel %vm803, %v1023, 0
        %v1030 = vsel %vm807, %v1025, 0
        %1032 = vmatprep.subr.bf16.mxu0 0
        %1033 = vmatpush1.bf16.msra.mxu0 %v1030
        %1034 = vmatprep.subr.bf16.mxu0 0
        %1035 = vmatpush1.bf16.msra.mxu0 0
        %1036 = vmatprep.subr.bf16.mxu0 0
        %1037 = vmatpush1.bf16.msra.mxu0 0
        %1038 = vmatprep.subr.bf16.mxu0 0
        %1039 = vmatpush1.bf16.msra.mxu0 0
        %1040 = vmatprep.subr.bf16.mxu0 0
        %1041 = vmatpush1.bf16.msra.mxu0 0
        %1042 = vmatprep.subr.bf16.mxu0 0
        %1043 = vmatpush1.bf16.msra.mxu0 0
        %1044 = vmatprep.subr.bf16.mxu0 0
        %1045 = vmatpush1.bf16.msra.mxu0 0
        %1046 = vmatprep.subr.bf16.mxu0 0
        %1047 = vmatpush1.bf16.msra.mxu0 0
        %1048 = vmatprep.subr.bf16.mxu0 0
        %1049 = vmatpush1.bf16.msra.mxu0 0
        %1050 = vmatprep.subr.bf16.mxu0 0
        %1051 = vmatpush1.bf16.msra.mxu0 0
        %1052 = vmatprep.subr.bf16.mxu0 0
        %1053 = vmatpush1.bf16.msra.mxu0 0
        %1054 = vmatprep.subr.bf16.mxu0 0
        %1055 = vmatpush1.bf16.msra.mxu0 0
        %1056 = vmatprep.subr.bf16.mxu0 0
        %1057 = vmatpush1.bf16.msra.mxu0 0
        %1058 = vmatprep.subr.bf16.mxu0 0
        %1059 = vmatpush1.bf16.msra.mxu0 0
        %1060 = vmatprep.subr.bf16.mxu0 0
        %1061 = vmatpush1.bf16.msra.mxu0 0
        %1062 = vmatprep.subr.bf16.mxu0 0
        %1063 = vmatpush1.bf16.msra.mxu0 0
        %1064 = vmatprep.mubr.bf16.mxu0 0
        %1065 = vmatmul.mubr.bf16.gmra.mrb[0].mxu0 %v1027
        %v1066 = vpop.f32.mrb[0].mxu0
        %v1067 = vadd.f32 0.0, %v1066
        %v1068 = vpop.f32.mrb[0].mxu0
        %v1069 = vpop.f32.mrb[0].mxu0
        %v1070 = vpop.f32.mrb[0].mxu0
        %1071 = vdwg.mxu0
        %1072 = vrot.lane.b32.xlu0 %v734, 104
        %v1073 = vpop.permute.xlu0 %1072
        %1074 = vrot.lane.b32.xlu0 %v735, 72
        %v1075 = vpop.permute.xlu0 %1074
        %v1077 = vsel %vm740, %v1073, 0
        %v1080 = vsel %vm740, %v1075, 0
        %1082 = vmatprep.subr.bf16.mxu0 0
        %1083 = vmatpush1.bf16.xpose.msra.mxu0 %v1080
        %1084 = vmatprep.subr.bf16.mxu0 0
        %1085 = vmatpush1.bf16.xpose.msra.mxu0 0
        %1086 = vmatprep.subr.bf16.mxu0 0
        %1087 = vmatpush1.bf16.xpose.msra.mxu0 0
        %1088 = vmatprep.subr.bf16.mxu0 0
        %1089 = vmatpush1.bf16.xpose.msra.mxu0 0
        %1090 = vmatprep.subr.bf16.mxu0 0
        %1091 = vmatpush1.bf16.xpose.msra.mxu0 0
        %1092 = vmatprep.subr.bf16.mxu0 0
        %1093 = vmatpush1.bf16.xpose.msra.mxu0 0
        %1094 = vmatprep.subr.bf16.mxu0 0
        %1095 = vmatpush1.bf16.xpose.msra.mxu0 0
        %1096 = vmatprep.subr.bf16.mxu0 0
        %1097 = vmatpush1.bf16.xpose.msra.mxu0 0
        %1098 = vmatprep.subr.bf16.mxu0 0
        %1099 = vmatpush1.bf16.xpose.msra.mxu0 0
        %1100 = vmatprep.subr.bf16.mxu0 0
        %1101 = vmatpush1.bf16.xpose.msra.mxu0 0
        %1102 = vmatprep.subr.bf16.mxu0 0
        %1103 = vmatpush1.bf16.xpose.msra.mxu0 0
        %1104 = vmatprep.subr.bf16.mxu0 0
        %1105 = vmatpush1.bf16.xpose.msra.mxu0 0
        %1106 = vmatprep.subr.bf16.mxu0 0
        %1107 = vmatpush1.bf16.xpose.msra.mxu0 0
        %1108 = vmatprep.subr.bf16.mxu0 0
        %1109 = vmatpush1.bf16.xpose.msra.mxu0 0
        %1110 = vmatprep.subr.bf16.mxu0 0
        %1111 = vmatpush1.bf16.xpose.msra.mxu0 0
        %1112 = vmatprep.subr.bf16.mxu0 0
        %1113 = vmatpush1.bf16.xpose.msra.mxu0 0
        %1114 = vmatprep.mubr.bf16.mxu0 0
        %1115 = vmatmul.mubr.bf16.gmra.mrb[0].mxu0 %v1077
        %v1116 = vpop.f32.mrb[0].mxu0
        %v1117 = vadd.f32 0.0, %v1116
        %v1118 = vpop.f32.mrb[0].mxu0
        %v1119 = vpop.f32.mrb[0].mxu0
        %v1120 = vpop.f32.mrb[0].mxu0
        %1121 = vdwg.mxu0
        %v1122 = vsel %vm787, %v1117, -inf
        %1123 = vmax.xlane.f32.xlu0 %v1122
        %v1124 = vpop.xlane.xlu0 %1123
        %v1125 = vsub.f32 %v1117, %v1124
        %v1126 = vmul.f32 %v1125, 1.442695
        %v1127 = vpow.pop %v1126
        %v1128 = vsel %vm787, %v1127, 0.0
        %1129 = vadd.xlane.f32.xlu0 %v1128
        %v1130 = vpop.xlane.xlu0 %1129
        %v1131 = vrcp.pop %v1130
        %v1132 = vmul.f32 %v1127, %v1131
        %v1133 = vpack.c.bf16 %v1132, %v1132
        %1134 = vrot.lane.b32.xlu0 %v736, 40
        %v1135 = vpop.permute.xlu0 %1134
        %v1137 = vsel %vm803, %v1133, 0
        %v1140 = vsel %vm807, %v1135, 0
        %1142 = vmatprep.subr.bf16.mxu0 0
        %1143 = vmatpush1.bf16.msra.mxu0 %v1140
        %1144 = vmatprep.subr.bf16.mxu0 0
        %1145 = vmatpush1.bf16.msra.mxu0 0
        %1146 = vmatprep.subr.bf16.mxu0 0
        %1147 = vmatpush1.bf16.msra.mxu0 0
        %1148 = vmatprep.subr.bf16.mxu0 0
        %1149 = vmatpush1.bf16.msra.mxu0 0
        %1150 = vmatprep.subr.bf16.mxu0 0
        %1151 = vmatpush1.bf16.msra.mxu0 0
        %1152 = vmatprep.subr.bf16.mxu0 0
        %1153 = vmatpush1.bf16.msra.mxu0 0
        %1154 = vmatprep.subr.bf16.mxu0 0
        %1155 = vmatpush1.bf16.msra.mxu0 0
        %1156 = vmatprep.subr.bf16.mxu0 0
        %1157 = vmatpush1.bf16.msra.mxu0 0
        %1158 = vmatprep.subr.bf16.mxu0 0
        %1159 = vmatpush1.bf16.msra.mxu0 0
        %1160 = vmatprep.subr.bf16.mxu0 0
        %1161 = vmatpush1.bf16.msra.mxu0 0
        %1162 = vmatprep.subr.bf16.mxu0 0
        %1163 = vmatpush1.bf16.msra.mxu0 0
        %1164 = vmatprep.subr.bf16.mxu0 0
        %1165 = vmatpush1.bf16.msra.mxu0 0
        %1166 = vmatprep.subr.bf16.mxu0 0
        %1167 = vmatpush1.bf16.msra.mxu0 0
        %1168 = vmatprep.subr.bf16.mxu0 0
        %1169 = vmatpush1.bf16.msra.mxu0 0
        %1170 = vmatprep.subr.bf16.mxu0 0
        %1171 = vmatpush1.bf16.msra.mxu0 0
        %1172 = vmatprep.subr.bf16.mxu0 0
        %1173 = vmatpush1.bf16.msra.mxu0 0
        %1174 = vmatprep.mubr.bf16.mxu0 0
        %1175 = vmatmul.mubr.bf16.gmra.mrb[0].mxu0 %v1137
        %v1176 = vpop.f32.mrb[0].mxu0
        %v1177 = vadd.f32 0.0, %v1176
        %v1178 = vpop.f32.mrb[0].mxu0
        %v1179 = vpop.f32.mrb[0].mxu0
        %v1180 = vpop.f32.mrb[0].mxu0
        %1181 = vdwg.mxu0
        %1183 = vrot.lane.b32.xlu0 %v957, 8
        %v1184 = vpop.permute.xlu0 %1183
        %1187 = vrot.lane.b32.xlu0 %v1067, 16
        %v1188 = vpop.permute.xlu0 %1187
        %1191 = vrot.lane.b32.xlu0 %v1177, 24
        %v1192 = vpop.permute.xlu0 %1191
        %v1194 = vsel %vm740, %v846, %v1184
        %vm1195 = vcmask 130048
        %v1196 = vsel %vm1195, %v1194, %v1188
        %vm1197 = vcmask 195584
        %v1198 = vsel %vm1197, %v1196, %v1192
        %v1199 = vld [vmem:[%s4] sm:$0xf]
        %v1200 = vld [vmem:[%s4 + $0x4] sm:$0xf]
        %v1201 = vld [vmem:[%s4 + $0x8] sm:$0xf]
        %v1202 = vld [vmem:[%s4 + $0xc] sm:$0xf]
        %v1203 = vpack.c.bf16 %v1198, %v1198
        %v1204 = vld [vmem:[%s5] sm:$0x1]
        %v1206 = vlaneseq
        %v1207 = vshrl.u32 %v1206, 7
        %v1208 = vsub.s32 0, %v1207
        %v1209 = vrot.slane %v1204, %v1208
        %v1215 = vunpack.c.l.b16 %v1199
        %v1216 = vunpack.c.l.b16 %v1200
        %v1217 = vunpack.c.l.b16 %v1201
        %v1218 = vunpack.c.l.b16 %v1202
        %v1219 = vpack.c.b16 %v1216, %v1215
        %v1220 = vpack.c.b16 %v1218, %v1217
        %v1224 = vsel %vm683, %v1203, 0
        %1226 = vmatprep.subr.bf16.mxu0 0
        %1227 = vmatpush1.bf16.msra.mxu0 %v1219
        %1228 = vmatprep.subr.bf16.mxu0 0
        %1229 = vmatpush1.bf16.msra.mxu0 %v1220
        %1230 = vmatprep.subr.bf16.mxu0 0
        %1231 = vmatpush1.bf16.msra.mxu0 0
        %1232 = vmatprep.subr.bf16.mxu0 0
        %1233 = vmatpush1.bf16.msra.mxu0 0
        %1234 = vmatprep.subr.bf16.mxu0 0
        %1235 = vmatpush1.bf16.msra.mxu0 0
        %1236 = vmatprep.subr.bf16.mxu0 0
        %1237 = vmatpush1.bf16.msra.mxu0 0
        %1238 = vmatprep.subr.bf16.mxu0 0
        %1239 = vmatpush1.bf16.msra.mxu0 0
        %1240 = vmatprep.subr.bf16.mxu0 0
        %1241 = vmatpush1.bf16.msra.mxu0 0
        %1242 = vmatprep.subr.bf16.mxu0 0
        %1243 = vmatpush1.bf16.msra.mxu0 0
        %1244 = vmatprep.subr.bf16.mxu0 0
        %1245 = vmatpush1.bf16.msra.mxu0 0
        %1246 = vmatprep.subr.bf16.mxu0 0
        %1247 = vmatpush1.bf16.msra.mxu0 0
        %1248 = vmatprep.subr.bf16.mxu0 0
        %1249 = vmatpush1.bf16.msra.mxu0 0
        %1250 = vmatprep.subr.bf16.mxu0 0
        %1251 = vmatpush1.bf16.msra.mxu0 0
        %1252 = vmatprep.subr.bf16.mxu0 0
        %1253 = vmatpush1.bf16.msra.mxu0 0
        %1254 = vmatprep.subr.bf16.mxu0 0
        %1255 = vmatpush1.bf16.msra.mxu0 0
        %1256 = vmatprep.subr.bf16.mxu0 0
        %1257 = vmatpush1.bf16.msra.mxu0 0
        %1258 = vmatprep.mubr.bf16.mxu0 0
        %1259 = vmatmul.mubr.bf16.gmra.mrb[0].mxu0 %v1224
        %v1260 = vpop.f32.mrb[0].mxu0
        %v1261 = vadd.f32 %v1209, %v1260
        %v1262 = vpop.f32.mrb[0].mxu0
        %v1263 = vpop.f32.mrb[0].mxu0
        %v1264 = vpop.f32.mrb[0].mxu0
        %1265 = vdwg.mxu0
        %v1266 = vld [vmem:[%s6] sm:$0xf]
        %v1267 = vld [vmem:[%s6 + $0x4] sm:$0xf]
        %v1268 = vld [vmem:[%s6 + $0x8] sm:$0xf]
        %v1269 = vld [vmem:[%s6 + $0xc] sm:$0xf]
        %v1270 = vld [vmem:[%s7] sm:$0xf]
        %v1271 = vld [vmem:[%s7 + $0x4] sm:$0xf]
        %v1272 = vld [vmem:[%s7 + $0x8] sm:$0xf]
        %v1273 = vld [vmem:[%s7 + $0xc] sm:$0xf]
        %v1274 = vld [vmem:[%s8] sm:$0xf]
        %v1275 = vld [vmem:[%s8 + $0x4] sm:$0xf]
        %v1276 = vld [vmem:[%s8 + $0x8] sm:$0xf]
        %v1277 = vld [vmem:[%s8 + $0xc] sm:$0xf]
        %v1278 = vpack.c.bf16 %v1261, %v1261
        %v1283 = vunpack.c.l.b16 %v1266
        %v1284 = vunpack.c.l.b16 %v1267
        %v1285 = vunpack.c.l.b16 %v1268
        %v1286 = vunpack.c.l.b16 %v1269
        %v1287 = vpack.c.b16 %v1284, %v1283
        %v1288 = vpack.c.b16 %v1286, %v1285
        %v1292 = vsel %vm683, %v1278, 0
        %1294 = vmatprep.subr.bf16.mxu0 0
        %1295 = vmatpush1.bf16.msra.mxu0 %v1287
        %1296 = vmatprep.subr.bf16.mxu0 0
        %1297 = vmatpush1.bf16.msra.mxu0 %v1288
        %1298 = vmatprep.subr.bf16.mxu0 0
        %1299 = vmatpush1.bf16.msra.mxu0 0
        %1300 = vmatprep.subr.bf16.mxu0 0
        %1301 = vmatpush1.bf16.msra.mxu0 0
        %1302 = vmatprep.subr.bf16.mxu0 0
        %1303 = vmatpush1.bf16.msra.mxu0 0
        %1304 = vmatprep.subr.bf16.mxu0 0
        %1305 = vmatpush1.bf16.msra.mxu0 0
        %1306 = vmatprep.subr.bf16.mxu0 0
        %1307 = vmatpush1.bf16.msra.mxu0 0
        %1308 = vmatprep.subr.bf16.mxu0 0
        %1309 = vmatpush1.bf16.msra.mxu0 0
        %1310 = vmatprep.subr.bf16.mxu0 0
        %1311 = vmatpush1.bf16.msra.mxu0 0
        %1312 = vmatprep.subr.bf16.mxu0 0
        %1313 = vmatpush1.bf16.msra.mxu0 0
        %1314 = vmatprep.subr.bf16.mxu0 0
        %1315 = vmatpush1.bf16.msra.mxu0 0
        %1316 = vmatprep.subr.bf16.mxu0 0
        %1317 = vmatpush1.bf16.msra.mxu0 0
        %1318 = vmatprep.subr.bf16.mxu0 0
        %1319 = vmatpush1.bf16.msra.mxu0 0
        %1320 = vmatprep.subr.bf16.mxu0 0
        %1321 = vmatpush1.bf16.msra.mxu0 0
        %1322 = vmatprep.subr.bf16.mxu0 0
        %1323 = vmatpush1.bf16.msra.mxu0 0
        %1324 = vmatprep.subr.bf16.mxu0 0
        %1325 = vmatpush1.bf16.msra.mxu0 0
        %1326 = vmatprep.mubr.bf16.mxu0 0
        %1327 = vmatmul.mubr.bf16.gmra.mrb[0].mxu0 %v1292
        %v1328 = vpop.f32.mrb[0].mxu0
        %v1329 = vadd.f32 0.0, %v1328
        %v1330 = vpop.f32.mrb[0].mxu0
        %v1331 = vpop.f32.mrb[0].mxu0
        %v1332 = vpop.f32.mrb[0].mxu0
        %1333 = vdwg.mxu0
        %v1338 = vunpack.c.l.b16 %v1270
        %v1339 = vunpack.c.l.b16 %v1271
        %v1340 = vunpack.c.l.b16 %v1272
        %v1341 = vunpack.c.l.b16 %v1273
        %v1342 = vpack.c.b16 %v1339, %v1338
        %v1343 = vpack.c.b16 %v1341, %v1340
        %1346 = vmatprep.subr.bf16.mxu0 0
        %1347 = vmatpush1.bf16.msra.mxu0 %v1342
        %1348 = vmatprep.subr.bf16.mxu0 0
        %1349 = vmatpush1.bf16.msra.mxu0 %v1343
        %1350 = vmatprep.subr.bf16.mxu0 0
        %1351 = vmatpush1.bf16.msra.mxu0 0
        %1352 = vmatprep.subr.bf16.mxu0 0
        %1353 = vmatpush1.bf16.msra.mxu0 0
        %1354 = vmatprep.subr.bf16.mxu0 0
        %1355 = vmatpush1.bf16.msra.mxu0 0
        %1356 = vmatprep.subr.bf16.mxu0 0
        %1357 = vmatpush1.bf16.msra.mxu0 0
        %1358 = vmatprep.subr.bf16.mxu0 0
        %1359 = vmatpush1.bf16.msra.mxu0 0
        %1360 = vmatprep.subr.bf16.mxu0 0
        %1361 = vmatpush1.bf16.msra.mxu0 0
        %1362 = vmatprep.subr.bf16.mxu0 0
        %1363 = vmatpush1.bf16.msra.mxu0 0
        %1364 = vmatprep.subr.bf16.mxu0 0
        %1365 = vmatpush1.bf16.msra.mxu0 0
        %1366 = vmatprep.subr.bf16.mxu0 0
        %1367 = vmatpush1.bf16.msra.mxu0 0
        %1368 = vmatprep.subr.bf16.mxu0 0
        %1369 = vmatpush1.bf16.msra.mxu0 0
        %1370 = vmatprep.subr.bf16.mxu0 0
        %1371 = vmatpush1.bf16.msra.mxu0 0
        %1372 = vmatprep.subr.bf16.mxu0 0
        %1373 = vmatpush1.bf16.msra.mxu0 0
        %1374 = vmatprep.subr.bf16.mxu0 0
        %1375 = vmatpush1.bf16.msra.mxu0 0
        %1376 = vmatprep.subr.bf16.mxu0 0
        %1377 = vmatpush1.bf16.msra.mxu0 0
        %1378 = vmatprep.mubr.bf16.mxu0 0
        %1379 = vmatmul.mubr.bf16.gmra.mrb[0].mxu0 %v685
        %v1380 = vpop.f32.mrb[0].mxu0
        %v1381 = vadd.f32 0.0, %v1380
        %v1382 = vpop.f32.mrb[0].mxu0
        %v1383 = vpop.f32.mrb[0].mxu0
        %v1384 = vpop.f32.mrb[0].mxu0
        %1385 = vdwg.mxu0
        %v1386 = vadd.f32 %v1329, %v1381
        %v1387 = vxor.u32 %v1386, 2147483648
        %v1388 = vmul.f32 %v1387, 1.442695
        %v1389 = vpow.pop %v1388
        %v1390 = vadd.f32 %v1389, 1.0
        %v1391 = vrcp.pop %v1390
        %v1392 = vmul.f32 1.0, %v1391
        %v1393 = vsub.f32 %v1386, 2.0
        %v1394 = vxor.u32 %v1393, 2147483648
        %v1395 = vmul.f32 %v1394, 1.442695
        %v1396 = vpow.pop %v1395
        %v1397 = vadd.f32 %v1396, 1.0
        %v1398 = vrcp.pop %v1397
        %v1399 = vmul.f32 1.0, %v1398
        %v1400 = vmul.f32 %v656, %v1392
        %v1401 = vpack.c.bf16 %v1400, %v1400
        %v1406 = vunpack.c.l.b16 %v1274
        %v1407 = vunpack.c.l.b16 %v1275
        %v1408 = vunpack.c.l.b16 %v1276
        %v1409 = vunpack.c.l.b16 %v1277
        %v1410 = vpack.c.b16 %v1407, %v1406
        %v1411 = vpack.c.b16 %v1409, %v1408
        %v1415 = vsel %vm683, %v1401, 0
        %1417 = vmatprep.subr.bf16.mxu0 0
        %1418 = vmatpush1.bf16.msra.mxu0 %v1410
        %1419 = vmatprep.subr.bf16.mxu0 0
        %1420 = vmatpush1.bf16.msra.mxu0 %v1411
        %1421 = vmatprep.subr.bf16.mxu0 0
        %1422 = vmatpush1.bf16.msra.mxu0 0
        %1423 = vmatprep.subr.bf16.mxu0 0
        %1424 = vmatpush1.bf16.msra.mxu0 0
        %1425 = vmatprep.subr.bf16.mxu0 0
        %1426 = vmatpush1.bf16.msra.mxu0 0
        %1427 = vmatprep.subr.bf16.mxu0 0
        %1428 = vmatpush1.bf16.msra.mxu0 0
        %1429 = vmatprep.subr.bf16.mxu0 0
        %1430 = vmatpush1.bf16.msra.mxu0 0
        %1431 = vmatprep.subr.bf16.mxu0 0
        %1432 = vmatpush1.bf16.msra.mxu0 0
        %1433 = vmatprep.subr.bf16.mxu0 0
        %1434 = vmatpush1.bf16.msra.mxu0 0
        %1435 = vmatprep.subr.bf16.mxu0 0
        %1436 = vmatpush1.bf16.msra.mxu0 0
        %1437 = vmatprep.subr.bf16.mxu0 0
        %1438 = vmatpush1.bf16.msra.mxu0 0
        %1439 = vmatprep.subr.bf16.mxu0 0
        %1440 = vmatpush1.bf16.msra.mxu0 0
        %1441 = vmatprep.subr.bf16.mxu0 0
        %1442 = vmatpush1.bf16.msra.mxu0 0
        %1443 = vmatprep.subr.bf16.mxu0 0
        %1444 = vmatpush1.bf16.msra.mxu0 0
        %1445 = vmatprep.subr.bf16.mxu0 0
        %1446 = vmatpush1.bf16.msra.mxu0 0
        %1447 = vmatprep.subr.bf16.mxu0 0
        %1448 = vmatpush1.bf16.msra.mxu0 0
        %1449 = vmatprep.mubr.bf16.mxu0 0
        %1450 = vmatmul.mubr.bf16.gmra.mrb[0].mxu0 %v1415
        %v1451 = vpop.f32.mrb[0].mxu0
        %v1452 = vadd.f32 0.0, %v1451
        %v1453 = vpop.f32.mrb[0].mxu0
        %v1454 = vpop.f32.mrb[0].mxu0
        %v1455 = vpop.f32.mrb[0].mxu0
        %1456 = vdwg.mxu0
        %1458 = vrot.lane.b32.xlu0 %v1452, 64
        %v1459 = vpop.permute.xlu0 %1458
        %v1461 = vadd.f32 %v1329, %v1459
        %v1462 = vtanh.pop %v1461
        %v1463 = vsub.f32 1.0, %v1399
        %1465 = vrot.lane.b32.xlu0 %v656, 32
        %v1466 = vpop.permute.xlu0 %1465
        %v1468 = vmul.f32 %v1463, %v1466
        %1470 = vrot.lane.b32.xlu0 %v1462, 96
        %v1471 = vpop.permute.xlu0 %1470
        %v1473 = vmul.f32 %v1399, %v1471
        %v1474 = vadd.f32 %v1468, %v1473
        %v1475 = vld [vmem:[%s9] sm:$0x1]
        %v1476 = vld [vmem:[%s10] sm:$0x1]
        %1478 = vrot.lane.b32.xlu0 %v1474, 96
        %v1479 = vpop.permute.xlu0 %1478
        %vm1481 = vcmask 257024
        %v1482 = vsel %vm1481, %v1479, 0.0
        %1483 = vadd.xlane.f32.xlu0 %v1482
        %v1484 = vpop.xlane.xlu0 %1483
        %v1485 = vrcp.pop 32.0
        %v1486 = vmul.f32 %v1484, %v1485
        %v1487 = vsub.f32 %v1474, %v1486
        %v1488 = vmul.f32 %v1487, %v1487
        %1490 = vrot.lane.b32.xlu0 %v1488, 96
        %v1491 = vpop.permute.xlu0 %1490
        %v1493 = vsel %vm1481, %v1491, 0.0
        %1494 = vadd.xlane.f32.xlu0 %v1493
        %v1495 = vpop.xlane.xlu0 %1494
        %v1496 = vmul.f32 %v1495, %v1485
        %v1497 = vadd.f32 %v1496, 1e-06
        %v1498 = vrsqrt.pop %v1497
        %v1499 = vmul.f32 %v1487, %v1498
        %v1501 = vlaneseq
        %v1502 = vshrl.u32 %v1501, 7
        %v1503 = vsub.s32 0, %v1502
        %v1504 = vrot.slane %v1475, %v1503
        %1505 = vrot.lane.b32.xlu0 %v1504, 32
        %v1506 = vpop.permute.xlu0 %1505
        %v1508 = vmul.f32 %v1499, %v1506
        %v1510 = vlaneseq
        %v1511 = vshrl.u32 %v1510, 7
        %v1512 = vsub.s32 0, %v1511
        %v1513 = vrot.slane %v1476, %v1512
        %1514 = vrot.lane.b32.xlu0 %v1513, 32
        %v1515 = vpop.permute.xlu0 %1514
        %v1517 = vadd.f32 %v1508, %v1515
        %v1518 = vld [vmem:[%s11] sm:$0xf]
        %v1519 = vld [vmem:[%s11 + $0x4] sm:$0xf]
        %v1520 = vld [vmem:[%s11 + $0x8] sm:$0xf]
        %v1521 = vld [vmem:[%s11 + $0xc] sm:$0xf]
        %v1522 = vpack.c.bf16 %v1517, %v1517
        %v1523 = vld [vmem:[%s12] sm:$0x1]
        %v1525 = vlaneseq
        %v1526 = vshrl.u32 %v1525, 7
        %v1527 = vsub.s32 0, %v1526
        %v1528 = vrot.slane %v1523, %v1527
        %1531 = vrot.lane.b32.xlu0 %v1522, 96
        %v1532 = vpop.permute.xlu0 %1531
        %v1537 = vunpack.c.l.b16 %v1518
        %v1538 = vunpack.c.l.b16 %v1519
        %v1539 = vunpack.c.l.b16 %v1520
        %v1540 = vunpack.c.l.b16 %v1521
        %v1541 = vpack.c.b16 %v1538, %v1537
        %v1542 = vpack.c.b16 %v1540, %v1539
        %v1546 = vsel %vm683, %v1532, 0
        %1548 = vmatprep.subr.bf16.mxu0 0
        %1549 = vmatpush1.bf16.msra.mxu0 %v1541
        %1550 = vmatprep.subr.bf16.mxu0 0
        %1551 = vmatpush1.bf16.msra.mxu0 %v1542
        %1552 = vmatprep.subr.bf16.mxu0 0
        %1553 = vmatpush1.bf16.msra.mxu0 0
        %1554 = vmatprep.subr.bf16.mxu0 0
        %1555 = vmatpush1.bf16.msra.mxu0 0
        %1556 = vmatprep.subr.bf16.mxu0 0
        %1557 = vmatpush1.bf16.msra.mxu0 0
        %1558 = vmatprep.subr.bf16.mxu0 0
        %1559 = vmatpush1.bf16.msra.mxu0 0
        %1560 = vmatprep.subr.bf16.mxu0 0
        %1561 = vmatpush1.bf16.msra.mxu0 0
        %1562 = vmatprep.subr.bf16.mxu0 0
        %1563 = vmatpush1.bf16.msra.mxu0 0
        %1564 = vmatprep.subr.bf16.mxu0 0
        %1565 = vmatpush1.bf16.msra.mxu0 0
        %1566 = vmatprep.subr.bf16.mxu0 0
        %1567 = vmatpush1.bf16.msra.mxu0 0
        %1568 = vmatprep.subr.bf16.mxu0 0
        %1569 = vmatpush1.bf16.msra.mxu0 0
        %1570 = vmatprep.subr.bf16.mxu0 0
        %1571 = vmatpush1.bf16.msra.mxu0 0
        %1572 = vmatprep.subr.bf16.mxu0 0
        %1573 = vmatpush1.bf16.msra.mxu0 0
        %1574 = vmatprep.subr.bf16.mxu0 0
        %1575 = vmatpush1.bf16.msra.mxu0 0
        %1576 = vmatprep.subr.bf16.mxu0 0
        %1577 = vmatpush1.bf16.msra.mxu0 0
        %1578 = vmatprep.subr.bf16.mxu0 0
        %1579 = vmatpush1.bf16.msra.mxu0 0
        %1580 = vmatprep.mubr.bf16.mxu0 0
        %1581 = vmatmul.mubr.bf16.gmra.mrb[0].mxu0 %v1546
        %v1582 = vpop.f32.mrb[0].mxu0
        %v1583 = vadd.f32 %v1528, %v1582
        %v1584 = vpop.f32.mrb[0].mxu0
        %v1585 = vpop.f32.mrb[0].mxu0
        %v1586 = vpop.f32.mrb[0].mxu0
        %1587 = vdwg.mxu0
        %v1588 = vmax.f32 %v1583, 0.0
        %v1589 = vld [vmem:[%s13] sm:$0xf]
        %v1590 = vld [vmem:[%s13 + $0x4] sm:$0xf]
        %v1591 = vld [vmem:[%s13 + $0x8] sm:$0xf]
        %v1592 = vld [vmem:[%s13 + $0xc] sm:$0xf]
        %v1593 = vpack.c.bf16 %v1588, %v1588
        %v1594 = vld [vmem:[#allocation2] sm:$0x1]
        %v1596 = vlaneseq
        %v1597 = vshrl.u32 %v1596, 7
        %v1598 = vsub.s32 0, %v1597
        %v1599 = vrot.slane %v1594, %v1598
        %v1605 = vunpack.c.l.b16 %v1589
        %v1606 = vunpack.c.l.b16 %v1590
        %v1607 = vunpack.c.l.b16 %v1591
        %v1608 = vunpack.c.l.b16 %v1592
        %v1609 = vpack.c.b16 %v1606, %v1605
        %v1610 = vpack.c.b16 %v1608, %v1607
        %v1614 = vsel %vm683, %v1593, 0
        %1616 = vmatprep.subr.bf16.mxu0 0
        %1617 = vmatpush1.bf16.msra.mxu0 %v1609
        %1618 = vmatprep.subr.bf16.mxu0 0
        %1619 = vmatpush1.bf16.msra.mxu0 %v1610
        %1620 = vmatprep.subr.bf16.mxu0 0
        %1621 = vmatpush1.bf16.msra.mxu0 0
        %1622 = vmatprep.subr.bf16.mxu0 0
        %1623 = vmatpush1.bf16.msra.mxu0 0
        %1624 = vmatprep.subr.bf16.mxu0 0
        %1625 = vmatpush1.bf16.msra.mxu0 0
        %1626 = vmatprep.subr.bf16.mxu0 0
        %1627 = vmatpush1.bf16.msra.mxu0 0
        %1628 = vmatprep.subr.bf16.mxu0 0
        %1629 = vmatpush1.bf16.msra.mxu0 0
        %1630 = vmatprep.subr.bf16.mxu0 0
        %1631 = vmatpush1.bf16.msra.mxu0 0
        %1632 = vmatprep.subr.bf16.mxu0 0
        %1633 = vmatpush1.bf16.msra.mxu0 0
        %1634 = vmatprep.subr.bf16.mxu0 0
        %1635 = vmatpush1.bf16.msra.mxu0 0
        %1636 = vmatprep.subr.bf16.mxu0 0
        %1637 = vmatpush1.bf16.msra.mxu0 0
        %1638 = vmatprep.subr.bf16.mxu0 0
        %1639 = vmatpush1.bf16.msra.mxu0 0
        %1640 = vmatprep.subr.bf16.mxu0 0
        %1641 = vmatpush1.bf16.msra.mxu0 0
        %1642 = vmatprep.subr.bf16.mxu0 0
        %1643 = vmatpush1.bf16.msra.mxu0 0
        %1644 = vmatprep.subr.bf16.mxu0 0
        %1645 = vmatpush1.bf16.msra.mxu0 0
        %1646 = vmatprep.subr.bf16.mxu0 0
        %1647 = vmatpush1.bf16.msra.mxu0 0
        %1648 = vmatprep.mubr.bf16.mxu0 0
        %1649 = vmatmul.mubr.bf16.gmra.mrb[0].mxu0 %v1614
        %v1650 = vpop.f32.mrb[0].mxu0
        %v1651 = vadd.f32 %v1599, %v1650
        %v1652 = vpop.f32.mrb[0].mxu0
        %v1653 = vpop.f32.mrb[0].mxu0
        %v1654 = vpop.f32.mrb[0].mxu0
        %1655 = vdwg.mxu0
        %v1656 = vld [vmem:[%s15] sm:$0xf]
        %v1657 = vld [vmem:[%s15 + $0x4] sm:$0xf]
        %v1658 = vld [vmem:[%s15 + $0x8] sm:$0xf]
        %v1659 = vld [vmem:[%s15 + $0xc] sm:$0xf]
        %v1660 = vld [vmem:[%s16] sm:$0xf]
        %v1661 = vld [vmem:[%s16 + $0x4] sm:$0xf]
        %v1662 = vld [vmem:[%s16 + $0x8] sm:$0xf]
        %v1663 = vld [vmem:[%s16 + $0xc] sm:$0xf]
        %v1664 = vld [vmem:[%s17] sm:$0xf]
        %v1665 = vld [vmem:[%s17 + $0x4] sm:$0xf]
        %v1666 = vld [vmem:[%s17 + $0x8] sm:$0xf]
        %v1667 = vld [vmem:[%s17 + $0xc] sm:$0xf]
        %v1668 = vpack.c.bf16 %v1651, %v1651
        %v1673 = vunpack.c.l.b16 %v1656
        %v1674 = vunpack.c.l.b16 %v1657
        %v1675 = vunpack.c.l.b16 %v1658
        %v1676 = vunpack.c.l.b16 %v1659
        %v1677 = vpack.c.b16 %v1674, %v1673
        %v1678 = vpack.c.b16 %v1676, %v1675
        %v1682 = vsel %vm683, %v1668, 0
        %1684 = vmatprep.subr.bf16.mxu0 0
        %1685 = vmatpush1.bf16.msra.mxu0 %v1677
        %1686 = vmatprep.subr.bf16.mxu0 0
        %1687 = vmatpush1.bf16.msra.mxu0 %v1678
        %1688 = vmatprep.subr.bf16.mxu0 0
        %1689 = vmatpush1.bf16.msra.mxu0 0
        %1690 = vmatprep.subr.bf16.mxu0 0
        %1691 = vmatpush1.bf16.msra.mxu0 0
        %1692 = vmatprep.subr.bf16.mxu0 0
        %1693 = vmatpush1.bf16.msra.mxu0 0
        %1694 = vmatprep.subr.bf16.mxu0 0
        %1695 = vmatpush1.bf16.msra.mxu0 0
        %1696 = vmatprep.subr.bf16.mxu0 0
        %1697 = vmatpush1.bf16.msra.mxu0 0
        %1698 = vmatprep.subr.bf16.mxu0 0
        %1699 = vmatpush1.bf16.msra.mxu0 0
        %1700 = vmatprep.subr.bf16.mxu0 0
        %1701 = vmatpush1.bf16.msra.mxu0 0
        %1702 = vmatprep.subr.bf16.mxu0 0
        %1703 = vmatpush1.bf16.msra.mxu0 0
        %1704 = vmatprep.subr.bf16.mxu0 0
        %1705 = vmatpush1.bf16.msra.mxu0 0
        %1706 = vmatprep.subr.bf16.mxu0 0
        %1707 = vmatpush1.bf16.msra.mxu0 0
        %1708 = vmatprep.subr.bf16.mxu0 0
        %1709 = vmatpush1.bf16.msra.mxu0 0
        %1710 = vmatprep.subr.bf16.mxu0 0
        %1711 = vmatpush1.bf16.msra.mxu0 0
        %1712 = vmatprep.subr.bf16.mxu0 0
        %1713 = vmatpush1.bf16.msra.mxu0 0
        %1714 = vmatprep.subr.bf16.mxu0 0
        %1715 = vmatpush1.bf16.msra.mxu0 0
        %1716 = vmatprep.mubr.bf16.mxu0 0
        %1717 = vmatmul.mubr.bf16.gmra.mrb[0].mxu0 %v1682
        %v1718 = vpop.f32.mrb[0].mxu0
        %v1719 = vadd.f32 0.0, %v1718
        %v1720 = vpop.f32.mrb[0].mxu0
        %v1721 = vpop.f32.mrb[0].mxu0
        %v1722 = vpop.f32.mrb[0].mxu0
        %1723 = vdwg.mxu0
        %v1724 = vpack.c.bf16 %v1474, %v1474
        %1726 = vrot.lane.b32.xlu0 %v1724, 96
        %v1727 = vpop.permute.xlu0 %1726
        %v1732 = vunpack.c.l.b16 %v1660
        %v1733 = vunpack.c.l.b16 %v1661
        %v1734 = vunpack.c.l.b16 %v1662
        %v1735 = vunpack.c.l.b16 %v1663
        %v1736 = vpack.c.b16 %v1733, %v1732
        %v1737 = vpack.c.b16 %v1735, %v1734
        %v1741 = vsel %vm683, %v1727, 0
        %1743 = vmatprep.subr.bf16.mxu0 0
        %1744 = vmatpush1.bf16.msra.mxu0 %v1736
        %1745 = vmatprep.subr.bf16.mxu0 0
        %1746 = vmatpush1.bf16.msra.mxu0 %v1737
        %1747 = vmatprep.subr.bf16.mxu0 0
        %1748 = vmatpush1.bf16.msra.mxu0 0
        %1749 = vmatprep.subr.bf16.mxu0 0
        %1750 = vmatpush1.bf16.msra.mxu0 0
        %1751 = vmatprep.subr.bf16.mxu0 0
        %1752 = vmatpush1.bf16.msra.mxu0 0
        %1753 = vmatprep.subr.bf16.mxu0 0
        %1754 = vmatpush1.bf16.msra.mxu0 0
        %1755 = vmatprep.subr.bf16.mxu0 0
        %1756 = vmatpush1.bf16.msra.mxu0 0
        %1757 = vmatprep.subr.bf16.mxu0 0
        %1758 = vmatpush1.bf16.msra.mxu0 0
        %1759 = vmatprep.subr.bf16.mxu0 0
        %1760 = vmatpush1.bf16.msra.mxu0 0
        %1761 = vmatprep.subr.bf16.mxu0 0
        %1762 = vmatpush1.bf16.msra.mxu0 0
        %1763 = vmatprep.subr.bf16.mxu0 0
        %1764 = vmatpush1.bf16.msra.mxu0 0
        %1765 = vmatprep.subr.bf16.mxu0 0
        %1766 = vmatpush1.bf16.msra.mxu0 0
        %1767 = vmatprep.subr.bf16.mxu0 0
        %1768 = vmatpush1.bf16.msra.mxu0 0
        %1769 = vmatprep.subr.bf16.mxu0 0
        %1770 = vmatpush1.bf16.msra.mxu0 0
        %1771 = vmatprep.subr.bf16.mxu0 0
        %1772 = vmatpush1.bf16.msra.mxu0 0
        %1773 = vmatprep.subr.bf16.mxu0 0
        %1774 = vmatpush1.bf16.msra.mxu0 0
        %1775 = vmatprep.mubr.bf16.mxu0 0
        %1776 = vmatmul.mubr.bf16.gmra.mrb[0].mxu0 %v1741
        %v1777 = vpop.f32.mrb[0].mxu0
        %v1778 = vadd.f32 0.0, %v1777
        %v1779 = vpop.f32.mrb[0].mxu0
        %v1780 = vpop.f32.mrb[0].mxu0
        %v1781 = vpop.f32.mrb[0].mxu0
        %1782 = vdwg.mxu0
        %v1783 = vadd.f32 %v1719, %v1778
        %v1784 = vxor.u32 %v1783, 2147483648
        %v1785 = vmul.f32 %v1784, 1.442695
        %v1786 = vpow.pop %v1785
        %v1787 = vadd.f32 %v1786, 1.0
        %v1788 = vrcp.pop %v1787
        %v1789 = vmul.f32 1.0, %v1788
        %v1790 = vsub.f32 %v1783, 2.0
        %v1791 = vxor.u32 %v1790, 2147483648
        %v1792 = vmul.f32 %v1791, 1.442695
        %v1793 = vpow.pop %v1792
        %v1794 = vadd.f32 %v1793, 1.0
        %v1795 = vrcp.pop %v1794
        %v1796 = vmul.f32 1.0, %v1795
        %1798 = vrot.lane.b32.xlu0 %v1789, 32
        %v1799 = vpop.permute.xlu0 %1798
        %v1801 = vmul.f32 %v1474, %v1799
        %v1802 = vpack.c.bf16 %v1801, %v1801
        %1804 = vrot.lane.b32.xlu0 %v1802, 96
        %v1805 = vpop.permute.xlu0 %1804
        %v1810 = vunpack.c.l.b16 %v1664
        %v1811 = vunpack.c.l.b16 %v1665
        %v1812 = vunpack.c.l.b16 %v1666
        %v1813 = vunpack.c.l.b16 %v1667
        %v1814 = vpack.c.b16 %v1811, %v1810
        %v1815 = vpack.c.b16 %v1813, %v1812
        %v1819 = vsel %vm683, %v1805, 0
        %1821 = vmatprep.subr.bf16.mxu0 0
        %1822 = vmatpush1.bf16.msra.mxu0 %v1814
        %1823 = vmatprep.subr.bf16.mxu0 0
        %1824 = vmatpush1.bf16.msra.mxu0 %v1815
        %1825 = vmatprep.subr.bf16.mxu0 0
        %1826 = vmatpush1.bf16.msra.mxu0 0
        %1827 = vmatprep.subr.bf16.mxu0 0
        %1828 = vmatpush1.bf16.msra.mxu0 0
        %1829 = vmatprep.subr.bf16.mxu0 0
        %1830 = vmatpush1.bf16.msra.mxu0 0
        %1831 = vmatprep.subr.bf16.mxu0 0
        %1832 = vmatpush1.bf16.msra.mxu0 0
        %1833 = vmatprep.subr.bf16.mxu0 0
        %1834 = vmatpush1.bf16.msra.mxu0 0
        %1835 = vmatprep.subr.bf16.mxu0 0
        %1836 = vmatpush1.bf16.msra.mxu0 0
        %1837 = vmatprep.subr.bf16.mxu0 0
        %1838 = vmatpush1.bf16.msra.mxu0 0
        %1839 = vmatprep.subr.bf16.mxu0 0
        %1840 = vmatpush1.bf16.msra.mxu0 0
        %1841 = vmatprep.subr.bf16.mxu0 0
        %1842 = vmatpush1.bf16.msra.mxu0 0
        %1843 = vmatprep.subr.bf16.mxu0 0
        %1844 = vmatpush1.bf16.msra.mxu0 0
        %1845 = vmatprep.subr.bf16.mxu0 0
        %1846 = vmatpush1.bf16.msra.mxu0 0
        %1847 = vmatprep.subr.bf16.mxu0 0
        %1848 = vmatpush1.bf16.msra.mxu0 0
        %1849 = vmatprep.subr.bf16.mxu0 0
        %1850 = vmatpush1.bf16.msra.mxu0 0
        %1851 = vmatprep.subr.bf16.mxu0 0
        %1852 = vmatpush1.bf16.msra.mxu0 0
        %1853 = vmatprep.mubr.bf16.mxu0 0
        %1854 = vmatmul.mubr.bf16.gmra.mrb[0].mxu0 %v1819
        %v1855 = vpop.f32.mrb[0].mxu0
        %v1856 = vadd.f32 0.0, %v1855
        %v1857 = vpop.f32.mrb[0].mxu0
        %v1858 = vpop.f32.mrb[0].mxu0
        %v1859 = vpop.f32.mrb[0].mxu0
        %1860 = vdwg.mxu0
        %1862 = vrot.lane.b32.xlu0 %v1856, 64
        %v1863 = vpop.permute.xlu0 %1862
        %v1865 = vadd.f32 %v1719, %v1863
        %v1866 = vtanh.pop %v1865
        %v1867 = vsub.f32 1.0, %v1796
        %v1868 = vmul.f32 %v1867, %v1474
        %1870 = vrot.lane.b32.xlu0 %v1866, 96
        %v1871 = vpop.permute.xlu0 %1870
        %v1873 = vmul.f32 %v1796, %v1871
        %v1874 = vadd.f32 %v1868, %v1873
        %v1875 = vld [vmem:[%s18] sm:$0x1]
        %v1876 = vld [vmem:[%s19] sm:$0x1]
        %1878 = vrot.lane.b32.xlu0 %v1874, 96
        %v1879 = vpop.permute.xlu0 %1878
        %v1881 = vsel %vm1481, %v1879, 0.0
        %1882 = vadd.xlane.f32.xlu0 %v1881
        %v1883 = vpop.xlane.xlu0 %1882
        %v1884 = vmul.f32 %v1883, %v1485
        %v1885 = vsub.f32 %v1874, %v1884
        %v1886 = vmul.f32 %v1885, %v1885
        %1888 = vrot.lane.b32.xlu0 %v1886, 96
        %v1889 = vpop.permute.xlu0 %1888
        %v1891 = vsel %vm1481, %v1889, 0.0
        %1892 = vadd.xlane.f32.xlu0 %v1891
        %v1893 = vpop.xlane.xlu0 %1892
        %v1894 = vmul.f32 %v1893, %v1485
        %v1895 = vadd.f32 %v1894, 1e-06
        %v1896 = vrsqrt.pop %v1895
        %v1897 = vmul.f32 %v1885, %v1896
        %v1899 = vlaneseq
        %v1900 = vshrl.u32 %v1899, 7
        %v1901 = vsub.s32 0, %v1900
        %v1902 = vrot.slane %v1875, %v1901
        %1903 = vrot.lane.b32.xlu0 %v1902, 32
        %v1904 = vpop.permute.xlu0 %1903
        %v1906 = vmul.f32 %v1897, %v1904
        %v1908 = vlaneseq
        %v1909 = vshrl.u32 %v1908, 7
        %v1910 = vsub.s32 0, %v1909
        %v1911 = vrot.slane %v1876, %v1910
        %1912 = vrot.lane.b32.xlu0 %v1911, 32
        %v1913 = vpop.permute.xlu0 %1912
        %v1915 = vadd.f32 %v1906, %v1913
        %1917 = vrot.lane.b32.xlu0 %v1915, 96
        %v1918 = vpop.permute.xlu0 %1917
        %1920 = vst.msk [vmem:[%s654] sm:$0xf] %vm1481, %v1918
        %p1921 = scmp.lt.s32.totalorder %s32, 3
        %s1922 = scalar_select %p1921, %s32, 3
        %s1923 = smul.addr %s1922, 4
        %s1924 = scalar_lea.vmem %s20, %s1923
        // Predicated region
        $region105: #{transformer_intention_layer.6} parent=99 // pred_check
          %p1925 = pneg %p480
        $region106: #{transformer_intention_layer.6} parent=99 // pred_check_branch
          %1927 = sbr.rel (%p1925) target = $region108
        $region107: #{transformer_intention_layer.6} parent=99 // pred_region
          _
        $region108: #{transformer_intention_layer.6} parent=99 // pred_fallthru
          _
      $region100: #{transformer_intention_layer.6} parent=5 // pred_fallthru
        _
      %p1928 = scmp.le.s32.totalorder 2, %s27
      // Predicated region
      $region109: #{transformer_intention_layer.6} parent=5 // pred_check
        %p1929 = pneg %p1928
      $region110: #{transformer_intention_layer.6} parent=5 // pred_check_branch
        %1931 = sbr.rel (%p1929) target = $region112
      $region111: #{transformer_intention_layer.6} parent=5 // pred_region
        %s1932 = ssub.s32 %s27, 2
        // Predicated region
        $region113: #{transformer_intention_layer.6} parent=111 // pred_check
          %p1933 = pneg %p486
        $region114: #{transformer_intention_layer.6} parent=111 // pred_check_branch
          %1935 = sbr.rel (%p1933) target = $region116
        $region115: #{transformer_intention_layer.6} parent=111 // pred_region
          %p1936 = scmp.lt.s32.totalorder %s33, 3
          %s1937 = scalar_select %p1936, %s33, 3
          %s1938 = smul.addr %s1937, 4
          %s1939 = scalar_lea.vmem %s20, %s1938
        $region116: #{transformer_intention_layer.6} parent=111 // pred_fallthru
          _
      $region112: #{transformer_intention_layer.6} parent=5 // pred_fallthru
        _
    $region6: #{transformer_intention_layer.6} parent=1 // loop_footer
      %s31 = sadd.s32 1, %s27
    $region7: #{transformer_intention_layer.6} parent=1 // loop_footer_branch
      %26 = sbr.rel target = $region3
    $region8: #{transformer_intention_layer.6} parent=1 // loop_exit
      _
    %1940 = vsyncpa [#allocation3], 1
    %s1941 = scalar_lea.sflag [#allocation3], 1
    %1942 = vsyncpa %s1941, 1

// kernel: transformer_intention_layer.8
$region0: #{transformer_intention_layer.8}
  #allocation0 [shape = 'u32[]', space=smem, size = 0x4, offset = 0x4, fixed_abs, tag = 'smem constant byte address 0x4 - core index']
  #allocation1 [shape = 'u32[144,128]{1,0:T(1,128)}', space=vmem, size = 0x12000, scoped, tag = 'internal scratch']
  %s0 = inlined_call_operand.vmem [shape: f32[16,32], index: 0, kind: input, shape index: {}]
  %s1 = inlined_call_operand.vmem [shape: bf16[16,32], index: 1, kind: input, shape index: {}]
  %s2 = inlined_call_operand.vmem [shape: bf16[16,32], index: 2, kind: input, shape index: {}]
  %s3 = inlined_call_operand.vmem [shape: bf16[16,32], index: 3, kind: input, shape index: {}]
  %s4 = inlined_call_operand.vmem [shape: bf16[32,32], index: 4, kind: input, shape index: {}]
  %s5 = inlined_call_operand.vmem [shape: f32[1,32], index: 5, kind: input, shape index: {}]
  %s6 = inlined_call_operand.vmem [shape: bf16[32,32], index: 6, kind: input, shape index: {}]
  %s7 = inlined_call_operand.vmem [shape: f32[1,32], index: 7, kind: input, shape index: {}]
  %s8 = inlined_call_operand.vmem [shape: bf16[32,96], index: 8, kind: input, shape index: {}]
  %s9 = inlined_call_operand.vmem [shape: bf16[32,64], index: 9, kind: input, shape index: {}]
  %s10 = inlined_call_operand.vmem [shape: bf16[32,32], index: 10, kind: input, shape index: {}]
  %s11 = inlined_call_operand.vmem [shape: f32[1,32], index: 11, kind: input, shape index: {}]
  %s12 = inlined_call_operand.vmem [shape: f32[1,32], index: 12, kind: input, shape index: {}]
  %s13 = inlined_call_operand.vmem [shape: bf16[32,32], index: 13, kind: input, shape index: {}]
  %s14 = inlined_call_operand.vmem [shape: f32[1,32], index: 14, kind: input, shape index: {}]
  %s15 = inlined_call_operand.vmem [shape: bf16[32,32], index: 15, kind: input, shape index: {}]
  %s16 = inlined_call_operand.vmem [shape: f32[1,32], index: 16, kind: input, shape index: {}]
  %s17 = inlined_call_operand.vmem [shape: bf16[32,96], index: 17, kind: input, shape index: {}]
  %s18 = inlined_call_operand.vmem [shape: bf16[32,64], index: 18, kind: input, shape index: {}]
  %s19 = inlined_call_operand.vmem [shape: bf16[32,32], index: 19, kind: input, shape index: {}]
  %s20 = inlined_call_operand.vmem [shape: f32[1,32], index: 20, kind: input, shape index: {}]
  %s21 = inlined_call_operand.vmem [shape: f32[1,32], index: 21, kind: input, shape index: {}]
  %s22 = inlined_call_operand.vmem [shape: f32[16,32], index: 22, kind: output, shape index: {}]
  %s23 = sld [smem:[#allocation0]]
  $region98: #{transformer_intention_layer.8} parent=0
    _
  %s25 = ssub.s32 1, %s23
  %s26 = scalar_select 0, %s25, %s23
  // Predicated region
  $region2: #{transformer_intention_layer.8} parent=0 // pred_check
    _
  $region3: #{transformer_intention_layer.8} parent=0 // pred_check_branch
    %28 = sbr.rel (0) target = $region5
  $region4: #{transformer_intention_layer.8} parent=0 // pred_region
    _
  $region5: #{transformer_intention_layer.8} parent=0 // pred_fallthru
    _
  // Predicated region
  $region6: #{transformer_intention_layer.8} parent=0 // pred_check
    _
  $region7: #{transformer_intention_layer.8} parent=0 // pred_check_branch
    %30 = sbr.rel (0) target = $region9
  $region8: #{transformer_intention_layer.8} parent=0 // pred_region
    _
  $region9: #{transformer_intention_layer.8} parent=0 // pred_fallthru
    _
  // Predicated region
  $region10: #{transformer_intention_layer.8} parent=0 // pred_check
    _
  $region11: #{transformer_intention_layer.8} parent=0 // pred_check_branch
    %32 = sbr.rel (0) target = $region13
  $region12: #{transformer_intention_layer.8} parent=0 // pred_region
    _
  $region13: #{transformer_intention_layer.8} parent=0 // pred_fallthru
    _
  // Predicated region
  $region14: #{transformer_intention_layer.8} parent=0 // pred_check
    _
  $region15: #{transformer_intention_layer.8} parent=0 // pred_check_branch
    %34 = sbr.rel (0) target = $region17
  $region16: #{transformer_intention_layer.8} parent=0 // pred_region
    _
  $region17: #{transformer_intention_layer.8} parent=0 // pred_fallthru
    _
  // Predicated region
  $region18: #{transformer_intention_layer.8} parent=0 // pred_check
    _
  $region19: #{transformer_intention_layer.8} parent=0 // pred_check_branch
    %36 = sbr.rel (0) target = $region21
  $region20: #{transformer_intention_layer.8} parent=0 // pred_region
    _
  $region21: #{transformer_intention_layer.8} parent=0 // pred_fallthru
    _
  // Predicated region
  $region22: #{transformer_intention_layer.8} parent=0 // pred_check
    _
  $region23: #{transformer_intention_layer.8} parent=0 // pred_check_branch
    %38 = sbr.rel (0) target = $region25
  $region24: #{transformer_intention_layer.8} parent=0 // pred_region
    _
  $region25: #{transformer_intention_layer.8} parent=0 // pred_fallthru
    _
  // Predicated region
  $region26: #{transformer_intention_layer.8} parent=0 // pred_check
    _
  $region27: #{transformer_intention_layer.8} parent=0 // pred_check_branch
    %40 = sbr.rel (0) target = $region29
  $region28: #{transformer_intention_layer.8} parent=0 // pred_region
    _
  $region29: #{transformer_intention_layer.8} parent=0 // pred_fallthru
    _
  // Predicated region
  $region30: #{transformer_intention_layer.8} parent=0 // pred_check
    _
  $region31: #{transformer_intention_layer.8} parent=0 // pred_check_branch
    %42 = sbr.rel (0) target = $region33
  $region32: #{transformer_intention_layer.8} parent=0 // pred_region
    _
  $region33: #{transformer_intention_layer.8} parent=0 // pred_fallthru
    _
  // Predicated region
  $region34: #{transformer_intention_layer.8} parent=0 // pred_check
    _
  $region35: #{transformer_intention_layer.8} parent=0 // pred_check_branch
    %44 = sbr.rel (0) target = $region37
  $region36: #{transformer_intention_layer.8} parent=0 // pred_region
    _
  $region37: #{transformer_intention_layer.8} parent=0 // pred_fallthru
    _
  // Predicated region
  $region38: #{transformer_intention_layer.8} parent=0 // pred_check
    _
  $region39: #{transformer_intention_layer.8} parent=0 // pred_check_branch
    %46 = sbr.rel (0) target = $region41
  $region40: #{transformer_intention_layer.8} parent=0 // pred_region
    _
  $region41: #{transformer_intention_layer.8} parent=0 // pred_fallthru
    _
  // Predicated region
  $region42: #{transformer_intention_layer.8} parent=0 // pred_check
    _
  $region43: #{transformer_intention_layer.8} parent=0 // pred_check_branch
    %48 = sbr.rel (0) target = $region45
  $region44: #{transformer_intention_layer.8} parent=0 // pred_region
    _
  $region45: #{transformer_intention_layer.8} parent=0 // pred_fallthru
    _
  // Predicated region
  $region46: #{transformer_intention_layer.8} parent=0 // pred_check
    _
  $region47: #{transformer_intention_layer.8} parent=0 // pred_check_branch
    %50 = sbr.rel (0) target = $region49
  $region48: #{transformer_intention_layer.8} parent=0 // pred_region
    _
  $region49: #{transformer_intention_layer.8} parent=0 // pred_fallthru
    _
  // Predicated region
  $region50: #{transformer_intention_layer.8} parent=0 // pred_check
    _
  $region51: #{transformer_intention_layer.8} parent=0 // pred_check_branch
    %52 = sbr.rel (0) target = $region53
  $region52: #{transformer_intention_layer.8} parent=0 // pred_region
    _
  $region53: #{transformer_intention_layer.8} parent=0 // pred_fallthru
    _
  // Predicated region
  $region54: #{transformer_intention_layer.8} parent=0 // pred_check
    _
  $region55: #{transformer_intention_layer.8} parent=0 // pred_check_branch
    %54 = sbr.rel (0) target = $region57
  $region56: #{transformer_intention_layer.8} parent=0 // pred_region
    _
  $region57: #{transformer_intention_layer.8} parent=0 // pred_fallthru
    _
  // Predicated region
  $region58: #{transformer_intention_layer.8} parent=0 // pred_check
    _
  $region59: #{transformer_intention_layer.8} parent=0 // pred_check_branch
    %56 = sbr.rel (0) target = $region61
  $region60: #{transformer_intention_layer.8} parent=0 // pred_region
    _
  $region61: #{transformer_intention_layer.8} parent=0 // pred_fallthru
    _
  // Predicated region
  $region62: #{transformer_intention_layer.8} parent=0 // pred_check
    _
  $region63: #{transformer_intention_layer.8} parent=0 // pred_check_branch
    %58 = sbr.rel (0) target = $region65
  $region64: #{transformer_intention_layer.8} parent=0 // pred_region
    _
  $region65: #{transformer_intention_layer.8} parent=0 // pred_fallthru
    _
  // Predicated region
  $region66: #{transformer_intention_layer.8} parent=0 // pred_check
    _
  $region67: #{transformer_intention_layer.8} parent=0 // pred_check_branch
    %60 = sbr.rel (0) target = $region69
  $region68: #{transformer_intention_layer.8} parent=0 // pred_region
    _
  $region69: #{transformer_intention_layer.8} parent=0 // pred_fallthru
    _
  // Predicated region
  $region70: #{transformer_intention_layer.8} parent=0 // pred_check
    _
  $region71: #{transformer_intention_layer.8} parent=0 // pred_check_branch
    %62 = sbr.rel (0) target = $region73
  $region72: #{transformer_intention_layer.8} parent=0 // pred_region
    _
  $region73: #{transformer_intention_layer.8} parent=0 // pred_fallthru
    _
  // Predicated region
  $region74: #{transformer_intention_layer.8} parent=0 // pred_check
    _
  $region75: #{transformer_intention_layer.8} parent=0 // pred_check_branch
    %64 = sbr.rel (0) target = $region77
  $region76: #{transformer_intention_layer.8} parent=0 // pred_region
    _
  $region77: #{transformer_intention_layer.8} parent=0 // pred_fallthru
    _
  // Predicated region
  $region78: #{transformer_intention_layer.8} parent=0 // pred_check
    _
  $region79: #{transformer_intention_layer.8} parent=0 // pred_check_branch
    %66 = sbr.rel (0) target = $region81
  $region80: #{transformer_intention_layer.8} parent=0 // pred_region
    _
  $region81: #{transformer_intention_layer.8} parent=0 // pred_fallthru
    _
  // Predicated region
  $region82: #{transformer_intention_layer.8} parent=0 // pred_check
    _
  $region83: #{transformer_intention_layer.8} parent=0 // pred_check_branch
    %68 = sbr.rel (0) target = $region85
  $region84: #{transformer_intention_layer.8} parent=0 // pred_region
    _
  $region85: #{transformer_intention_layer.8} parent=0 // pred_fallthru
    _
  // Predicated region
  $region86: #{transformer_intention_layer.8} parent=0 // pred_check
    _
  $region87: #{transformer_intention_layer.8} parent=0 // pred_check_branch
    %70 = sbr.rel (0) target = $region89
  $region88: #{transformer_intention_layer.8} parent=0 // pred_region
    _
  $region89: #{transformer_intention_layer.8} parent=0 // pred_fallthru
    _
  %v72 = vld [vmem:[%s0] sm:$0xff]
  %v73 = vld [vmem:[%s0 + $0x8] sm:$0xff]
  %v74 = vld [vmem:[%s1] sm:$0xf]
  %v75 = vld [vmem:[%s1 + $0x4] sm:$0xf]
  %v76 = vunpack.c.l.bf16 %v74
  %v77 = vunpack.c.l.bf16 %v75
  %v78 = vld [vmem:[%s4] sm:$0xf]
  %v79 = vld [vmem:[%s4 + $0x4] sm:$0xf]
  %v80 = vld [vmem:[%s4 + $0x8] sm:$0xf]
  %v81 = vld [vmem:[%s4 + $0xc] sm:$0xf]
  %v82 = vpack.c.bf16 %v73, %v72
  %v83 = vld [vmem:[%s5] sm:$0x1]
  %v85 = vlaneseq
  %v86 = vshrl.u32 %v85, 7
  %v87 = vsub.s32 0, %v86
  %v88 = vrot.slane %v83, %v87
  %v94 = vunpack.c.l.b16 %v78
  %v95 = vunpack.c.l.b16 %v79
  %v96 = vunpack.c.l.b16 %v80
  %v97 = vunpack.c.l.b16 %v81
  %v98 = vpack.c.b16 %v95, %v94
  %v99 = vpack.c.b16 %v97, %v96
  %vm102 = vcmask 261120
  %v104 = vsel %vm102, %v82, 0
  %106 = vmatprep.subr.bf16.mxu0 0
  %107 = vmatpush1.bf16.msra.mxu0 %v98
  %108 = vmatprep.subr.bf16.mxu0 0
  %109 = vmatpush1.bf16.msra.mxu0 %v99
  %110 = vmatprep.subr.bf16.mxu0 0
  %111 = vmatpush1.bf16.msra.mxu0 0
  %112 = vmatprep.subr.bf16.mxu0 0
  %113 = vmatpush1.bf16.msra.mxu0 0
  %114 = vmatprep.subr.bf16.mxu0 0
  %115 = vmatpush1.bf16.msra.mxu0 0
  %116 = vmatprep.subr.bf16.mxu0 0
  %117 = vmatpush1.bf16.msra.mxu0 0
  %118 = vmatprep.subr.bf16.mxu0 0
  %119 = vmatpush1.bf16.msra.mxu0 0
  %120 = vmatprep.subr.bf16.mxu0 0
  %121 = vmatpush1.bf16.msra.mxu0 0
  %122 = vmatprep.subr.bf16.mxu0 0
  %123 = vmatpush1.bf16.msra.mxu0 0
  %124 = vmatprep.subr.bf16.mxu0 0
  %125 = vmatpush1.bf16.msra.mxu0 0
  %126 = vmatprep.subr.bf16.mxu0 0
  %127 = vmatpush1.bf16.msra.mxu0 0
  %128 = vmatprep.subr.bf16.mxu0 0
  %129 = vmatpush1.bf16.msra.mxu0 0
  %130 = vmatprep.subr.bf16.mxu0 0
  %131 = vmatpush1.bf16.msra.mxu0 0
  %132 = vmatprep.subr.bf16.mxu0 0
  %133 = vmatpush1.bf16.msra.mxu0 0
  %134 = vmatprep.subr.bf16.mxu0 0
  %135 = vmatpush1.bf16.msra.mxu0 0
  %136 = vmatprep.subr.bf16.mxu0 0
  %137 = vmatpush1.bf16.msra.mxu0 0
  %138 = vmatprep.mubr.bf16.mxu0 0
  %139 = vmatmul.mubr.bf16.gmra.mrb[0].mxu0 %v104
  %v140 = vpop.f32.mrb[0].mxu0
  %v141 = vadd.f32 %v88, %v140
  %v142 = vpop.f32.mrb[0].mxu0
  %v143 = vpop.f32.mrb[0].mxu0
  %v144 = vadd.f32 %v88, %v143
  %v145 = vpop.f32.mrb[0].mxu0
  %146 = vdwg.mxu0
  %v147 = vadd.f32 %v141, %v76
  %v148 = vadd.f32 %v144, %v77
  %v149 = vld [vmem:[%s2] sm:$0xf]
  %v150 = vld [vmem:[%s2 + $0x4] sm:$0xf]
  %v151 = vld [vmem:[%s3] sm:$0xf]
  %v152 = vld [vmem:[%s3 + $0x4] sm:$0xf]
  %v153 = vmul.f32 %v147, 0.35355338
  %v154 = vmul.f32 %v148, 0.35355338
  %v155 = vpack.c.bf16 %v154, %v153
  %v158 = vunpack.c.l.b16 %v149
  %v159 = vunpack.c.l.b16 %v150
  %v160 = vpack.c.b16 %v159, %v158
  %vm161 = vcmask 64512
  %v163 = vsel %vm161, %v155, 0
  %v166 = vsel %vm161, %v160, 0
  %168 = vmatprep.subr.bf16.mxu0 0
  %169 = vmatpush1.bf16.xpose.msra.mxu0 %v166
  %170 = vmatprep.subr.bf16.mxu0 0
  %171 = vmatpush1.bf16.xpose.msra.mxu0 0
  %172 = vmatprep.subr.bf16.mxu0 0
  %173 = vmatpush1.bf16.xpose.msra.mxu0 0
  %174 = vmatprep.subr.bf16.mxu0 0
  %175 = vmatpush1.bf16.xpose.msra.mxu0 0
  %176 = vmatprep.subr.bf16.mxu0 0
  %177 = vmatpush1.bf16.xpose.msra.mxu0 0
  %178 = vmatprep.subr.bf16.mxu0 0
  %179 = vmatpush1.bf16.xpose.msra.mxu0 0
  %180 = vmatprep.subr.bf16.mxu0 0
  %181 = vmatpush1.bf16.xpose.msra.mxu0 0
  %182 = vmatprep.subr.bf16.mxu0 0
  %183 = vmatpush1.bf16.xpose.msra.mxu0 0
  %184 = vmatprep.subr.bf16.mxu0 0
  %185 = vmatpush1.bf16.xpose.msra.mxu0 0
  %186 = vmatprep.subr.bf16.mxu0 0
  %187 = vmatpush1.bf16.xpose.msra.mxu0 0
  %188 = vmatprep.subr.bf16.mxu0 0
  %189 = vmatpush1.bf16.xpose.msra.mxu0 0
  %190 = vmatprep.subr.bf16.mxu0 0
  %191 = vmatpush1.bf16.xpose.msra.mxu0 0
  %192 = vmatprep.subr.bf16.mxu0 0
  %193 = vmatpush1.bf16.xpose.msra.mxu0 0
  %194 = vmatprep.subr.bf16.mxu0 0
  %195 = vmatpush1.bf16.xpose.msra.mxu0 0
  %196 = vmatprep.subr.bf16.mxu0 0
  %197 = vmatpush1.bf16.xpose.msra.mxu0 0
  %198 = vmatprep.subr.bf16.mxu0 0
  %199 = vmatpush1.bf16.xpose.msra.mxu0 0
  %200 = vmatprep.mubr.bf16.mxu0 0
  %201 = vmatmul.mubr.bf16.gmra.mrb[0].mxu0 %v163
  %v202 = vpop.f32.mrb[0].mxu0
  %v203 = vadd.f32 0.0, %v202
  %v204 = vpop.f32.mrb[0].mxu0
  %v205 = vpop.f32.mrb[0].mxu0
  %v206 = vadd.f32 0.0, %v205
  %v207 = vpop.f32.mrb[0].mxu0
  %208 = vdwg.mxu0
  %vm209 = vcmask 130048
  %v210 = vsel %vm209, %v203, -inf
  %211 = vmax.xlane.f32.xlu0 %v210
  %v212 = vpop.xlane.xlu0 %211
  %v213 = vsel %vm209, %v206, -inf
  %214 = vmax.xlane.f32.xlu0 %v213
  %v215 = vpop.xlane.xlu0 %214
  %v216 = vsub.f32 %v203, %v212
  %v217 = vsub.f32 %v206, %v215
  %v218 = vmul.f32 %v216, 1.442695
  %v219 = vpow.pop %v218
  %v220 = vmul.f32 %v217, 1.442695
  %v221 = vpow.pop %v220
  %v222 = vsel %vm209, %v219, 0.0
  %223 = vadd.xlane.f32.xlu0 %v222
  %v224 = vpop.xlane.xlu0 %223
  %v225 = vsel %vm209, %v221, 0.0
  %226 = vadd.xlane.f32.xlu0 %v225
  %v227 = vpop.xlane.xlu0 %226
  %v228 = vrcp.pop %v224
  %v229 = vmul.f32 %v219, %v228
  %v230 = vrcp.pop %v227
  %v231 = vmul.f32 %v221, %v230
  %v232 = vpack.c.bf16 %v231, %v229
  %v235 = vunpack.c.l.b16 %v151
  %v236 = vunpack.c.l.b16 %v152
  %v237 = vpack.c.b16 %v236, %v235
  %v240 = vsel %vm209, %v232, 0
  %242 = vmatprep.subr.bf16.mxu0 0
  %243 = vmatpush1.bf16.msra.mxu0 %v237
  %244 = vmatprep.subr.bf16.mxu0 0
  %245 = vmatpush1.bf16.msra.mxu0 0
  %246 = vmatprep.subr.bf16.mxu0 0
  %247 = vmatpush1.bf16.msra.mxu0 0
  %248 = vmatprep.subr.bf16.mxu0 0
  %249 = vmatpush1.bf16.msra.mxu0 0
  %250 = vmatprep.subr.bf16.mxu0 0
  %251 = vmatpush1.bf16.msra.mxu0 0
  %252 = vmatprep.subr.bf16.mxu0 0
  %253 = vmatpush1.bf16.msra.mxu0 0
  %254 = vmatprep.subr.bf16.mxu0 0
  %255 = vmatpush1.bf16.msra.mxu0 0
  %256 = vmatprep.subr.bf16.mxu0 0
  %257 = vmatpush1.bf16.msra.mxu0 0
  %258 = vmatprep.subr.bf16.mxu0 0
  %259 = vmatpush1.bf16.msra.mxu0 0
  %260 = vmatprep.subr.bf16.mxu0 0
  %261 = vmatpush1.bf16.msra.mxu0 0
  %262 = vmatprep.subr.bf16.mxu0 0
  %263 = vmatpush1.bf16.msra.mxu0 0
  %264 = vmatprep.subr.bf16.mxu0 0
  %265 = vmatpush1.bf16.msra.mxu0 0
  %266 = vmatprep.subr.bf16.mxu0 0
  %267 = vmatpush1.bf16.msra.mxu0 0
  %268 = vmatprep.subr.bf16.mxu0 0
  %269 = vmatpush1.bf16.msra.mxu0 0
  %270 = vmatprep.subr.bf16.mxu0 0
  %271 = vmatpush1.bf16.msra.mxu0 0
  %272 = vmatprep.subr.bf16.mxu0 0
  %273 = vmatpush1.bf16.msra.mxu0 0
  %274 = vmatprep.mubr.bf16.mxu0 0
  %275 = vmatmul.mubr.bf16.gmra.mrb[0].mxu0 %v240
  %v276 = vpop.f32.mrb[0].mxu0
  %v277 = vadd.f32 0.0, %v276
  %v278 = vpop.f32.mrb[0].mxu0
  %v279 = vpop.f32.mrb[0].mxu0
  %v280 = vadd.f32 0.0, %v279
  %v281 = vpop.f32.mrb[0].mxu0
  %282 = vdwg.mxu0
  %284 = vrot.lane.b32.xlu0 %v155, 120
  %v285 = vpop.permute.xlu0 %284
  %286 = vrot.lane.b32.xlu0 %v160, 120
  %v287 = vpop.permute.xlu0 %286
  %v289 = vsel %vm161, %v285, 0
  %v292 = vsel %vm161, %v287, 0
  %294 = vmatprep.subr.bf16.mxu0 0
  %295 = vmatpush1.bf16.xpose.msra.mxu0 %v292
  %296 = vmatprep.subr.bf16.mxu0 0
  %297 = vmatpush1.bf16.xpose.msra.mxu0 0
  %298 = vmatprep.subr.bf16.mxu0 0
  %299 = vmatpush1.bf16.xpose.msra.mxu0 0
  %300 = vmatprep.subr.bf16.mxu0 0
  %301 = vmatpush1.bf16.xpose.msra.mxu0 0
  %302 = vmatprep.subr.bf16.mxu0 0
  %303 = vmatpush1.bf16.xpose.msra.mxu0 0
  %304 = vmatprep.subr.bf16.mxu0 0
  %305 = vmatpush1.bf16.xpose.msra.mxu0 0
  %306 = vmatprep.subr.bf16.mxu0 0
  %307 = vmatpush1.bf16.xpose.msra.mxu0 0
  %308 = vmatprep.subr.bf16.mxu0 0
  %309 = vmatpush1.bf16.xpose.msra.mxu0 0
  %310 = vmatprep.subr.bf16.mxu0 0
  %311 = vmatpush1.bf16.xpose.msra.mxu0 0
  %312 = vmatprep.subr.bf16.mxu0 0
  %313 = vmatpush1.bf16.xpose.msra.mxu0 0
  %314 = vmatprep.subr.bf16.mxu0 0
  %315 = vmatpush1.bf16.xpose.msra.mxu0 0
  %316 = vmatprep.subr.bf16.mxu0 0
  %317 = vmatpush1.bf16.xpose.msra.mxu0 0
  %318 = vmatprep.subr.bf16.mxu0 0
  %319 = vmatpush1.bf16.xpose.msra.mxu0 0
  %320 = vmatprep.subr.bf16.mxu0 0
  %321 = vmatpush1.bf16.xpose.msra.mxu0 0
  %322 = vmatprep.subr.bf16.mxu0 0
  %323 = vmatpush1.bf16.xpose.msra.mxu0 0
  %324 = vmatprep.subr.bf16.mxu0 0
  %325 = vmatpush1.bf16.xpose.msra.mxu0 0
  %326 = vmatprep.mubr.bf16.mxu0 0
  %327 = vmatmul.mubr.bf16.gmra.mrb[0].mxu0 %v289
  %v328 = vpop.f32.mrb[0].mxu0
  %v329 = vadd.f32 0.0, %v328
  %v330 = vpop.f32.mrb[0].mxu0
  %v331 = vpop.f32.mrb[0].mxu0
  %v332 = vadd.f32 0.0, %v331
  %v333 = vpop.f32.mrb[0].mxu0
  %334 = vdwg.mxu0
  %v335 = vsel %vm209, %v329, -inf
  %336 = vmax.xlane.f32.xlu0 %v335
  %v337 = vpop.xlane.xlu0 %336
  %v338 = vsel %vm209, %v332, -inf
  %339 = vmax.xlane.f32.xlu0 %v338
  %v340 = vpop.xlane.xlu0 %339
  %v341 = vsub.f32 %v329, %v337
  %v342 = vsub.f32 %v332, %v340
  %v343 = vmul.f32 %v341, 1.442695
  %v344 = vpow.pop %v343
  %v345 = vmul.f32 %v342, 1.442695
  %v346 = vpow.pop %v345
  %v347 = vsel %vm209, %v344, 0.0
  %348 = vadd.xlane.f32.xlu0 %v347
  %v349 = vpop.xlane.xlu0 %348
  %v350 = vsel %vm209, %v346, 0.0
  %351 = vadd.xlane.f32.xlu0 %v350
  %v352 = vpop.xlane.xlu0 %351
  %v353 = vrcp.pop %v349
  %v354 = vmul.f32 %v344, %v353
  %v355 = vrcp.pop %v352
  %v356 = vmul.f32 %v346, %v355
  %v357 = vpack.c.bf16 %v356, %v354
  %358 = vrot.lane.b32.xlu0 %v237, 120
  %v359 = vpop.permute.xlu0 %358
  %v362 = vsel %vm209, %v357, 0
  %364 = vmatprep.subr.bf16.mxu0 0
  %365 = vmatpush1.bf16.msra.mxu0 %v359
  %366 = vmatprep.subr.bf16.mxu0 0
  %367 = vmatpush1.bf16.msra.mxu0 0
  %368 = vmatprep.subr.bf16.mxu0 0
  %369 = vmatpush1.bf16.msra.mxu0 0
  %370 = vmatprep.subr.bf16.mxu0 0
  %371 = vmatpush1.bf16.msra.mxu0 0
  %372 = vmatprep.subr.bf16.mxu0 0
  %373 = vmatpush1.bf16.msra.mxu0 0
  %374 = vmatprep.subr.bf16.mxu0 0
  %375 = vmatpush1.bf16.msra.mxu0 0
  %376 = vmatprep.subr.bf16.mxu0 0
  %377 = vmatpush1.bf16.msra.mxu0 0
  %378 = vmatprep.subr.bf16.mxu0 0
  %379 = vmatpush1.bf16.msra.mxu0 0
  %380 = vmatprep.subr.bf16.mxu0 0
  %381 = vmatpush1.bf16.msra.mxu0 0
  %382 = vmatprep.subr.bf16.mxu0 0
  %383 = vmatpush1.bf16.msra.mxu0 0
  %384 = vmatprep.subr.bf16.mxu0 0
  %385 = vmatpush1.bf16.msra.mxu0 0
  %386 = vmatprep.subr.bf16.mxu0 0
  %387 = vmatpush1.bf16.msra.mxu0 0
  %388 = vmatprep.subr.bf16.mxu0 0
  %389 = vmatpush1.bf16.msra.mxu0 0
  %390 = vmatprep.subr.bf16.mxu0 0
  %391 = vmatpush1.bf16.msra.mxu0 0
  %392 = vmatprep.subr.bf16.mxu0 0
  %393 = vmatpush1.bf16.msra.mxu0 0
  %394 = vmatprep.subr.bf16.mxu0 0
  %395 = vmatpush1.bf16.msra.mxu0 0
  %396 = vmatprep.mubr.bf16.mxu0 0
  %397 = vmatmul.mubr.bf16.gmra.mrb[0].mxu0 %v362
  %v398 = vpop.f32.mrb[0].mxu0
  %v399 = vadd.f32 0.0, %v398
  %v400 = vpop.f32.mrb[0].mxu0
  %v401 = vpop.f32.mrb[0].mxu0
  %v402 = vadd.f32 0.0, %v401
  %v403 = vpop.f32.mrb[0].mxu0
  %404 = vdwg.mxu0
  %405 = vrot.lane.b32.xlu0 %v155, 112
  %v406 = vpop.permute.xlu0 %405
  %407 = vrot.lane.b32.xlu0 %v160, 112
  %v408 = vpop.permute.xlu0 %407
  %v410 = vsel %vm161, %v406, 0
  %v413 = vsel %vm161, %v408, 0
  %415 = vmatprep.subr.bf16.mxu0 0
  %416 = vmatpush1.bf16.xpose.msra.mxu0 %v413
  %417 = vmatprep.subr.bf16.mxu0 0
  %418 = vmatpush1.bf16.xpose.msra.mxu0 0
  %419 = vmatprep.subr.bf16.mxu0 0
  %420 = vmatpush1.bf16.xpose.msra.mxu0 0
  %421 = vmatprep.subr.bf16.mxu0 0
  %422 = vmatpush1.bf16.xpose.msra.mxu0 0
  %423 = vmatprep.subr.bf16.mxu0 0
  %424 = vmatpush1.bf16.xpose.msra.mxu0 0
  %425 = vmatprep.subr.bf16.mxu0 0
  %426 = vmatpush1.bf16.xpose.msra.mxu0 0
  %427 = vmatprep.subr.bf16.mxu0 0
  %428 = vmatpush1.bf16.xpose.msra.mxu0 0
  %429 = vmatprep.subr.bf16.mxu0 0
  %430 = vmatpush1.bf16.xpose.msra.mxu0 0
  %431 = vmatprep.subr.bf16.mxu0 0
  %432 = vmatpush1.bf16.xpose.msra.mxu0 0
  %433 = vmatprep.subr.bf16.mxu0 0
  %434 = vmatpush1.bf16.xpose.msra.mxu0 0
  %435 = vmatprep.subr.bf16.mxu0 0
  %436 = vmatpush1.bf16.xpose.msra.mxu0 0
  %437 = vmatprep.subr.bf16.mxu0 0
  %438 = vmatpush1.bf16.xpose.msra.mxu0 0
  %439 = vmatprep.subr.bf16.mxu0 0
  %440 = vmatpush1.bf16.xpose.msra.mxu0 0
  %441 = vmatprep.subr.bf16.mxu0 0
  %442 = vmatpush1.bf16.xpose.msra.mxu0 0
  %443 = vmatprep.subr.bf16.mxu0 0
  %444 = vmatpush1.bf16.xpose.msra.mxu0 0
  %445 = vmatprep.subr.bf16.mxu0 0
  %446 = vmatpush1.bf16.xpose.msra.mxu0 0
  %447 = vmatprep.mubr.bf16.mxu0 0
  %448 = vmatmul.mubr.bf16.gmra.mrb[0].mxu0 %v410
  %v449 = vpop.f32.mrb[0].mxu0
  %v450 = vadd.f32 0.0, %v449
  %v451 = vpop.f32.mrb[0].mxu0
  %v452 = vpop.f32.mrb[0].mxu0
  %v453 = vadd.f32 0.0, %v452
  %v454 = vpop.f32.mrb[0].mxu0
  %455 = vdwg.mxu0
  %v456 = vsel %vm209, %v450, -inf
  %457 = vmax.xlane.f32.xlu0 %v456
  %v458 = vpop.xlane.xlu0 %457
  %v459 = vsel %vm209, %v453, -inf
  %460 = vmax.xlane.f32.xlu0 %v459
  %v461 = vpop.xlane.xlu0 %460
  %v462 = vsub.f32 %v450, %v458
  %v463 = vsub.f32 %v453, %v461
  %v464 = vmul.f32 %v462, 1.442695
  %v465 = vpow.pop %v464
  %v466 = vmul.f32 %v463, 1.442695
  %v467 = vpow.pop %v466
  %v468 = vsel %vm209, %v465, 0.0
  %469 = vadd.xlane.f32.xlu0 %v468
  %v470 = vpop.xlane.xlu0 %469
  %v471 = vsel %vm209, %v467, 0.0
  %472 = vadd.xlane.f32.xlu0 %v471
  %v473 = vpop.xlane.xlu0 %472
  %v474 = vrcp.pop %v470
  %v475 = vmul.f32 %v465, %v474
  %v476 = vrcp.pop %v473
  %v477 = vmul.f32 %v467, %v476
  %v478 = vpack.c.bf16 %v477, %v475
  %479 = vrot.lane.b32.xlu0 %v237, 112
  %v480 = vpop.permute.xlu0 %479
  %v483 = vsel %vm209, %v478, 0
  %485 = vmatprep.subr.bf16.mxu0 0
  %486 = vmatpush1.bf16.msra.mxu0 %v480
  %487 = vmatprep.subr.bf16.mxu0 0
  %488 = vmatpush1.bf16.msra.mxu0 0
  %489 = vmatprep.subr.bf16.mxu0 0
  %490 = vmatpush1.bf16.msra.mxu0 0
  %491 = vmatprep.subr.bf16.mxu0 0
  %492 = vmatpush1.bf16.msra.mxu0 0
  %493 = vmatprep.subr.bf16.mxu0 0
  %494 = vmatpush1.bf16.msra.mxu0 0
  %495 = vmatprep.subr.bf16.mxu0 0
  %496 = vmatpush1.bf16.msra.mxu0 0
  %497 = vmatprep.subr.bf16.mxu0 0
  %498 = vmatpush1.bf16.msra.mxu0 0
  %499 = vmatprep.subr.bf16.mxu0 0
  %500 = vmatpush1.bf16.msra.mxu0 0
  %501 = vmatprep.subr.bf16.mxu0 0
  %502 = vmatpush1.bf16.msra.mxu0 0
  %503 = vmatprep.subr.bf16.mxu0 0
  %504 = vmatpush1.bf16.msra.mxu0 0
  %505 = vmatprep.subr.bf16.mxu0 0
  %506 = vmatpush1.bf16.msra.mxu0 0
  %507 = vmatprep.subr.bf16.mxu0 0
  %508 = vmatpush1.bf16.msra.mxu0 0
  %509 = vmatprep.subr.bf16.mxu0 0
  %510 = vmatpush1.bf16.msra.mxu0 0
  %511 = vmatprep.subr.bf16.mxu0 0
  %512 = vmatpush1.bf16.msra.mxu0 0
  %513 = vmatprep.subr.bf16.mxu0 0
  %514 = vmatpush1.bf16.msra.mxu0 0
  %515 = vmatprep.subr.bf16.mxu0 0
  %516 = vmatpush1.bf16.msra.mxu0 0
  %517 = vmatprep.mubr.bf16.mxu0 0
  %518 = vmatmul.mubr.bf16.gmra.mrb[0].mxu0 %v483
  %v519 = vpop.f32.mrb[0].mxu0
  %v520 = vadd.f32 0.0, %v519
  %v521 = vpop.f32.mrb[0].mxu0
  %v522 = vpop.f32.mrb[0].mxu0
  %v523 = vadd.f32 0.0, %v522
  %v524 = vpop.f32.mrb[0].mxu0
  %525 = vdwg.mxu0
  %526 = vrot.lane.b32.xlu0 %v155, 104
  %v527 = vpop.permute.xlu0 %526
  %528 = vrot.lane.b32.xlu0 %v160, 104
  %v529 = vpop.permute.xlu0 %528
  %v531 = vsel %vm161, %v527, 0
  %v534 = vsel %vm161, %v529, 0
  %536 = vmatprep.subr.bf16.mxu0 0
  %537 = vmatpush1.bf16.xpose.msra.mxu0 %v534
  %538 = vmatprep.subr.bf16.mxu0 0
  %539 = vmatpush1.bf16.xpose.msra.mxu0 0
  %540 = vmatprep.subr.bf16.mxu0 0
  %541 = vmatpush1.bf16.xpose.msra.mxu0 0
  %542 = vmatprep.subr.bf16.mxu0 0
  %543 = vmatpush1.bf16.xpose.msra.mxu0 0
  %544 = vmatprep.subr.bf16.mxu0 0
  %545 = vmatpush1.bf16.xpose.msra.mxu0 0
  %546 = vmatprep.subr.bf16.mxu0 0
  %547 = vmatpush1.bf16.xpose.msra.mxu0 0
  %548 = vmatprep.subr.bf16.mxu0 0
  %549 = vmatpush1.bf16.xpose.msra.mxu0 0
  %550 = vmatprep.subr.bf16.mxu0 0
  %551 = vmatpush1.bf16.xpose.msra.mxu0 0
  %552 = vmatprep.subr.bf16.mxu0 0
  %553 = vmatpush1.bf16.xpose.msra.mxu0 0
  %554 = vmatprep.subr.bf16.mxu0 0
  %555 = vmatpush1.bf16.xpose.msra.mxu0 0
  %556 = vmatprep.subr.bf16.mxu0 0
  %557 = vmatpush1.bf16.xpose.msra.mxu0 0
  %558 = vmatprep.subr.bf16.mxu0 0
  %559 = vmatpush1.bf16.xpose.msra.mxu0 0
  %560 = vmatprep.subr.bf16.mxu0 0
  %561 = vmatpush1.bf16.xpose.msra.mxu0 0
  %562 = vmatprep.subr.bf16.mxu0 0
  %563 = vmatpush1.bf16.xpose.msra.mxu0 0
  %564 = vmatprep.subr.bf16.mxu0 0
  %565 = vmatpush1.bf16.xpose.msra.mxu0 0
  %566 = vmatprep.subr.bf16.mxu0 0
  %567 = vmatpush1.bf16.xpose.msra.mxu0 0
  %568 = vmatprep.mubr.bf16.mxu0 0
  %569 = vmatmul.mubr.bf16.gmra.mrb[0].mxu0 %v531
  %v570 = vpop.f32.mrb[0].mxu0
  %v571 = vadd.f32 0.0, %v570
  %v572 = vpop.f32.mrb[0].mxu0
  %v573 = vpop.f32.mrb[0].mxu0
  %v574 = vadd.f32 0.0, %v573
  %v575 = vpop.f32.mrb[0].mxu0
  %576 = vdwg.mxu0
  %v577 = vsel %vm209, %v571, -inf
  %578 = vmax.xlane.f32.xlu0 %v577
  %v579 = vpop.xlane.xlu0 %578
  %v580 = vsel %vm209, %v574, -inf
  %581 = vmax.xlane.f32.xlu0 %v580
  %v582 = vpop.xlane.xlu0 %581
  %v583 = vsub.f32 %v571, %v579
  %v584 = vsub.f32 %v574, %v582
  %v585 = vmul.f32 %v583, 1.442695
  %v586 = vpow.pop %v585
  %v587 = vmul.f32 %v584, 1.442695
  %v588 = vpow.pop %v587
  %v589 = vsel %vm209, %v586, 0.0
  %590 = vadd.xlane.f32.xlu0 %v589
  %v591 = vpop.xlane.xlu0 %590
  %v592 = vsel %vm209, %v588, 0.0
  %593 = vadd.xlane.f32.xlu0 %v592
  %v594 = vpop.xlane.xlu0 %593
  %v595 = vrcp.pop %v591
  %v596 = vmul.f32 %v586, %v595
  %v597 = vrcp.pop %v594
  %v598 = vmul.f32 %v588, %v597
  %v599 = vpack.c.bf16 %v598, %v596
  %600 = vrot.lane.b32.xlu0 %v237, 104
  %v601 = vpop.permute.xlu0 %600
  %v604 = vsel %vm209, %v599, 0
  %606 = vmatprep.subr.bf16.mxu0 0
  %607 = vmatpush1.bf16.msra.mxu0 %v601
  %608 = vmatprep.subr.bf16.mxu0 0
  %609 = vmatpush1.bf16.msra.mxu0 0
  %610 = vmatprep.subr.bf16.mxu0 0
  %611 = vmatpush1.bf16.msra.mxu0 0
  %612 = vmatprep.subr.bf16.mxu0 0
  %613 = vmatpush1.bf16.msra.mxu0 0
  %614 = vmatprep.subr.bf16.mxu0 0
  %615 = vmatpush1.bf16.msra.mxu0 0
  %616 = vmatprep.subr.bf16.mxu0 0
  %617 = vmatpush1.bf16.msra.mxu0 0
  %618 = vmatprep.subr.bf16.mxu0 0
  %619 = vmatpush1.bf16.msra.mxu0 0
  %620 = vmatprep.subr.bf16.mxu0 0
  %621 = vmatpush1.bf16.msra.mxu0 0
  %622 = vmatprep.subr.bf16.mxu0 0
  %623 = vmatpush1.bf16.msra.mxu0 0
  %624 = vmatprep.subr.bf16.mxu0 0
  %625 = vmatpush1.bf16.msra.mxu0 0
  %626 = vmatprep.subr.bf16.mxu0 0
  %627 = vmatpush1.bf16.msra.mxu0 0
  %628 = vmatprep.subr.bf16.mxu0 0
  %629 = vmatpush1.bf16.msra.mxu0 0
  %630 = vmatprep.subr.bf16.mxu0 0
  %631 = vmatpush1.bf16.msra.mxu0 0
  %632 = vmatprep.subr.bf16.mxu0 0
  %633 = vmatpush1.bf16.msra.mxu0 0
  %634 = vmatprep.subr.bf16.mxu0 0
  %635 = vmatpush1.bf16.msra.mxu0 0
  %636 = vmatprep.subr.bf16.mxu0 0
  %637 = vmatpush1.bf16.msra.mxu0 0
  %638 = vmatprep.mubr.bf16.mxu0 0
  %639 = vmatmul.mubr.bf16.gmra.mrb[0].mxu0 %v604
  %v640 = vpop.f32.mrb[0].mxu0
  %v641 = vadd.f32 0.0, %v640
  %v642 = vpop.f32.mrb[0].mxu0
  %v643 = vpop.f32.mrb[0].mxu0
  %v644 = vadd.f32 0.0, %v643
  %v645 = vpop.f32.mrb[0].mxu0
  %646 = vdwg.mxu0
  %649 = vrot.lane.b32.xlu0 %v399, 8
  %v650 = vpop.permute.xlu0 %649
  %651 = vrot.lane.b32.xlu0 %v402, 8
  %v652 = vpop.permute.xlu0 %651
  %657 = vrot.lane.b32.xlu0 %v520, 16
  %v658 = vpop.permute.xlu0 %657
  %659 = vrot.lane.b32.xlu0 %v523, 16
  %v660 = vpop.permute.xlu0 %659
  %665 = vrot.lane.b32.xlu0 %v641, 24
  %v666 = vpop.permute.xlu0 %665
  %667 = vrot.lane.b32.xlu0 %v644, 24
  %v668 = vpop.permute.xlu0 %667
  %v671 = vsel %vm161, %v277, %v650
  %v672 = vsel %vm161, %v280, %v652
  %v673 = vsel %vm209, %v671, %v658
  %v674 = vsel %vm209, %v672, %v660
  %vm675 = vcmask 195584
  %v676 = vsel %vm675, %v673, %v666
  %v677 = vsel %vm675, %v674, %v668
  %v678 = vld [vmem:[%s6] sm:$0xf]
  %v679 = vld [vmem:[%s6 + $0x4] sm:$0xf]
  %v680 = vld [vmem:[%s6 + $0x8] sm:$0xf]
  %v681 = vld [vmem:[%s6 + $0xc] sm:$0xf]
  %v682 = vpack.c.bf16 %v677, %v676
  %v683 = vld [vmem:[%s7] sm:$0x1]
  %v685 = vlaneseq
  %v686 = vshrl.u32 %v685, 7
  %v687 = vsub.s32 0, %v686
  %v688 = vrot.slane %v683, %v687
  %v694 = vunpack.c.l.b16 %v678
  %v695 = vunpack.c.l.b16 %v679
  %v696 = vunpack.c.l.b16 %v680
  %v697 = vunpack.c.l.b16 %v681
  %v698 = vpack.c.b16 %v695, %v694
  %v699 = vpack.c.b16 %v697, %v696
  %v703 = vsel %vm102, %v682, 0
  %705 = vmatprep.subr.bf16.mxu0 0
  %706 = vmatpush1.bf16.msra.mxu0 %v698
  %707 = vmatprep.subr.bf16.mxu0 0
  %708 = vmatpush1.bf16.msra.mxu0 %v699
  %709 = vmatprep.subr.bf16.mxu0 0
  %710 = vmatpush1.bf16.msra.mxu0 0
  %711 = vmatprep.subr.bf16.mxu0 0
  %712 = vmatpush1.bf16.msra.mxu0 0
  %713 = vmatprep.subr.bf16.mxu0 0
  %714 = vmatpush1.bf16.msra.mxu0 0
  %715 = vmatprep.subr.bf16.mxu0 0
  %716 = vmatpush1.bf16.msra.mxu0 0
  %717 = vmatprep.subr.bf16.mxu0 0
  %718 = vmatpush1.bf16.msra.mxu0 0
  %719 = vmatprep.subr.bf16.mxu0 0
  %720 = vmatpush1.bf16.msra.mxu0 0
  %721 = vmatprep.subr.bf16.mxu0 0
  %722 = vmatpush1.bf16.msra.mxu0 0
  %723 = vmatprep.subr.bf16.mxu0 0
  %724 = vmatpush1.bf16.msra.mxu0 0
  %725 = vmatprep.subr.bf16.mxu0 0
  %726 = vmatpush1.bf16.msra.mxu0 0
  %727 = vmatprep.subr.bf16.mxu0 0
  %728 = vmatpush1.bf16.msra.mxu0 0
  %729 = vmatprep.subr.bf16.mxu0 0
  %730 = vmatpush1.bf16.msra.mxu0 0
  %731 = vmatprep.subr.bf16.mxu0 0
  %732 = vmatpush1.bf16.msra.mxu0 0
  %733 = vmatprep.subr.bf16.mxu0 0
  %734 = vmatpush1.bf16.msra.mxu0 0
  %735 = vmatprep.subr.bf16.mxu0 0
  %736 = vmatpush1.bf16.msra.mxu0 0
  %737 = vmatprep.mubr.bf16.mxu0 0
  %738 = vmatmul.mubr.bf16.gmra.mrb[0].mxu0 %v703
  %v739 = vpop.f32.mrb[0].mxu0
  %v740 = vadd.f32 %v688, %v739
  %v741 = vpop.f32.mrb[0].mxu0
  %v742 = vpop.f32.mrb[0].mxu0
  %v743 = vadd.f32 %v688, %v742
  %v744 = vpop.f32.mrb[0].mxu0
  %745 = vdwg.mxu0
  %v746 = vld [vmem:[%s8] sm:$0xf]
  %v747 = vld [vmem:[%s8 + $0x4] sm:$0xf]
  %v748 = vld [vmem:[%s8 + $0x8] sm:$0xf]
  %v749 = vld [vmem:[%s8 + $0xc] sm:$0xf]
  %v750 = vld [vmem:[%s9] sm:$0xf]
  %v751 = vld [vmem:[%s9 + $0x4] sm:$0xf]
  %v752 = vld [vmem:[%s9 + $0x8] sm:$0xf]
  %v753 = vld [vmem:[%s9 + $0xc] sm:$0xf]
  %v754 = vld [vmem:[%s10] sm:$0xf]
  %v755 = vld [vmem:[%s10 + $0x4] sm:$0xf]
  %v756 = vld [vmem:[%s10 + $0x8] sm:$0xf]
  %v757 = vld [vmem:[%s10 + $0xc] sm:$0xf]
  %v758 = vpack.c.bf16 %v743, %v740
  %v763 = vunpack.c.l.b16 %v746
  %v764 = vunpack.c.l.b16 %v747
  %v765 = vunpack.c.l.b16 %v748
  %v766 = vunpack.c.l.b16 %v749
  %v767 = vpack.c.b16 %v764, %v763
  %v768 = vpack.c.b16 %v766, %v765
  %v772 = vsel %vm102, %v758, 0
  %774 = vmatprep.subr.bf16.mxu0 0
  %775 = vmatpush1.bf16.msra.mxu0 %v767
  %776 = vmatprep.subr.bf16.mxu0 0
  %777 = vmatpush1.bf16.msra.mxu0 %v768
  %778 = vmatprep.subr.bf16.mxu0 0
  %779 = vmatpush1.bf16.msra.mxu0 0
  %780 = vmatprep.subr.bf16.mxu0 0
  %781 = vmatpush1.bf16.msra.mxu0 0
  %782 = vmatprep.subr.bf16.mxu0 0
  %783 = vmatpush1.bf16.msra.mxu0 0
  %784 = vmatprep.subr.bf16.mxu0 0
  %785 = vmatpush1.bf16.msra.mxu0 0
  %786 = vmatprep.subr.bf16.mxu0 0
  %787 = vmatpush1.bf16.msra.mxu0 0
  %788 = vmatprep.subr.bf16.mxu0 0
  %789 = vmatpush1.bf16.msra.mxu0 0
  %790 = vmatprep.subr.bf16.mxu0 0
  %791 = vmatpush1.bf16.msra.mxu0 0
  %792 = vmatprep.subr.bf16.mxu0 0
  %793 = vmatpush1.bf16.msra.mxu0 0
  %794 = vmatprep.subr.bf16.mxu0 0
  %795 = vmatpush1.bf16.msra.mxu0 0
  %796 = vmatprep.subr.bf16.mxu0 0
  %797 = vmatpush1.bf16.msra.mxu0 0
  %798 = vmatprep.subr.bf16.mxu0 0
  %799 = vmatpush1.bf16.msra.mxu0 0
  %800 = vmatprep.subr.bf16.mxu0 0
  %801 = vmatpush1.bf16.msra.mxu0 0
  %802 = vmatprep.subr.bf16.mxu0 0
  %803 = vmatpush1.bf16.msra.mxu0 0
  %804 = vmatprep.subr.bf16.mxu0 0
  %805 = vmatpush1.bf16.msra.mxu0 0
  %806 = vmatprep.mubr.bf16.mxu0 0
  %807 = vmatmul.mubr.bf16.gmra.mrb[0].mxu0 %v772
  %v808 = vpop.f32.mrb[0].mxu0
  %v809 = vadd.f32 0.0, %v808
  %v810 = vpop.f32.mrb[0].mxu0
  %v811 = vpop.f32.mrb[0].mxu0
  %v812 = vadd.f32 0.0, %v811
  %v813 = vpop.f32.mrb[0].mxu0
  %814 = vdwg.mxu0
  %v819 = vunpack.c.l.b16 %v750
  %v820 = vunpack.c.l.b16 %v751
  %v821 = vunpack.c.l.b16 %v752
  %v822 = vunpack.c.l.b16 %v753
  %v823 = vpack.c.b16 %v820, %v819
  %v824 = vpack.c.b16 %v822, %v821
  %827 = vmatprep.subr.bf16.mxu0 0
  %828 = vmatpush1.bf16.msra.mxu0 %v823
  %829 = vmatprep.subr.bf16.mxu0 0
  %830 = vmatpush1.bf16.msra.mxu0 %v824
  %831 = vmatprep.subr.bf16.mxu0 0
  %832 = vmatpush1.bf16.msra.mxu0 0
  %833 = vmatprep.subr.bf16.mxu0 0
  %834 = vmatpush1.bf16.msra.mxu0 0
  %835 = vmatprep.subr.bf16.mxu0 0
  %836 = vmatpush1.bf16.msra.mxu0 0
  %837 = vmatprep.subr.bf16.mxu0 0
  %838 = vmatpush1.bf16.msra.mxu0 0
  %839 = vmatprep.subr.bf16.mxu0 0
  %840 = vmatpush1.bf16.msra.mxu0 0
  %841 = vmatprep.subr.bf16.mxu0 0
  %842 = vmatpush1.bf16.msra.mxu0 0
  %843 = vmatprep.subr.bf16.mxu0 0
  %844 = vmatpush1.bf16.msra.mxu0 0
  %845 = vmatprep.subr.bf16.mxu0 0
  %846 = vmatpush1.bf16.msra.mxu0 0
  %847 = vmatprep.subr.bf16.mxu0 0
  %848 = vmatpush1.bf16.msra.mxu0 0
  %849 = vmatprep.subr.bf16.mxu0 0
  %850 = vmatpush1.bf16.msra.mxu0 0
  %851 = vmatprep.subr.bf16.mxu0 0
  %852 = vmatpush1.bf16.msra.mxu0 0
  %853 = vmatprep.subr.bf16.mxu0 0
  %854 = vmatpush1.bf16.msra.mxu0 0
  %855 = vmatprep.subr.bf16.mxu0 0
  %856 = vmatpush1.bf16.msra.mxu0 0
  %857 = vmatprep.subr.bf16.mxu0 0
  %858 = vmatpush1.bf16.msra.mxu0 0
  %859 = vmatprep.mubr.bf16.mxu0 0
  %860 = vmatmul.mubr.bf16.gmra.mrb[0].mxu0 %v104
  %v861 = vpop.f32.mrb[0].mxu0
  %v862 = vadd.f32 0.0, %v861
  %v863 = vpop.f32.mrb[0].mxu0
  %v864 = vpop.f32.mrb[0].mxu0
  %v865 = vadd.f32 0.0, %v864
  %v866 = vpop.f32.mrb[0].mxu0
  %867 = vdwg.mxu0
  %v868 = vadd.f32 %v809, %v862
  %v869 = vadd.f32 %v812, %v865
  %v870 = vxor.u32 %v868, 2147483648
  %v871 = vxor.u32 %v869, 2147483648
  %v872 = vmul.f32 %v870, 1.442695
  %v873 = vpow.pop %v872
  %v874 = vmul.f32 %v871, 1.442695
  %v875 = vpow.pop %v874
  %v876 = vadd.f32 %v873, 1.0
  %v877 = vadd.f32 %v875, 1.0
  %v878 = vrcp.pop %v876
  %v879 = vmul.f32 1.0, %v878
  %v880 = vrcp.pop %v877
  %v881 = vmul.f32 1.0, %v880
  %v882 = vsub.f32 %v868, 2.0
  %v883 = vsub.f32 %v869, 2.0
  %v884 = vxor.u32 %v882, 2147483648
  %v885 = vxor.u32 %v883, 2147483648
  %v886 = vmul.f32 %v884, 1.442695
  %v887 = vpow.pop %v886
  %v888 = vmul.f32 %v885, 1.442695
  %v889 = vpow.pop %v888
  %v890 = vadd.f32 %v887, 1.0
  %v891 = vadd.f32 %v889, 1.0
  %v892 = vrcp.pop %v890
  %v893 = vmul.f32 1.0, %v892
  %v894 = vrcp.pop %v891
  %v895 = vmul.f32 1.0, %v894
  %v896 = vmul.f32 %v72, %v879
  %v897 = vmul.f32 %v73, %v881
  %v898 = vpack.c.bf16 %v897, %v896
  %v903 = vunpack.c.l.b16 %v754
  %v904 = vunpack.c.l.b16 %v755
  %v905 = vunpack.c.l.b16 %v756
  %v906 = vunpack.c.l.b16 %v757
  %v907 = vpack.c.b16 %v904, %v903
  %v908 = vpack.c.b16 %v906, %v905
  %v912 = vsel %vm102, %v898, 0
  %914 = vmatprep.subr.bf16.mxu0 0
  %915 = vmatpush1.bf16.msra.mxu0 %v907
  %916 = vmatprep.subr.bf16.mxu0 0
  %917 = vmatpush1.bf16.msra.mxu0 %v908
  %918 = vmatprep.subr.bf16.mxu0 0
  %919 = vmatpush1.bf16.msra.mxu0 0
  %920 = vmatprep.subr.bf16.mxu0 0
  %921 = vmatpush1.bf16.msra.mxu0 0
  %922 = vmatprep.subr.bf16.mxu0 0
  %923 = vmatpush1.bf16.msra.mxu0 0
  %924 = vmatprep.subr.bf16.mxu0 0
  %925 = vmatpush1.bf16.msra.mxu0 0
  %926 = vmatprep.subr.bf16.mxu0 0
  %927 = vmatpush1.bf16.msra.mxu0 0
  %928 = vmatprep.subr.bf16.mxu0 0
  %929 = vmatpush1.bf16.msra.mxu0 0
  %930 = vmatprep.subr.bf16.mxu0 0
  %931 = vmatpush1.bf16.msra.mxu0 0
  %932 = vmatprep.subr.bf16.mxu0 0
  %933 = vmatpush1.bf16.msra.mxu0 0
  %934 = vmatprep.subr.bf16.mxu0 0
  %935 = vmatpush1.bf16.msra.mxu0 0
  %936 = vmatprep.subr.bf16.mxu0 0
  %937 = vmatpush1.bf16.msra.mxu0 0
  %938 = vmatprep.subr.bf16.mxu0 0
  %939 = vmatpush1.bf16.msra.mxu0 0
  %940 = vmatprep.subr.bf16.mxu0 0
  %941 = vmatpush1.bf16.msra.mxu0 0
  %942 = vmatprep.subr.bf16.mxu0 0
  %943 = vmatpush1.bf16.msra.mxu0 0
  %944 = vmatprep.subr.bf16.mxu0 0
  %945 = vmatpush1.bf16.msra.mxu0 0
  %946 = vmatprep.mubr.bf16.mxu0 0
  %947 = vmatmul.mubr.bf16.gmra.mrb[0].mxu0 %v912
  %v948 = vpop.f32.mrb[0].mxu0
  %v949 = vadd.f32 0.0, %v948
  %v950 = vpop.f32.mrb[0].mxu0
  %v951 = vpop.f32.mrb[0].mxu0
  %v952 = vadd.f32 0.0, %v951
  %v953 = vpop.f32.mrb[0].mxu0
  %954 = vdwg.mxu0
  %957 = vrot.lane.b32.xlu0 %v949, 64
  %v958 = vpop.permute.xlu0 %957
  %959 = vrot.lane.b32.xlu0 %v952, 64
  %v960 = vpop.permute.xlu0 %959
  %v963 = vadd.f32 %v809, %v958
  %v964 = vadd.f32 %v812, %v960
  %v965 = vtanh.pop %v963
  %v966 = vtanh.pop %v964
  %v967 = vsub.f32 1.0, %v893
  %v968 = vsub.f32 1.0, %v895
  %971 = vrot.lane.b32.xlu0 %v72, 32
  %v972 = vpop.permute.xlu0 %971
  %973 = vrot.lane.b32.xlu0 %v73, 32
  %v974 = vpop.permute.xlu0 %973
  %v977 = vmul.f32 %v967, %v972
  %v978 = vmul.f32 %v968, %v974
  %981 = vrot.lane.b32.xlu0 %v965, 96
  %v982 = vpop.permute.xlu0 %981
  %983 = vrot.lane.b32.xlu0 %v966, 96
  %v984 = vpop.permute.xlu0 %983
  %v987 = vmul.f32 %v893, %v982
  %v988 = vmul.f32 %v895, %v984
  %v989 = vadd.f32 %v977, %v987
  %v990 = vadd.f32 %v978, %v988
  %v991 = vld [vmem:[%s11] sm:$0x1]
  %v992 = vld [vmem:[%s12] sm:$0x1]
  %995 = vrot.lane.b32.xlu0 %v989, 96
  %v996 = vpop.permute.xlu0 %995
  %997 = vrot.lane.b32.xlu0 %v990, 96
  %v998 = vpop.permute.xlu0 %997
  %v1001 = vsel %vm102, %v996, 0.0
  %1002 = vadd.xlane.f32.xlu0 %v1001
  %v1003 = vpop.xlane.xlu0 %1002
  %v1004 = vsel %vm102, %v998, 0.0
  %1005 = vadd.xlane.f32.xlu0 %v1004
  %v1006 = vpop.xlane.xlu0 %1005
  %v1007 = vrcp.pop 32.0
  %v1008 = vmul.f32 %v1003, %v1007
  %v1009 = vmul.f32 %v1006, %v1007
  %v1010 = vsub.f32 %v989, %v1008
  %v1011 = vsub.f32 %v990, %v1009
  %v1012 = vmul.f32 %v1010, %v1010
  %v1013 = vmul.f32 %v1011, %v1011
  %1016 = vrot.lane.b32.xlu0 %v1012, 96
  %v1017 = vpop.permute.xlu0 %1016
  %1018 = vrot.lane.b32.xlu0 %v1013, 96
  %v1019 = vpop.permute.xlu0 %1018
  %v1022 = vsel %vm102, %v1017, 0.0
  %1023 = vadd.xlane.f32.xlu0 %v1022
  %v1024 = vpop.xlane.xlu0 %1023
  %v1025 = vsel %vm102, %v1019, 0.0
  %1026 = vadd.xlane.f32.xlu0 %v1025
  %v1027 = vpop.xlane.xlu0 %1026
  %v1028 = vmul.f32 %v1024, %v1007
  %v1029 = vmul.f32 %v1027, %v1007
  %v1030 = vadd.f32 %v1028, 1e-06
  %v1031 = vadd.f32 %v1029, 1e-06
  %v1032 = vrsqrt.pop %v1030
  %v1033 = vrsqrt.pop %v1031
  %v1034 = vmul.f32 %v1010, %v1032
  %v1035 = vmul.f32 %v1011, %v1033
  %v1037 = vlaneseq
  %v1038 = vshrl.u32 %v1037, 7
  %v1039 = vsub.s32 0, %v1038
  %v1040 = vrot.slane %v991, %v1039
  %1041 = vrot.lane.b32.xlu0 %v1040, 32
  %v1042 = vpop.permute.xlu0 %1041
  %v1044 = vmul.f32 %v1034, %v1042
  %v1045 = vmul.f32 %v1035, %v1042
  %v1047 = vlaneseq
  %v1048 = vshrl.u32 %v1047, 7
  %v1049 = vsub.s32 0, %v1048
  %v1050 = vrot.slane %v992, %v1049
  %1051 = vrot.lane.b32.xlu0 %v1050, 32
  %v1052 = vpop.permute.xlu0 %1051
  %v1054 = vadd.f32 %v1044, %v1052
  %v1055 = vadd.f32 %v1045, %v1052
  %v1056 = vld [vmem:[%s13] sm:$0xf]
  %v1057 = vld [vmem:[%s13 + $0x4] sm:$0xf]
  %v1058 = vld [vmem:[%s13 + $0x8] sm:$0xf]
  %v1059 = vld [vmem:[%s13 + $0xc] sm:$0xf]
  %v1060 = vpack.c.bf16 %v1055, %v1054
  %v1061 = vld [vmem:[%s14] sm:$0x1]
  %v1063 = vlaneseq
  %v1064 = vshrl.u32 %v1063, 7
  %v1065 = vsub.s32 0, %v1064
  %v1066 = vrot.slane %v1061, %v1065
  %1069 = vrot.lane.b32.xlu0 %v1060, 96
  %v1070 = vpop.permute.xlu0 %1069
  %v1075 = vunpack.c.l.b16 %v1056
  %v1076 = vunpack.c.l.b16 %v1057
  %v1077 = vunpack.c.l.b16 %v1058
  %v1078 = vunpack.c.l.b16 %v1059
  %v1079 = vpack.c.b16 %v1076, %v1075
  %v1080 = vpack.c.b16 %v1078, %v1077
  %v1084 = vsel %vm102, %v1070, 0
  %1086 = vmatprep.subr.bf16.mxu0 0
  %1087 = vmatpush1.bf16.msra.mxu0 %v1079
  %1088 = vmatprep.subr.bf16.mxu0 0
  %1089 = vmatpush1.bf16.msra.mxu0 %v1080
  %1090 = vmatprep.subr.bf16.mxu0 0
  %1091 = vmatpush1.bf16.msra.mxu0 0
  %1092 = vmatprep.subr.bf16.mxu0 0
  %1093 = vmatpush1.bf16.msra.mxu0 0
  %1094 = vmatprep.subr.bf16.mxu0 0
  %1095 = vmatpush1.bf16.msra.mxu0 0
  %1096 = vmatprep.subr.bf16.mxu0 0
  %1097 = vmatpush1.bf16.msra.mxu0 0
  %1098 = vmatprep.subr.bf16.mxu0 0
  %1099 = vmatpush1.bf16.msra.mxu0 0
  %1100 = vmatprep.subr.bf16.mxu0 0
  %1101 = vmatpush1.bf16.msra.mxu0 0
  %1102 = vmatprep.subr.bf16.mxu0 0
  %1103 = vmatpush1.bf16.msra.mxu0 0
  %1104 = vmatprep.subr.bf16.mxu0 0
  %1105 = vmatpush1.bf16.msra.mxu0 0
  %1106 = vmatprep.subr.bf16.mxu0 0
  %1107 = vmatpush1.bf16.msra.mxu0 0
  %1108 = vmatprep.subr.bf16.mxu0 0
  %1109 = vmatpush1.bf16.msra.mxu0 0
  %1110 = vmatprep.subr.bf16.mxu0 0
  %1111 = vmatpush1.bf16.msra.mxu0 0
  %1112 = vmatprep.subr.bf16.mxu0 0
  %1113 = vmatpush1.bf16.msra.mxu0 0
  %1114 = vmatprep.subr.bf16.mxu0 0
  %1115 = vmatpush1.bf16.msra.mxu0 0
  %1116 = vmatprep.subr.bf16.mxu0 0
  %1117 = vmatpush1.bf16.msra.mxu0 0
  %1118 = vmatprep.mubr.bf16.mxu0 0
  %1119 = vmatmul.mubr.bf16.gmra.mrb[0].mxu0 %v1084
  %v1120 = vpop.f32.mrb[0].mxu0
  %v1121 = vadd.f32 %v1066, %v1120
  %v1122 = vpop.f32.mrb[0].mxu0
  %v1123 = vpop.f32.mrb[0].mxu0
  %v1124 = vadd.f32 %v1066, %v1123
  %v1125 = vpop.f32.mrb[0].mxu0
  %1126 = vdwg.mxu0
  %v1127 = vmax.f32 %v1121, 0.0
  %v1128 = vmax.f32 %v1124, 0.0
  %v1129 = vld [vmem:[%s15] sm:$0xf]
  %v1130 = vld [vmem:[%s15 + $0x4] sm:$0xf]
  %v1131 = vld [vmem:[%s15 + $0x8] sm:$0xf]
  %v1132 = vld [vmem:[%s15 + $0xc] sm:$0xf]
  %v1133 = vpack.c.bf16 %v1128, %v1127
  %v1134 = vld [vmem:[%s16] sm:$0x1]
  %v1136 = vlaneseq
  %v1137 = vshrl.u32 %v1136, 7
  %v1138 = vsub.s32 0, %v1137
  %v1139 = vrot.slane %v1134, %v1138
  %v1145 = vunpack.c.l.b16 %v1129
  %v1146 = vunpack.c.l.b16 %v1130
  %v1147 = vunpack.c.l.b16 %v1131
  %v1148 = vunpack.c.l.b16 %v1132
  %v1149 = vpack.c.b16 %v1146, %v1145
  %v1150 = vpack.c.b16 %v1148, %v1147
  %v1154 = vsel %vm102, %v1133, 0
  %1156 = vmatprep.subr.bf16.mxu0 0
  %1157 = vmatpush1.bf16.msra.mxu0 %v1149
  %1158 = vmatprep.subr.bf16.mxu0 0
  %1159 = vmatpush1.bf16.msra.mxu0 %v1150
  %1160 = vmatprep.subr.bf16.mxu0 0
  %1161 = vmatpush1.bf16.msra.mxu0 0
  %1162 = vmatprep.subr.bf16.mxu0 0
  %1163 = vmatpush1.bf16.msra.mxu0 0
  %1164 = vmatprep.subr.bf16.mxu0 0
  %1165 = vmatpush1.bf16.msra.mxu0 0
  %1166 = vmatprep.subr.bf16.mxu0 0
  %1167 = vmatpush1.bf16.msra.mxu0 0
  %1168 = vmatprep.subr.bf16.mxu0 0
  %1169 = vmatpush1.bf16.msra.mxu0 0
  %1170 = vmatprep.subr.bf16.mxu0 0
  %1171 = vmatpush1.bf16.msra.mxu0 0
  %1172 = vmatprep.subr.bf16.mxu0 0
  %1173 = vmatpush1.bf16.msra.mxu0 0
  %1174 = vmatprep.subr.bf16.mxu0 0
  %1175 = vmatpush1.bf16.msra.mxu0 0
  %1176 = vmatprep.subr.bf16.mxu0 0
  %1177 = vmatpush1.bf16.msra.mxu0 0
  %1178 = vmatprep.subr.bf16.mxu0 0
  %1179 = vmatpush1.bf16.msra.mxu0 0
  %1180 = vmatprep.subr.bf16.mxu0 0
  %1181 = vmatpush1.bf16.msra.mxu0 0
  %1182 = vmatprep.subr.bf16.mxu0 0
  %1183 = vmatpush1.bf16.msra.mxu0 0
  %1184 = vmatprep.subr.bf16.mxu0 0
  %1185 = vmatpush1.bf16.msra.mxu0 0
  %1186 = vmatprep.subr.bf16.mxu0 0
  %1187 = vmatpush1.bf16.msra.mxu0 0
  %1188 = vmatprep.mubr.bf16.mxu0 0
  %1189 = vmatmul.mubr.bf16.gmra.mrb[0].mxu0 %v1154
  %v1190 = vpop.f32.mrb[0].mxu0
  %v1191 = vadd.f32 %v1139, %v1190
  %v1192 = vpop.f32.mrb[0].mxu0
  %v1193 = vpop.f32.mrb[0].mxu0
  %v1194 = vadd.f32 %v1139, %v1193
  %v1195 = vpop.f32.mrb[0].mxu0
  %1196 = vdwg.mxu0
  %v1197 = vld [vmem:[%s17] sm:$0xf]
  %v1198 = vld [vmem:[%s17 + $0x4] sm:$0xf]
  %v1199 = vld [vmem:[%s17 + $0x8] sm:$0xf]
  %v1200 = vld [vmem:[%s17 + $0xc] sm:$0xf]
  %v1201 = vld [vmem:[%s18] sm:$0xf]
  %v1202 = vld [vmem:[%s18 + $0x4] sm:$0xf]
  %v1203 = vld [vmem:[%s18 + $0x8] sm:$0xf]
  %v1204 = vld [vmem:[%s18 + $0xc] sm:$0xf]
  %v1205 = vld [vmem:[%s19] sm:$0xf]
  %v1206 = vld [vmem:[%s19 + $0x4] sm:$0xf]
  %v1207 = vld [vmem:[%s19 + $0x8] sm:$0xf]
  %v1208 = vld [vmem:[%s19 + $0xc] sm:$0xf]
  %v1209 = vpack.c.bf16 %v1194, %v1191
  %v1214 = vunpack.c.l.b16 %v1197
  %v1215 = vunpack.c.l.b16 %v1198
  %v1216 = vunpack.c.l.b16 %v1199
  %v1217 = vunpack.c.l.b16 %v1200
  %v1218 = vpack.c.b16 %v1215, %v1214
  %v1219 = vpack.c.b16 %v1217, %v1216
  %v1223 = vsel %vm102, %v1209, 0
  %1225 = vmatprep.subr.bf16.mxu0 0
  %1226 = vmatpush1.bf16.msra.mxu0 %v1218
  %1227 = vmatprep.subr.bf16.mxu0 0
  %1228 = vmatpush1.bf16.msra.mxu0 %v1219
  %1229 = vmatprep.subr.bf16.mxu0 0
  %1230 = vmatpush1.bf16.msra.mxu0 0
  %1231 = vmatprep.subr.bf16.mxu0 0
  %1232 = vmatpush1.bf16.msra.mxu0 0
  %1233 = vmatprep.subr.bf16.mxu0 0
  %1234 = vmatpush1.bf16.msra.mxu0 0
  %1235 = vmatprep.subr.bf16.mxu0 0
  %1236 = vmatpush1.bf16.msra.mxu0 0
  %1237 = vmatprep.subr.bf16.mxu0 0
  %1238 = vmatpush1.bf16.msra.mxu0 0
  %1239 = vmatprep.subr.bf16.mxu0 0
  %1240 = vmatpush1.bf16.msra.mxu0 0
  %1241 = vmatprep.subr.bf16.mxu0 0
  %1242 = vmatpush1.bf16.msra.mxu0 0
  %1243 = vmatprep.subr.bf16.mxu0 0
  %1244 = vmatpush1.bf16.msra.mxu0 0
  %1245 = vmatprep.subr.bf16.mxu0 0
  %1246 = vmatpush1.bf16.msra.mxu0 0
  %1247 = vmatprep.subr.bf16.mxu0 0
  %1248 = vmatpush1.bf16.msra.mxu0 0
  %1249 = vmatprep.subr.bf16.mxu0 0
  %1250 = vmatpush1.bf16.msra.mxu0 0
  %1251 = vmatprep.subr.bf16.mxu0 0
  %1252 = vmatpush1.bf16.msra.mxu0 0
  %1253 = vmatprep.subr.bf16.mxu0 0
  %1254 = vmatpush1.bf16.msra.mxu0 0
  %1255 = vmatprep.subr.bf16.mxu0 0
  %1256 = vmatpush1.bf16.msra.mxu0 0
  %1257 = vmatprep.mubr.bf16.mxu0 0
  %1258 = vmatmul.mubr.bf16.gmra.mrb[0].mxu0 %v1223
  %v1259 = vpop.f32.mrb[0].mxu0
  %v1260 = vadd.f32 0.0, %v1259
  %v1261 = vpop.f32.mrb[0].mxu0
  %v1262 = vpop.f32.mrb[0].mxu0
  %v1263 = vadd.f32 0.0, %v1262
  %v1264 = vpop.f32.mrb[0].mxu0
  %1265 = vdwg.mxu0
  %v1266 = vpack.c.bf16 %v990, %v989
  %1268 = vrot.lane.b32.xlu0 %v1266, 96
  %v1269 = vpop.permute.xlu0 %1268
  %v1274 = vunpack.c.l.b16 %v1201
  %v1275 = vunpack.c.l.b16 %v1202
  %v1276 = vunpack.c.l.b16 %v1203
  %v1277 = vunpack.c.l.b16 %v1204
  %v1278 = vpack.c.b16 %v1275, %v1274
  %v1279 = vpack.c.b16 %v1277, %v1276
  %v1283 = vsel %vm102, %v1269, 0
  %1285 = vmatprep.subr.bf16.mxu0 0
  %1286 = vmatpush1.bf16.msra.mxu0 %v1278
  %1287 = vmatprep.subr.bf16.mxu0 0
  %1288 = vmatpush1.bf16.msra.mxu0 %v1279
  %1289 = vmatprep.subr.bf16.mxu0 0
  %1290 = vmatpush1.bf16.msra.mxu0 0
  %1291 = vmatprep.subr.bf16.mxu0 0
  %1292 = vmatpush1.bf16.msra.mxu0 0
  %1293 = vmatprep.subr.bf16.mxu0 0
  %1294 = vmatpush1.bf16.msra.mxu0 0
  %1295 = vmatprep.subr.bf16.mxu0 0
  %1296 = vmatpush1.bf16.msra.mxu0 0
  %1297 = vmatprep.subr.bf16.mxu0 0
  %1298 = vmatpush1.bf16.msra.mxu0 0
  %1299 = vmatprep.subr.bf16.mxu0 0
  %1300 = vmatpush1.bf16.msra.mxu0 0
  %1301 = vmatprep.subr.bf16.mxu0 0
  %1302 = vmatpush1.bf16.msra.mxu0 0
  %1303 = vmatprep.subr.bf16.mxu0 0
  %1304 = vmatpush1.bf16.msra.mxu0 0
  %1305 = vmatprep.subr.bf16.mxu0 0
  %1306 = vmatpush1.bf16.msra.mxu0 0
  %1307 = vmatprep.subr.bf16.mxu0 0
  %1308 = vmatpush1.bf16.msra.mxu0 0
  %1309 = vmatprep.subr.bf16.mxu0 0
  %1310 = vmatpush1.bf16.msra.mxu0 0
  %1311 = vmatprep.subr.bf16.mxu0 0
  %1312 = vmatpush1.bf16.msra.mxu0 0
  %1313 = vmatprep.subr.bf16.mxu0 0
  %1314 = vmatpush1.bf16.msra.mxu0 0
  %1315 = vmatprep.subr.bf16.mxu0 0
  %1316 = vmatpush1.bf16.msra.mxu0 0
  %1317 = vmatprep.mubr.bf16.mxu0 0
  %1318 = vmatmul.mubr.bf16.gmra.mrb[0].mxu0 %v1283
  %v1319 = vpop.f32.mrb[0].mxu0
  %v1320 = vadd.f32 0.0, %v1319
  %v1321 = vpop.f32.mrb[0].mxu0
  %v1322 = vpop.f32.mrb[0].mxu0
  %v1323 = vadd.f32 0.0, %v1322
  %v1324 = vpop.f32.mrb[0].mxu0
  %1325 = vdwg.mxu0
  %v1326 = vadd.f32 %v1260, %v1320
  %v1327 = vadd.f32 %v1263, %v1323
  %v1328 = vxor.u32 %v1326, 2147483648
  %v1329 = vxor.u32 %v1327, 2147483648
  %v1330 = vmul.f32 %v1328, 1.442695
  %v1331 = vpow.pop %v1330
  %v1332 = vmul.f32 %v1329, 1.442695
  %v1333 = vpow.pop %v1332
  %v1334 = vadd.f32 %v1331, 1.0
  %v1335 = vadd.f32 %v1333, 1.0
  %v1336 = vrcp.pop %v1334
  %v1337 = vmul.f32 1.0, %v1336
  %v1338 = vrcp.pop %v1335
  %v1339 = vmul.f32 1.0, %v1338
  %v1340 = vsub.f32 %v1326, 2.0
  %v1341 = vsub.f32 %v1327, 2.0
  %v1342 = vxor.u32 %v1340, 2147483648
  %v1343 = vxor.u32 %v1341, 2147483648
  %v1344 = vmul.f32 %v1342, 1.442695
  %v1345 = vpow.pop %v1344
  %v1346 = vmul.f32 %v1343, 1.442695
  %v1347 = vpow.pop %v1346
  %v1348 = vadd.f32 %v1345, 1.0
  %v1349 = vadd.f32 %v1347, 1.0
  %v1350 = vrcp.pop %v1348
  %v1351 = vmul.f32 1.0, %v1350
  %v1352 = vrcp.pop %v1349
  %v1353 = vmul.f32 1.0, %v1352
  %1356 = vrot.lane.b32.xlu0 %v1337, 32
  %v1357 = vpop.permute.xlu0 %1356
  %1358 = vrot.lane.b32.xlu0 %v1339, 32
  %v1359 = vpop.permute.xlu0 %1358
  %v1362 = vmul.f32 %v989, %v1357
  %v1363 = vmul.f32 %v990, %v1359
  %v1364 = vpack.c.bf16 %v1363, %v1362
  %1366 = vrot.lane.b32.xlu0 %v1364, 96
  %v1367 = vpop.permute.xlu0 %1366
  %v1372 = vunpack.c.l.b16 %v1205
  %v1373 = vunpack.c.l.b16 %v1206
  %v1374 = vunpack.c.l.b16 %v1207
  %v1375 = vunpack.c.l.b16 %v1208
  %v1376 = vpack.c.b16 %v1373, %v1372
  %v1377 = vpack.c.b16 %v1375, %v1374
  %v1381 = vsel %vm102, %v1367, 0
  %1383 = vmatprep.subr.bf16.mxu0 0
  %1384 = vmatpush1.bf16.msra.mxu0 %v1376
  %1385 = vmatprep.subr.bf16.mxu0 0
  %1386 = vmatpush1.bf16.msra.mxu0 %v1377
  %1387 = vmatprep.subr.bf16.mxu0 0
  %1388 = vmatpush1.bf16.msra.mxu0 0
  %1389 = vmatprep.subr.bf16.mxu0 0
  %1390 = vmatpush1.bf16.msra.mxu0 0
  %1391 = vmatprep.subr.bf16.mxu0 0
  %1392 = vmatpush1.bf16.msra.mxu0 0
  %1393 = vmatprep.subr.bf16.mxu0 0
  %1394 = vmatpush1.bf16.msra.mxu0 0
  %1395 = vmatprep.subr.bf16.mxu0 0
  %1396 = vmatpush1.bf16.msra.mxu0 0
  %1397 = vmatprep.subr.bf16.mxu0 0
  %1398 = vmatpush1.bf16.msra.mxu0 0
  %1399 = vmatprep.subr.bf16.mxu0 0
  %1400 = vmatpush1.bf16.msra.mxu0 0
  %1401 = vmatprep.subr.bf16.mxu0 0
  %1402 = vmatpush1.bf16.msra.mxu0 0
  %1403 = vmatprep.subr.bf16.mxu0 0
  %1404 = vmatpush1.bf16.msra.mxu0 0
  %1405 = vmatprep.subr.bf16.mxu0 0
  %1406 = vmatpush1.bf16.msra.mxu0 0
  %1407 = vmatprep.subr.bf16.mxu0 0
  %1408 = vmatpush1.bf16.msra.mxu0 0
  %1409 = vmatprep.subr.bf16.mxu0 0
  %1410 = vmatpush1.bf16.msra.mxu0 0
  %1411 = vmatprep.subr.bf16.mxu0 0
  %1412 = vmatpush1.bf16.msra.mxu0 0
  %1413 = vmatprep.subr.bf16.mxu0 0
  %1414 = vmatpush1.bf16.msra.mxu0 0
  %1415 = vmatprep.mubr.bf16.mxu0 0
  %1416 = vmatmul.mubr.bf16.gmra.mrb[0].mxu0 %v1381
  %v1417 = vpop.f32.mrb[0].mxu0
  %v1418 = vadd.f32 0.0, %v1417
  %v1419 = vpop.f32.mrb[0].mxu0
  %v1420 = vpop.f32.mrb[0].mxu0
  %v1421 = vadd.f32 0.0, %v1420
  %v1422 = vpop.f32.mrb[0].mxu0
  %1423 = vdwg.mxu0
  %1426 = vrot.lane.b32.xlu0 %v1418, 64
  %v1427 = vpop.permute.xlu0 %1426
  %1428 = vrot.lane.b32.xlu0 %v1421, 64
  %v1429 = vpop.permute.xlu0 %1428
  %v1432 = vadd.f32 %v1260, %v1427
  %v1433 = vadd.f32 %v1263, %v1429
  %v1434 = vtanh.pop %v1432
  %v1435 = vtanh.pop %v1433
  %v1436 = vsub.f32 1.0, %v1351
  %v1437 = vsub.f32 1.0, %v1353
  %v1438 = vmul.f32 %v1436, %v989
  %v1439 = vmul.f32 %v1437, %v990
  %1442 = vrot.lane.b32.xlu0 %v1434, 96
  %v1443 = vpop.permute.xlu0 %1442
  %1444 = vrot.lane.b32.xlu0 %v1435, 96
  %v1445 = vpop.permute.xlu0 %1444
  %v1448 = vmul.f32 %v1351, %v1443
  %v1449 = vmul.f32 %v1353, %v1445
  %v1450 = vadd.f32 %v1438, %v1448
  %v1451 = vadd.f32 %v1439, %v1449
  %v1452 = vld [vmem:[%s20] sm:$0x1]
  %v1453 = vld [vmem:[%s21] sm:$0x1]
  %1456 = vrot.lane.b32.xlu0 %v1450, 96
  %v1457 = vpop.permute.xlu0 %1456
  %1458 = vrot.lane.b32.xlu0 %v1451, 96
  %v1459 = vpop.permute.xlu0 %1458
  %v1462 = vsel %vm102, %v1457, 0.0
  %1463 = vadd.xlane.f32.xlu0 %v1462
  %v1464 = vpop.xlane.xlu0 %1463
  %v1465 = vsel %vm102, %v1459, 0.0
  %1466 = vadd.xlane.f32.xlu0 %v1465
  %v1467 = vpop.xlane.xlu0 %1466
  %v1468 = vmul.f32 %v1464, %v1007
  %v1469 = vmul.f32 %v1467, %v1007
  %v1470 = vsub.f32 %v1450, %v1468
  %v1471 = vsub.f32 %v1451, %v1469
  %v1472 = vmul.f32 %v1470, %v1470
  %v1473 = vmul.f32 %v1471, %v1471
  %1476 = vrot.lane.b32.xlu0 %v1472, 96
  %v1477 = vpop.permute.xlu0 %1476
  %1478 = vrot.lane.b32.xlu0 %v1473, 96
  %v1479 = vpop.permute.xlu0 %1478
  %v1482 = vsel %vm102, %v1477, 0.0
  %1483 = vadd.xlane.f32.xlu0 %v1482
  %v1484 = vpop.xlane.xlu0 %1483
  %v1485 = vsel %vm102, %v1479, 0.0
  %1486 = vadd.xlane.f32.xlu0 %v1485
  %v1487 = vpop.xlane.xlu0 %1486
  %v1488 = vmul.f32 %v1484, %v1007
  %v1489 = vmul.f32 %v1487, %v1007
  %v1490 = vadd.f32 %v1488, 1e-06
  %v1491 = vadd.f32 %v1489, 1e-06
  %v1492 = vrsqrt.pop %v1490
  %v1493 = vrsqrt.pop %v1491
  %v1494 = vmul.f32 %v1470, %v1492
  %v1495 = vmul.f32 %v1471, %v1493
  %v1497 = vlaneseq
  %v1498 = vshrl.u32 %v1497, 7
  %v1499 = vsub.s32 0, %v1498
  %v1500 = vrot.slane %v1452, %v1499
  %1501 = vrot.lane.b32.xlu0 %v1500, 32
  %v1502 = vpop.permute.xlu0 %1501
  %v1504 = vmul.f32 %v1494, %v1502
  %v1505 = vmul.f32 %v1495, %v1502
  %v1507 = vlaneseq
  %v1508 = vshrl.u32 %v1507, 7
  %v1509 = vsub.s32 0, %v1508
  %v1510 = vrot.slane %v1453, %v1509
  %1511 = vrot.lane.b32.xlu0 %v1510, 32
  %v1512 = vpop.permute.xlu0 %1511
  %v1514 = vadd.f32 %v1504, %v1512
  %v1515 = vadd.f32 %v1505, %v1512
  %1518 = vrot.lane.b32.xlu0 %v1514, 96
  %v1519 = vpop.permute.xlu0 %1518
  %1520 = vrot.lane.b32.xlu0 %v1515, 96
  %v1521 = vpop.permute.xlu0 %1520
  %1524 = vst.msk [vmem:[%s22] sm:$0xff] %vm102, %v1519
  %1525 = vst.msk [vmem:[%s22 + $0x8] sm:$0xff] %vm102, %v1521
  // Predicated region
  $region90: #{transformer_intention_layer.8} parent=0 // pred_check
    _
  $region91: #{transformer_intention_layer.8} parent=0 // pred_check_branch
    %1527 = sbr.rel (0) target = $region93
  $region92: #{transformer_intention_layer.8} parent=0 // pred_region
    _
  $region93: #{transformer_intention_layer.8} parent=0 // pred_fallthru
    _
  // Predicated region
  $region94: #{transformer_intention_layer.8} parent=0 // pred_check
    _
  $region95: #{transformer_intention_layer.8} parent=0 // pred_check_branch
    %1529 = sbr.rel (0) target = $region97
  $region96: #{transformer_intention_layer.8} parent=0 // pred_region
    _
  $region97: #{transformer_intention_layer.8} parent=0 // pred_fallthru
    _

// kernel: transformer_intention_layer.9
$region0: #{transformer_intention_layer.9}
  #allocation0 [shape = 'u32[]', space=smem, size = 0x4, offset = 0x4, fixed_abs, tag = 'smem constant byte address 0x4 - core index']
  #allocation1 [shape = 'u32[144,128]{1,0:T(1,128)}', space=vmem, size = 0x12000, scoped, tag = 'internal scratch']
  %s0 = inlined_call_operand.vmem [shape: f32[4,4,32], index: 0, kind: input, shape index: {}]
  %s1 = inlined_call_operand.vmem [shape: bf16[4,4,32], index: 1, kind: input, shape index: {}]
  %s2 = inlined_call_operand.vmem [shape: bf16[32,96], index: 2, kind: input, shape index: {}]
  %s3 = inlined_call_operand.vmem [shape: f32[1,96], index: 3, kind: input, shape index: {}]
  %s4 = inlined_call_operand.vmem [shape: bf16[32,32], index: 4, kind: input, shape index: {}]
  %s5 = inlined_call_operand.vmem [shape: f32[1,32], index: 5, kind: input, shape index: {}]
  %s6 = inlined_call_operand.vmem [shape: bf16[32,96], index: 6, kind: input, shape index: {}]
  %s7 = inlined_call_operand.vmem [shape: bf16[32,64], index: 7, kind: input, shape index: {}]
  %s8 = inlined_call_operand.vmem [shape: bf16[32,32], index: 8, kind: input, shape index: {}]
  %s9 = inlined_call_operand.vmem [shape: f32[1,32], index: 9, kind: input, shape index: {}]
  %s10 = inlined_call_operand.vmem [shape: f32[1,32], index: 10, kind: input, shape index: {}]
  %s11 = inlined_call_operand.vmem [shape: bf16[32,32], index: 11, kind: input, shape index: {}]
  %s12 = inlined_call_operand.vmem [shape: f32[1,32], index: 12, kind: input, shape index: {}]
  %s13 = inlined_call_operand.vmem [shape: bf16[32,32], index: 13, kind: input, shape index: {}]
  %s14 = inlined_call_operand.vmem [shape: f32[1,32], index: 14, kind: input, shape index: {}]
  %s15 = inlined_call_operand.vmem [shape: bf16[32,96], index: 15, kind: input, shape index: {}]
  %s16 = inlined_call_operand.vmem [shape: bf16[32,64], index: 16, kind: input, shape index: {}]
  %s17 = inlined_call_operand.vmem [shape: bf16[32,32], index: 17, kind: input, shape index: {}]
  %s18 = inlined_call_operand.vmem [shape: f32[1,32], index: 18, kind: input, shape index: {}]
  %s19 = inlined_call_operand.vmem [shape: f32[1,32], index: 19, kind: input, shape index: {}]
  %s20 = inlined_call_operand.hbm [shape: f32[4,4,32], index: 20, kind: output, shape index: {0}]
  %s21 = inlined_call_operand.hbm [shape: f32[4,4,32], index: 21, kind: output, shape index: {1}]
  %22 = xla_tuple %s20, %s21
  %s23 = sld [smem:[#allocation0]]
  $region121: #{transformer_intention_layer.9} parent=0
    _
  %s25 = ssub.s32 1, %s23
  %s26 = scalar_select 0, %s25, %s23
  $region1: #{transformer_intention_layer.9} parent=0
    #allocation2 [shape = 'u8[4096]{0}', space=vmem, size = 0x1000, scoped, tag = 'output window, operand 0']
    #allocation3 [shape = 's32[2]{0}', space=sflag, size = 0x8, scoped, tag = 'scoped memory for transformer_intention_layer.9']
    #allocation4 [shape = 'u8[4096]{0}', space=vmem, size = 0x1000, scoped, tag = 'output window, operand 1']
    #allocation5 [shape = 's32[2]{0}', space=sflag, size = 0x8, scoped, tag = 'scoped memory for transformer_intention_layer.9']
    %27 = vsyncpa [#allocation3], 0
    %s28 = scalar_lea.sflag [#allocation3], 1
    %29 = vsyncpa %s28, 0
    %30 = vsyncpa [#allocation5], 0
    %s31 = scalar_lea.sflag [#allocation5], 1
    %32 = vsyncpa %s31, 0
    loop: start=0, step=1, limit=6
    $region2: #{transformer_intention_layer.9} parent=1 // loop_pre_header
      _
    $region3: #{transformer_intention_layer.9} parent=1 // loop_header
      %s34 = sphi 0, %s38
      %p35 = scmp.ge.s32.totalorder %s34, 6
      %s44 = sphi 0, %s46
      %s47 = sphi 0, %s44
      %s48 = sphi 0, %s47
      %s64 = sphi 0, %s48
      %s70 = sphi 0, %s72
      %s73 = sphi 0, %s70
      %s74 = sphi 0, %s73
      %s90 = sphi 0, %s74
      %s94 = sphi 0, %s94
      %s96 = sphi 0, %s94
      %s97 = sphi 0, %s96
      %s111 = sphi 0, %s97
      %s115 = sphi 0, %s115
      %s117 = sphi 0, %s115
      %s118 = sphi 0, %s117
      %s132 = sphi 0, %s118
      %s136 = sphi 0, %s136
      %s138 = sphi 0, %s136
      %s139 = sphi 0, %s138
      %s153 = sphi 0, %s139
      %s157 = sphi 0, %s157
      %s159 = sphi 0, %s157
      %s160 = sphi 0, %s159
      %s174 = sphi 0, %s160
      %s178 = sphi 0, %s178
      %s180 = sphi 0, %s178
      %s181 = sphi 0, %s180
      %s195 = sphi 0, %s181
      %s199 = sphi 0, %s199
      %s201 = sphi 0, %s199
      %s202 = sphi 0, %s201
      %s216 = sphi 0, %s202
      %s220 = sphi 0, %s220
      %s222 = sphi 0, %s220
      %s223 = sphi 0, %s222
      %s237 = sphi 0, %s223
      %s241 = sphi 0, %s241
      %s243 = sphi 0, %s241
      %s244 = sphi 0, %s243
      %s258 = sphi 0, %s244
      %s262 = sphi 0, %s262
      %s264 = sphi 0, %s262
      %s265 = sphi 0, %s264
      %s279 = sphi 0, %s265
      %s283 = sphi 0, %s283
      %s285 = sphi 0, %s283
      %s286 = sphi 0, %s285
      %s300 = sphi 0, %s286
      %s304 = sphi 0, %s304
      %s306 = sphi 0, %s304
      %s307 = sphi 0, %s306
      %s321 = sphi 0, %s307
      %s325 = sphi 0, %s325
      %s327 = sphi 0, %s325
      %s328 = sphi 0, %s327
      %s342 = sphi 0, %s328
      %s346 = sphi 0, %s346
      %s348 = sphi 0, %s346
      %s349 = sphi 0, %s348
      %s363 = sphi 0, %s349
      %s367 = sphi 0, %s367
      %s369 = sphi 0, %s367
      %s370 = sphi 0, %s369
      %s384 = sphi 0, %s370
      %s388 = sphi 0, %s388
      %s390 = sphi 0, %s388
      %s391 = sphi 0, %s390
      %s405 = sphi 0, %s391
      %s409 = sphi 0, %s409
      %s411 = sphi 0, %s409
      %s412 = sphi 0, %s411
      %s426 = sphi 0, %s412
      %s430 = sphi 0, %s430
      %s432 = sphi 0, %s430
      %s433 = sphi 0, %s432
      %s447 = sphi 0, %s433
      %s451 = sphi 0, %s451
      %s453 = sphi 0, %s451
      %s454 = sphi 0, %s453
      %s468 = sphi 0, %s454
      %s474 = sphi 0, %s476
      %s477 = sphi 0, %s474
      %s478 = sphi 0, %s477
      %s494 = sphi 0, %s478
      %s500 = sphi 0, %s502
      %s503 = sphi 0, %s500
      %s504 = sphi 0, %s503
      %s520 = sphi 0, %s504
    $region4: #{transformer_intention_layer.9} parent=1 // loop_header_branch
      %37 = sbr.rel (%p35) target = $region8
    $region5: #{transformer_intention_layer.9} parent=1 // loop_body
      %s39 = ssub.s32 %s34, 1
      %s40 = ssub.s32 %s34, 2
      %s41 = sadd.s32 %s34, 1
      %s42 = ssub.s32 %s34, %s41
      %p43 = scmp.eq.s32.totalorder %s42, 0
      %s45 = sadd.s32 %s44, 1
      %s46 = scalar_select %p43, %s44, %s45
      %p49 = pneg %p43
      %p50 = scmp.eq.s32.totalorder %s34, 3
      %p51 = por %p49, %p50
      %p52 = scmp.ne.s32.totalorder %s44, %s47
      %p53 = scmp.eq.s32.totalorder %s34, 0
      %p54 = por %p52, %p53
      %p55 = scmp.ne.s32.totalorder %s44, %s47
      %p56 = scmp.eq.s32.totalorder %s39, 3
      %p57 = por %p55, %p56
      %p58 = scmp.ne.s32.totalorder %s47, %s48
      %p59 = scmp.eq.s32.totalorder %s39, 0
      %p60 = por %p58, %p59
      %p61 = scmp.ne.s32.totalorder %s47, %s48
      %p62 = scmp.eq.s32.totalorder %s40, 3
      %p63 = por %p61, %p62
      %p65 = scmp.ne.s32.totalorder %s48, %s64
      %p66 = scmp.eq.s32.totalorder %s40, 0
      %p67 = por %p65, %p66
      %s68 = ssub.s32 %s34, %s41
      %p69 = scmp.eq.s32.totalorder %s68, 0
      %s71 = sadd.s32 %s70, 1
      %s72 = scalar_select %p69, %s70, %s71
      %p75 = pneg %p69
      %p76 = scmp.eq.s32.totalorder %s34, 3
      %p77 = por %p75, %p76
      %p78 = scmp.ne.s32.totalorder %s70, %s73
      %p79 = scmp.eq.s32.totalorder %s34, 0
      %p80 = por %p78, %p79
      %p81 = scmp.ne.s32.totalorder %s70, %s73
      %p82 = scmp.eq.s32.totalorder %s39, 3
      %p83 = por %p81, %p82
      %p84 = scmp.ne.s32.totalorder %s73, %s74
      %p85 = scmp.eq.s32.totalorder %s39, 0
      %p86 = por %p84, %p85
      %p87 = scmp.ne.s32.totalorder %s73, %s74
      %p88 = scmp.eq.s32.totalorder %s40, 3
      %p89 = por %p87, %p88
      %p91 = scmp.ne.s32.totalorder %s74, %s90
      %p92 = scmp.eq.s32.totalorder %s40, 0
      %p93 = por %p91, %p92
      %s95 = sadd.s32 %s94, 1
      %p98 = scmp.eq.s32.totalorder %s34, 3
      %p99 = scmp.ne.s32.totalorder %s94, %s96
      %p100 = scmp.eq.s32.totalorder %s34, 0
      %p101 = por %p99, %p100
      %p102 = scmp.ne.s32.totalorder %s94, %s96
      %p103 = scmp.eq.s32.totalorder %s39, 3
      %p104 = por %p102, %p103
      %p105 = scmp.ne.s32.totalorder %s96, %s97
      %p106 = scmp.eq.s32.totalorder %s39, 0
      %p107 = por %p105, %p106
      %p108 = scmp.ne.s32.totalorder %s96, %s97
      %p109 = scmp.eq.s32.totalorder %s40, 3
      %p110 = por %p108, %p109
      %p112 = scmp.ne.s32.totalorder %s97, %s111
      %p113 = scmp.eq.s32.totalorder %s40, 0
      %p114 = por %p112, %p113
      %s116 = sadd.s32 %s115, 1
      %p119 = scmp.eq.s32.totalorder %s34, 3
      %p120 = scmp.ne.s32.totalorder %s115, %s117
      %p121 = scmp.eq.s32.totalorder %s34, 0
      %p122 = por %p120, %p121
      %p123 = scmp.ne.s32.totalorder %s115, %s117
      %p124 = scmp.eq.s32.totalorder %s39, 3
      %p125 = por %p123, %p124
      %p126 = scmp.ne.s32.totalorder %s117, %s118
      %p127 = scmp.eq.s32.totalorder %s39, 0
      %p128 = por %p126, %p127
      %p129 = scmp.ne.s32.totalorder %s117, %s118
      %p130 = scmp.eq.s32.totalorder %s40, 3
      %p131 = por %p129, %p130
      %p133 = scmp.ne.s32.totalorder %s118, %s132
      %p134 = scmp.eq.s32.totalorder %s40, 0
      %p135 = por %p133, %p134
      %s137 = sadd.s32 %s136, 1
      %p140 = scmp.eq.s32.totalorder %s34, 3
      %p141 = scmp.ne.s32.totalorder %s136, %s138
      %p142 = scmp.eq.s32.totalorder %s34, 0
      %p143 = por %p141, %p142
      %p144 = scmp.ne.s32.totalorder %s136, %s138
      %p145 = scmp.eq.s32.totalorder %s39, 3
      %p146 = por %p144, %p145
      %p147 = scmp.ne.s32.totalorder %s138, %s139
      %p148 = scmp.eq.s32.totalorder %s39, 0
      %p149 = por %p147, %p148
      %p150 = scmp.ne.s32.totalorder %s138, %s139
      %p151 = scmp.eq.s32.totalorder %s40, 3
      %p152 = por %p150, %p151
      %p154 = scmp.ne.s32.totalorder %s139, %s153
      %p155 = scmp.eq.s32.totalorder %s40, 0
      %p156 = por %p154, %p155
      %s158 = sadd.s32 %s157, 1
      %p161 = scmp.eq.s32.totalorder %s34, 3
      %p162 = scmp.ne.s32.totalorder %s157, %s159
      %p163 = scmp.eq.s32.totalorder %s34, 0
      %p164 = por %p162, %p163
      %p165 = scmp.ne.s32.totalorder %s157, %s159
      %p166 = scmp.eq.s32.totalorder %s39, 3
      %p167 = por %p165, %p166
      %p168 = scmp.ne.s32.totalorder %s159, %s160
      %p169 = scmp.eq.s32.totalorder %s39, 0
      %p170 = por %p168, %p169
      %p171 = scmp.ne.s32.totalorder %s159, %s160
      %p172 = scmp.eq.s32.totalorder %s40, 3
      %p173 = por %p171, %p172
      %p175 = scmp.ne.s32.totalorder %s160, %s174
      %p176 = scmp.eq.s32.totalorder %s40, 0
      %p177 = por %p175, %p176
      %s179 = sadd.s32 %s178, 1
      %p182 = scmp.eq.s32.totalorder %s34, 3
      %p183 = scmp.ne.s32.totalorder %s178, %s180
      %p184 = scmp.eq.s32.totalorder %s34, 0
      %p185 = por %p183, %p184
      %p186 = scmp.ne.s32.totalorder %s178, %s180
      %p187 = scmp.eq.s32.totalorder %s39, 3
      %p188 = por %p186, %p187
      %p189 = scmp.ne.s32.totalorder %s180, %s181
      %p190 = scmp.eq.s32.totalorder %s39, 0
      %p191 = por %p189, %p190
      %p192 = scmp.ne.s32.totalorder %s180, %s181
      %p193 = scmp.eq.s32.totalorder %s40, 3
      %p194 = por %p192, %p193
      %p196 = scmp.ne.s32.totalorder %s181, %s195
      %p197 = scmp.eq.s32.totalorder %s40, 0
      %p198 = por %p196, %p197
      %s200 = sadd.s32 %s199, 1
      %p203 = scmp.eq.s32.totalorder %s34, 3
      %p204 = scmp.ne.s32.totalorder %s199, %s201
      %p205 = scmp.eq.s32.totalorder %s34, 0
      %p206 = por %p204, %p205
      %p207 = scmp.ne.s32.totalorder %s199, %s201
      %p208 = scmp.eq.s32.totalorder %s39, 3
      %p209 = por %p207, %p208
      %p210 = scmp.ne.s32.totalorder %s201, %s202
      %p211 = scmp.eq.s32.totalorder %s39, 0
      %p212 = por %p210, %p211
      %p213 = scmp.ne.s32.totalorder %s201, %s202
      %p214 = scmp.eq.s32.totalorder %s40, 3
      %p215 = por %p213, %p214
      %p217 = scmp.ne.s32.totalorder %s202, %s216
      %p218 = scmp.eq.s32.totalorder %s40, 0
      %p219 = por %p217, %p218
      %s221 = sadd.s32 %s220, 1
      %p224 = scmp.eq.s32.totalorder %s34, 3
      %p225 = scmp.ne.s32.totalorder %s220, %s222
      %p226 = scmp.eq.s32.totalorder %s34, 0
      %p227 = por %p225, %p226
      %p228 = scmp.ne.s32.totalorder %s220, %s222
      %p229 = scmp.eq.s32.totalorder %s39, 3
      %p230 = por %p228, %p229
      %p231 = scmp.ne.s32.totalorder %s222, %s223
      %p232 = scmp.eq.s32.totalorder %s39, 0
      %p233 = por %p231, %p232
      %p234 = scmp.ne.s32.totalorder %s222, %s223
      %p235 = scmp.eq.s32.totalorder %s40, 3
      %p236 = por %p234, %p235
      %p238 = scmp.ne.s32.totalorder %s223, %s237
      %p239 = scmp.eq.s32.totalorder %s40, 0
      %p240 = por %p238, %p239
      %s242 = sadd.s32 %s241, 1
      %p245 = scmp.eq.s32.totalorder %s34, 3
      %p246 = scmp.ne.s32.totalorder %s241, %s243
      %p247 = scmp.eq.s32.totalorder %s34, 0
      %p248 = por %p246, %p247
      %p249 = scmp.ne.s32.totalorder %s241, %s243
      %p250 = scmp.eq.s32.totalorder %s39, 3
      %p251 = por %p249, %p250
      %p252 = scmp.ne.s32.totalorder %s243, %s244
      %p253 = scmp.eq.s32.totalorder %s39, 0
      %p254 = por %p252, %p253
      %p255 = scmp.ne.s32.totalorder %s243, %s244
      %p256 = scmp.eq.s32.totalorder %s40, 3
      %p257 = por %p255, %p256
      %p259 = scmp.ne.s32.totalorder %s244, %s258
      %p260 = scmp.eq.s32.totalorder %s40, 0
      %p261 = por %p259, %p260
      %s263 = sadd.s32 %s262, 1
      %p266 = scmp.eq.s32.totalorder %s34, 3
      %p267 = scmp.ne.s32.totalorder %s262, %s264
      %p268 = scmp.eq.s32.totalorder %s34, 0
      %p269 = por %p267, %p268
      %p270 = scmp.ne.s32.totalorder %s262, %s264
      %p271 = scmp.eq.s32.totalorder %s39, 3
      %p272 = por %p270, %p271
      %p273 = scmp.ne.s32.totalorder %s264, %s265
      %p274 = scmp.eq.s32.totalorder %s39, 0
      %p275 = por %p273, %p274
      %p276 = scmp.ne.s32.totalorder %s264, %s265
      %p277 = scmp.eq.s32.totalorder %s40, 3
      %p278 = por %p276, %p277
      %p280 = scmp.ne.s32.totalorder %s265, %s279
      %p281 = scmp.eq.s32.totalorder %s40, 0
      %p282 = por %p280, %p281
      %s284 = sadd.s32 %s283, 1
      %p287 = scmp.eq.s32.totalorder %s34, 3
      %p288 = scmp.ne.s32.totalorder %s283, %s285
      %p289 = scmp.eq.s32.totalorder %s34, 0
      %p290 = por %p288, %p289
      %p291 = scmp.ne.s32.totalorder %s283, %s285
      %p292 = scmp.eq.s32.totalorder %s39, 3
      %p293 = por %p291, %p292
      %p294 = scmp.ne.s32.totalorder %s285, %s286
      %p295 = scmp.eq.s32.totalorder %s39, 0
      %p296 = por %p294, %p295
      %p297 = scmp.ne.s32.totalorder %s285, %s286
      %p298 = scmp.eq.s32.totalorder %s40, 3
      %p299 = por %p297, %p298
      %p301 = scmp.ne.s32.totalorder %s286, %s300
      %p302 = scmp.eq.s32.totalorder %s40, 0
      %p303 = por %p301, %p302
      %s305 = sadd.s32 %s304, 1
      %p308 = scmp.eq.s32.totalorder %s34, 3
      %p309 = scmp.ne.s32.totalorder %s304, %s306
      %p310 = scmp.eq.s32.totalorder %s34, 0
      %p311 = por %p309, %p310
      %p312 = scmp.ne.s32.totalorder %s304, %s306
      %p313 = scmp.eq.s32.totalorder %s39, 3
      %p314 = por %p312, %p313
      %p315 = scmp.ne.s32.totalorder %s306, %s307
      %p316 = scmp.eq.s32.totalorder %s39, 0
      %p317 = por %p315, %p316
      %p318 = scmp.ne.s32.totalorder %s306, %s307
      %p319 = scmp.eq.s32.totalorder %s40, 3
      %p320 = por %p318, %p319
      %p322 = scmp.ne.s32.totalorder %s307, %s321
      %p323 = scmp.eq.s32.totalorder %s40, 0
      %p324 = por %p322, %p323
      %s326 = sadd.s32 %s325, 1
      %p329 = scmp.eq.s32.totalorder %s34, 3
      %p330 = scmp.ne.s32.totalorder %s325, %s327
      %p331 = scmp.eq.s32.totalorder %s34, 0
      %p332 = por %p330, %p331
      %p333 = scmp.ne.s32.totalorder %s325, %s327
      %p334 = scmp.eq.s32.totalorder %s39, 3
      %p335 = por %p333, %p334
      %p336 = scmp.ne.s32.totalorder %s327, %s328
      %p337 = scmp.eq.s32.totalorder %s39, 0
      %p338 = por %p336, %p337
      %p339 = scmp.ne.s32.totalorder %s327, %s328
      %p340 = scmp.eq.s32.totalorder %s40, 3
      %p341 = por %p339, %p340
      %p343 = scmp.ne.s32.totalorder %s328, %s342
      %p344 = scmp.eq.s32.totalorder %s40, 0
      %p345 = por %p343, %p344
      %s347 = sadd.s32 %s346, 1
      %p350 = scmp.eq.s32.totalorder %s34, 3
      %p351 = scmp.ne.s32.totalorder %s346, %s348
      %p352 = scmp.eq.s32.totalorder %s34, 0
      %p353 = por %p351, %p352
      %p354 = scmp.ne.s32.totalorder %s346, %s348
      %p355 = scmp.eq.s32.totalorder %s39, 3
      %p356 = por %p354, %p355
      %p357 = scmp.ne.s32.totalorder %s348, %s349
      %p358 = scmp.eq.s32.totalorder %s39, 0
      %p359 = por %p357, %p358
      %p360 = scmp.ne.s32.totalorder %s348, %s349
      %p361 = scmp.eq.s32.totalorder %s40, 3
      %p362 = por %p360, %p361
      %p364 = scmp.ne.s32.totalorder %s349, %s363
      %p365 = scmp.eq.s32.totalorder %s40, 0
      %p366 = por %p364, %p365
      %s368 = sadd.s32 %s367, 1
      %p371 = scmp.eq.s32.totalorder %s34, 3
      %p372 = scmp.ne.s32.totalorder %s367, %s369
      %p373 = scmp.eq.s32.totalorder %s34, 0
      %p374 = por %p372, %p373
      %p375 = scmp.ne.s32.totalorder %s367, %s369
      %p376 = scmp.eq.s32.totalorder %s39, 3
      %p377 = por %p375, %p376
      %p378 = scmp.ne.s32.totalorder %s369, %s370
      %p379 = scmp.eq.s32.totalorder %s39, 0
      %p380 = por %p378, %p379
      %p381 = scmp.ne.s32.totalorder %s369, %s370
      %p382 = scmp.eq.s32.totalorder %s40, 3
      %p383 = por %p381, %p382
      %p385 = scmp.ne.s32.totalorder %s370, %s384
      %p386 = scmp.eq.s32.totalorder %s40, 0
      %p387 = por %p385, %p386
      %s389 = sadd.s32 %s388, 1
      %p392 = scmp.eq.s32.totalorder %s34, 3
      %p393 = scmp.ne.s32.totalorder %s388, %s390
      %p394 = scmp.eq.s32.totalorder %s34, 0
      %p395 = por %p393, %p394
      %p396 = scmp.ne.s32.totalorder %s388, %s390
      %p397 = scmp.eq.s32.totalorder %s39, 3
      %p398 = por %p396, %p397
      %p399 = scmp.ne.s32.totalorder %s390, %s391
      %p400 = scmp.eq.s32.totalorder %s39, 0
      %p401 = por %p399, %p400
      %p402 = scmp.ne.s32.totalorder %s390, %s391
      %p403 = scmp.eq.s32.totalorder %s40, 3
      %p404 = por %p402, %p403
      %p406 = scmp.ne.s32.totalorder %s391, %s405
      %p407 = scmp.eq.s32.totalorder %s40, 0
      %p408 = por %p406, %p407
      %s410 = sadd.s32 %s409, 1
      %p413 = scmp.eq.s32.totalorder %s34, 3
      %p414 = scmp.ne.s32.totalorder %s409, %s411
      %p415 = scmp.eq.s32.totalorder %s34, 0
      %p416 = por %p414, %p415
      %p417 = scmp.ne.s32.totalorder %s409, %s411
      %p418 = scmp.eq.s32.totalorder %s39, 3
      %p419 = por %p417, %p418
      %p420 = scmp.ne.s32.totalorder %s411, %s412
      %p421 = scmp.eq.s32.totalorder %s39, 0
      %p422 = por %p420, %p421
      %p423 = scmp.ne.s32.totalorder %s411, %s412
      %p424 = scmp.eq.s32.totalorder %s40, 3
      %p425 = por %p423, %p424
      %p427 = scmp.ne.s32.totalorder %s412, %s426
      %p428 = scmp.eq.s32.totalorder %s40, 0
      %p429 = por %p427, %p428
      %s431 = sadd.s32 %s430, 1
      %p434 = scmp.eq.s32.totalorder %s34, 3
      %p435 = scmp.ne.s32.totalorder %s430, %s432
      %p436 = scmp.eq.s32.totalorder %s34, 0
      %p437 = por %p435, %p436
      %p438 = scmp.ne.s32.totalorder %s430, %s432
      %p439 = scmp.eq.s32.totalorder %s39, 3
      %p440 = por %p438, %p439
      %p441 = scmp.ne.s32.totalorder %s432, %s433
      %p442 = scmp.eq.s32.totalorder %s39, 0
      %p443 = por %p441, %p442
      %p444 = scmp.ne.s32.totalorder %s432, %s433
      %p445 = scmp.eq.s32.totalorder %s40, 3
      %p446 = por %p444, %p445
      %p448 = scmp.ne.s32.totalorder %s433, %s447
      %p449 = scmp.eq.s32.totalorder %s40, 0
      %p450 = por %p448, %p449
      %s452 = sadd.s32 %s451, 1
      %p455 = scmp.eq.s32.totalorder %s34, 3
      %p456 = scmp.ne.s32.totalorder %s451, %s453
      %p457 = scmp.eq.s32.totalorder %s34, 0
      %p458 = por %p456, %p457
      %p459 = scmp.ne.s32.totalorder %s451, %s453
      %p460 = scmp.eq.s32.totalorder %s39, 3
      %p461 = por %p459, %p460
      %p462 = scmp.ne.s32.totalorder %s453, %s454
      %p463 = scmp.eq.s32.totalorder %s39, 0
      %p464 = por %p462, %p463
      %p465 = scmp.ne.s32.totalorder %s453, %s454
      %p466 = scmp.eq.s32.totalorder %s40, 3
      %p467 = por %p465, %p466
      %p469 = scmp.ne.s32.totalorder %s454, %s468
      %p470 = scmp.eq.s32.totalorder %s40, 0
      %p471 = por %p469, %p470
      %s472 = ssub.s32 %s34, %s41
      %p473 = scmp.eq.s32.totalorder %s472, 0
      %s475 = sadd.s32 %s474, 1
      %s476 = scalar_select %p473, %s474, %s475
      %p479 = pneg %p473
      %p480 = scmp.eq.s32.totalorder %s34, 3
      %p481 = por %p479, %p480
      %p482 = scmp.ne.s32.totalorder %s474, %s477
      %p483 = scmp.eq.s32.totalorder %s34, 0
      %p484 = por %p482, %p483
      %p485 = scmp.ne.s32.totalorder %s474, %s477
      %p486 = scmp.eq.s32.totalorder %s39, 3
      %p487 = por %p485, %p486
      %p488 = scmp.ne.s32.totalorder %s477, %s478
      %p489 = scmp.eq.s32.totalorder %s39, 0
      %p490 = por %p488, %p489
      %p491 = scmp.ne.s32.totalorder %s477, %s478
      %p492 = scmp.eq.s32.totalorder %s40, 3
      %p493 = por %p491, %p492
      %p495 = scmp.ne.s32.totalorder %s478, %s494
      %p496 = scmp.eq.s32.totalorder %s40, 0
      %p497 = por %p495, %p496
      %s498 = ssub.s32 %s34, %s41
      %p499 = scmp.eq.s32.totalorder %s498, 0
      %s501 = sadd.s32 %s500, 1
      %s502 = scalar_select %p499, %s500, %s501
      %p505 = pneg %p499
      %p506 = scmp.eq.s32.totalorder %s34, 3
      %p507 = por %p505, %p506
      %p508 = scmp.ne.s32.totalorder %s500, %s503
      %p509 = scmp.eq.s32.totalorder %s34, 0
      %p510 = por %p508, %p509
      %p511 = scmp.ne.s32.totalorder %s500, %s503
      %p512 = scmp.eq.s32.totalorder %s39, 3
      %p513 = por %p511, %p512
      %p514 = scmp.ne.s32.totalorder %s503, %s504
      %p515 = scmp.eq.s32.totalorder %s39, 0
      %p516 = por %p514, %p515
      %p517 = scmp.ne.s32.totalorder %s503, %s504
      %p518 = scmp.eq.s32.totalorder %s40, 3
      %p519 = por %p517, %p518
      %p521 = scmp.ne.s32.totalorder %s504, %s520
      %p522 = scmp.eq.s32.totalorder %s40, 0
      %p523 = por %p521, %p522
      %p524 = scmp.le.s32.totalorder 1, %s34
      %p525 = scmp.lt.s32.totalorder %s34, 5
      %p526 = pnand %p524, %p525
      %p527 = pneg %p526
      // Predicated region
      $region9: #{transformer_intention_layer.9} parent=5 // pred_check
        _
      $region10: #{transformer_intention_layer.9} parent=5 // pred_check_branch
        %529 = sbr.rel (%p526) target = $region12
      $region11: #{transformer_intention_layer.9} parent=5 // pred_region
        %s530 = ssub.s32 %s34, 1
        // Predicated region
        $region13: #{transformer_intention_layer.9} parent=11 // pred_check
          %p531 = pneg %p107
        $region14: #{transformer_intention_layer.9} parent=11 // pred_check_branch
          %533 = sbr.rel (%p531) target = $region16
        $region15: #{transformer_intention_layer.9} parent=11 // pred_region
          _
        $region16: #{transformer_intention_layer.9} parent=11 // pred_fallthru
          _
        // Predicated region
        $region17: #{transformer_intention_layer.9} parent=11 // pred_check
          %p534 = pneg %p128
        $region18: #{transformer_intention_layer.9} parent=11 // pred_check_branch
          %536 = sbr.rel (%p534) target = $region20
        $region19: #{transformer_intention_layer.9} parent=11 // pred_region
          _
        $region20: #{transformer_intention_layer.9} parent=11 // pred_fallthru
          _
        // Predicated region
        $region21: #{transformer_intention_layer.9} parent=11 // pred_check
          %p537 = pneg %p149
        $region22: #{transformer_intention_layer.9} parent=11 // pred_check_branch
          %539 = sbr.rel (%p537) target = $region24
        $region23: #{transformer_intention_layer.9} parent=11 // pred_region
          _
        $region24: #{transformer_intention_layer.9} parent=11 // pred_fallthru
          _
        // Predicated region
        $region25: #{transformer_intention_layer.9} parent=11 // pred_check
          %p540 = pneg %p170
        $region26: #{transformer_intention_layer.9} parent=11 // pred_check_branch
          %542 = sbr.rel (%p540) target = $region28
        $region27: #{transformer_intention_layer.9} parent=11 // pred_region
          _
        $region28: #{transformer_intention_layer.9} parent=11 // pred_fallthru
          _
        // Predicated region
        $region29: #{transformer_intention_layer.9} parent=11 // pred_check
          %p543 = pneg %p191
        $region30: #{transformer_intention_layer.9} parent=11 // pred_check_branch
          %545 = sbr.rel (%p543) target = $region32
        $region31: #{transformer_intention_layer.9} parent=11 // pred_region
          _
        $region32: #{transformer_intention_layer.9} parent=11 // pred_fallthru
          _
        // Predicated region
        $region33: #{transformer_intention_layer.9} parent=11 // pred_check
          %p546 = pneg %p212
        $region34: #{transformer_intention_layer.9} parent=11 // pred_check_branch
          %548 = sbr.rel (%p546) target = $region36
        $region35: #{transformer_intention_layer.9} parent=11 // pred_region
          _
        $region36: #{transformer_intention_layer.9} parent=11 // pred_fallthru
          _
        // Predicated region
        $region37: #{transformer_intention_layer.9} parent=11 // pred_check
          %p549 = pneg %p233
        $region38: #{transformer_intention_layer.9} parent=11 // pred_check_branch
          %551 = sbr.rel (%p549) target = $region40
        $region39: #{transformer_intention_layer.9} parent=11 // pred_region
          _
        $region40: #{transformer_intention_layer.9} parent=11 // pred_fallthru
          _
        // Predicated region
        $region41: #{transformer_intention_layer.9} parent=11 // pred_check
          %p552 = pneg %p254
        $region42: #{transformer_intention_layer.9} parent=11 // pred_check_branch
          %554 = sbr.rel (%p552) target = $region44
        $region43: #{transformer_intention_layer.9} parent=11 // pred_region
          _
        $region44: #{transformer_intention_layer.9} parent=11 // pred_fallthru
          _
        // Predicated region
        $region45: #{transformer_intention_layer.9} parent=11 // pred_check
          %p555 = pneg %p275
        $region46: #{transformer_intention_layer.9} parent=11 // pred_check_branch
          %557 = sbr.rel (%p555) target = $region48
        $region47: #{transformer_intention_layer.9} parent=11 // pred_region
          _
        $region48: #{transformer_intention_layer.9} parent=11 // pred_fallthru
          _
        // Predicated region
        $region49: #{transformer_intention_layer.9} parent=11 // pred_check
          %p558 = pneg %p296
        $region50: #{transformer_intention_layer.9} parent=11 // pred_check_branch
          %560 = sbr.rel (%p558) target = $region52
        $region51: #{transformer_intention_layer.9} parent=11 // pred_region
          _
        $region52: #{transformer_intention_layer.9} parent=11 // pred_fallthru
          _
        // Predicated region
        $region53: #{transformer_intention_layer.9} parent=11 // pred_check
          %p561 = pneg %p317
        $region54: #{transformer_intention_layer.9} parent=11 // pred_check_branch
          %563 = sbr.rel (%p561) target = $region56
        $region55: #{transformer_intention_layer.9} parent=11 // pred_region
          _
        $region56: #{transformer_intention_layer.9} parent=11 // pred_fallthru
          _
        // Predicated region
        $region57: #{transformer_intention_layer.9} parent=11 // pred_check
          %p564 = pneg %p338
        $region58: #{transformer_intention_layer.9} parent=11 // pred_check_branch
          %566 = sbr.rel (%p564) target = $region60
        $region59: #{transformer_intention_layer.9} parent=11 // pred_region
          _
        $region60: #{transformer_intention_layer.9} parent=11 // pred_fallthru
          _
        // Predicated region
        $region61: #{transformer_intention_layer.9} parent=11 // pred_check
          %p567 = pneg %p359
        $region62: #{transformer_intention_layer.9} parent=11 // pred_check_branch
          %569 = sbr.rel (%p567) target = $region64
        $region63: #{transformer_intention_layer.9} parent=11 // pred_region
          _
        $region64: #{transformer_intention_layer.9} parent=11 // pred_fallthru
          _
        // Predicated region
        $region65: #{transformer_intention_layer.9} parent=11 // pred_check
          %p570 = pneg %p380
        $region66: #{transformer_intention_layer.9} parent=11 // pred_check_branch
          %572 = sbr.rel (%p570) target = $region68
        $region67: #{transformer_intention_layer.9} parent=11 // pred_region
          _
        $region68: #{transformer_intention_layer.9} parent=11 // pred_fallthru
          _
        // Predicated region
        $region69: #{transformer_intention_layer.9} parent=11 // pred_check
          %p573 = pneg %p401
        $region70: #{transformer_intention_layer.9} parent=11 // pred_check_branch
          %575 = sbr.rel (%p573) target = $region72
        $region71: #{transformer_intention_layer.9} parent=11 // pred_region
          _
        $region72: #{transformer_intention_layer.9} parent=11 // pred_fallthru
          _
        // Predicated region
        $region73: #{transformer_intention_layer.9} parent=11 // pred_check
          %p576 = pneg %p422
        $region74: #{transformer_intention_layer.9} parent=11 // pred_check_branch
          %578 = sbr.rel (%p576) target = $region76
        $region75: #{transformer_intention_layer.9} parent=11 // pred_region
          _
        $region76: #{transformer_intention_layer.9} parent=11 // pred_fallthru
          _
        // Predicated region
        $region77: #{transformer_intention_layer.9} parent=11 // pred_check
          %p579 = pneg %p443
        $region78: #{transformer_intention_layer.9} parent=11 // pred_check_branch
          %581 = sbr.rel (%p579) target = $region80
        $region79: #{transformer_intention_layer.9} parent=11 // pred_region
          _
        $region80: #{transformer_intention_layer.9} parent=11 // pred_fallthru
          _
        // Predicated region
        $region81: #{transformer_intention_layer.9} parent=11 // pred_check
          %p582 = pneg %p464
        $region82: #{transformer_intention_layer.9} parent=11 // pred_check_branch
          %584 = sbr.rel (%p582) target = $region84
        $region83: #{transformer_intention_layer.9} parent=11 // pred_region
          _
        $region84: #{transformer_intention_layer.9} parent=11 // pred_fallthru
          _
      $region12: #{transformer_intention_layer.9} parent=5 // pred_fallthru
        _
      %p585 = scmp.lt.s32.totalorder %s34, 4
      // Predicated region
      $region85: #{transformer_intention_layer.9} parent=5 // pred_check
        %p586 = pneg %p585
      $region86: #{transformer_intention_layer.9} parent=5 // pred_check_branch
        %588 = sbr.rel (%p586) target = $region88
      $region87: #{transformer_intention_layer.9} parent=5 // pred_region
        // Predicated region
        $region89: #{transformer_intention_layer.9} parent=87 // pred_check
          %p589 = pneg %p54
        $region90: #{transformer_intention_layer.9} parent=87 // pred_check_branch
          %591 = sbr.rel (%p589) target = $region92
        $region91: #{transformer_intention_layer.9} parent=87 // pred_region
          %p592 = scmp.lt.s32.totalorder %s34, 3
          %s593 = scalar_select %p592, %s34, 3
          %s594 = smul.addr %s593, 4
          %s595 = scalar_lea.vmem %s0, %s594
        $region92: #{transformer_intention_layer.9} parent=87 // pred_fallthru
          _
        // Predicated region
        $region93: #{transformer_intention_layer.9} parent=87 // pred_check
          %p596 = pneg %p80
        $region94: #{transformer_intention_layer.9} parent=87 // pred_check_branch
          %598 = sbr.rel (%p596) target = $region96
        $region95: #{transformer_intention_layer.9} parent=87 // pred_region
          %p599 = scmp.lt.s32.totalorder %s34, 3
          %s600 = scalar_select %p599, %s34, 3
          %s601 = smul.addr %s600, 2
          %s602 = scalar_lea.vmem %s1, %s601
        $region96: #{transformer_intention_layer.9} parent=87 // pred_fallthru
          _
      $region88: #{transformer_intention_layer.9} parent=5 // pred_fallthru
        _
      %p603 = scmp.le.s32.totalorder 1, %s34
      %p604 = scmp.lt.s32.totalorder %s34, 5
      %p605 = pnand %p603, %p604
      %p606 = pneg %p605
      // Predicated region
      $region97: #{transformer_intention_layer.9} parent=5 // pred_check
        _
      $region98: #{transformer_intention_layer.9} parent=5 // pred_check_branch
        %608 = sbr.rel (%p605) target = $region100
      $region99: #{transformer_intention_layer.9} parent=5 // pred_region
        %s609 = ssub.s32 %s34, 1
        %p610 = scmp.lt.s32.totalorder %s39, 3
        %s611 = scalar_select %p610, %s39, 3
        %s612 = smul.addr %s611, 4
        %s613 = scalar_lea.vmem %s0, %s612
        %p614 = pneg %p60
        %p615 = pneg %p57
        %p616 = scmp.lt.s32.totalorder %s39, 3
        %s617 = scalar_select %p616, %s39, 3
        %s618 = smul.addr %s617, 2
        %s619 = scalar_lea.vmem %s1, %s618
        %p620 = pneg %p86
        %p621 = pneg %p83
        %p622 = pneg %p107
        %p623 = pneg %p104
        %p624 = pneg %p128
        %p625 = pneg %p125
        %p626 = pneg %p149
        %p627 = pneg %p146
        %p628 = pneg %p170
        %p629 = pneg %p167
        %p630 = pneg %p191
        %p631 = pneg %p188
        %p632 = pneg %p212
        %p633 = pneg %p209
        %p634 = pneg %p233
        %p635 = pneg %p230
        %p636 = pneg %p254
        %p637 = pneg %p251
        %p638 = pneg %p275
        %p639 = pneg %p272
        %p640 = pneg %p296
        %p641 = pneg %p293
        %p642 = pneg %p317
        %p643 = pneg %p314
        %p644 = pneg %p338
        %p645 = pneg %p335
        %p646 = pneg %p359
        %p647 = pneg %p356
        %p648 = pneg %p380
        %p649 = pneg %p377
        %p650 = pneg %p401
        %p651 = pneg %p398
        %p652 = pneg %p422
        %p653 = pneg %p419
        %p654 = pneg %p443
        %p655 = pneg %p440
        %p656 = pneg %p464
        %p657 = pneg %p461
        %p658 = pneg %p490
        %p659 = pneg %p487
        %s660 = sand.u32 %s477, 1
        %s661 = scalar_lea.sflag [#allocation3], %s660
        %s662 = sand.u32 %s477, 1
        %s663 = smul.addr %s662, 4
        %s664 = scalar_lea.vmem [#allocation2], %s663
        %p665 = pneg %p516
        %p666 = pneg %p513
        %s667 = sand.u32 %s503, 1
        %s668 = scalar_lea.sflag [#allocation5], %s667
        %s669 = sand.u32 %s503, 1
        %s670 = smul.addr %s669, 4
        %s671 = scalar_lea.vmem [#allocation4], %s670
        %p672 = scmp.lt.s32.totalorder %s39, 3
        %s673 = scalar_select %p672, %s39, 3
        %s674 = smul.addr %s673, 4
        %s675 = scalar_lea.vmem %s0, %s674
        %p676 = scmp.lt.s32.totalorder %s39, 3
        %s677 = scalar_select %p676, %s39, 3
        %s678 = smul.addr %s677, 2
        %s679 = scalar_lea.vmem %s1, %s678
        %v681 = vld [vmem:[%s675] sm:$0xf]
        %v682 = vld [vmem:[%s679] sm:$0x3]
        %v683 = vunpack.c.l.bf16 %v682
        %v684 = vld [vmem:[%s2] sm:$0xf]
        %v685 = vld [vmem:[%s2 + $0x4] sm:$0xf]
        %v686 = vld [vmem:[%s2 + $0x8] sm:$0xf]
        %v687 = vld [vmem:[%s2 + $0xc] sm:$0xf]
        %v688 = vpack.c.bf16 %v681, %v681
        %v689 = vld [vmem:[%s3] sm:$0x1]
        %v691 = vlaneseq
        %v692 = vshrl.u32 %v691, 7
        %v693 = vsub.s32 0, %v692
        %v694 = vrot.slane %v689, %v693
        %v700 = vunpack.c.l.b16 %v684
        %v701 = vunpack.c.l.b16 %v685
        %v702 = vunpack.c.l.b16 %v686
        %v703 = vunpack.c.l.b16 %v687
        %v704 = vpack.c.b16 %v701, %v700
        %v705 = vpack.c.b16 %v703, %v702
        %vm708 = vcmask 261120
        %v710 = vsel %vm708, %v688, 0
        %712 = vmatprep.subr.bf16.mxu0 0
        %713 = vmatpush1.bf16.msra.mxu0 %v704
        %714 = vmatprep.subr.bf16.mxu0 0
        %715 = vmatpush1.bf16.msra.mxu0 %v705
        %716 = vmatprep.subr.bf16.mxu0 0
        %717 = vmatpush1.bf16.msra.mxu0 0
        %718 = vmatprep.subr.bf16.mxu0 0
        %719 = vmatpush1.bf16.msra.mxu0 0
        %720 = vmatprep.subr.bf16.mxu0 0
        %721 = vmatpush1.bf16.msra.mxu0 0
        %722 = vmatprep.subr.bf16.mxu0 0
        %723 = vmatpush1.bf16.msra.mxu0 0
        %724 = vmatprep.subr.bf16.mxu0 0
        %725 = vmatpush1.bf16.msra.mxu0 0
        %726 = vmatprep.subr.bf16.mxu0 0
        %727 = vmatpush1.bf16.msra.mxu0 0
        %728 = vmatprep.subr.bf16.mxu0 0
        %729 = vmatpush1.bf16.msra.mxu0 0
        %730 = vmatprep.subr.bf16.mxu0 0
        %731 = vmatpush1.bf16.msra.mxu0 0
        %732 = vmatprep.subr.bf16.mxu0 0
        %733 = vmatpush1.bf16.msra.mxu0 0
        %734 = vmatprep.subr.bf16.mxu0 0
        %735 = vmatpush1.bf16.msra.mxu0 0
        %736 = vmatprep.subr.bf16.mxu0 0
        %737 = vmatpush1.bf16.msra.mxu0 0
        %738 = vmatprep.subr.bf16.mxu0 0
        %739 = vmatpush1.bf16.msra.mxu0 0
        %740 = vmatprep.subr.bf16.mxu0 0
        %741 = vmatpush1.bf16.msra.mxu0 0
        %742 = vmatprep.subr.bf16.mxu0 0
        %743 = vmatpush1.bf16.msra.mxu0 0
        %744 = vmatprep.mubr.bf16.mxu0 0
        %745 = vmatmul.mubr.bf16.gmra.mrb[0].mxu0 %v710
        %v746 = vpop.f32.mrb[0].mxu0
        %v747 = vadd.f32 %v694, %v746
        %v748 = vpop.f32.mrb[0].mxu0
        %v749 = vpop.f32.mrb[0].mxu0
        %v750 = vpop.f32.mrb[0].mxu0
        %751 = vdwg.mxu0
        %753 = vrot.lane.b32.xlu0 %v683, 32
        %v754 = vpop.permute.xlu0 %753
        %v756 = vsel %vm708, %v747, %v754
        %758 = vrot.lane.b32.xlu0 %v747, 96
        %v759 = vpop.permute.xlu0 %758
        %v761 = vsel %vm708, %v759, %v754
        %v762 = vmul.f32 %v756, 0.25
        %v763 = vpack.c.bf16 %v762, %v762
        %v764 = vpack.c.bf16 %v761, %v761
        %v765 = vpack.c.bf16 %v747, %v747
        %vm766 = vcmask 130048
        %v768 = vsel %vm766, %v763, 0
        %v771 = vsel %vm766, %v764, 0
        %773 = vmatprep.subr.bf16.mxu0 0
        %774 = vmatpush1.bf16.xpose.msra.mxu0 %v771
        %775 = vmatprep.subr.bf16.mxu0 0
        %776 = vmatpush1.bf16.xpose.msra.mxu0 0
        %777 = vmatprep.subr.bf16.mxu0 0
        %778 = vmatpush1.bf16.xpose.msra.mxu0 0
        %779 = vmatprep.subr.bf16.mxu0 0
        %780 = vmatpush1.bf16.xpose.msra.mxu0 0
        %781 = vmatprep.subr.bf16.mxu0 0
        %782 = vmatpush1.bf16.xpose.msra.mxu0 0
        %783 = vmatprep.subr.bf16.mxu0 0
        %784 = vmatpush1.bf16.xpose.msra.mxu0 0
        %785 = vmatprep.subr.bf16.mxu0 0
        %786 = vmatpush1.bf16.xpose.msra.mxu0 0
        %787 = vmatprep.subr.bf16.mxu0 0
        %788 = vmatpush1.bf16.xpose.msra.mxu0 0
        %789 = vmatprep.subr.bf16.mxu0 0
        %790 = vmatpush1.bf16.xpose.msra.mxu0 0
        %791 = vmatprep.subr.bf16.mxu0 0
        %792 = vmatpush1.bf16.xpose.msra.mxu0 0
        %793 = vmatprep.subr.bf16.mxu0 0
        %794 = vmatpush1.bf16.xpose.msra.mxu0 0
        %795 = vmatprep.subr.bf16.mxu0 0
        %796 = vmatpush1.bf16.xpose.msra.mxu0 0
        %797 = vmatprep.subr.bf16.mxu0 0
        %798 = vmatpush1.bf16.xpose.msra.mxu0 0
        %799 = vmatprep.subr.bf16.mxu0 0
        %800 = vmatpush1.bf16.xpose.msra.mxu0 0
        %801 = vmatprep.subr.bf16.mxu0 0
        %802 = vmatpush1.bf16.xpose.msra.mxu0 0
        %803 = vmatprep.subr.bf16.mxu0 0
        %804 = vmatpush1.bf16.xpose.msra.mxu0 0
        %805 = vmatprep.mubr.bf16.mxu0 0
        %806 = vmatmul.mubr.bf16.gmra.mrb[0].mxu0 %v768
        %v807 = vpop.f32.mrb[0].mxu0
        %v808 = vadd.f32 0.0, %v807
        %v809 = vpop.f32.mrb[0].mxu0
        %v810 = vpop.f32.mrb[0].mxu0
        %v811 = vpop.f32.mrb[0].mxu0
        %812 = vdwg.mxu0
        %vm813 = vcmask 27648
        %v814 = vsel %vm813, %v808, -inf
        %815 = vmax.xlane.f32.xlu0 %v814
        %v816 = vpop.xlane.xlu0 %815
        %v817 = vsub.f32 %v808, %v816
        %v818 = vmul.f32 %v817, 1.442695
        %v819 = vpow.pop %v818
        %v820 = vsel %vm813, %v819, 0.0
        %821 = vadd.xlane.f32.xlu0 %v820
        %v822 = vpop.xlane.xlu0 %821
        %v823 = vrcp.pop %v822
        %v824 = vmul.f32 %v819, %v823
        %v825 = vpack.c.bf16 %v824, %v824
        %827 = vrot.lane.b32.xlu0 %v765, 64
        %v828 = vpop.permute.xlu0 %827
        %vm829 = vcmask 31744
        %v831 = vsel %vm829, %v825, 0
        %vm833 = vcmask 1041408
        %v835 = vsel %vm833, %v828, 0
        %837 = vmatprep.subr.bf16.mxu0 0
        %838 = vmatpush1.bf16.msra.mxu0 %v835
        %839 = vmatprep.subr.bf16.mxu0 0
        %840 = vmatpush1.bf16.msra.mxu0 0
        %841 = vmatprep.subr.bf16.mxu0 0
        %842 = vmatpush1.bf16.msra.mxu0 0
        %843 = vmatprep.subr.bf16.mxu0 0
        %844 = vmatpush1.bf16.msra.mxu0 0
        %845 = vmatprep.subr.bf16.mxu0 0
        %846 = vmatpush1.bf16.msra.mxu0 0
        %847 = vmatprep.subr.bf16.mxu0 0
        %848 = vmatpush1.bf16.msra.mxu0 0
        %849 = vmatprep.subr.bf16.mxu0 0
        %850 = vmatpush1.bf16.msra.mxu0 0
        %851 = vmatprep.subr.bf16.mxu0 0
        %852 = vmatpush1.bf16.msra.mxu0 0
        %853 = vmatprep.subr.bf16.mxu0 0
        %854 = vmatpush1.bf16.msra.mxu0 0
        %855 = vmatprep.subr.bf16.mxu0 0
        %856 = vmatpush1.bf16.msra.mxu0 0
        %857 = vmatprep.subr.bf16.mxu0 0
        %858 = vmatpush1.bf16.msra.mxu0 0
        %859 = vmatprep.subr.bf16.mxu0 0
        %860 = vmatpush1.bf16.msra.mxu0 0
        %861 = vmatprep.subr.bf16.mxu0 0
        %862 = vmatpush1.bf16.msra.mxu0 0
        %863 = vmatprep.subr.bf16.mxu0 0
        %864 = vmatpush1.bf16.msra.mxu0 0
        %865 = vmatprep.subr.bf16.mxu0 0
        %866 = vmatpush1.bf16.msra.mxu0 0
        %867 = vmatprep.subr.bf16.mxu0 0
        %868 = vmatpush1.bf16.msra.mxu0 0
        %869 = vmatprep.mubr.bf16.mxu0 0
        %870 = vmatmul.mubr.bf16.gmra.mrb[0].mxu0 %v831
        %v871 = vpop.f32.mrb[0].mxu0
        %v872 = vadd.f32 0.0, %v871
        %v873 = vpop.f32.mrb[0].mxu0
        %v874 = vpop.f32.mrb[0].mxu0
        %v875 = vpop.f32.mrb[0].mxu0
        %876 = vdwg.mxu0
        %878 = vrot.lane.b32.xlu0 %v763, 112
        %v879 = vpop.permute.xlu0 %878
        %881 = vrot.lane.b32.xlu0 %v764, 112
        %v882 = vpop.permute.xlu0 %881
        %v884 = vsel %vm766, %v879, 0
        %v887 = vsel %vm766, %v882, 0
        %889 = vmatprep.subr.bf16.mxu0 0
        %890 = vmatpush1.bf16.xpose.msra.mxu0 %v887
        %891 = vmatprep.subr.bf16.mxu0 0
        %892 = vmatpush1.bf16.xpose.msra.mxu0 0
        %893 = vmatprep.subr.bf16.mxu0 0
        %894 = vmatpush1.bf16.xpose.msra.mxu0 0
        %895 = vmatprep.subr.bf16.mxu0 0
        %896 = vmatpush1.bf16.xpose.msra.mxu0 0
        %897 = vmatprep.subr.bf16.mxu0 0
        %898 = vmatpush1.bf16.xpose.msra.mxu0 0
        %899 = vmatprep.subr.bf16.mxu0 0
        %900 = vmatpush1.bf16.xpose.msra.mxu0 0
        %901 = vmatprep.subr.bf16.mxu0 0
        %902 = vmatpush1.bf16.xpose.msra.mxu0 0
        %903 = vmatprep.subr.bf16.mxu0 0
        %904 = vmatpush1.bf16.xpose.msra.mxu0 0
        %905 = vmatprep.subr.bf16.mxu0 0
        %906 = vmatpush1.bf16.xpose.msra.mxu0 0
        %907 = vmatprep.subr.bf16.mxu0 0
        %908 = vmatpush1.bf16.xpose.msra.mxu0 0
        %909 = vmatprep.subr.bf16.mxu0 0
        %910 = vmatpush1.bf16.xpose.msra.mxu0 0
        %911 = vmatprep.subr.bf16.mxu0 0
        %912 = vmatpush1.bf16.xpose.msra.mxu0 0
        %913 = vmatprep.subr.bf16.mxu0 0
        %914 = vmatpush1.bf16.xpose.msra.mxu0 0
        %915 = vmatprep.subr.bf16.mxu0 0
        %916 = vmatpush1.bf16.xpose.msra.mxu0 0
        %917 = vmatprep.subr.bf16.mxu0 0
        %918 = vmatpush1.bf16.xpose.msra.mxu0 0
        %919 = vmatprep.subr.bf16.mxu0 0
        %920 = vmatpush1.bf16.xpose.msra.mxu0 0
        %921 = vmatprep.mubr.bf16.mxu0 0
        %922 = vmatmul.mubr.bf16.gmra.mrb[0].mxu0 %v884
        %v923 = vpop.f32.mrb[0].mxu0
        %v924 = vadd.f32 0.0, %v923
        %v925 = vpop.f32.mrb[0].mxu0
        %v926 = vpop.f32.mrb[0].mxu0
        %v927 = vpop.f32.mrb[0].mxu0
        %928 = vdwg.mxu0
        %v929 = vsel %vm813, %v924, -inf
        %930 = vmax.xlane.f32.xlu0 %v929
        %v931 = vpop.xlane.xlu0 %930
        %v932 = vsub.f32 %v924, %v931
        %v933 = vmul.f32 %v932, 1.442695
        %v934 = vpow.pop %v933
        %v935 = vsel %vm813, %v934, 0.0
        %936 = vadd.xlane.f32.xlu0 %v935
        %v937 = vpop.xlane.xlu0 %936
        %v938 = vrcp.pop %v937
        %v939 = vmul.f32 %v934, %v938
        %v940 = vpack.c.bf16 %v939, %v939
        %941 = vrot.lane.b32.xlu0 %v765, 56
        %v942 = vpop.permute.xlu0 %941
        %v944 = vsel %vm829, %v940, 0
        %v947 = vsel %vm833, %v942, 0
        %949 = vmatprep.subr.bf16.mxu0 0
        %950 = vmatpush1.bf16.msra.mxu0 %v947
        %951 = vmatprep.subr.bf16.mxu0 0
        %952 = vmatpush1.bf16.msra.mxu0 0
        %953 = vmatprep.subr.bf16.mxu0 0
        %954 = vmatpush1.bf16.msra.mxu0 0
        %955 = vmatprep.subr.bf16.mxu0 0
        %956 = vmatpush1.bf16.msra.mxu0 0
        %957 = vmatprep.subr.bf16.mxu0 0
        %958 = vmatpush1.bf16.msra.mxu0 0
        %959 = vmatprep.subr.bf16.mxu0 0
        %960 = vmatpush1.bf16.msra.mxu0 0
        %961 = vmatprep.subr.bf16.mxu0 0
        %962 = vmatpush1.bf16.msra.mxu0 0
        %963 = vmatprep.subr.bf16.mxu0 0
        %964 = vmatpush1.bf16.msra.mxu0 0
        %965 = vmatprep.subr.bf16.mxu0 0
        %966 = vmatpush1.bf16.msra.mxu0 0
        %967 = vmatprep.subr.bf16.mxu0 0
        %968 = vmatpush1.bf16.msra.mxu0 0
        %969 = vmatprep.subr.bf16.mxu0 0
        %970 = vmatpush1.bf16.msra.mxu0 0
        %971 = vmatprep.subr.bf16.mxu0 0
        %972 = vmatpush1.bf16.msra.mxu0 0
        %973 = vmatprep.subr.bf16.mxu0 0
        %974 = vmatpush1.bf16.msra.mxu0 0
        %975 = vmatprep.subr.bf16.mxu0 0
        %976 = vmatpush1.bf16.msra.mxu0 0
        %977 = vmatprep.subr.bf16.mxu0 0
        %978 = vmatpush1.bf16.msra.mxu0 0
        %979 = vmatprep.subr.bf16.mxu0 0
        %980 = vmatpush1.bf16.msra.mxu0 0
        %981 = vmatprep.mubr.bf16.mxu0 0
        %982 = vmatmul.mubr.bf16.gmra.mrb[0].mxu0 %v944
        %v983 = vpop.f32.mrb[0].mxu0
        %v984 = vadd.f32 0.0, %v983
        %v985 = vpop.f32.mrb[0].mxu0
        %v986 = vpop.f32.mrb[0].mxu0
        %v987 = vpop.f32.mrb[0].mxu0
        %988 = vdwg.mxu0
        %989 = vrot.lane.b32.xlu0 %v763, 96
        %v990 = vpop.permute.xlu0 %989
        %991 = vrot.lane.b32.xlu0 %v764, 96
        %v992 = vpop.permute.xlu0 %991
        %v994 = vsel %vm766, %v990, 0
        %v997 = vsel %vm766, %v992, 0
        %999 = vmatprep.subr.bf16.mxu0 0
        %1000 = vmatpush1.bf16.xpose.msra.mxu0 %v997
        %1001 = vmatprep.subr.bf16.mxu0 0
        %1002 = vmatpush1.bf16.xpose.msra.mxu0 0
        %1003 = vmatprep.subr.bf16.mxu0 0
        %1004 = vmatpush1.bf16.xpose.msra.mxu0 0
        %1005 = vmatprep.subr.bf16.mxu0 0
        %1006 = vmatpush1.bf16.xpose.msra.mxu0 0
        %1007 = vmatprep.subr.bf16.mxu0 0
        %1008 = vmatpush1.bf16.xpose.msra.mxu0 0
        %1009 = vmatprep.subr.bf16.mxu0 0
        %1010 = vmatpush1.bf16.xpose.msra.mxu0 0
        %1011 = vmatprep.subr.bf16.mxu0 0
        %1012 = vmatpush1.bf16.xpose.msra.mxu0 0
        %1013 = vmatprep.subr.bf16.mxu0 0
        %1014 = vmatpush1.bf16.xpose.msra.mxu0 0
        %1015 = vmatprep.subr.bf16.mxu0 0
        %1016 = vmatpush1.bf16.xpose.msra.mxu0 0
        %1017 = vmatprep.subr.bf16.mxu0 0
        %1018 = vmatpush1.bf16.xpose.msra.mxu0 0
        %1019 = vmatprep.subr.bf16.mxu0 0
        %1020 = vmatpush1.bf16.xpose.msra.mxu0 0
        %1021 = vmatprep.subr.bf16.mxu0 0
        %1022 = vmatpush1.bf16.xpose.msra.mxu0 0
        %1023 = vmatprep.subr.bf16.mxu0 0
        %1024 = vmatpush1.bf16.xpose.msra.mxu0 0
        %1025 = vmatprep.subr.bf16.mxu0 0
        %1026 = vmatpush1.bf16.xpose.msra.mxu0 0
        %1027 = vmatprep.subr.bf16.mxu0 0
        %1028 = vmatpush1.bf16.xpose.msra.mxu0 0
        %1029 = vmatprep.subr.bf16.mxu0 0
        %1030 = vmatpush1.bf16.xpose.msra.mxu0 0
        %1031 = vmatprep.mubr.bf16.mxu0 0
        %1032 = vmatmul.mubr.bf16.gmra.mrb[0].mxu0 %v994
        %v1033 = vpop.f32.mrb[0].mxu0
        %v1034 = vadd.f32 0.0, %v1033
        %v1035 = vpop.f32.mrb[0].mxu0
        %v1036 = vpop.f32.mrb[0].mxu0
        %v1037 = vpop.f32.mrb[0].mxu0
        %1038 = vdwg.mxu0
        %v1039 = vsel %vm813, %v1034, -inf
        %1040 = vmax.xlane.f32.xlu0 %v1039
        %v1041 = vpop.xlane.xlu0 %1040
        %v1042 = vsub.f32 %v1034, %v1041
        %v1043 = vmul.f32 %v1042, 1.442695
        %v1044 = vpow.pop %v1043
        %v1045 = vsel %vm813, %v1044, 0.0
        %1046 = vadd.xlane.f32.xlu0 %v1045
        %v1047 = vpop.xlane.xlu0 %1046
        %v1048 = vrcp.pop %v1047
        %v1049 = vmul.f32 %v1044, %v1048
        %v1050 = vpack.c.bf16 %v1049, %v1049
        %1051 = vrot.lane.b32.xlu0 %v765, 48
        %v1052 = vpop.permute.xlu0 %1051
        %v1054 = vsel %vm829, %v1050, 0
        %v1057 = vsel %vm833, %v1052, 0
        %1059 = vmatprep.subr.bf16.mxu0 0
        %1060 = vmatpush1.bf16.msra.mxu0 %v1057
        %1061 = vmatprep.subr.bf16.mxu0 0
        %1062 = vmatpush1.bf16.msra.mxu0 0
        %1063 = vmatprep.subr.bf16.mxu0 0
        %1064 = vmatpush1.bf16.msra.mxu0 0
        %1065 = vmatprep.subr.bf16.mxu0 0
        %1066 = vmatpush1.bf16.msra.mxu0 0
        %1067 = vmatprep.subr.bf16.mxu0 0
        %1068 = vmatpush1.bf16.msra.mxu0 0
        %1069 = vmatprep.subr.bf16.mxu0 0
        %1070 = vmatpush1.bf16.msra.mxu0 0
        %1071 = vmatprep.subr.bf16.mxu0 0
        %1072 = vmatpush1.bf16.msra.mxu0 0
        %1073 = vmatprep.subr.bf16.mxu0 0
        %1074 = vmatpush1.bf16.msra.mxu0 0
        %1075 = vmatprep.subr.bf16.mxu0 0
        %1076 = vmatpush1.bf16.msra.mxu0 0
        %1077 = vmatprep.subr.bf16.mxu0 0
        %1078 = vmatpush1.bf16.msra.mxu0 0
        %1079 = vmatprep.subr.bf16.mxu0 0
        %1080 = vmatpush1.bf16.msra.mxu0 0
        %1081 = vmatprep.subr.bf16.mxu0 0
        %1082 = vmatpush1.bf16.msra.mxu0 0
        %1083 = vmatprep.subr.bf16.mxu0 0
        %1084 = vmatpush1.bf16.msra.mxu0 0
        %1085 = vmatprep.subr.bf16.mxu0 0
        %1086 = vmatpush1.bf16.msra.mxu0 0
        %1087 = vmatprep.subr.bf16.mxu0 0
        %1088 = vmatpush1.bf16.msra.mxu0 0
        %1089 = vmatprep.subr.bf16.mxu0 0
        %1090 = vmatpush1.bf16.msra.mxu0 0
        %1091 = vmatprep.mubr.bf16.mxu0 0
        %1092 = vmatmul.mubr.bf16.gmra.mrb[0].mxu0 %v1054
        %v1093 = vpop.f32.mrb[0].mxu0
        %v1094 = vadd.f32 0.0, %v1093
        %v1095 = vpop.f32.mrb[0].mxu0
        %v1096 = vpop.f32.mrb[0].mxu0
        %v1097 = vpop.f32.mrb[0].mxu0
        %1098 = vdwg.mxu0
        %1099 = vrot.lane.b32.xlu0 %v763, 80
        %v1100 = vpop.permute.xlu0 %1099
        %1101 = vrot.lane.b32.xlu0 %v764, 80
        %v1102 = vpop.permute.xlu0 %1101
        %v1104 = vsel %vm766, %v1100, 0
        %v1107 = vsel %vm766, %v1102, 0
        %1109 = vmatprep.subr.bf16.mxu0 0
        %1110 = vmatpush1.bf16.xpose.msra.mxu0 %v1107
        %1111 = vmatprep.subr.bf16.mxu0 0
        %1112 = vmatpush1.bf16.xpose.msra.mxu0 0
        %1113 = vmatprep.subr.bf16.mxu0 0
        %1114 = vmatpush1.bf16.xpose.msra.mxu0 0
        %1115 = vmatprep.subr.bf16.mxu0 0
        %1116 = vmatpush1.bf16.xpose.msra.mxu0 0
        %1117 = vmatprep.subr.bf16.mxu0 0
        %1118 = vmatpush1.bf16.xpose.msra.mxu0 0
        %1119 = vmatprep.subr.bf16.mxu0 0
        %1120 = vmatpush1.bf16.xpose.msra.mxu0 0
        %1121 = vmatprep.subr.bf16.mxu0 0
        %1122 = vmatpush1.bf16.xpose.msra.mxu0 0
        %1123 = vmatprep.subr.bf16.mxu0 0
        %1124 = vmatpush1.bf16.xpose.msra.mxu0 0
        %1125 = vmatprep.subr.bf16.mxu0 0
        %1126 = vmatpush1.bf16.xpose.msra.mxu0 0
        %1127 = vmatprep.subr.bf16.mxu0 0
        %1128 = vmatpush1.bf16.xpose.msra.mxu0 0
        %1129 = vmatprep.subr.bf16.mxu0 0
        %1130 = vmatpush1.bf16.xpose.msra.mxu0 0
        %1131 = vmatprep.subr.bf16.mxu0 0
        %1132 = vmatpush1.bf16.xpose.msra.mxu0 0
        %1133 = vmatprep.subr.bf16.mxu0 0
        %1134 = vmatpush1.bf16.xpose.msra.mxu0 0
        %1135 = vmatprep.subr.bf16.mxu0 0
        %1136 = vmatpush1.bf16.xpose.msra.mxu0 0
        %1137 = vmatprep.subr.bf16.mxu0 0
        %1138 = vmatpush1.bf16.xpose.msra.mxu0 0
        %1139 = vmatprep.subr.bf16.mxu0 0
        %1140 = vmatpush1.bf16.xpose.msra.mxu0 0
        %1141 = vmatprep.mubr.bf16.mxu0 0
        %1142 = vmatmul.mubr.bf16.gmra.mrb[0].mxu0 %v1104
        %v1143 = vpop.f32.mrb[0].mxu0
        %v1144 = vadd.f32 0.0, %v1143
        %v1145 = vpop.f32.mrb[0].mxu0
        %v1146 = vpop.f32.mrb[0].mxu0
        %v1147 = vpop.f32.mrb[0].mxu0
        %1148 = vdwg.mxu0
        %v1149 = vsel %vm813, %v1144, -inf
        %1150 = vmax.xlane.f32.xlu0 %v1149
        %v1151 = vpop.xlane.xlu0 %1150
        %v1152 = vsub.f32 %v1144, %v1151
        %v1153 = vmul.f32 %v1152, 1.442695
        %v1154 = vpow.pop %v1153
        %v1155 = vsel %vm813, %v1154, 0.0
        %1156 = vadd.xlane.f32.xlu0 %v1155
        %v1157 = vpop.xlane.xlu0 %1156
        %v1158 = vrcp.pop %v1157
        %v1159 = vmul.f32 %v1154, %v1158
        %v1160 = vpack.c.bf16 %v1159, %v1159
        %1161 = vrot.lane.b32.xlu0 %v765, 40
        %v1162 = vpop.permute.xlu0 %1161
        %v1164 = vsel %vm829, %v1160, 0
        %v1167 = vsel %vm833, %v1162, 0
        %1169 = vmatprep.subr.bf16.mxu0 0
        %1170 = vmatpush1.bf16.msra.mxu0 %v1167
        %1171 = vmatprep.subr.bf16.mxu0 0
        %1172 = vmatpush1.bf16.msra.mxu0 0
        %1173 = vmatprep.subr.bf16.mxu0 0
        %1174 = vmatpush1.bf16.msra.mxu0 0
        %1175 = vmatprep.subr.bf16.mxu0 0
        %1176 = vmatpush1.bf16.msra.mxu0 0
        %1177 = vmatprep.subr.bf16.mxu0 0
        %1178 = vmatpush1.bf16.msra.mxu0 0
        %1179 = vmatprep.subr.bf16.mxu0 0
        %1180 = vmatpush1.bf16.msra.mxu0 0
        %1181 = vmatprep.subr.bf16.mxu0 0
        %1182 = vmatpush1.bf16.msra.mxu0 0
        %1183 = vmatprep.subr.bf16.mxu0 0
        %1184 = vmatpush1.bf16.msra.mxu0 0
        %1185 = vmatprep.subr.bf16.mxu0 0
        %1186 = vmatpush1.bf16.msra.mxu0 0
        %1187 = vmatprep.subr.bf16.mxu0 0
        %1188 = vmatpush1.bf16.msra.mxu0 0
        %1189 = vmatprep.subr.bf16.mxu0 0
        %1190 = vmatpush1.bf16.msra.mxu0 0
        %1191 = vmatprep.subr.bf16.mxu0 0
        %1192 = vmatpush1.bf16.msra.mxu0 0
        %1193 = vmatprep.subr.bf16.mxu0 0
        %1194 = vmatpush1.bf16.msra.mxu0 0
        %1195 = vmatprep.subr.bf16.mxu0 0
        %1196 = vmatpush1.bf16.msra.mxu0 0
        %1197 = vmatprep.subr.bf16.mxu0 0
        %1198 = vmatpush1.bf16.msra.mxu0 0
        %1199 = vmatprep.subr.bf16.mxu0 0
        %1200 = vmatpush1.bf16.msra.mxu0 0
        %1201 = vmatprep.mubr.bf16.mxu0 0
        %1202 = vmatmul.mubr.bf16.gmra.mrb[0].mxu0 %v1164
        %v1203 = vpop.f32.mrb[0].mxu0
        %v1204 = vadd.f32 0.0, %v1203
        %v1205 = vpop.f32.mrb[0].mxu0
        %v1206 = vpop.f32.mrb[0].mxu0
        %v1207 = vpop.f32.mrb[0].mxu0
        %1208 = vdwg.mxu0
        %1210 = vrot.lane.b32.xlu0 %v984, 8
        %v1211 = vpop.permute.xlu0 %1210
        %1214 = vrot.lane.b32.xlu0 %v1094, 16
        %v1215 = vpop.permute.xlu0 %1214
        %1218 = vrot.lane.b32.xlu0 %v1204, 24
        %v1219 = vpop.permute.xlu0 %1218
        %vm1221 = vcmask 64512
        %v1222 = vsel %vm1221, %v872, %v1211
        %v1223 = vsel %vm766, %v1222, %v1215
        %vm1224 = vcmask 195584
        %v1225 = vsel %vm1224, %v1223, %v1219
        %v1226 = vld [vmem:[%s4] sm:$0xf]
        %v1227 = vld [vmem:[%s4 + $0x4] sm:$0xf]
        %v1228 = vld [vmem:[%s4 + $0x8] sm:$0xf]
        %v1229 = vld [vmem:[%s4 + $0xc] sm:$0xf]
        %v1230 = vpack.c.bf16 %v1225, %v1225
        %v1231 = vld [vmem:[%s5] sm:$0x1]
        %v1233 = vlaneseq
        %v1234 = vshrl.u32 %v1233, 7
        %v1235 = vsub.s32 0, %v1234
        %v1236 = vrot.slane %v1231, %v1235
        %v1242 = vunpack.c.l.b16 %v1226
        %v1243 = vunpack.c.l.b16 %v1227
        %v1244 = vunpack.c.l.b16 %v1228
        %v1245 = vunpack.c.l.b16 %v1229
        %v1246 = vpack.c.b16 %v1243, %v1242
        %v1247 = vpack.c.b16 %v1245, %v1244
        %v1251 = vsel %vm708, %v1230, 0
        %1253 = vmatprep.subr.bf16.mxu0 0
        %1254 = vmatpush1.bf16.msra.mxu0 %v1246
        %1255 = vmatprep.subr.bf16.mxu0 0
        %1256 = vmatpush1.bf16.msra.mxu0 %v1247
        %1257 = vmatprep.subr.bf16.mxu0 0
        %1258 = vmatpush1.bf16.msra.mxu0 0
        %1259 = vmatprep.subr.bf16.mxu0 0
        %1260 = vmatpush1.bf16.msra.mxu0 0
        %1261 = vmatprep.subr.bf16.mxu0 0
        %1262 = vmatpush1.bf16.msra.mxu0 0
        %1263 = vmatprep.subr.bf16.mxu0 0
        %1264 = vmatpush1.bf16.msra.mxu0 0
        %1265 = vmatprep.subr.bf16.mxu0 0
        %1266 = vmatpush1.bf16.msra.mxu0 0
        %1267 = vmatprep.subr.bf16.mxu0 0
        %1268 = vmatpush1.bf16.msra.mxu0 0
        %1269 = vmatprep.subr.bf16.mxu0 0
        %1270 = vmatpush1.bf16.msra.mxu0 0
        %1271 = vmatprep.subr.bf16.mxu0 0
        %1272 = vmatpush1.bf16.msra.mxu0 0
        %1273 = vmatprep.subr.bf16.mxu0 0
        %1274 = vmatpush1.bf16.msra.mxu0 0
        %1275 = vmatprep.subr.bf16.mxu0 0
        %1276 = vmatpush1.bf16.msra.mxu0 0
        %1277 = vmatprep.subr.bf16.mxu0 0
        %1278 = vmatpush1.bf16.msra.mxu0 0
        %1279 = vmatprep.subr.bf16.mxu0 0
        %1280 = vmatpush1.bf16.msra.mxu0 0
        %1281 = vmatprep.subr.bf16.mxu0 0
        %1282 = vmatpush1.bf16.msra.mxu0 0
        %1283 = vmatprep.subr.bf16.mxu0 0
        %1284 = vmatpush1.bf16.msra.mxu0 0
        %1285 = vmatprep.mubr.bf16.mxu0 0
        %1286 = vmatmul.mubr.bf16.gmra.mrb[0].mxu0 %v1251
        %v1287 = vpop.f32.mrb[0].mxu0
        %v1288 = vadd.f32 %v1236, %v1287
        %v1289 = vpop.f32.mrb[0].mxu0
        %v1290 = vpop.f32.mrb[0].mxu0
        %v1291 = vpop.f32.mrb[0].mxu0
        %1292 = vdwg.mxu0
        %v1293 = vld [vmem:[%s6] sm:$0xf]
        %v1294 = vld [vmem:[%s6 + $0x4] sm:$0xf]
        %v1295 = vld [vmem:[%s6 + $0x8] sm:$0xf]
        %v1296 = vld [vmem:[%s6 + $0xc] sm:$0xf]
        %v1297 = vld [vmem:[%s7] sm:$0xf]
        %v1298 = vld [vmem:[%s7 + $0x4] sm:$0xf]
        %v1299 = vld [vmem:[%s7 + $0x8] sm:$0xf]
        %v1300 = vld [vmem:[%s7 + $0xc] sm:$0xf]
        %v1301 = vld [vmem:[%s8] sm:$0xf]
        %v1302 = vld [vmem:[%s8 + $0x4] sm:$0xf]
        %v1303 = vld [vmem:[%s8 + $0x8] sm:$0xf]
        %v1304 = vld [vmem:[%s8 + $0xc] sm:$0xf]
        %v1305 = vpack.c.bf16 %v1288, %v1288
        %v1310 = vunpack.c.l.b16 %v1293
        %v1311 = vunpack.c.l.b16 %v1294
        %v1312 = vunpack.c.l.b16 %v1295
        %v1313 = vunpack.c.l.b16 %v1296
        %v1314 = vpack.c.b16 %v1311, %v1310
        %v1315 = vpack.c.b16 %v1313, %v1312
        %v1319 = vsel %vm708, %v1305, 0
        %1321 = vmatprep.subr.bf16.mxu0 0
        %1322 = vmatpush1.bf16.msra.mxu0 %v1314
        %1323 = vmatprep.subr.bf16.mxu0 0
        %1324 = vmatpush1.bf16.msra.mxu0 %v1315
        %1325 = vmatprep.subr.bf16.mxu0 0
        %1326 = vmatpush1.bf16.msra.mxu0 0
        %1327 = vmatprep.subr.bf16.mxu0 0
        %1328 = vmatpush1.bf16.msra.mxu0 0
        %1329 = vmatprep.subr.bf16.mxu0 0
        %1330 = vmatpush1.bf16.msra.mxu0 0
        %1331 = vmatprep.subr.bf16.mxu0 0
        %1332 = vmatpush1.bf16.msra.mxu0 0
        %1333 = vmatprep.subr.bf16.mxu0 0
        %1334 = vmatpush1.bf16.msra.mxu0 0
        %1335 = vmatprep.subr.bf16.mxu0 0
        %1336 = vmatpush1.bf16.msra.mxu0 0
        %1337 = vmatprep.subr.bf16.mxu0 0
        %1338 = vmatpush1.bf16.msra.mxu0 0
        %1339 = vmatprep.subr.bf16.mxu0 0
        %1340 = vmatpush1.bf16.msra.mxu0 0
        %1341 = vmatprep.subr.bf16.mxu0 0
        %1342 = vmatpush1.bf16.msra.mxu0 0
        %1343 = vmatprep.subr.bf16.mxu0 0
        %1344 = vmatpush1.bf16.msra.mxu0 0
        %1345 = vmatprep.subr.bf16.mxu0 0
        %1346 = vmatpush1.bf16.msra.mxu0 0
        %1347 = vmatprep.subr.bf16.mxu0 0
        %1348 = vmatpush1.bf16.msra.mxu0 0
        %1349 = vmatprep.subr.bf16.mxu0 0
        %1350 = vmatpush1.bf16.msra.mxu0 0
        %1351 = vmatprep.subr.bf16.mxu0 0
        %1352 = vmatpush1.bf16.msra.mxu0 0
        %1353 = vmatprep.mubr.bf16.mxu0 0
        %1354 = vmatmul.mubr.bf16.gmra.mrb[0].mxu0 %v1319
        %v1355 = vpop.f32.mrb[0].mxu0
        %v1356 = vadd.f32 0.0, %v1355
        %v1357 = vpop.f32.mrb[0].mxu0
        %v1358 = vpop.f32.mrb[0].mxu0
        %v1359 = vpop.f32.mrb[0].mxu0
        %1360 = vdwg.mxu0
        %v1365 = vunpack.c.l.b16 %v1297
        %v1366 = vunpack.c.l.b16 %v1298
        %v1367 = vunpack.c.l.b16 %v1299
        %v1368 = vunpack.c.l.b16 %v1300
        %v1369 = vpack.c.b16 %v1366, %v1365
        %v1370 = vpack.c.b16 %v1368, %v1367
        %1373 = vmatprep.subr.bf16.mxu0 0
        %1374 = vmatpush1.bf16.msra.mxu0 %v1369
        %1375 = vmatprep.subr.bf16.mxu0 0
        %1376 = vmatpush1.bf16.msra.mxu0 %v1370
        %1377 = vmatprep.subr.bf16.mxu0 0
        %1378 = vmatpush1.bf16.msra.mxu0 0
        %1379 = vmatprep.subr.bf16.mxu0 0
        %1380 = vmatpush1.bf16.msra.mxu0 0
        %1381 = vmatprep.subr.bf16.mxu0 0
        %1382 = vmatpush1.bf16.msra.mxu0 0
        %1383 = vmatprep.subr.bf16.mxu0 0
        %1384 = vmatpush1.bf16.msra.mxu0 0
        %1385 = vmatprep.subr.bf16.mxu0 0
        %1386 = vmatpush1.bf16.msra.mxu0 0
        %1387 = vmatprep.subr.bf16.mxu0 0
        %1388 = vmatpush1.bf16.msra.mxu0 0
        %1389 = vmatprep.subr.bf16.mxu0 0
        %1390 = vmatpush1.bf16.msra.mxu0 0
        %1391 = vmatprep.subr.bf16.mxu0 0
        %1392 = vmatpush1.bf16.msra.mxu0 0
        %1393 = vmatprep.subr.bf16.mxu0 0
        %1394 = vmatpush1.bf16.msra.mxu0 0
        %1395 = vmatprep.subr.bf16.mxu0 0
        %1396 = vmatpush1.bf16.msra.mxu0 0
        %1397 = vmatprep.subr.bf16.mxu0 0
        %1398 = vmatpush1.bf16.msra.mxu0 0
        %1399 = vmatprep.subr.bf16.mxu0 0
        %1400 = vmatpush1.bf16.msra.mxu0 0
        %1401 = vmatprep.subr.bf16.mxu0 0
        %1402 = vmatpush1.bf16.msra.mxu0 0
        %1403 = vmatprep.subr.bf16.mxu0 0
        %1404 = vmatpush1.bf16.msra.mxu0 0
        %1405 = vmatprep.mubr.bf16.mxu0 0
        %1406 = vmatmul.mubr.bf16.gmra.mrb[0].mxu0 %v710
        %v1407 = vpop.f32.mrb[0].mxu0
        %v1408 = vadd.f32 0.0, %v1407
        %v1409 = vpop.f32.mrb[0].mxu0
        %v1410 = vpop.f32.mrb[0].mxu0
        %v1411 = vpop.f32.mrb[0].mxu0
        %1412 = vdwg.mxu0
        %v1413 = vadd.f32 %v1356, %v1408
        %v1414 = vxor.u32 %v1413, 2147483648
        %v1415 = vmul.f32 %v1414, 1.442695
        %v1416 = vpow.pop %v1415
        %v1417 = vadd.f32 %v1416, 1.0
        %v1418 = vrcp.pop %v1417
        %v1419 = vmul.f32 1.0, %v1418
        %v1420 = vsub.f32 %v1413, 2.0
        %v1421 = vxor.u32 %v1420, 2147483648
        %v1422 = vmul.f32 %v1421, 1.442695
        %v1423 = vpow.pop %v1422
        %v1424 = vadd.f32 %v1423, 1.0
        %v1425 = vrcp.pop %v1424
        %v1426 = vmul.f32 1.0, %v1425
        %v1427 = vmul.f32 %v681, %v1419
        %v1428 = vpack.c.bf16 %v1427, %v1427
        %v1433 = vunpack.c.l.b16 %v1301
        %v1434 = vunpack.c.l.b16 %v1302
        %v1435 = vunpack.c.l.b16 %v1303
        %v1436 = vunpack.c.l.b16 %v1304
        %v1437 = vpack.c.b16 %v1434, %v1433
        %v1438 = vpack.c.b16 %v1436, %v1435
        %v1442 = vsel %vm708, %v1428, 0
        %1444 = vmatprep.subr.bf16.mxu0 0
        %1445 = vmatpush1.bf16.msra.mxu0 %v1437
        %1446 = vmatprep.subr.bf16.mxu0 0
        %1447 = vmatpush1.bf16.msra.mxu0 %v1438
        %1448 = vmatprep.subr.bf16.mxu0 0
        %1449 = vmatpush1.bf16.msra.mxu0 0
        %1450 = vmatprep.subr.bf16.mxu0 0
        %1451 = vmatpush1.bf16.msra.mxu0 0
        %1452 = vmatprep.subr.bf16.mxu0 0
        %1453 = vmatpush1.bf16.msra.mxu0 0
        %1454 = vmatprep.subr.bf16.mxu0 0
        %1455 = vmatpush1.bf16.msra.mxu0 0
        %1456 = vmatprep.subr.bf16.mxu0 0
        %1457 = vmatpush1.bf16.msra.mxu0 0
        %1458 = vmatprep.subr.bf16.mxu0 0
        %1459 = vmatpush1.bf16.msra.mxu0 0
        %1460 = vmatprep.subr.bf16.mxu0 0
        %1461 = vmatpush1.bf16.msra.mxu0 0
        %1462 = vmatprep.subr.bf16.mxu0 0
        %1463 = vmatpush1.bf16.msra.mxu0 0
        %1464 = vmatprep.subr.bf16.mxu0 0
        %1465 = vmatpush1.bf16.msra.mxu0 0
        %1466 = vmatprep.subr.bf16.mxu0 0
        %1467 = vmatpush1.bf16.msra.mxu0 0
        %1468 = vmatprep.subr.bf16.mxu0 0
        %1469 = vmatpush1.bf16.msra.mxu0 0
        %1470 = vmatprep.subr.bf16.mxu0 0
        %1471 = vmatpush1.bf16.msra.mxu0 0
        %1472 = vmatprep.subr.bf16.mxu0 0
        %1473 = vmatpush1.bf16.msra.mxu0 0
        %1474 = vmatprep.subr.bf16.mxu0 0
        %1475 = vmatpush1.bf16.msra.mxu0 0
        %1476 = vmatprep.mubr.bf16.mxu0 0
        %1477 = vmatmul.mubr.bf16.gmra.mrb[0].mxu0 %v1442
        %v1478 = vpop.f32.mrb[0].mxu0
        %v1479 = vadd.f32 0.0, %v1478
        %v1480 = vpop.f32.mrb[0].mxu0
        %v1481 = vpop.f32.mrb[0].mxu0
        %v1482 = vpop.f32.mrb[0].mxu0
        %1483 = vdwg.mxu0
        %1485 = vrot.lane.b32.xlu0 %v1479, 64
        %v1486 = vpop.permute.xlu0 %1485
        %v1488 = vadd.f32 %v1356, %v1486
        %v1489 = vtanh.pop %v1488
        %v1490 = vsub.f32 1.0, %v1426
        %1492 = vrot.lane.b32.xlu0 %v681, 32
        %v1493 = vpop.permute.xlu0 %1492
        %v1495 = vmul.f32 %v1490, %v1493
        %1497 = vrot.lane.b32.xlu0 %v1489, 96
        %v1498 = vpop.permute.xlu0 %1497
        %v1500 = vmul.f32 %v1426, %v1498
        %v1501 = vadd.f32 %v1495, %v1500
        %v1502 = vld [vmem:[%s9] sm:$0x1]
        %v1503 = vld [vmem:[%s10] sm:$0x1]
        %1505 = vrot.lane.b32.xlu0 %v1501, 96
        %v1506 = vpop.permute.xlu0 %1505
        %vm1508 = vcmask 257024
        %v1509 = vsel %vm1508, %v1506, 0.0
        %1510 = vadd.xlane.f32.xlu0 %v1509
        %v1511 = vpop.xlane.xlu0 %1510
        %v1512 = vrcp.pop 32.0
        %v1513 = vmul.f32 %v1511, %v1512
        %v1514 = vsub.f32 %v1501, %v1513
        %v1515 = vmul.f32 %v1514, %v1514
        %1517 = vrot.lane.b32.xlu0 %v1515, 96
        %v1518 = vpop.permute.xlu0 %1517
        %v1520 = vsel %vm1508, %v1518, 0.0
        %1521 = vadd.xlane.f32.xlu0 %v1520
        %v1522 = vpop.xlane.xlu0 %1521
        %v1523 = vmul.f32 %v1522, %v1512
        %v1524 = vadd.f32 %v1523, 1e-06
        %v1525 = vrsqrt.pop %v1524
        %v1526 = vmul.f32 %v1514, %v1525
        %v1528 = vlaneseq
        %v1529 = vshrl.u32 %v1528, 7
        %v1530 = vsub.s32 0, %v1529
        %v1531 = vrot.slane %v1502, %v1530
        %1532 = vrot.lane.b32.xlu0 %v1531, 32
        %v1533 = vpop.permute.xlu0 %1532
        %v1535 = vmul.f32 %v1526, %v1533
        %v1537 = vlaneseq
        %v1538 = vshrl.u32 %v1537, 7
        %v1539 = vsub.s32 0, %v1538
        %v1540 = vrot.slane %v1503, %v1539
        %1541 = vrot.lane.b32.xlu0 %v1540, 32
        %v1542 = vpop.permute.xlu0 %1541
        %v1544 = vadd.f32 %v1535, %v1542
        %v1545 = vld [vmem:[%s11] sm:$0xf]
        %v1546 = vld [vmem:[%s11 + $0x4] sm:$0xf]
        %v1547 = vld [vmem:[%s11 + $0x8] sm:$0xf]
        %v1548 = vld [vmem:[%s11 + $0xc] sm:$0xf]
        %v1549 = vpack.c.bf16 %v1544, %v1544
        %v1550 = vld [vmem:[%s12] sm:$0x1]
        %v1552 = vlaneseq
        %v1553 = vshrl.u32 %v1552, 7
        %v1554 = vsub.s32 0, %v1553
        %v1555 = vrot.slane %v1550, %v1554
        %1558 = vrot.lane.b32.xlu0 %v1549, 96
        %v1559 = vpop.permute.xlu0 %1558
        %v1564 = vunpack.c.l.b16 %v1545
        %v1565 = vunpack.c.l.b16 %v1546
        %v1566 = vunpack.c.l.b16 %v1547
        %v1567 = vunpack.c.l.b16 %v1548
        %v1568 = vpack.c.b16 %v1565, %v1564
        %v1569 = vpack.c.b16 %v1567, %v1566
        %v1573 = vsel %vm708, %v1559, 0
        %1575 = vmatprep.subr.bf16.mxu0 0
        %1576 = vmatpush1.bf16.msra.mxu0 %v1568
        %1577 = vmatprep.subr.bf16.mxu0 0
        %1578 = vmatpush1.bf16.msra.mxu0 %v1569
        %1579 = vmatprep.subr.bf16.mxu0 0
        %1580 = vmatpush1.bf16.msra.mxu0 0
        %1581 = vmatprep.subr.bf16.mxu0 0
        %1582 = vmatpush1.bf16.msra.mxu0 0
        %1583 = vmatprep.subr.bf16.mxu0 0
        %1584 = vmatpush1.bf16.msra.mxu0 0
        %1585 = vmatprep.subr.bf16.mxu0 0
        %1586 = vmatpush1.bf16.msra.mxu0 0
        %1587 = vmatprep.subr.bf16.mxu0 0
        %1588 = vmatpush1.bf16.msra.mxu0 0
        %1589 = vmatprep.subr.bf16.mxu0 0
        %1590 = vmatpush1.bf16.msra.mxu0 0
        %1591 = vmatprep.subr.bf16.mxu0 0
        %1592 = vmatpush1.bf16.msra.mxu0 0
        %1593 = vmatprep.subr.bf16.mxu0 0
        %1594 = vmatpush1.bf16.msra.mxu0 0
        %1595 = vmatprep.subr.bf16.mxu0 0
        %1596 = vmatpush1.bf16.msra.mxu0 0
        %1597 = vmatprep.subr.bf16.mxu0 0
        %1598 = vmatpush1.bf16.msra.mxu0 0
        %1599 = vmatprep.subr.bf16.mxu0 0
        %1600 = vmatpush1.bf16.msra.mxu0 0
        %1601 = vmatprep.subr.bf16.mxu0 0
        %1602 = vmatpush1.bf16.msra.mxu0 0
        %1603 = vmatprep.subr.bf16.mxu0 0
        %1604 = vmatpush1.bf16.msra.mxu0 0
        %1605 = vmatprep.subr.bf16.mxu0 0
        %1606 = vmatpush1.bf16.msra.mxu0 0
        %1607 = vmatprep.mubr.bf16.mxu0 0
        %1608 = vmatmul.mubr.bf16.gmra.mrb[0].mxu0 %v1573
        %v1609 = vpop.f32.mrb[0].mxu0
        %v1610 = vadd.f32 %v1555, %v1609
        %v1611 = vpop.f32.mrb[0].mxu0
        %v1612 = vpop.f32.mrb[0].mxu0
        %v1613 = vpop.f32.mrb[0].mxu0
        %1614 = vdwg.mxu0
        %v1615 = vmax.f32 %v1610, 0.0
        %v1616 = vld [vmem:[%s13] sm:$0xf]
        %v1617 = vld [vmem:[%s13 + $0x4] sm:$0xf]
        %v1618 = vld [vmem:[%s13 + $0x8] sm:$0xf]
        %v1619 = vld [vmem:[%s13 + $0xc] sm:$0xf]
        %v1620 = vpack.c.bf16 %v1615, %v1615
        %v1621 = vld [vmem:[%s14] sm:$0x1]
        %v1623 = vlaneseq
        %v1624 = vshrl.u32 %v1623, 7
        %v1625 = vsub.s32 0, %v1624
        %v1626 = vrot.slane %v1621, %v1625
        %v1632 = vunpack.c.l.b16 %v1616
        %v1633 = vunpack.c.l.b16 %v1617
        %v1634 = vunpack.c.l.b16 %v1618
        %v1635 = vunpack.c.l.b16 %v1619
        %v1636 = vpack.c.b16 %v1633, %v1632
        %v1637 = vpack.c.b16 %v1635, %v1634
        %v1641 = vsel %vm708, %v1620, 0
        %1643 = vmatprep.subr.bf16.mxu0 0
        %1644 = vmatpush1.bf16.msra.mxu0 %v1636
        %1645 = vmatprep.subr.bf16.mxu0 0
        %1646 = vmatpush1.bf16.msra.mxu0 %v1637
        %1647 = vmatprep.subr.bf16.mxu0 0
        %1648 = vmatpush1.bf16.msra.mxu0 0
        %1649 = vmatprep.subr.bf16.mxu0 0
        %1650 = vmatpush1.bf16.msra.mxu0 0
        %1651 = vmatprep.subr.bf16.mxu0 0
        %1652 = vmatpush1.bf16.msra.mxu0 0
        %1653 = vmatprep.subr.bf16.mxu0 0
        %1654 = vmatpush1.bf16.msra.mxu0 0
        %1655 = vmatprep.subr.bf16.mxu0 0
        %1656 = vmatpush1.bf16.msra.mxu0 0
        %1657 = vmatprep.subr.bf16.mxu0 0
        %1658 = vmatpush1.bf16.msra.mxu0 0
        %1659 = vmatprep.subr.bf16.mxu0 0
        %1660 = vmatpush1.bf16.msra.mxu0 0
        %1661 = vmatprep.subr.bf16.mxu0 0
        %1662 = vmatpush1.bf16.msra.mxu0 0
        %1663 = vmatprep.subr.bf16.mxu0 0
        %1664 = vmatpush1.bf16.msra.mxu0 0
        %1665 = vmatprep.subr.bf16.mxu0 0
        %1666 = vmatpush1.bf16.msra.mxu0 0
        %1667 = vmatprep.subr.bf16.mxu0 0
        %1668 = vmatpush1.bf16.msra.mxu0 0
        %1669 = vmatprep.subr.bf16.mxu0 0
        %1670 = vmatpush1.bf16.msra.mxu0 0
        %1671 = vmatprep.subr.bf16.mxu0 0
        %1672 = vmatpush1.bf16.msra.mxu0 0
        %1673 = vmatprep.subr.bf16.mxu0 0
        %1674 = vmatpush1.bf16.msra.mxu0 0
        %1675 = vmatprep.mubr.bf16.mxu0 0
        %1676 = vmatmul.mubr.bf16.gmra.mrb[0].mxu0 %v1641
        %v1677 = vpop.f32.mrb[0].mxu0
        %v1678 = vadd.f32 %v1626, %v1677
        %v1679 = vpop.f32.mrb[0].mxu0
        %v1680 = vpop.f32.mrb[0].mxu0
        %v1681 = vpop.f32.mrb[0].mxu0
        %1682 = vdwg.mxu0
        %v1683 = vld [vmem:[%s15] sm:$0xf]
        %v1684 = vld [vmem:[%s15 + $0x4] sm:$0xf]
        %v1685 = vld [vmem:[%s15 + $0x8] sm:$0xf]
        %v1686 = vld [vmem:[%s15 + $0xc] sm:$0xf]
        %v1687 = vld [vmem:[%s16] sm:$0xf]
        %v1688 = vld [vmem:[%s16 + $0x4] sm:$0xf]
        %v1689 = vld [vmem:[%s16 + $0x8] sm:$0xf]
        %v1690 = vld [vmem:[%s16 + $0xc] sm:$0xf]
        %v1691 = vld [vmem:[%s17] sm:$0xf]
        %v1692 = vld [vmem:[%s17 + $0x4] sm:$0xf]
        %v1693 = vld [vmem:[%s17 + $0x8] sm:$0xf]
        %v1694 = vld [vmem:[%s17 + $0xc] sm:$0xf]
        %v1695 = vpack.c.bf16 %v1678, %v1678
        %v1700 = vunpack.c.l.b16 %v1683
        %v1701 = vunpack.c.l.b16 %v1684
        %v1702 = vunpack.c.l.b16 %v1685
        %v1703 = vunpack.c.l.b16 %v1686
        %v1704 = vpack.c.b16 %v1701, %v1700
        %v1705 = vpack.c.b16 %v1703, %v1702
        %v1709 = vsel %vm708, %v1695, 0
        %1711 = vmatprep.subr.bf16.mxu0 0
        %1712 = vmatpush1.bf16.msra.mxu0 %v1704
        %1713 = vmatprep.subr.bf16.mxu0 0
        %1714 = vmatpush1.bf16.msra.mxu0 %v1705
        %1715 = vmatprep.subr.bf16.mxu0 0
        %1716 = vmatpush1.bf16.msra.mxu0 0
        %1717 = vmatprep.subr.bf16.mxu0 0
        %1718 = vmatpush1.bf16.msra.mxu0 0
        %1719 = vmatprep.subr.bf16.mxu0 0
        %1720 = vmatpush1.bf16.msra.mxu0 0
        %1721 = vmatprep.subr.bf16.mxu0 0
        %1722 = vmatpush1.bf16.msra.mxu0 0
        %1723 = vmatprep.subr.bf16.mxu0 0
        %1724 = vmatpush1.bf16.msra.mxu0 0
        %1725 = vmatprep.subr.bf16.mxu0 0
        %1726 = vmatpush1.bf16.msra.mxu0 0
        %1727 = vmatprep.subr.bf16.mxu0 0
        %1728 = vmatpush1.bf16.msra.mxu0 0
        %1729 = vmatprep.subr.bf16.mxu0 0
        %1730 = vmatpush1.bf16.msra.mxu0 0
        %1731 = vmatprep.subr.bf16.mxu0 0
        %1732 = vmatpush1.bf16.msra.mxu0 0
        %1733 = vmatprep.subr.bf16.mxu0 0
        %1734 = vmatpush1.bf16.msra.mxu0 0
        %1735 = vmatprep.subr.bf16.mxu0 0
        %1736 = vmatpush1.bf16.msra.mxu0 0
        %1737 = vmatprep.subr.bf16.mxu0 0
        %1738 = vmatpush1.bf16.msra.mxu0 0
        %1739 = vmatprep.subr.bf16.mxu0 0
        %1740 = vmatpush1.bf16.msra.mxu0 0
        %1741 = vmatprep.subr.bf16.mxu0 0
        %1742 = vmatpush1.bf16.msra.mxu0 0
        %1743 = vmatprep.mubr.bf16.mxu0 0
        %1744 = vmatmul.mubr.bf16.gmra.mrb[0].mxu0 %v1709
        %v1745 = vpop.f32.mrb[0].mxu0
        %v1746 = vadd.f32 0.0, %v1745
        %v1747 = vpop.f32.mrb[0].mxu0
        %v1748 = vpop.f32.mrb[0].mxu0
        %v1749 = vpop.f32.mrb[0].mxu0
        %1750 = vdwg.mxu0
        %v1751 = vpack.c.bf16 %v1501, %v1501
        %1753 = vrot.lane.b32.xlu0 %v1751, 96
        %v1754 = vpop.permute.xlu0 %1753
        %v1759 = vunpack.c.l.b16 %v1687
        %v1760 = vunpack.c.l.b16 %v1688
        %v1761 = vunpack.c.l.b16 %v1689
        %v1762 = vunpack.c.l.b16 %v1690
        %v1763 = vpack.c.b16 %v1760, %v1759
        %v1764 = vpack.c.b16 %v1762, %v1761
        %v1768 = vsel %vm708, %v1754, 0
        %1770 = vmatprep.subr.bf16.mxu0 0
        %1771 = vmatpush1.bf16.msra.mxu0 %v1763
        %1772 = vmatprep.subr.bf16.mxu0 0
        %1773 = vmatpush1.bf16.msra.mxu0 %v1764
        %1774 = vmatprep.subr.bf16.mxu0 0
        %1775 = vmatpush1.bf16.msra.mxu0 0
        %1776 = vmatprep.subr.bf16.mxu0 0
        %1777 = vmatpush1.bf16.msra.mxu0 0
        %1778 = vmatprep.subr.bf16.mxu0 0
        %1779 = vmatpush1.bf16.msra.mxu0 0
        %1780 = vmatprep.subr.bf16.mxu0 0
        %1781 = vmatpush1.bf16.msra.mxu0 0
        %1782 = vmatprep.subr.bf16.mxu0 0
        %1783 = vmatpush1.bf16.msra.mxu0 0
        %1784 = vmatprep.subr.bf16.mxu0 0
        %1785 = vmatpush1.bf16.msra.mxu0 0
        %1786 = vmatprep.subr.bf16.mxu0 0
        %1787 = vmatpush1.bf16.msra.mxu0 0
        %1788 = vmatprep.subr.bf16.mxu0 0
        %1789 = vmatpush1.bf16.msra.mxu0 0
        %1790 = vmatprep.subr.bf16.mxu0 0
        %1791 = vmatpush1.bf16.msra.mxu0 0
        %1792 = vmatprep.subr.bf16.mxu0 0
        %1793 = vmatpush1.bf16.msra.mxu0 0
        %1794 = vmatprep.subr.bf16.mxu0 0
        %1795 = vmatpush1.bf16.msra.mxu0 0
        %1796 = vmatprep.subr.bf16.mxu0 0
        %1797 = vmatpush1.bf16.msra.mxu0 0
        %1798 = vmatprep.subr.bf16.mxu0 0
        %1799 = vmatpush1.bf16.msra.mxu0 0
        %1800 = vmatprep.subr.bf16.mxu0 0
        %1801 = vmatpush1.bf16.msra.mxu0 0
        %1802 = vmatprep.mubr.bf16.mxu0 0
        %1803 = vmatmul.mubr.bf16.gmra.mrb[0].mxu0 %v1768
        %v1804 = vpop.f32.mrb[0].mxu0
        %v1805 = vadd.f32 0.0, %v1804
        %v1806 = vpop.f32.mrb[0].mxu0
        %v1807 = vpop.f32.mrb[0].mxu0
        %v1808 = vpop.f32.mrb[0].mxu0
        %1809 = vdwg.mxu0
        %v1810 = vadd.f32 %v1746, %v1805
        %v1811 = vxor.u32 %v1810, 2147483648
        %v1812 = vmul.f32 %v1811, 1.442695
        %v1813 = vpow.pop %v1812
        %v1814 = vadd.f32 %v1813, 1.0
        %v1815 = vrcp.pop %v1814
        %v1816 = vmul.f32 1.0, %v1815
        %v1817 = vsub.f32 %v1810, 2.0
        %v1818 = vxor.u32 %v1817, 2147483648
        %v1819 = vmul.f32 %v1818, 1.442695
        %v1820 = vpow.pop %v1819
        %v1821 = vadd.f32 %v1820, 1.0
        %v1822 = vrcp.pop %v1821
        %v1823 = vmul.f32 1.0, %v1822
        %1825 = vrot.lane.b32.xlu0 %v1816, 32
        %v1826 = vpop.permute.xlu0 %1825
        %v1828 = vmul.f32 %v1501, %v1826
        %v1829 = vpack.c.bf16 %v1828, %v1828
        %1831 = vrot.lane.b32.xlu0 %v1829, 96
        %v1832 = vpop.permute.xlu0 %1831
        %v1837 = vunpack.c.l.b16 %v1691
        %v1838 = vunpack.c.l.b16 %v1692
        %v1839 = vunpack.c.l.b16 %v1693
        %v1840 = vunpack.c.l.b16 %v1694
        %v1841 = vpack.c.b16 %v1838, %v1837
        %v1842 = vpack.c.b16 %v1840, %v1839
        %v1846 = vsel %vm708, %v1832, 0
        %1848 = vmatprep.subr.bf16.mxu0 0
        %1849 = vmatpush1.bf16.msra.mxu0 %v1841
        %1850 = vmatprep.subr.bf16.mxu0 0
        %1851 = vmatpush1.bf16.msra.mxu0 %v1842
        %1852 = vmatprep.subr.bf16.mxu0 0
        %1853 = vmatpush1.bf16.msra.mxu0 0
        %1854 = vmatprep.subr.bf16.mxu0 0
        %1855 = vmatpush1.bf16.msra.mxu0 0
        %1856 = vmatprep.subr.bf16.mxu0 0
        %1857 = vmatpush1.bf16.msra.mxu0 0
        %1858 = vmatprep.subr.bf16.mxu0 0
        %1859 = vmatpush1.bf16.msra.mxu0 0
        %1860 = vmatprep.subr.bf16.mxu0 0
        %1861 = vmatpush1.bf16.msra.mxu0 0
        %1862 = vmatprep.subr.bf16.mxu0 0
        %1863 = vmatpush1.bf16.msra.mxu0 0
        %1864 = vmatprep.subr.bf16.mxu0 0
        %1865 = vmatpush1.bf16.msra.mxu0 0
        %1866 = vmatprep.subr.bf16.mxu0 0
        %1867 = vmatpush1.bf16.msra.mxu0 0
        %1868 = vmatprep.subr.bf16.mxu0 0
        %1869 = vmatpush1.bf16.msra.mxu0 0
        %1870 = vmatprep.subr.bf16.mxu0 0
        %1871 = vmatpush1.bf16.msra.mxu0 0
        %1872 = vmatprep.subr.bf16.mxu0 0
        %1873 = vmatpush1.bf16.msra.mxu0 0
        %1874 = vmatprep.subr.bf16.mxu0 0
        %1875 = vmatpush1.bf16.msra.mxu0 0
        %1876 = vmatprep.subr.bf16.mxu0 0
        %1877 = vmatpush1.bf16.msra.mxu0 0
        %1878 = vmatprep.subr.bf16.mxu0 0
        %1879 = vmatpush1.bf16.msra.mxu0 0
        %1880 = vmatprep.mubr.bf16.mxu0 0
        %1881 = vmatmul.mubr.bf16.gmra.mrb[0].mxu0 %v1846
        %v1882 = vpop.f32.mrb[0].mxu0
        %v1883 = vadd.f32 0.0, %v1882
        %v1884 = vpop.f32.mrb[0].mxu0
        %v1885 = vpop.f32.mrb[0].mxu0
        %v1886 = vpop.f32.mrb[0].mxu0
        %1887 = vdwg.mxu0
        %1889 = vrot.lane.b32.xlu0 %v1883, 64
        %v1890 = vpop.permute.xlu0 %1889
        %v1892 = vadd.f32 %v1746, %v1890
        %v1893 = vtanh.pop %v1892
        %v1894 = vsub.f32 1.0, %v1823
        %v1895 = vmul.f32 %v1894, %v1501
        %1897 = vrot.lane.b32.xlu0 %v1893, 96
        %v1898 = vpop.permute.xlu0 %1897
        %v1900 = vmul.f32 %v1823, %v1898
        %v1901 = vadd.f32 %v1895, %v1900
        %v1902 = vld [vmem:[%s18] sm:$0x1]
        %v1903 = vld [vmem:[%s19] sm:$0x1]
        %1905 = vrot.lane.b32.xlu0 %v1901, 96
        %v1906 = vpop.permute.xlu0 %1905
        %v1908 = vsel %vm1508, %v1906, 0.0
        %1909 = vadd.xlane.f32.xlu0 %v1908
        %v1910 = vpop.xlane.xlu0 %1909
        %v1911 = vmul.f32 %v1910, %v1512
        %v1912 = vsub.f32 %v1901, %v1911
        %v1913 = vmul.f32 %v1912, %v1912
        %1915 = vrot.lane.b32.xlu0 %v1913, 96
        %v1916 = vpop.permute.xlu0 %1915
        %v1918 = vsel %vm1508, %v1916, 0.0
        %1919 = vadd.xlane.f32.xlu0 %v1918
        %v1920 = vpop.xlane.xlu0 %1919
        %v1921 = vmul.f32 %v1920, %v1512
        %v1922 = vadd.f32 %v1921, 1e-06
        %v1923 = vrsqrt.pop %v1922
        %v1924 = vmul.f32 %v1912, %v1923
        %v1926 = vlaneseq
        %v1927 = vshrl.u32 %v1926, 7
        %v1928 = vsub.s32 0, %v1927
        %v1929 = vrot.slane %v1902, %v1928
        %1930 = vrot.lane.b32.xlu0 %v1929, 32
        %v1931 = vpop.permute.xlu0 %1930
        %v1933 = vmul.f32 %v1924, %v1931
        %v1935 = vlaneseq
        %v1936 = vshrl.u32 %v1935, 7
        %v1937 = vsub.s32 0, %v1936
        %v1938 = vrot.slane %v1903, %v1937
        %1939 = vrot.lane.b32.xlu0 %v1938, 32
        %v1940 = vpop.permute.xlu0 %1939
        %v1942 = vadd.f32 %v1933, %v1940
        %1944 = vrot.lane.b32.xlu0 %v1942, 96
        %v1945 = vpop.permute.xlu0 %1944
        %1947 = vst.msk [vmem:[%s664] sm:$0xf] %vm1508, %v1945
        %1948 = vst.msk [vmem:[%s671] sm:$0xf] %vm1508, %v1288
        %s1949 = sand.u32 %s477, 1
        %s1950 = scalar_lea.sflag [#allocation3], %s1949
        %s1951 = sand.u32 %s477, 1
        %s1952 = smul.addr %s1951, 4
        %s1953 = scalar_lea.vmem [#allocation2], %s1952
        %s1954 = sand.u32 %s503, 1
        %s1955 = scalar_lea.sflag [#allocation5], %s1954
        %s1956 = sand.u32 %s503, 1
        %s1957 = smul.addr %s1956, 4
        %s1958 = scalar_lea.vmem [#allocation4], %s1957
        // Predicated region
        $region101: #{transformer_intention_layer.9} parent=99 // pred_check
          %p1959 = pneg %p487
        $region102: #{transformer_intention_layer.9} parent=99 // pred_check_branch
          %1961 = sbr.rel (%p1959) target = $region104
        $region103: #{transformer_intention_layer.9} parent=99 // pred_region
          %s1963 = ssub.s32 64, 64
          %1964 = vsyncadd %s1950, %s1963
          %s1965 = smul.addr %s39, 64
          %s1966 = scalar_lea.hbm %s20, %s1965
          %s1968 = sshll.u32 %s1953, 4
          %s1969 = int_to_ptr.vmem [resolvable:$true] %s1968
          %1971 = dma.vmem_to_hbm [thread:$0]  %s1969, 64, %s1966, %s1950
        $region104: #{transformer_intention_layer.9} parent=99 // pred_fallthru
          _
        // Predicated region
        $region105: #{transformer_intention_layer.9} parent=99 // pred_check
          %p1972 = pneg %p513
        $region106: #{transformer_intention_layer.9} parent=99 // pred_check_branch
          %1974 = sbr.rel (%p1972) target = $region108
        $region107: #{transformer_intention_layer.9} parent=99 // pred_region
          %s1976 = ssub.s32 64, 64
          %1977 = vsyncadd %s1955, %s1976
          %s1978 = smul.addr %s39, 64
          %s1979 = scalar_lea.hbm %s21, %s1978
          %s1981 = sshll.u32 %s1958, 4
          %s1982 = int_to_ptr.vmem [resolvable:$true] %s1981
          %1984 = dma.vmem_to_hbm [thread:$0]  %s1982, 64, %s1979, %s1955
        $region108: #{transformer_intention_layer.9} parent=99 // pred_fallthru
          _
      $region100: #{transformer_intention_layer.9} parent=5 // pred_fallthru
        _
      %p1985 = scmp.le.s32.totalorder 2, %s34
      // Predicated region
      $region109: #{transformer_intention_layer.9} parent=5 // pred_check
        %p1986 = pneg %p1985
      $region110: #{transformer_intention_layer.9} parent=5 // pred_check_branch
        %1988 = sbr.rel (%p1986) target = $region112
      $region111: #{transformer_intention_layer.9} parent=5 // pred_region
        %s1989 = ssub.s32 %s34, 2
        // Predicated region
        $region113: #{transformer_intention_layer.9} parent=111 // pred_check
          %p1990 = pneg %p493
        $region114: #{transformer_intention_layer.9} parent=111 // pred_check_branch
          %1992 = sbr.rel (%p1990) target = $region116
        $region115: #{transformer_intention_layer.9} parent=111 // pred_region
          %s1993 = sand.u32 %s478, 1
          %s1994 = scalar_lea.sflag [#allocation3], %s1993
          %s1995 = sand.u32 %s478, 1
          %s1996 = smul.addr %s1995, 4
          %s1997 = scalar_lea.vmem [#allocation2], %s1996
          %1998 = dma.done %s1994, 64
        $region116: #{transformer_intention_layer.9} parent=111 // pred_fallthru
          _
        // Predicated region
        $region117: #{transformer_intention_layer.9} parent=111 // pred_check
          %p1999 = pneg %p519
        $region118: #{transformer_intention_layer.9} parent=111 // pred_check_branch
          %2001 = sbr.rel (%p1999) target = $region120
        $region119: #{transformer_intention_layer.9} parent=111 // pred_region
          %s2002 = sand.u32 %s504, 1
          %s2003 = scalar_lea.sflag [#allocation5], %s2002
          %s2004 = sand.u32 %s504, 1
          %s2005 = smul.addr %s2004, 4
          %s2006 = scalar_lea.vmem [#allocation4], %s2005
          %2007 = dma.done %s2003, 64
        $region120: #{transformer_intention_layer.9} parent=111 // pred_fallthru
          _
      $region112: #{transformer_intention_layer.9} parent=5 // pred_fallthru
        _
    $region6: #{transformer_intention_layer.9} parent=1 // loop_footer
      %s38 = sadd.s32 1, %s34
    $region7: #{transformer_intention_layer.9} parent=1 // loop_footer_branch
      %33 = sbr.rel target = $region3
    $region8: #{transformer_intention_layer.9} parent=1 // loop_exit
      _
    %2008 = vsyncpa [#allocation3], 1
    %s2009 = scalar_lea.sflag [#allocation3], 1
    %2010 = vsyncpa %s2009, 1
    %2011 = vsyncpa [#allocation5], 1
    %s2012 = scalar_lea.sflag [#allocation5], 1
    %2013 = vsyncpa %s2012, 1

</llo_original>
